<compile_context>
chip_gen: v7x
topology: tpu7x:2x2x1
jax: 0.10.0
libtpu: 0.0.40
codegen_flags: <defaults>
</compile_context>

<pallas_src>
import numpy as np
import jax
import jax.numpy as jnp
from jax.experimental import pallas as pl
from jax.experimental.pallas import tpu as pltpu

EPS = 1e-5
KSIZE = 3
STRIDE = 2


# ---------------------------------------------------------------------------
# Fused 4-layer kernel: conv (matmul) -> BN (batch stats) -> ReLU, four times.
# ---------------------------------------------------------------------------
def fused_conv_bn_relu_kernel(p1t_ref, w1t_ref,
                              g2_ref, w2_ref,
                              g3_ref, w3_ref,
                              g4_ref, w4_ref,
                              gamma_ref, beta_ref,
                              o_ref):
    """All activations are lane-dense (C, M) slabs and never leave the chip."""

    def bn_relu(y, layer):
        # y: (C, M) pre-activation. Training-mode BatchNorm over the M axis,
        # single-pass biased stats, affine folded into one FMA, ReLU fused.
        inv_m = 1.0 / y.shape[1]
        mean = jnp.sum(y, axis=1, keepdims=True) * inv_m            # (C, 1)
        ex2 = jnp.sum(y * y, axis=1, keepdims=True) * inv_m         # (C, 1)
        var = ex2 - mean * mean
        scale = gamma_ref[layer] * jax.lax.rsqrt(var + EPS)         # (C, 1)
        shift = beta_ref[layer] - mean * scale                      # (C, 1)
        return jnp.maximum(y * scale + shift, 0.0)

    def conv_taps(a, g_ref, w_ref):
        # In-kernel im2col + conv for one layer:
        #   a:     (Cin, M_in)      lane-dense input activation
        #   g_ref: (9, M_in, M_out) one-hot column-gather matrices (exact select)
        #   w_ref: (9, Cout, Cin)   per-tap weights
        acc = None
        for tap in range(KSIZE * KSIZE):                            # unrolled 9-tap loop
            sel = jnp.dot(a, g_ref[tap], preferred_element_type=jnp.float32)
            contrib = jnp.dot(w_ref[tap], sel, preferred_element_type=jnp.float32)
            acc = contrib if acc is None else acc + contrib
        return acc

    # Layer 1: patches pre-gathered by the wrapper -> single big matmul.
    y1 = jnp.dot(w1t_ref[...], p1t_ref[...], preferred_element_type=jnp.float32)
    a = bn_relu(y1, 0)
    # Layers 2-4: im2col in-kernel via one-hot gather matmuls.
    a = bn_relu(conv_taps(a, g2_ref, w2_ref), 1)
    a = bn_relu(conv_taps(a, g3_ref, w3_ref), 2)
    a = bn_relu(conv_taps(a, g4_ref, w4_ref), 3)
    o_ref[...] = a                                                  # (Cout, N) since H=W=1


# ---------------------------------------------------------------------------
# Wrapper-side glue (plain JAX / numpy constants)
# ---------------------------------------------------------------------------
def conv_out_size(n):
    return (n - KSIZE) // STRIDE + 1


def im2col_layer1(x):
    # x: (N, C, H, W) NCHW -> (9*C, M) lane-dense patch matrix.
    # K ordered (di, dj, c); M = N*Ho*Wo columns ordered (n, oh, ow).
    N, C, H, W = x.shape
    Ho, Wo = conv_out_size(H), conv_out_size(W)
    taps = []
    for di in range(KSIZE):
        for dj in range(KSIZE):
            taps.append(x[:, :, di:di + STRIDE * Ho:STRIDE, dj:dj + STRIDE * Wo:STRIDE])
    p = jnp.stack(taps, axis=0)                  # (9, N, C, Ho, Wo)
    p = p.transpose(1, 3, 4, 0, 2)               # (N, Ho, Wo, 9, C)
    p = p.reshape(N * Ho * Wo, KSIZE * KSIZE * C)
    return p.T, Ho, Wo                           # (9*C, M)


def make_gather_onehots(N, Hi, Wi):
    # One-hot gather matrices G[t] of shape (M_in, M_out): G[t, r_in, r_out] = 1
    # where r_in = flat(n, 2*oh+di, 2*ow+dj) feeds output row r_out = flat(n, oh, ow)
    # for tap t = (di, dj).  Used inside the kernel as  sel = A @ G[t].
    Ho, Wo = conv_out_size(Hi), conv_out_size(Wi)
    Mi, Mo = N * Hi * Wi, N * Ho * Wo
    G = np.zeros((KSIZE * KSIZE, Mi, Mo), np.float32)
    t = 0
    for di in range(KSIZE):
        for dj in range(KSIZE):
            for n in range(N):
                for oh in range(Ho):
                    for ow in range(Wo):
                        r_out = (n * Ho + oh) * Wo + ow
                        r_in = (n * Hi + (STRIDE * oh + di)) * Wi + (STRIDE * ow + dj)
                        G[t, r_in, r_out] = 1.0
            t += 1
    return G, Ho, Wo


def tap_weights(w):
    # (Cout, Cin, 3, 3) OIHW -> (9, Cout, Cin), tap order (di, dj) di-major.
    cout, cin = w.shape[0], w.shape[1]
    return jnp.transpose(w, (2, 3, 0, 1)).reshape(KSIZE * KSIZE, cout, cin)


def full_spec(shape):
    n = len(shape)
    return pl.BlockSpec(shape, lambda i, n=n: (0,) * n)


def conv_module_forward(x, params):
    # x: (N, 16, H, W) NCHW; params: 4 x (w, b, gamma, beta) as in the PyTorch module.
    N = x.shape[0]
    (w1, _b1, gm1, bt1), (w2, _b2, gm2, bt2), \
        (w3, _b3, gm3, bt3), (w4, _b4, gm4, bt4) = params
    # Conv biases are not passed in: training-mode BN cancels them exactly.
    cout = w1.shape[0]

    p1t, H1, W1 = im2col_layer1(x.astype(jnp.float32))                 # (144, M1)
    w1t = jnp.transpose(w1, (0, 2, 3, 1)).reshape(cout, -1)            # (32, 144), (di,dj,c)

    G2, H2, W2 = make_gather_onehots(N, H1, W1)
    G3, H3, W3 = make_gather_onehots(N, H2, W2)
    G4, H4, W4 = make_gather_onehots(N, H3, W3)
    assert (H4, W4) == (1, 1), "input spatial size must reduce to 1x1 after 4 stride-2 convs"

    w2t, w3t, w4t = tap_weights(w2), tap_weights(w3), tap_weights(w4)
    gammas = jnp.stack([gm1, gm2, gm3, gm4]).reshape(4, cout, 1).astype(jnp.float32)
    betas = jnp.stack([bt1, bt2, bt3, bt4]).reshape(4, cout, 1).astype(jnp.float32)

    operands = (p1t.astype(jnp.float32), w1t.astype(jnp.float32),
                jnp.asarray(G2), w2t.astype(jnp.float32),
                jnp.asarray(G3), w3t.astype(jnp.float32),
                jnp.asarray(G4), w4t.astype(jnp.float32),
                gammas, betas)

    out_t = pl.pallas_call(
        fused_conv_bn_relu_kernel,
        out_shape=jax.ShapeDtypeStruct((cout, N), jnp.float32),
        grid_spec=pl.GridSpec(
            grid=(1,),
            in_specs=[full_spec(op.shape) for op in operands],
            out_specs=full_spec((cout, N)),
        ),
        compiler_params=pltpu.CompilerParams(dimension_semantics=("arbitrary",)),
    )(*operands)

    # (Cout, N) -> NCHW (N, Cout, 1, 1)
    return out_t.T.reshape(N, cout, 1, 1)


# ---------------------------------------------------------------------------
# Deterministic synthetic params (shapes match the PyTorch module __init__)
# ---------------------------------------------------------------------------
def init_params(key):
    layer_shapes = [(32, 16, 3, 3), (32, 32, 3, 3), (32, 32, 3, 3), (32, 32, 3, 3)]
    params = []
    for i, shp in enumerate(layer_shapes):
        kw, kb = jax.random.split(jax.random.fold_in(key, i))
        cout, cin, k, _ = shp
        fan_in = cin * k * k
        w = jax.random.normal(kw, shp, jnp.float32) * (1.0 / np.sqrt(fan_in))
        b = jax.random.normal(kb, (cout,), jnp.float32) * 0.01
        gamma = jnp.ones((cout,), jnp.float32)   # BatchNorm default weight
        beta = jnp.zeros((cout,), jnp.float32)   # BatchNorm default bias
        params.append((w, b, gamma, beta))
    return params


# ---------------------------------------------------------------------------
# Pure-JAX reference (PyTorch-equivalent forward, bias included)
# ---------------------------------------------------------------------------
def ref_layer(x, w, b, gamma, beta):
    y = jax.lax.conv_general_dilated(
        x, w, window_strides=(STRIDE, STRIDE), padding="VALID",
        dimension_numbers=("NCHW", "OIHW", "NCHW"))
    y = y + b.reshape(1, -1, 1, 1)
    mean = jnp.mean(y, axis=(0, 2, 3), keepdims=True)
    var = jnp.mean(jnp.square(y - mean), axis=(0, 2, 3), keepdims=True)
    yhat = (y - mean) * jax.lax.rsqrt(var + EPS)
    return jnp.maximum(yhat * gamma.reshape(1, -1, 1, 1) + beta.reshape(1, -1, 1, 1), 0.0)


def ref_forward(x, params):
    for (w, b, gamma, beta) in params:
        x = ref_layer(x, w, b, gamma, beta)
    return x


if __name__ == "__main__":
    key = jax.random.PRNGKey(0)
    kx, kp = jax.random.split(key)
    # NCHW input with 16 channels; 33x33 so all four stride-2 valid convs are
    # legal (spatial: 33 -> 16 -> 7 -> 3 -> 1).
    x = jax.random.normal(kx, (2, 16, 33, 33), jnp.float32)
    params = init_params(kp)

    out = jax.block_until_ready(conv_module_forward(x, params))
    assert out.shape == (2, 32, 1, 1), out.shape

    ref = jax.block_until_ready(ref_forward(x, params))
    # Tolerance note: the last BatchNorm normalizes over only 2 samples at 1x1
    # spatial size, which amplifies tiny f32 accumulation-order differences.
    np.testing.assert_allclose(np.asarray(out), np.asarray(ref), rtol=2e-3, atol=2e-3)

    print("KERNEL_OK")
</pallas_src>

<mosaic_0001>
module attributes {stable_mosaic.version = 11 : i64} {
  func.func @fused_conv_bn_relu_kernel(%arg0: i32, %arg1: memref<144x512xf32, #tpu.memory_space<vmem>>, %arg2: memref<32x144xf32, #tpu.memory_space<vmem>>, %arg3: memref<9x512x98xf32, #tpu.memory_space<vmem>>, %arg4: memref<9x32x32xf32, #tpu.memory_space<vmem>>, %arg5: memref<9x98x18xf32, #tpu.memory_space<vmem>>, %arg6: memref<9x32x32xf32, #tpu.memory_space<vmem>>, %arg7: memref<9x18x2xf32, #tpu.memory_space<vmem>>, %arg8: memref<9x32x32xf32, #tpu.memory_space<vmem>>, %arg9: memref<4x32x1xf32, #tpu.memory_space<vmem>>, %arg10: memref<4x32x1xf32, #tpu.memory_space<vmem>>, %arg11: memref<32x2xf32, #tpu.memory_space<vmem>>) attributes {dimension_semantics = [#tpu.dimension_semantics<arbitrary>], iteration_bounds = array<i64: 1>, scalar_prefetch = 0 : i64, scratch_operands = 0 : i64, tpu.core_type = #tpu.core_type<tc>, window_params = [{pipeline_mode = #tpu.pipeline_mode<synchronous>, transform_indices = @transform_0, window_bounds = array<i64: 144, 512>}, {pipeline_mode = #tpu.pipeline_mode<synchronous>, transform_indices = @transform_1, window_bounds = array<i64: 32, 144>}, {pipeline_mode = #tpu.pipeline_mode<synchronous>, transform_indices = @transform_2, window_bounds = array<i64: 9, 512, 98>}, {pipeline_mode = #tpu.pipeline_mode<synchronous>, transform_indices = @transform_3, window_bounds = array<i64: 9, 32, 32>}, {pipeline_mode = #tpu.pipeline_mode<synchronous>, transform_indices = @transform_4, window_bounds = array<i64: 9, 98, 18>}, {pipeline_mode = #tpu.pipeline_mode<synchronous>, transform_indices = @transform_5, window_bounds = array<i64: 9, 32, 32>}, {pipeline_mode = #tpu.pipeline_mode<synchronous>, transform_indices = @transform_6, window_bounds = array<i64: 9, 18, 2>}, {pipeline_mode = #tpu.pipeline_mode<synchronous>, transform_indices = @transform_7, window_bounds = array<i64: 9, 32, 32>}, {pipeline_mode = #tpu.pipeline_mode<synchronous>, transform_indices = @transform_8, window_bounds = array<i64: 4, 32, 1>}, {pipeline_mode = #tpu.pipeline_mode<synchronous>, transform_indices = @transform_9, window_bounds = array<i64: 4, 32, 1>}, {pipeline_mode = #tpu.pipeline_mode<synchronous>, transform_indices = @transform_10, window_bounds = array<i64: 32, 2>}]} {
    %c0 = arith.constant 0 : index
    %c0_0 = arith.constant 0 : index
    %0 = vector.load %arg2[%c0, %c0_0] : memref<32x144xf32, #tpu.memory_space<vmem>>, vector<32x144xf32>
    %c0_1 = arith.constant 0 : index
    %c0_2 = arith.constant 0 : index
    %1 = vector.load %arg1[%c0_1, %c0_2] : memref<144x512xf32, #tpu.memory_space<vmem>>, vector<144x512xf32>
    %cst = arith.constant dense<0.000000e+00> : vector<32x512xf32>
    %2 = tpu.matmul %0, %1, %cst {dimension_numbers = #tpu.dot_dimension_numbers<[1], [0], [0], [1], [0, 0, 1, 1], [], []>} : vector<32x144xf32>, vector<144x512xf32>, vector<32x512xf32> -> vector<32x512xf32>
    %cst_3 = arith.constant dense<0.000000e+00> : vector<32xf32>
    %3 = vector.multi_reduction <add>, %2, %cst_3 [1] : vector<32x512xf32> to vector<32xf32>
    %4 = vector.shape_cast %3 : vector<32xf32> to vector<32x1xf32>
    %cst_4 = arith.constant 0.001953125 : f32
    %5 = vector.broadcast %cst_4 : f32 to vector<32x1xf32>
    %6 = arith.mulf %4, %5 : vector<32x1xf32>
    %7 = arith.mulf %2, %2 : vector<32x512xf32>
    %cst_5 = arith.constant dense<0.000000e+00> : vector<32xf32>
    %8 = vector.multi_reduction <add>, %7, %cst_5 [1] : vector<32x512xf32> to vector<32xf32>
    %9 = vector.shape_cast %8 : vector<32xf32> to vector<32x1xf32>
    %cst_6 = arith.constant 0.001953125 : f32
    %10 = vector.broadcast %cst_6 : f32 to vector<32x1xf32>
    %11 = arith.mulf %9, %10 : vector<32x1xf32>
    %12 = arith.mulf %6, %6 : vector<32x1xf32>
    %13 = arith.subf %11, %12 : vector<32x1xf32>
    %c0_7 = arith.constant 0 : index
    %c0_8 = arith.constant 0 : index
    %c0_9 = arith.constant 0 : index
    %14 = vector.load %arg9[%c0_7, %c0_8, %c0_9] : memref<4x32x1xf32, #tpu.memory_space<vmem>>, vector<1x32x1xf32>
    %15 = vector.shape_cast %14 : vector<1x32x1xf32> to vector<32x1xf32>
    %cst_10 = arith.constant 9.99999974E-6 : f32
    %16 = vector.broadcast %cst_10 : f32 to vector<32x1xf32>
    %17 = arith.addf %13, %16 : vector<32x1xf32>
    %18 = math.rsqrt %17 : vector<32x1xf32>
    %19 = arith.mulf %15, %18 : vector<32x1xf32>
    %c0_11 = arith.constant 0 : index
    %c0_12 = arith.constant 0 : index
    %c0_13 = arith.constant 0 : index
    %20 = vector.load %arg10[%c0_11, %c0_12, %c0_13] : memref<4x32x1xf32, #tpu.memory_space<vmem>>, vector<1x32x1xf32>
    %21 = vector.shape_cast %20 : vector<1x32x1xf32> to vector<32x1xf32>
    %22 = arith.mulf %6, %19 : vector<32x1xf32>
    %23 = arith.subf %21, %22 : vector<32x1xf32>
    %24 = vector.broadcast %19 : vector<32x1xf32> to vector<32x512xf32>
    %25 = arith.mulf %2, %24 : vector<32x512xf32>
    %26 = vector.broadcast %23 : vector<32x1xf32> to vector<32x512xf32>
    %27 = arith.addf %25, %26 : vector<32x512xf32>
    %cst_14 = arith.constant 0.000000e+00 : f32
    %28 = vector.broadcast %cst_14 : f32 to vector<32x512xf32>
    %29 = arith.maximumf %27, %28 : vector<32x512xf32>
    %c0_15 = arith.constant 0 : index
    %c0_16 = arith.constant 0 : index
    %c0_17 = arith.constant 0 : index
    %30 = vector.load %arg3[%c0_15, %c0_16, %c0_17] : memref<9x512x98xf32, #tpu.memory_space<vmem>>, vector<1x512x98xf32>
    %31 = vector.shape_cast %30 : vector<1x512x98xf32> to vector<512x98xf32>
    %cst_18 = arith.constant dense<0.000000e+00> : vector<32x98xf32>
    %32 = tpu.matmul %29, %31, %cst_18 {dimension_numbers = #tpu.dot_dimension_numbers<[1], [0], [0], [1], [0, 0, 1, 1], [], []>} : vector<32x512xf32>, vector<512x98xf32>, vector<32x98xf32> -> vector<32x98xf32>
    %c0_19 = arith.constant 0 : index
    %c0_20 = arith.constant 0 : index
    %c0_21 = arith.constant 0 : index
    %33 = vector.load %arg4[%c0_19, %c0_20, %c0_21] : memref<9x32x32xf32, #tpu.memory_space<vmem>>, vector<1x32x32xf32>
    %34 = vector.shape_cast %33 : vector<1x32x32xf32> to vector<32x32xf32>
    %cst_22 = arith.constant dense<0.000000e+00> : vector<32x98xf32>
    %35 = tpu.matmul %34, %32, %cst_22 {dimension_numbers = #tpu.dot_dimension_numbers<[1], [0], [0], [1], [0, 0, 1, 1], [], []>} : vector<32x32xf32>, vector<32x98xf32>, vector<32x98xf32> -> vector<32x98xf32>
    %c1 = arith.constant 1 : index
    %c0_23 = arith.constant 0 : index
    %c0_24 = arith.constant 0 : index
    %36 = vector.load %arg3[%c1, %c0_23, %c0_24] : memref<9x512x98xf32, #tpu.memory_space<vmem>>, vector<1x512x98xf32>
    %37 = vector.shape_cast %36 : vector<1x512x98xf32> to vector<512x98xf32>
    %cst_25 = arith.constant dense<0.000000e+00> : vector<32x98xf32>
    %38 = tpu.matmul %29, %37, %cst_25 {dimension_numbers = #tpu.dot_dimension_numbers<[1], [0], [0], [1], [0, 0, 1, 1], [], []>} : vector<32x512xf32>, vector<512x98xf32>, vector<32x98xf32> -> vector<32x98xf32>
    %c1_26 = arith.constant 1 : index
    %c0_27 = arith.constant 0 : index
    %c0_28 = arith.constant 0 : index
    %39 = vector.load %arg4[%c1_26, %c0_27, %c0_28] : memref<9x32x32xf32, #tpu.memory_space<vmem>>, vector<1x32x32xf32>
    %40 = vector.shape_cast %39 : vector<1x32x32xf32> to vector<32x32xf32>
    %cst_29 = arith.constant dense<0.000000e+00> : vector<32x98xf32>
    %41 = tpu.matmul %40, %38, %cst_29 {dimension_numbers = #tpu.dot_dimension_numbers<[1], [0], [0], [1], [0, 0, 1, 1], [], []>} : vector<32x32xf32>, vector<32x98xf32>, vector<32x98xf32> -> vector<32x98xf32>
    %42 = arith.addf %35, %41 : vector<32x98xf32>
    %c2 = arith.constant 2 : index
    %c0_30 = arith.constant 0 : index
    %c0_31 = arith.constant 0 : index
    %43 = vector.load %arg3[%c2, %c0_30, %c0_31] : memref<9x512x98xf32, #tpu.memory_space<vmem>>, vector<1x512x98xf32>
    %44 = vector.shape_cast %43 : vector<1x512x98xf32> to vector<512x98xf32>
    %cst_32 = arith.constant dense<0.000000e+00> : vector<32x98xf32>
    %45 = tpu.matmul %29, %44, %cst_32 {dimension_numbers = #tpu.dot_dimension_numbers<[1], [0], [0], [1], [0, 0, 1, 1], [], []>} : vector<32x512xf32>, vector<512x98xf32>, vector<32x98xf32> -> vector<32x98xf32>
    %c2_33 = arith.constant 2 : index
    %c0_34 = arith.constant 0 : index
    %c0_35 = arith.constant 0 : index
    %46 = vector.load %arg4[%c2_33, %c0_34, %c0_35] : memref<9x32x32xf32, #tpu.memory_space<vmem>>, vector<1x32x32xf32>
    %47 = vector.shape_cast %46 : vector<1x32x32xf32> to vector<32x32xf32>
    %cst_36 = arith.constant dense<0.000000e+00> : vector<32x98xf32>
    %48 = tpu.matmul %47, %45, %cst_36 {dimension_numbers = #tpu.dot_dimension_numbers<[1], [0], [0], [1], [0, 0, 1, 1], [], []>} : vector<32x32xf32>, vector<32x98xf32>, vector<32x98xf32> -> vector<32x98xf32>
    %49 = arith.addf %42, %48 : vector<32x98xf32>
    %c3 = arith.constant 3 : index
    %c0_37 = arith.constant 0 : index
    %c0_38 = arith.constant 0 : index
    %50 = vector.load %arg3[%c3, %c0_37, %c0_38] : memref<9x512x98xf32, #tpu.memory_space<vmem>>, vector<1x512x98xf32>
    %51 = vector.shape_cast %50 : vector<1x512x98xf32> to vector<512x98xf32>
    %cst_39 = arith.constant dense<0.000000e+00> : vector<32x98xf32>
    %52 = tpu.matmul %29, %51, %cst_39 {dimension_numbers = #tpu.dot_dimension_numbers<[1], [0], [0], [1], [0, 0, 1, 1], [], []>} : vector<32x512xf32>, vector<512x98xf32>, vector<32x98xf32> -> vector<32x98xf32>
    %c3_40 = arith.constant 3 : index
    %c0_41 = arith.constant 0 : index
    %c0_42 = arith.constant 0 : index
    %53 = vector.load %arg4[%c3_40, %c0_41, %c0_42] : memref<9x32x32xf32, #tpu.memory_space<vmem>>, vector<1x32x32xf32>
    %54 = vector.shape_cast %53 : vector<1x32x32xf32> to vector<32x32xf32>
    %cst_43 = arith.constant dense<0.000000e+00> : vector<32x98xf32>
    %55 = tpu.matmul %54, %52, %cst_43 {dimension_numbers = #tpu.dot_dimension_numbers<[1], [0], [0], [1], [0, 0, 1, 1], [], []>} : vector<32x32xf32>, vector<32x98xf32>, vector<32x98xf32> -> vector<32x98xf32>
    %56 = arith.addf %49, %55 : vector<32x98xf32>
    %c4 = arith.constant 4 : index
    %c0_44 = arith.constant 0 : index
    %c0_45 = arith.constant 0 : index
    %57 = vector.load %arg3[%c4, %c0_44, %c0_45] : memref<9x512x98xf32, #tpu.memory_space<vmem>>, vector<1x512x98xf32>
    %58 = vector.shape_cast %57 : vector<1x512x98xf32> to vector<512x98xf32>
    %cst_46 = arith.constant dense<0.000000e+00> : vector<32x98xf32>
    %59 = tpu.matmul %29, %58, %cst_46 {dimension_numbers = #tpu.dot_dimension_numbers<[1], [0], [0], [1], [0, 0, 1, 1], [], []>} : vector<32x512xf32>, vector<512x98xf32>, vector<32x98xf32> -> vector<32x98xf32>
    %c4_47 = arith.constant 4 : index
    %c0_48 = arith.constant 0 : index
    %c0_49 = arith.constant 0 : index
    %60 = vector.load %arg4[%c4_47, %c0_48, %c0_49] : memref<9x32x32xf32, #tpu.memory_space<vmem>>, vector<1x32x32xf32>
    %61 = vector.shape_cast %60 : vector<1x32x32xf32> to vector<32x32xf32>
    %cst_50 = arith.constant dense<0.000000e+00> : vector<32x98xf32>
    %62 = tpu.matmul %61, %59, %cst_50 {dimension_numbers = #tpu.dot_dimension_numbers<[1], [0], [0], [1], [0, 0, 1, 1], [], []>} : vector<32x32xf32>, vector<32x98xf32>, vector<32x98xf32> -> vector<32x98xf32>
    %63 = arith.addf %56, %62 : vector<32x98xf32>
    %c5 = arith.constant 5 : index
    %c0_51 = arith.constant 0 : index
    %c0_52 = arith.constant 0 : index
    %64 = vector.load %arg3[%c5, %c0_51, %c0_52] : memref<9x512x98xf32, #tpu.memory_space<vmem>>, vector<1x512x98xf32>
    %65 = vector.shape_cast %64 : vector<1x512x98xf32> to vector<512x98xf32>
    %cst_53 = arith.constant dense<0.000000e+00> : vector<32x98xf32>
    %66 = tpu.matmul %29, %65, %cst_53 {dimension_numbers = #tpu.dot_dimension_numbers<[1], [0], [0], [1], [0, 0, 1, 1], [], []>} : vector<32x512xf32>, vector<512x98xf32>, vector<32x98xf32> -> vector<32x98xf32>
    %c5_54 = arith.constant 5 : index
    %c0_55 = arith.constant 0 : index
    %c0_56 = arith.constant 0 : index
    %67 = vector.load %arg4[%c5_54, %c0_55, %c0_56] : memref<9x32x32xf32, #tpu.memory_space<vmem>>, vector<1x32x32xf32>
    %68 = vector.shape_cast %67 : vector<1x32x32xf32> to vector<32x32xf32>
    %cst_57 = arith.constant dense<0.000000e+00> : vector<32x98xf32>
    %69 = tpu.matmul %68, %66, %cst_57 {dimension_numbers = #tpu.dot_dimension_numbers<[1], [0], [0], [1], [0, 0, 1, 1], [], []>} : vector<32x32xf32>, vector<32x98xf32>, vector<32x98xf32> -> vector<32x98xf32>
    %70 = arith.addf %63, %69 : vector<32x98xf32>
    %c6 = arith.constant 6 : index
    %c0_58 = arith.constant 0 : index
    %c0_59 = arith.constant 0 : index
    %71 = vector.load %arg3[%c6, %c0_58, %c0_59] : memref<9x512x98xf32, #tpu.memory_space<vmem>>, vector<1x512x98xf32>
    %72 = vector.shape_cast %71 : vector<1x512x98xf32> to vector<512x98xf32>
    %cst_60 = arith.constant dense<0.000000e+00> : vector<32x98xf32>
    %73 = tpu.matmul %29, %72, %cst_60 {dimension_numbers = #tpu.dot_dimension_numbers<[1], [0], [0], [1], [0, 0, 1, 1], [], []>} : vector<32x512xf32>, vector<512x98xf32>, vector<32x98xf32> -> vector<32x98xf32>
    %c6_61 = arith.constant 6 : index
    %c0_62 = arith.constant 0 : index
    %c0_63 = arith.constant 0 : index
    %74 = vector.load %arg4[%c6_61, %c0_62, %c0_63] : memref<9x32x32xf32, #tpu.memory_space<vmem>>, vector<1x32x32xf32>
    %75 = vector.shape_cast %74 : vector<1x32x32xf32> to vector<32x32xf32>
    %cst_64 = arith.constant dense<0.000000e+00> : vector<32x98xf32>
    %76 = tpu.matmul %75, %73, %cst_64 {dimension_numbers = #tpu.dot_dimension_numbers<[1], [0], [0], [1], [0, 0, 1, 1], [], []>} : vector<32x32xf32>, vector<32x98xf32>, vector<32x98xf32> -> vector<32x98xf32>
    %77 = arith.addf %70, %76 : vector<32x98xf32>
    %c7 = arith.constant 7 : index
    %c0_65 = arith.constant 0 : index
    %c0_66 = arith.constant 0 : index
    %78 = vector.load %arg3[%c7, %c0_65, %c0_66] : memref<9x512x98xf32, #tpu.memory_space<vmem>>, vector<1x512x98xf32>
    %79 = vector.shape_cast %78 : vector<1x512x98xf32> to vector<512x98xf32>
    %cst_67 = arith.constant dense<0.000000e+00> : vector<32x98xf32>
    %80 = tpu.matmul %29, %79, %cst_67 {dimension_numbers = #tpu.dot_dimension_numbers<[1], [0], [0], [1], [0, 0, 1, 1], [], []>} : vector<32x512xf32>, vector<512x98xf32>, vector<32x98xf32> -> vector<32x98xf32>
    %c7_68 = arith.constant 7 : index
    %c0_69 = arith.constant 0 : index
    %c0_70 = arith.constant 0 : index
    %81 = vector.load %arg4[%c7_68, %c0_69, %c0_70] : memref<9x32x32xf32, #tpu.memory_space<vmem>>, vector<1x32x32xf32>
    %82 = vector.shape_cast %81 : vector<1x32x32xf32> to vector<32x32xf32>
    %cst_71 = arith.constant dense<0.000000e+00> : vector<32x98xf32>
    %83 = tpu.matmul %82, %80, %cst_71 {dimension_numbers = #tpu.dot_dimension_numbers<[1], [0], [0], [1], [0, 0, 1, 1], [], []>} : vector<32x32xf32>, vector<32x98xf32>, vector<32x98xf32> -> vector<32x98xf32>
    %84 = arith.addf %77, %83 : vector<32x98xf32>
    %c8 = arith.constant 8 : index
    %c0_72 = arith.constant 0 : index
    %c0_73 = arith.constant 0 : index
    %85 = vector.load %arg3[%c8, %c0_72, %c0_73] : memref<9x512x98xf32, #tpu.memory_space<vmem>>, vector<1x512x98xf32>
    %86 = vector.shape_cast %85 : vector<1x512x98xf32> to vector<512x98xf32>
    %cst_74 = arith.constant dense<0.000000e+00> : vector<32x98xf32>
    %87 = tpu.matmul %29, %86, %cst_74 {dimension_numbers = #tpu.dot_dimension_numbers<[1], [0], [0], [1], [0, 0, 1, 1], [], []>} : vector<32x512xf32>, vector<512x98xf32>, vector<32x98xf32> -> vector<32x98xf32>
    %c8_75 = arith.constant 8 : index
    %c0_76 = arith.constant 0 : index
    %c0_77 = arith.constant 0 : index
    %88 = vector.load %arg4[%c8_75, %c0_76, %c0_77] : memref<9x32x32xf32, #tpu.memory_space<vmem>>, vector<1x32x32xf32>
    %89 = vector.shape_cast %88 : vector<1x32x32xf32> to vector<32x32xf32>
    %cst_78 = arith.constant dense<0.000000e+00> : vector<32x98xf32>
    %90 = tpu.matmul %89, %87, %cst_78 {dimension_numbers = #tpu.dot_dimension_numbers<[1], [0], [0], [1], [0, 0, 1, 1], [], []>} : vector<32x32xf32>, vector<32x98xf32>, vector<32x98xf32> -> vector<32x98xf32>
    %91 = arith.addf %84, %90 : vector<32x98xf32>
    %cst_79 = arith.constant dense<0.000000e+00> : vector<32xf32>
    %92 = vector.multi_reduction <add>, %91, %cst_79 [1] : vector<32x98xf32> to vector<32xf32>
    %93 = vector.shape_cast %92 : vector<32xf32> to vector<32x1xf32>
    %cst_80 = arith.constant 0.0102040814 : f32
    %94 = vector.broadcast %cst_80 : f32 to vector<32x1xf32>
    %95 = arith.mulf %93, %94 : vector<32x1xf32>
    %96 = arith.mulf %91, %91 : vector<32x98xf32>
    %cst_81 = arith.constant dense<0.000000e+00> : vector<32xf32>
    %97 = vector.multi_reduction <add>, %96, %cst_81 [1] : vector<32x98xf32> to vector<32xf32>
    %98 = vector.shape_cast %97 : vector<32xf32> to vector<32x1xf32>
    %cst_82 = arith.constant 0.0102040814 : f32
    %99 = vector.broadcast %cst_82 : f32 to vector<32x1xf32>
    %100 = arith.mulf %98, %99 : vector<32x1xf32>
    %101 = arith.mulf %95, %95 : vector<32x1xf32>
    %102 = arith.subf %100, %101 : vector<32x1xf32>
    %c1_83 = arith.constant 1 : index
    %c0_84 = arith.constant 0 : index
    %c0_85 = arith.constant 0 : index
    %103 = vector.load %arg9[%c1_83, %c0_84, %c0_85] : memref<4x32x1xf32, #tpu.memory_space<vmem>>, vector<1x32x1xf32>
    %104 = vector.shape_cast %103 : vector<1x32x1xf32> to vector<32x1xf32>
    %cst_86 = arith.constant 9.99999974E-6 : f32
    %105 = vector.broadcast %cst_86 : f32 to vector<32x1xf32>
    %106 = arith.addf %102, %105 : vector<32x1xf32>
    %107 = math.rsqrt %106 : vector<32x1xf32>
    %108 = arith.mulf %104, %107 : vector<32x1xf32>
    %c1_87 = arith.constant 1 : index
    %c0_88 = arith.constant 0 : index
    %c0_89 = arith.constant 0 : index
    %109 = vector.load %arg10[%c1_87, %c0_88, %c0_89] : memref<4x32x1xf32, #tpu.memory_space<vmem>>, vector<1x32x1xf32>
    %110 = vector.shape_cast %109 : vector<1x32x1xf32> to vector<32x1xf32>
    %111 = arith.mulf %95, %108 : vector<32x1xf32>
    %112 = arith.subf %110, %111 : vector<32x1xf32>
    %113 = vector.broadcast %108 : vector<32x1xf32> to vector<32x98xf32>
    %114 = arith.mulf %91, %113 : vector<32x98xf32>
    %115 = vector.broadcast %112 : vector<32x1xf32> to vector<32x98xf32>
    %116 = arith.addf %114, %115 : vector<32x98xf32>
    %cst_90 = arith.constant 0.000000e+00 : f32
    %117 = vector.broadcast %cst_90 : f32 to vector<32x98xf32>
    %118 = arith.maximumf %116, %117 : vector<32x98xf32>
    %c0_91 = arith.constant 0 : index
    %c0_92 = arith.constant 0 : index
    %c0_93 = arith.constant 0 : index
    %119 = vector.load %arg5[%c0_91, %c0_92, %c0_93] : memref<9x98x18xf32, #tpu.memory_space<vmem>>, vector<1x98x18xf32>
    %120 = vector.shape_cast %119 : vector<1x98x18xf32> to vector<98x18xf32>
    %cst_94 = arith.constant dense<0.000000e+00> : vector<32x18xf32>
    %121 = tpu.matmul %118, %120, %cst_94 {dimension_numbers = #tpu.dot_dimension_numbers<[1], [0], [0], [1], [0, 0, 1, 1], [], []>} : vector<32x98xf32>, vector<98x18xf32>, vector<32x18xf32> -> vector<32x18xf32>
    %c0_95 = arith.constant 0 : index
    %c0_96 = arith.constant 0 : index
    %c0_97 = arith.constant 0 : index
    %122 = vector.load %arg6[%c0_95, %c0_96, %c0_97] : memref<9x32x32xf32, #tpu.memory_space<vmem>>, vector<1x32x32xf32>
    %123 = vector.shape_cast %122 : vector<1x32x32xf32> to vector<32x32xf32>
    %cst_98 = arith.constant dense<0.000000e+00> : vector<32x18xf32>
    %124 = tpu.matmul %123, %121, %cst_98 {dimension_numbers = #tpu.dot_dimension_numbers<[1], [0], [0], [1], [0, 0, 1, 1], [], []>} : vector<32x32xf32>, vector<32x18xf32>, vector<32x18xf32> -> vector<32x18xf32>
    %c1_99 = arith.constant 1 : index
    %c0_100 = arith.constant 0 : index
    %c0_101 = arith.constant 0 : index
    %125 = vector.load %arg5[%c1_99, %c0_100, %c0_101] : memref<9x98x18xf32, #tpu.memory_space<vmem>>, vector<1x98x18xf32>
    %126 = vector.shape_cast %125 : vector<1x98x18xf32> to vector<98x18xf32>
    %cst_102 = arith.constant dense<0.000000e+00> : vector<32x18xf32>
    %127 = tpu.matmul %118, %126, %cst_102 {dimension_numbers = #tpu.dot_dimension_numbers<[1], [0], [0], [1], [0, 0, 1, 1], [], []>} : vector<32x98xf32>, vector<98x18xf32>, vector<32x18xf32> -> vector<32x18xf32>
    %c1_103 = arith.constant 1 : index
    %c0_104 = arith.constant 0 : index
    %c0_105 = arith.constant 0 : index
    %128 = vector.load %arg6[%c1_103, %c0_104, %c0_105] : memref<9x32x32xf32, #tpu.memory_space<vmem>>, vector<1x32x32xf32>
    %129 = vector.shape_cast %128 : vector<1x32x32xf32> to vector<32x32xf32>
    %cst_106 = arith.constant dense<0.000000e+00> : vector<32x18xf32>
    %130 = tpu.matmul %129, %127, %cst_106 {dimension_numbers = #tpu.dot_dimension_numbers<[1], [0], [0], [1], [0, 0, 1, 1], [], []>} : vector<32x32xf32>, vector<32x18xf32>, vector<32x18xf32> -> vector<32x18xf32>
    %131 = arith.addf %124, %130 : vector<32x18xf32>
    %c2_107 = arith.constant 2 : index
    %c0_108 = arith.constant 0 : index
    %c0_109 = arith.constant 0 : index
    %132 = vector.load %arg5[%c2_107, %c0_108, %c0_109] : memref<9x98x18xf32, #tpu.memory_space<vmem>>, vector<1x98x18xf32>
    %133 = vector.shape_cast %132 : vector<1x98x18xf32> to vector<98x18xf32>
    %cst_110 = arith.constant dense<0.000000e+00> : vector<32x18xf32>
    %134 = tpu.matmul %118, %133, %cst_110 {dimension_numbers = #tpu.dot_dimension_numbers<[1], [0], [0], [1], [0, 0, 1, 1], [], []>} : vector<32x98xf32>, vector<98x18xf32>, vector<32x18xf32> -> vector<32x18xf32>
    %c2_111 = arith.constant 2 : index
    %c0_112 = arith.constant 0 : index
    %c0_113 = arith.constant 0 : index
    %135 = vector.load %arg6[%c2_111, %c0_112, %c0_113] : memref<9x32x32xf32, #tpu.memory_space<vmem>>, vector<1x32x32xf32>
    %136 = vector.shape_cast %135 : vector<1x32x32xf32> to vector<32x32xf32>
    %cst_114 = arith.constant dense<0.000000e+00> : vector<32x18xf32>
    %137 = tpu.matmul %136, %134, %cst_114 {dimension_numbers = #tpu.dot_dimension_numbers<[1], [0], [0], [1], [0, 0, 1, 1], [], []>} : vector<32x32xf32>, vector<32x18xf32>, vector<32x18xf32> -> vector<32x18xf32>
    %138 = arith.addf %131, %137 : vector<32x18xf32>
    %c3_115 = arith.constant 3 : index
    %c0_116 = arith.constant 0 : index
    %c0_117 = arith.constant 0 : index
    %139 = vector.load %arg5[%c3_115, %c0_116, %c0_117] : memref<9x98x18xf32, #tpu.memory_space<vmem>>, vector<1x98x18xf32>
    %140 = vector.shape_cast %139 : vector<1x98x18xf32> to vector<98x18xf32>
    %cst_118 = arith.constant dense<0.000000e+00> : vector<32x18xf32>
    %141 = tpu.matmul %118, %140, %cst_118 {dimension_numbers = #tpu.dot_dimension_numbers<[1], [0], [0], [1], [0, 0, 1, 1], [], []>} : vector<32x98xf32>, vector<98x18xf32>, vector<32x18xf32> -> vector<32x18xf32>
    %c3_119 = arith.constant 3 : index
    %c0_120 = arith.constant 0 : index
    %c0_121 = arith.constant 0 : index
    %142 = vector.load %arg6[%c3_119, %c0_120, %c0_121] : memref<9x32x32xf32, #tpu.memory_space<vmem>>, vector<1x32x32xf32>
    %143 = vector.shape_cast %142 : vector<1x32x32xf32> to vector<32x32xf32>
    %cst_122 = arith.constant dense<0.000000e+00> : vector<32x18xf32>
    %144 = tpu.matmul %143, %141, %cst_122 {dimension_numbers = #tpu.dot_dimension_numbers<[1], [0], [0], [1], [0, 0, 1, 1], [], []>} : vector<32x32xf32>, vector<32x18xf32>, vector<32x18xf32> -> vector<32x18xf32>
    %145 = arith.addf %138, %144 : vector<32x18xf32>
    %c4_123 = arith.constant 4 : index
    %c0_124 = arith.constant 0 : index
    %c0_125 = arith.constant 0 : index
    %146 = vector.load %arg5[%c4_123, %c0_124, %c0_125] : memref<9x98x18xf32, #tpu.memory_space<vmem>>, vector<1x98x18xf32>
    %147 = vector.shape_cast %146 : vector<1x98x18xf32> to vector<98x18xf32>
    %cst_126 = arith.constant dense<0.000000e+00> : vector<32x18xf32>
    %148 = tpu.matmul %118, %147, %cst_126 {dimension_numbers = #tpu.dot_dimension_numbers<[1], [0], [0], [1], [0, 0, 1, 1], [], []>} : vector<32x98xf32>, vector<98x18xf32>, vector<32x18xf32> -> vector<32x18xf32>
    %c4_127 = arith.constant 4 : index
    %c0_128 = arith.constant 0 : index
    %c0_129 = arith.constant 0 : index
    %149 = vector.load %arg6[%c4_127, %c0_128, %c0_129] : memref<9x32x32xf32, #tpu.memory_space<vmem>>, vector<1x32x32xf32>
    %150 = vector.shape_cast %149 : vector<1x32x32xf32> to vector<32x32xf32>
    %cst_130 = arith.constant dense<0.000000e+00> : vector<32x18xf32>
    %151 = tpu.matmul %150, %148, %cst_130 {dimension_numbers = #tpu.dot_dimension_numbers<[1], [0], [0], [1], [0, 0, 1, 1], [], []>} : vector<32x32xf32>, vector<32x18xf32>, vector<32x18xf32> -> vector<32x18xf32>
    %152 = arith.addf %145, %151 : vector<32x18xf32>
    %c5_131 = arith.constant 5 : index
    %c0_132 = arith.constant 0 : index
    %c0_133 = arith.constant 0 : index
    %153 = vector.load %arg5[%c5_131, %c0_132, %c0_133] : memref<9x98x18xf32, #tpu.memory_space<vmem>>, vector<1x98x18xf32>
    %154 = vector.shape_cast %153 : vector<1x98x18xf32> to vector<98x18xf32>
    %cst_134 = arith.constant dense<0.000000e+00> : vector<32x18xf32>
    %155 = tpu.matmul %118, %154, %cst_134 {dimension_numbers = #tpu.dot_dimension_numbers<[1], [0], [0], [1], [0, 0, 1, 1], [], []>} : vector<32x98xf32>, vector<98x18xf32>, vector<32x18xf32> -> vector<32x18xf32>
    %c5_135 = arith.constant 5 : index
    %c0_136 = arith.constant 0 : index
    %c0_137 = arith.constant 0 : index
    %156 = vector.load %arg6[%c5_135, %c0_136, %c0_137] : memref<9x32x32xf32, #tpu.memory_space<vmem>>, vector<1x32x32xf32>
    %157 = vector.shape_cast %156 : vector<1x32x32xf32> to vector<32x32xf32>
    %cst_138 = arith.constant dense<0.000000e+00> : vector<32x18xf32>
    %158 = tpu.matmul %157, %155, %cst_138 {dimension_numbers = #tpu.dot_dimension_numbers<[1], [0], [0], [1], [0, 0, 1, 1], [], []>} : vector<32x32xf32>, vector<32x18xf32>, vector<32x18xf32> -> vector<32x18xf32>
    %159 = arith.addf %152, %158 : vector<32x18xf32>
    %c6_139 = arith.constant 6 : index
    %c0_140 = arith.constant 0 : index
    %c0_141 = arith.constant 0 : index
    %160 = vector.load %arg5[%c6_139, %c0_140, %c0_141] : memref<9x98x18xf32, #tpu.memory_space<vmem>>, vector<1x98x18xf32>
    %161 = vector.shape_cast %160 : vector<1x98x18xf32> to vector<98x18xf32>
    %cst_142 = arith.constant dense<0.000000e+00> : vector<32x18xf32>
    %162 = tpu.matmul %118, %161, %cst_142 {dimension_numbers = #tpu.dot_dimension_numbers<[1], [0], [0], [1], [0, 0, 1, 1], [], []>} : vector<32x98xf32>, vector<98x18xf32>, vector<32x18xf32> -> vector<32x18xf32>
    %c6_143 = arith.constant 6 : index
    %c0_144 = arith.constant 0 : index
    %c0_145 = arith.constant 0 : index
    %163 = vector.load %arg6[%c6_143, %c0_144, %c0_145] : memref<9x32x32xf32, #tpu.memory_space<vmem>>, vector<1x32x32xf32>
    %164 = vector.shape_cast %163 : vector<1x32x32xf32> to vector<32x32xf32>
    %cst_146 = arith.constant dense<0.000000e+00> : vector<32x18xf32>
    %165 = tpu.matmul %164, %162, %cst_146 {dimension_numbers = #tpu.dot_dimension_numbers<[1], [0], [0], [1], [0, 0, 1, 1], [], []>} : vector<32x32xf32>, vector<32x18xf32>, vector<32x18xf32> -> vector<32x18xf32>
    %166 = arith.addf %159, %165 : vector<32x18xf32>
    %c7_147 = arith.constant 7 : index
    %c0_148 = arith.constant 0 : index
    %c0_149 = arith.constant 0 : index
    %167 = vector.load %arg5[%c7_147, %c0_148, %c0_149] : memref<9x98x18xf32, #tpu.memory_space<vmem>>, vector<1x98x18xf32>
    %168 = vector.shape_cast %167 : vector<1x98x18xf32> to vector<98x18xf32>
    %cst_150 = arith.constant dense<0.000000e+00> : vector<32x18xf32>
    %169 = tpu.matmul %118, %168, %cst_150 {dimension_numbers = #tpu.dot_dimension_numbers<[1], [0], [0], [1], [0, 0, 1, 1], [], []>} : vector<32x98xf32>, vector<98x18xf32>, vector<32x18xf32> -> vector<32x18xf32>
    %c7_151 = arith.constant 7 : index
    %c0_152 = arith.constant 0 : index
    %c0_153 = arith.constant 0 : index
    %170 = vector.load %arg6[%c7_151, %c0_152, %c0_153] : memref<9x32x32xf32, #tpu.memory_space<vmem>>, vector<1x32x32xf32>
    %171 = vector.shape_cast %170 : vector<1x32x32xf32> to vector<32x32xf32>
    %cst_154 = arith.constant dense<0.000000e+00> : vector<32x18xf32>
    %172 = tpu.matmul %171, %169, %cst_154 {dimension_numbers = #tpu.dot_dimension_numbers<[1], [0], [0], [1], [0, 0, 1, 1], [], []>} : vector<32x32xf32>, vector<32x18xf32>, vector<32x18xf32> -> vector<32x18xf32>
    %173 = arith.addf %166, %172 : vector<32x18xf32>
    %c8_155 = arith.constant 8 : index
    %c0_156 = arith.constant 0 : index
    %c0_157 = arith.constant 0 : index
    %174 = vector.load %arg5[%c8_155, %c0_156, %c0_157] : memref<9x98x18xf32, #tpu.memory_space<vmem>>, vector<1x98x18xf32>
    %175 = vector.shape_cast %174 : vector<1x98x18xf32> to vector<98x18xf32>
    %cst_158 = arith.constant dense<0.000000e+00> : vector<32x18xf32>
    %176 = tpu.matmul %118, %175, %cst_158 {dimension_numbers = #tpu.dot_dimension_numbers<[1], [0], [0], [1], [0, 0, 1, 1], [], []>} : vector<32x98xf32>, vector<98x18xf32>, vector<32x18xf32> -> vector<32x18xf32>
    %c8_159 = arith.constant 8 : index
    %c0_160 = arith.constant 0 : index
    %c0_161 = arith.constant 0 : index
    %177 = vector.load %arg6[%c8_159, %c0_160, %c0_161] : memref<9x32x32xf32, #tpu.memory_space<vmem>>, vector<1x32x32xf32>
    %178 = vector.shape_cast %177 : vector<1x32x32xf32> to vector<32x32xf32>
    %cst_162 = arith.constant dense<0.000000e+00> : vector<32x18xf32>
    %179 = tpu.matmul %178, %176, %cst_162 {dimension_numbers = #tpu.dot_dimension_numbers<[1], [0], [0], [1], [0, 0, 1, 1], [], []>} : vector<32x32xf32>, vector<32x18xf32>, vector<32x18xf32> -> vector<32x18xf32>
    %180 = arith.addf %173, %179 : vector<32x18xf32>
    %cst_163 = arith.constant dense<0.000000e+00> : vector<32xf32>
    %181 = vector.multi_reduction <add>, %180, %cst_163 [1] : vector<32x18xf32> to vector<32xf32>
    %182 = vector.shape_cast %181 : vector<32xf32> to vector<32x1xf32>
    %cst_164 = arith.constant 0.055555556 : f32
    %183 = vector.broadcast %cst_164 : f32 to vector<32x1xf32>
    %184 = arith.mulf %182, %183 : vector<32x1xf32>
    %185 = arith.mulf %180, %180 : vector<32x18xf32>
    %cst_165 = arith.constant dense<0.000000e+00> : vector<32xf32>
    %186 = vector.multi_reduction <add>, %185, %cst_165 [1] : vector<32x18xf32> to vector<32xf32>
    %187 = vector.shape_cast %186 : vector<32xf32> to vector<32x1xf32>
    %cst_166 = arith.constant 0.055555556 : f32
    %188 = vector.broadcast %cst_166 : f32 to vector<32x1xf32>
    %189 = arith.mulf %187, %188 : vector<32x1xf32>
    %190 = arith.mulf %184, %184 : vector<32x1xf32>
    %191 = arith.subf %189, %190 : vector<32x1xf32>
    %c2_167 = arith.constant 2 : index
    %c0_168 = arith.constant 0 : index
    %c0_169 = arith.constant 0 : index
    %192 = vector.load %arg9[%c2_167, %c0_168, %c0_169] : memref<4x32x1xf32, #tpu.memory_space<vmem>>, vector<1x32x1xf32>
    %193 = vector.shape_cast %192 : vector<1x32x1xf32> to vector<32x1xf32>
    %cst_170 = arith.constant 9.99999974E-6 : f32
    %194 = vector.broadcast %cst_170 : f32 to vector<32x1xf32>
    %195 = arith.addf %191, %194 : vector<32x1xf32>
    %196 = math.rsqrt %195 : vector<32x1xf32>
    %197 = arith.mulf %193, %196 : vector<32x1xf32>
    %c2_171 = arith.constant 2 : index
    %c0_172 = arith.constant 0 : index
    %c0_173 = arith.constant 0 : index
    %198 = vector.load %arg10[%c2_171, %c0_172, %c0_173] : memref<4x32x1xf32, #tpu.memory_space<vmem>>, vector<1x32x1xf32>
    %199 = vector.shape_cast %198 : vector<1x32x1xf32> to vector<32x1xf32>
    %200 = arith.mulf %184, %197 : vector<32x1xf32>
    %201 = arith.subf %199, %200 : vector<32x1xf32>
    %202 = vector.broadcast %197 : vector<32x1xf32> to vector<32x18xf32>
    %203 = arith.mulf %180, %202 : vector<32x18xf32>
    %204 = vector.broadcast %201 : vector<32x1xf32> to vector<32x18xf32>
    %205 = arith.addf %203, %204 : vector<32x18xf32>
    %cst_174 = arith.constant 0.000000e+00 : f32
    %206 = vector.broadcast %cst_174 : f32 to vector<32x18xf32>
    %207 = arith.maximumf %205, %206 : vector<32x18xf32>
    %c0_175 = arith.constant 0 : index
    %c0_176 = arith.constant 0 : index
    %c0_177 = arith.constant 0 : index
    %208 = vector.load %arg7[%c0_175, %c0_176, %c0_177] : memref<9x18x2xf32, #tpu.memory_space<vmem>>, vector<1x18x2xf32>
    %209 = vector.shape_cast %208 : vector<1x18x2xf32> to vector<18x2xf32>
    %cst_178 = arith.constant dense<0.000000e+00> : vector<32x2xf32>
    %210 = tpu.matmul %207, %209, %cst_178 {dimension_numbers = #tpu.dot_dimension_numbers<[1], [0], [0], [1], [0, 0, 1, 1], [], []>} : vector<32x18xf32>, vector<18x2xf32>, vector<32x2xf32> -> vector<32x2xf32>
    %c0_179 = arith.constant 0 : index
    %c0_180 = arith.constant 0 : index
    %c0_181 = arith.constant 0 : index
    %211 = vector.load %arg8[%c0_179, %c0_180, %c0_181] : memref<9x32x32xf32, #tpu.memory_space<vmem>>, vector<1x32x32xf32>
    %212 = vector.shape_cast %211 : vector<1x32x32xf32> to vector<32x32xf32>
    %cst_182 = arith.constant dense<0.000000e+00> : vector<32x2xf32>
    %213 = tpu.matmul %212, %210, %cst_182 {dimension_numbers = #tpu.dot_dimension_numbers<[1], [0], [0], [1], [0, 0, 1, 1], [], []>} : vector<32x32xf32>, vector<32x2xf32>, vector<32x2xf32> -> vector<32x2xf32>
    %c1_183 = arith.constant 1 : index
    %c0_184 = arith.constant 0 : index
    %c0_185 = arith.constant 0 : index
    %214 = vector.load %arg7[%c1_183, %c0_184, %c0_185] : memref<9x18x2xf32, #tpu.memory_space<vmem>>, vector<1x18x2xf32>
    %215 = vector.shape_cast %214 : vector<1x18x2xf32> to vector<18x2xf32>
    %cst_186 = arith.constant dense<0.000000e+00> : vector<32x2xf32>
    %216 = tpu.matmul %207, %215, %cst_186 {dimension_numbers = #tpu.dot_dimension_numbers<[1], [0], [0], [1], [0, 0, 1, 1], [], []>} : vector<32x18xf32>, vector<18x2xf32>, vector<32x2xf32> -> vector<32x2xf32>
    %c1_187 = arith.constant 1 : index
    %c0_188 = arith.constant 0 : index
    %c0_189 = arith.constant 0 : index
    %217 = vector.load %arg8[%c1_187, %c0_188, %c0_189] : memref<9x32x32xf32, #tpu.memory_space<vmem>>, vector<1x32x32xf32>
    %218 = vector.shape_cast %217 : vector<1x32x32xf32> to vector<32x32xf32>
    %cst_190 = arith.constant dense<0.000000e+00> : vector<32x2xf32>
    %219 = tpu.matmul %218, %216, %cst_190 {dimension_numbers = #tpu.dot_dimension_numbers<[1], [0], [0], [1], [0, 0, 1, 1], [], []>} : vector<32x32xf32>, vector<32x2xf32>, vector<32x2xf32> -> vector<32x2xf32>
    %220 = arith.addf %213, %219 : vector<32x2xf32>
    %c2_191 = arith.constant 2 : index
    %c0_192 = arith.constant 0 : index
    %c0_193 = arith.constant 0 : index
    %221 = vector.load %arg7[%c2_191, %c0_192, %c0_193] : memref<9x18x2xf32, #tpu.memory_space<vmem>>, vector<1x18x2xf32>
    %222 = vector.shape_cast %221 : vector<1x18x2xf32> to vector<18x2xf32>
    %cst_194 = arith.constant dense<0.000000e+00> : vector<32x2xf32>
    %223 = tpu.matmul %207, %222, %cst_194 {dimension_numbers = #tpu.dot_dimension_numbers<[1], [0], [0], [1], [0, 0, 1, 1], [], []>} : vector<32x18xf32>, vector<18x2xf32>, vector<32x2xf32> -> vector<32x2xf32>
    %c2_195 = arith.constant 2 : index
    %c0_196 = arith.constant 0 : index
    %c0_197 = arith.constant 0 : index
    %224 = vector.load %arg8[%c2_195, %c0_196, %c0_197] : memref<9x32x32xf32, #tpu.memory_space<vmem>>, vector<1x32x32xf32>
    %225 = vector.shape_cast %224 : vector<1x32x32xf32> to vector<32x32xf32>
    %cst_198 = arith.constant dense<0.000000e+00> : vector<32x2xf32>
    %226 = tpu.matmul %225, %223, %cst_198 {dimension_numbers = #tpu.dot_dimension_numbers<[1], [0], [0], [1], [0, 0, 1, 1], [], []>} : vector<32x32xf32>, vector<32x2xf32>, vector<32x2xf32> -> vector<32x2xf32>
    %227 = arith.addf %220, %226 : vector<32x2xf32>
    %c3_199 = arith.constant 3 : index
    %c0_200 = arith.constant 0 : index
    %c0_201 = arith.constant 0 : index
    %228 = vector.load %arg7[%c3_199, %c0_200, %c0_201] : memref<9x18x2xf32, #tpu.memory_space<vmem>>, vector<1x18x2xf32>
    %229 = vector.shape_cast %228 : vector<1x18x2xf32> to vector<18x2xf32>
    %cst_202 = arith.constant dense<0.000000e+00> : vector<32x2xf32>
    %230 = tpu.matmul %207, %229, %cst_202 {dimension_numbers = #tpu.dot_dimension_numbers<[1], [0], [0], [1], [0, 0, 1, 1], [], []>} : vector<32x18xf32>, vector<18x2xf32>, vector<32x2xf32> -> vector<32x2xf32>
    %c3_203 = arith.constant 3 : index
    %c0_204 = arith.constant 0 : index
    %c0_205 = arith.constant 0 : index
    %231 = vector.load %arg8[%c3_203, %c0_204, %c0_205] : memref<9x32x32xf32, #tpu.memory_space<vmem>>, vector<1x32x32xf32>
    %232 = vector.shape_cast %231 : vector<1x32x32xf32> to vector<32x32xf32>
    %cst_206 = arith.constant dense<0.000000e+00> : vector<32x2xf32>
    %233 = tpu.matmul %232, %230, %cst_206 {dimension_numbers = #tpu.dot_dimension_numbers<[1], [0], [0], [1], [0, 0, 1, 1], [], []>} : vector<32x32xf32>, vector<32x2xf32>, vector<32x2xf32> -> vector<32x2xf32>
    %234 = arith.addf %227, %233 : vector<32x2xf32>
    %c4_207 = arith.constant 4 : index
    %c0_208 = arith.constant 0 : index
    %c0_209 = arith.constant 0 : index
    %235 = vector.load %arg7[%c4_207, %c0_208, %c0_209] : memref<9x18x2xf32, #tpu.memory_space<vmem>>, vector<1x18x2xf32>
    %236 = vector.shape_cast %235 : vector<1x18x2xf32> to vector<18x2xf32>
    %cst_210 = arith.constant dense<0.000000e+00> : vector<32x2xf32>
    %237 = tpu.matmul %207, %236, %cst_210 {dimension_numbers = #tpu.dot_dimension_numbers<[1], [0], [0], [1], [0, 0, 1, 1], [], []>} : vector<32x18xf32>, vector<18x2xf32>, vector<32x2xf32> -> vector<32x2xf32>
    %c4_211 = arith.constant 4 : index
    %c0_212 = arith.constant 0 : index
    %c0_213 = arith.constant 0 : index
    %238 = vector.load %arg8[%c4_211, %c0_212, %c0_213] : memref<9x32x32xf32, #tpu.memory_space<vmem>>, vector<1x32x32xf32>
    %239 = vector.shape_cast %238 : vector<1x32x32xf32> to vector<32x32xf32>
    %cst_214 = arith.constant dense<0.000000e+00> : vector<32x2xf32>
    %240 = tpu.matmul %239, %237, %cst_214 {dimension_numbers = #tpu.dot_dimension_numbers<[1], [0], [0], [1], [0, 0, 1, 1], [], []>} : vector<32x32xf32>, vector<32x2xf32>, vector<32x2xf32> -> vector<32x2xf32>
    %241 = arith.addf %234, %240 : vector<32x2xf32>
    %c5_215 = arith.constant 5 : index
    %c0_216 = arith.constant 0 : index
    %c0_217 = arith.constant 0 : index
    %242 = vector.load %arg7[%c5_215, %c0_216, %c0_217] : memref<9x18x2xf32, #tpu.memory_space<vmem>>, vector<1x18x2xf32>
    %243 = vector.shape_cast %242 : vector<1x18x2xf32> to vector<18x2xf32>
    %cst_218 = arith.constant dense<0.000000e+00> : vector<32x2xf32>
    %244 = tpu.matmul %207, %243, %cst_218 {dimension_numbers = #tpu.dot_dimension_numbers<[1], [0], [0], [1], [0, 0, 1, 1], [], []>} : vector<32x18xf32>, vector<18x2xf32>, vector<32x2xf32> -> vector<32x2xf32>
    %c5_219 = arith.constant 5 : index
    %c0_220 = arith.constant 0 : index
    %c0_221 = arith.constant 0 : index
    %245 = vector.load %arg8[%c5_219, %c0_220, %c0_221] : memref<9x32x32xf32, #tpu.memory_space<vmem>>, vector<1x32x32xf32>
    %246 = vector.shape_cast %245 : vector<1x32x32xf32> to vector<32x32xf32>
    %cst_222 = arith.constant dense<0.000000e+00> : vector<32x2xf32>
    %247 = tpu.matmul %246, %244, %cst_222 {dimension_numbers = #tpu.dot_dimension_numbers<[1], [0], [0], [1], [0, 0, 1, 1], [], []>} : vector<32x32xf32>, vector<32x2xf32>, vector<32x2xf32> -> vector<32x2xf32>
    %248 = arith.addf %241, %247 : vector<32x2xf32>
    %c6_223 = arith.constant 6 : index
    %c0_224 = arith.constant 0 : index
    %c0_225 = arith.constant 0 : index
    %249 = vector.load %arg7[%c6_223, %c0_224, %c0_225] : memref<9x18x2xf32, #tpu.memory_space<vmem>>, vector<1x18x2xf32>
    %250 = vector.shape_cast %249 : vector<1x18x2xf32> to vector<18x2xf32>
    %cst_226 = arith.constant dense<0.000000e+00> : vector<32x2xf32>
    %251 = tpu.matmul %207, %250, %cst_226 {dimension_numbers = #tpu.dot_dimension_numbers<[1], [0], [0], [1], [0, 0, 1, 1], [], []>} : vector<32x18xf32>, vector<18x2xf32>, vector<32x2xf32> -> vector<32x2xf32>
    %c6_227 = arith.constant 6 : index
    %c0_228 = arith.constant 0 : index
    %c0_229 = arith.constant 0 : index
    %252 = vector.load %arg8[%c6_227, %c0_228, %c0_229] : memref<9x32x32xf32, #tpu.memory_space<vmem>>, vector<1x32x32xf32>
    %253 = vector.shape_cast %252 : vector<1x32x32xf32> to vector<32x32xf32>
    %cst_230 = arith.constant dense<0.000000e+00> : vector<32x2xf32>
    %254 = tpu.matmul %253, %251, %cst_230 {dimension_numbers = #tpu.dot_dimension_numbers<[1], [0], [0], [1], [0, 0, 1, 1], [], []>} : vector<32x32xf32>, vector<32x2xf32>, vector<32x2xf32> -> vector<32x2xf32>
    %255 = arith.addf %248, %254 : vector<32x2xf32>
    %c7_231 = arith.constant 7 : index
    %c0_232 = arith.constant 0 : index
    %c0_233 = arith.constant 0 : index
    %256 = vector.load %arg7[%c7_231, %c0_232, %c0_233] : memref<9x18x2xf32, #tpu.memory_space<vmem>>, vector<1x18x2xf32>
    %257 = vector.shape_cast %256 : vector<1x18x2xf32> to vector<18x2xf32>
    %cst_234 = arith.constant dense<0.000000e+00> : vector<32x2xf32>
    %258 = tpu.matmul %207, %257, %cst_234 {dimension_numbers = #tpu.dot_dimension_numbers<[1], [0], [0], [1], [0, 0, 1, 1], [], []>} : vector<32x18xf32>, vector<18x2xf32>, vector<32x2xf32> -> vector<32x2xf32>
    %c7_235 = arith.constant 7 : index
    %c0_236 = arith.constant 0 : index
    %c0_237 = arith.constant 0 : index
    %259 = vector.load %arg8[%c7_235, %c0_236, %c0_237] : memref<9x32x32xf32, #tpu.memory_space<vmem>>, vector<1x32x32xf32>
    %260 = vector.shape_cast %259 : vector<1x32x32xf32> to vector<32x32xf32>
    %cst_238 = arith.constant dense<0.000000e+00> : vector<32x2xf32>
    %261 = tpu.matmul %260, %258, %cst_238 {dimension_numbers = #tpu.dot_dimension_numbers<[1], [0], [0], [1], [0, 0, 1, 1], [], []>} : vector<32x32xf32>, vector<32x2xf32>, vector<32x2xf32> -> vector<32x2xf32>
    %262 = arith.addf %255, %261 : vector<32x2xf32>
    %c8_239 = arith.constant 8 : index
    %c0_240 = arith.constant 0 : index
    %c0_241 = arith.constant 0 : index
    %263 = vector.load %arg7[%c8_239, %c0_240, %c0_241] : memref<9x18x2xf32, #tpu.memory_space<vmem>>, vector<1x18x2xf32>
    %264 = vector.shape_cast %263 : vector<1x18x2xf32> to vector<18x2xf32>
    %cst_242 = arith.constant dense<0.000000e+00> : vector<32x2xf32>
    %265 = tpu.matmul %207, %264, %cst_242 {dimension_numbers = #tpu.dot_dimension_numbers<[1], [0], [0], [1], [0, 0, 1, 1], [], []>} : vector<32x18xf32>, vector<18x2xf32>, vector<32x2xf32> -> vector<32x2xf32>
    %c8_243 = arith.constant 8 : index
    %c0_244 = arith.constant 0 : index
    %c0_245 = arith.constant 0 : index
    %266 = vector.load %arg8[%c8_243, %c0_244, %c0_245] : memref<9x32x32xf32, #tpu.memory_space<vmem>>, vector<1x32x32xf32>
    %267 = vector.shape_cast %266 : vector<1x32x32xf32> to vector<32x32xf32>
    %cst_246 = arith.constant dense<0.000000e+00> : vector<32x2xf32>
    %268 = tpu.matmul %267, %265, %cst_246 {dimension_numbers = #tpu.dot_dimension_numbers<[1], [0], [0], [1], [0, 0, 1, 1], [], []>} : vector<32x32xf32>, vector<32x2xf32>, vector<32x2xf32> -> vector<32x2xf32>
    %269 = arith.addf %262, %268 : vector<32x2xf32>
    %cst_247 = arith.constant dense<0.000000e+00> : vector<32xf32>
    %270 = vector.multi_reduction <add>, %269, %cst_247 [1] : vector<32x2xf32> to vector<32xf32>
    %271 = vector.shape_cast %270 : vector<32xf32> to vector<32x1xf32>
    %cst_248 = arith.constant 5.000000e-01 : f32
    %272 = vector.broadcast %cst_248 : f32 to vector<32x1xf32>
    %273 = arith.mulf %271, %272 : vector<32x1xf32>
    %274 = arith.mulf %269, %269 : vector<32x2xf32>
    %cst_249 = arith.constant dense<0.000000e+00> : vector<32xf32>
    %275 = vector.multi_reduction <add>, %274, %cst_249 [1] : vector<32x2xf32> to vector<32xf32>
    %276 = vector.shape_cast %275 : vector<32xf32> to vector<32x1xf32>
    %cst_250 = arith.constant 5.000000e-01 : f32
    %277 = vector.broadcast %cst_250 : f32 to vector<32x1xf32>
    %278 = arith.mulf %276, %277 : vector<32x1xf32>
    %279 = arith.mulf %273, %273 : vector<32x1xf32>
    %280 = arith.subf %278, %279 : vector<32x1xf32>
    %c3_251 = arith.constant 3 : index
    %c0_252 = arith.constant 0 : index
    %c0_253 = arith.constant 0 : index
    %281 = vector.load %arg9[%c3_251, %c0_252, %c0_253] : memref<4x32x1xf32, #tpu.memory_space<vmem>>, vector<1x32x1xf32>
    %282 = vector.shape_cast %281 : vector<1x32x1xf32> to vector<32x1xf32>
    %cst_254 = arith.constant 9.99999974E-6 : f32
    %283 = vector.broadcast %cst_254 : f32 to vector<32x1xf32>
    %284 = arith.addf %280, %283 : vector<32x1xf32>
    %285 = math.rsqrt %284 : vector<32x1xf32>
    %286 = arith.mulf %282, %285 : vector<32x1xf32>
    %c3_255 = arith.constant 3 : index
    %c0_256 = arith.constant 0 : index
    %c0_257 = arith.constant 0 : index
    %287 = vector.load %arg10[%c3_255, %c0_256, %c0_257] : memref<4x32x1xf32, #tpu.memory_space<vmem>>, vector<1x32x1xf32>
    %288 = vector.shape_cast %287 : vector<1x32x1xf32> to vector<32x1xf32>
    %289 = arith.mulf %273, %286 : vector<32x1xf32>
    %290 = arith.subf %288, %289 : vector<32x1xf32>
    %291 = vector.broadcast %286 : vector<32x1xf32> to vector<32x2xf32>
    %292 = arith.mulf %269, %291 : vector<32x2xf32>
    %293 = vector.broadcast %290 : vector<32x1xf32> to vector<32x2xf32>
    %294 = arith.addf %292, %293 : vector<32x2xf32>
    %cst_258 = arith.constant 0.000000e+00 : f32
    %295 = vector.broadcast %cst_258 : f32 to vector<32x2xf32>
    %296 = arith.maximumf %294, %295 : vector<32x2xf32>
    %c0_259 = arith.constant 0 : index
    %c0_260 = arith.constant 0 : index
    %297 = vector.load %arg11[%c0_259, %c0_260] : memref<32x2xf32, #tpu.memory_space<vmem>>, vector<32x2xf32>
    tpu.vector_store %arg11[%c0_259, %c0_260], %296 {strides = array<i32>} : memref<32x2xf32, #tpu.memory_space<vmem>>, vector<32x2xf32>,
    return
  }
  func.func @transform_0(%arg0: i32) -> (i32, i32) {
    %c0_i32 = arith.constant 0 : i32
    %c0_i32_0 = arith.constant 0 : i32
    %c0_i32_1 = arith.constant 0 : i32
    return %c0_i32, %c0_i32_0 : i32, i32
  }
  func.func @transform_1(%arg0: i32) -> (i32, i32) {
    %c0_i32 = arith.constant 0 : i32
    %c0_i32_0 = arith.constant 0 : i32
    %c0_i32_1 = arith.constant 0 : i32
    return %c0_i32, %c0_i32_0 : i32, i32
  }
  func.func @transform_2(%arg0: i32) -> (i32, i32, i32) {
    %c0_i32 = arith.constant 0 : i32
    %c0_i32_0 = arith.constant 0 : i32
    %c0_i32_1 = arith.constant 0 : i32
    %c0_i32_2 = arith.constant 0 : i32
    return %c0_i32, %c0_i32_0, %c0_i32_1 : i32, i32, i32
  }
  func.func @transform_3(%arg0: i32) -> (i32, i32, i32) {
    %c0_i32 = arith.constant 0 : i32
    %c0_i32_0 = arith.constant 0 : i32
    %c0_i32_1 = arith.constant 0 : i32
    %c0_i32_2 = arith.constant 0 : i32
    return %c0_i32, %c0_i32_0, %c0_i32_1 : i32, i32, i32
  }
  func.func @transform_4(%arg0: i32) -> (i32, i32, i32) {
    %c0_i32 = arith.constant 0 : i32
    %c0_i32_0 = arith.constant 0 : i32
    %c0_i32_1 = arith.constant 0 : i32
    %c0_i32_2 = arith.constant 0 : i32
    return %c0_i32, %c0_i32_0, %c0_i32_1 : i32, i32, i32
  }
  func.func @transform_5(%arg0: i32) -> (i32, i32, i32) {
    %c0_i32 = arith.constant 0 : i32
    %c0_i32_0 = arith.constant 0 : i32
    %c0_i32_1 = arith.constant 0 : i32
    %c0_i32_2 = arith.constant 0 : i32
    return %c0_i32, %c0_i32_0, %c0_i32_1 : i32, i32, i32
  }
  func.func @transform_6(%arg0: i32) -> (i32, i32, i32) {
    %c0_i32 = arith.constant 0 : i32
    %c0_i32_0 = arith.constant 0 : i32
    %c0_i32_1 = arith.constant 0 : i32
    %c0_i32_2 = arith.constant 0 : i32
    return %c0_i32, %c0_i32_0, %c0_i32_1 : i32, i32, i32
  }
  func.func @transform_7(%arg0: i32) -> (i32, i32, i32) {
    %c0_i32 = arith.constant 0 : i32
    %c0_i32_0 = arith.constant 0 : i32
    %c0_i32_1 = arith.constant 0 : i32
    %c0_i32_2 = arith.constant 0 : i32
    return %c0_i32, %c0_i32_0, %c0_i32_1 : i32, i32, i32
  }
  func.func @transform_8(%arg0: i32) -> (i32, i32, i32) {
    %c0_i32 = arith.constant 0 : i32
    %c0_i32_0 = arith.constant 0 : i32
    %c0_i32_1 = arith.constant 0 : i32
    %c0_i32_2 = arith.constant 0 : i32
    return %c0_i32, %c0_i32_0, %c0_i32_1 : i32, i32, i32
  }
  func.func @transform_9(%arg0: i32) -> (i32, i32, i32) {
    %c0_i32 = arith.constant 0 : i32
    %c0_i32_0 = arith.constant 0 : i32
    %c0_i32_1 = arith.constant 0 : i32
    %c0_i32_2 = arith.constant 0 : i32
    return %c0_i32, %c0_i32_0, %c0_i32_1 : i32, i32, i32
  }
  func.func @transform_10(%arg0: i32) -> (i32, i32) {
    %c0_i32 = arith.constant 0 : i32
    %c0_i32_0 = arith.constant 0 : i32
    %c0_i32_1 = arith.constant 0 : i32
    return %c0_i32, %c0_i32_0 : i32, i32
  }
}

</mosaic_0001>

<llo_original>
// kernel: tpu_custom_call.1
$region0: #{tpu_custom_call.1}
  #allocation0 [shape = 'u32[]', space=smem, size = 0x4, offset = 0x4, fixed_abs, tag = 'smem constant byte address 0x4 - core index']
  #allocation1 [shape = 'u32[144,128]{1,0:T(1,128)}', space=vmem, size = 0x12000, scoped, tag = 'internal scratch']
  %s0 = inlined_call_operand.vmem [shape: f32[144,512], index: 0, kind: input, shape index: {}]
  %s1 = inlined_call_operand.vmem [shape: f32[32,144], index: 1, kind: input, shape index: {}]
  %s2 = inlined_call_operand.vmem [shape: f32[9,512,98], index: 2, kind: input, shape index: {}]
  %s3 = inlined_call_operand.vmem [shape: f32[9,32,32], index: 3, kind: input, shape index: {}]
  %s4 = inlined_call_operand.vmem [shape: f32[9,98,18], index: 4, kind: input, shape index: {}]
  %s5 = inlined_call_operand.vmem [shape: f32[9,32,32], index: 5, kind: input, shape index: {}]
  %s6 = inlined_call_operand.vmem [shape: f32[9,18,2], index: 6, kind: input, shape index: {}]
  %s7 = inlined_call_operand.vmem [shape: f32[9,32,32], index: 7, kind: input, shape index: {}]
  %s8 = inlined_call_operand.vmem [shape: f32[4,32,1], index: 8, kind: input, shape index: {}]
  %s9 = inlined_call_operand.vmem [shape: f32[4,32,1], index: 9, kind: input, shape index: {}]
  %s10 = inlined_call_operand.vmem [shape: f32[32,2], index: 10, kind: output, shape index: {}]
  %s11 = sld [smem:[#allocation0]]
  $region50: #{tpu_custom_call.1} parent=0
    _
  %s13 = ssub.s32 1, %s11
  %s14 = scalar_select 0, %s13, %s11
  // Predicated region
  $region2: #{tpu_custom_call.1} parent=0 // pred_check
    _
  $region3: #{tpu_custom_call.1} parent=0 // pred_check_branch
    %16 = sbr.rel (0) target = $region5
  $region4: #{tpu_custom_call.1} parent=0 // pred_region
    _
  $region5: #{tpu_custom_call.1} parent=0 // pred_fallthru
    _
  // Predicated region
  $region6: #{tpu_custom_call.1} parent=0 // pred_check
    _
  $region7: #{tpu_custom_call.1} parent=0 // pred_check_branch
    %18 = sbr.rel (0) target = $region9
  $region8: #{tpu_custom_call.1} parent=0 // pred_region
    _
  $region9: #{tpu_custom_call.1} parent=0 // pred_fallthru
    _
  // Predicated region
  $region10: #{tpu_custom_call.1} parent=0 // pred_check
    _
  $region11: #{tpu_custom_call.1} parent=0 // pred_check_branch
    %20 = sbr.rel (0) target = $region13
  $region12: #{tpu_custom_call.1} parent=0 // pred_region
    _
  $region13: #{tpu_custom_call.1} parent=0 // pred_fallthru
    _
  // Predicated region
  $region14: #{tpu_custom_call.1} parent=0 // pred_check
    _
  $region15: #{tpu_custom_call.1} parent=0 // pred_check_branch
    %22 = sbr.rel (0) target = $region17
  $region16: #{tpu_custom_call.1} parent=0 // pred_region
    _
  $region17: #{tpu_custom_call.1} parent=0 // pred_fallthru
    _
  // Predicated region
  $region18: #{tpu_custom_call.1} parent=0 // pred_check
    _
  $region19: #{tpu_custom_call.1} parent=0 // pred_check_branch
    %24 = sbr.rel (0) target = $region21
  $region20: #{tpu_custom_call.1} parent=0 // pred_region
    _
  $region21: #{tpu_custom_call.1} parent=0 // pred_fallthru
    _
  // Predicated region
  $region22: #{tpu_custom_call.1} parent=0 // pred_check
    _
  $region23: #{tpu_custom_call.1} parent=0 // pred_check_branch
    %26 = sbr.rel (0) target = $region25
  $region24: #{tpu_custom_call.1} parent=0 // pred_region
    _
  $region25: #{tpu_custom_call.1} parent=0 // pred_fallthru
    _
  // Predicated region
  $region26: #{tpu_custom_call.1} parent=0 // pred_check
    _
  $region27: #{tpu_custom_call.1} parent=0 // pred_check_branch
    %28 = sbr.rel (0) target = $region29
  $region28: #{tpu_custom_call.1} parent=0 // pred_region
    _
  $region29: #{tpu_custom_call.1} parent=0 // pred_fallthru
    _
  // Predicated region
  $region30: #{tpu_custom_call.1} parent=0 // pred_check
    _
  $region31: #{tpu_custom_call.1} parent=0 // pred_check_branch
    %30 = sbr.rel (0) target = $region33
  $region32: #{tpu_custom_call.1} parent=0 // pred_region
    _
  $region33: #{tpu_custom_call.1} parent=0 // pred_fallthru
    _
  // Predicated region
  $region34: #{tpu_custom_call.1} parent=0 // pred_check
    _
  $region35: #{tpu_custom_call.1} parent=0 // pred_check_branch
    %32 = sbr.rel (0) target = $region37
  $region36: #{tpu_custom_call.1} parent=0 // pred_region
    _
  $region37: #{tpu_custom_call.1} parent=0 // pred_fallthru
    _
  // Predicated region
  $region38: #{tpu_custom_call.1} parent=0 // pred_check
    _
  $region39: #{tpu_custom_call.1} parent=0 // pred_check_branch
    %34 = sbr.rel (0) target = $region41
  $region40: #{tpu_custom_call.1} parent=0 // pred_region
    _
  $region41: #{tpu_custom_call.1} parent=0 // pred_fallthru
    _
  %v35 = vld [vmem:[%s1] sm:$0xff]
  %v36 = vld [vmem:[%s1 + $0x8] sm:$0xff]
  %v37 = vld [vmem:[%s1 + $0x10] sm:$0xff]
  %v38 = vld [vmem:[%s1 + $0x18] sm:$0xff]
  %v39 = vld [vmem:[%s1 + $0x20] sm:$0xff]
  %v40 = vld [vmem:[%s1 + $0x28] sm:$0xff]
  %v41 = vld [vmem:[%s1 + $0x30] sm:$0xff]
  %v42 = vld [vmem:[%s1 + $0x38] sm:$0xff]
  %v43 = vld [vmem:[%s0] sm:$0xff]
  %v44 = vld [vmem:[%s0 + $0x8] sm:$0xff]
  %v45 = vld [vmem:[%s0 + $0x10] sm:$0xff]
  %v46 = vld [vmem:[%s0 + $0x18] sm:$0xff]
  %v47 = vld [vmem:[%s0 + $0x20] sm:$0xff]
  %v48 = vld [vmem:[%s0 + $0x28] sm:$0xff]
  %v49 = vld [vmem:[%s0 + $0x30] sm:$0xff]
  %v50 = vld [vmem:[%s0 + $0x38] sm:$0xff]
  %v51 = vld [vmem:[%s0 + $0x40] sm:$0xff]
  %v52 = vld [vmem:[%s0 + $0x48] sm:$0xff]
  %v53 = vld [vmem:[%s0 + $0x50] sm:$0xff]
  %v54 = vld [vmem:[%s0 + $0x58] sm:$0xff]
  %v55 = vld [vmem:[%s0 + $0x60] sm:$0xff]
  %v56 = vld [vmem:[%s0 + $0x68] sm:$0xff]
  %v57 = vld [vmem:[%s0 + $0x70] sm:$0xff]
  %v58 = vld [vmem:[%s0 + $0x78] sm:$0xff]
  %v59 = vld [vmem:[%s0 + $0x80] sm:$0xff]
  %v60 = vld [vmem:[%s0 + $0x88] sm:$0xff]
  %v61 = vld [vmem:[%s0 + $0x90] sm:$0xff]
  %v62 = vld [vmem:[%s0 + $0x98] sm:$0xff]
  %v63 = vld [vmem:[%s0 + $0xa0] sm:$0xff]
  %v64 = vld [vmem:[%s0 + $0xa8] sm:$0xff]
  %v65 = vld [vmem:[%s0 + $0xb0] sm:$0xff]
  %v66 = vld [vmem:[%s0 + $0xb8] sm:$0xff]
  %v67 = vld [vmem:[%s0 + $0xc0] sm:$0xff]
  %v68 = vld [vmem:[%s0 + $0xc8] sm:$0xff]
  %v69 = vld [vmem:[%s0 + $0xd0] sm:$0xff]
  %v70 = vld [vmem:[%s0 + $0xd8] sm:$0xff]
  %v71 = vld [vmem:[%s0 + $0xe0] sm:$0xff]
  %v72 = vld [vmem:[%s0 + $0xe8] sm:$0xff]
  %v73 = vld [vmem:[%s0 + $0xf0] sm:$0xff]
  %v74 = vld [vmem:[%s0 + $0xf8] sm:$0xff]
  %v75 = vld [vmem:[%s0 + $0x100] sm:$0xff]
  %v76 = vld [vmem:[%s0 + $0x108] sm:$0xff]
  %v77 = vld [vmem:[%s0 + $0x110] sm:$0xff]
  %v78 = vld [vmem:[%s0 + $0x118] sm:$0xff]
  %v79 = vld [vmem:[%s0 + $0x120] sm:$0xff]
  %v80 = vld [vmem:[%s0 + $0x128] sm:$0xff]
  %v81 = vld [vmem:[%s0 + $0x130] sm:$0xff]
  %v82 = vld [vmem:[%s0 + $0x138] sm:$0xff]
  %v83 = vld [vmem:[%s0 + $0x140] sm:$0xff]
  %v84 = vld [vmem:[%s0 + $0x148] sm:$0xff]
  %v85 = vld [vmem:[%s0 + $0x150] sm:$0xff]
  %v86 = vld [vmem:[%s0 + $0x158] sm:$0xff]
  %v87 = vld [vmem:[%s0 + $0x160] sm:$0xff]
  %v88 = vld [vmem:[%s0 + $0x168] sm:$0xff]
  %v89 = vld [vmem:[%s0 + $0x170] sm:$0xff]
  %v90 = vld [vmem:[%s0 + $0x178] sm:$0xff]
  %v91 = vld [vmem:[%s0 + $0x180] sm:$0xff]
  %v92 = vld [vmem:[%s0 + $0x188] sm:$0xff]
  %v93 = vld [vmem:[%s0 + $0x190] sm:$0xff]
  %v94 = vld [vmem:[%s0 + $0x198] sm:$0xff]
  %v95 = vld [vmem:[%s0 + $0x1a0] sm:$0xff]
  %v96 = vld [vmem:[%s0 + $0x1a8] sm:$0xff]
  %v97 = vld [vmem:[%s0 + $0x1b0] sm:$0xff]
  %v98 = vld [vmem:[%s0 + $0x1b8] sm:$0xff]
  %v99 = vld [vmem:[%s0 + $0x1c0] sm:$0xff]
  %v100 = vld [vmem:[%s0 + $0x1c8] sm:$0xff]
  %v101 = vld [vmem:[%s0 + $0x1d0] sm:$0xff]
  %v102 = vld [vmem:[%s0 + $0x1d8] sm:$0xff]
  %v103 = vld [vmem:[%s0 + $0x1e0] sm:$0xff]
  %v104 = vld [vmem:[%s0 + $0x1e8] sm:$0xff]
  %v105 = vld [vmem:[%s0 + $0x1f0] sm:$0xff]
  %v106 = vld [vmem:[%s0 + $0x1f8] sm:$0xff]
  %v107 = vld [vmem:[%s0 + $0x200] sm:$0xff]
  %v108 = vld [vmem:[%s0 + $0x208] sm:$0xff]
  %v109 = vld [vmem:[%s0 + $0x210] sm:$0xff]
  %v110 = vld [vmem:[%s0 + $0x218] sm:$0xff]
  %v111 = vld [vmem:[%s0 + $0x220] sm:$0xff]
  %v112 = vld [vmem:[%s0 + $0x228] sm:$0xff]
  %v113 = vld [vmem:[%s0 + $0x230] sm:$0xff]
  %v114 = vld [vmem:[%s0 + $0x238] sm:$0xff]
  %vm115 = vcmask 130048
  %v117 = vsel %vm115, %v36, 0
  %v120 = vsel %vm115, %v38, 0
  %v123 = vsel %vm115, %v40, 0
  %v126 = vsel %vm115, %v42, 0
  %128 = vmatprep.subr.mxu0 %v44
  %129 = vmatpush1.msra.mxu0 %v43
  %130 = vmatprep.subr.mxu0 %v48
  %131 = vmatpush1.msra.mxu0 %v47
  %132 = vmatprep.subr.mxu0 %v52
  %133 = vmatpush1.msra.mxu0 %v51
  %134 = vmatprep.subr.mxu0 %v56
  %135 = vmatpush1.msra.mxu0 %v55
  %136 = vmatprep.subr.mxu0 %v60
  %137 = vmatpush1.msra.mxu0 %v59
  %138 = vmatprep.subr.mxu0 %v64
  %139 = vmatpush1.msra.mxu0 %v63
  %140 = vmatprep.subr.mxu0 %v68
  %141 = vmatpush1.msra.mxu0 %v67
  %142 = vmatprep.subr.mxu0 %v72
  %143 = vmatpush1.msra.mxu0 %v71
  %144 = vmatprep.subr.mxu0 %v76
  %145 = vmatpush1.msra.mxu0 %v75
  %146 = vmatprep.subr.mxu0 %v80
  %147 = vmatpush1.msra.mxu0 %v79
  %148 = vmatprep.subr.mxu0 %v84
  %149 = vmatpush1.msra.mxu0 %v83
  %150 = vmatprep.subr.mxu0 %v88
  %151 = vmatpush1.msra.mxu0 %v87
  %152 = vmatprep.subr.mxu0 %v92
  %153 = vmatpush1.msra.mxu0 %v91
  %154 = vmatprep.subr.mxu0 %v96
  %155 = vmatpush1.msra.mxu0 %v95
  %156 = vmatprep.subr.mxu0 %v100
  %157 = vmatpush1.msra.mxu0 %v99
  %158 = vmatprep.subr.mxu0 %v104
  %159 = vmatpush1.msra.mxu0 %v103
  %160 = vmatprep.subr.mxu0 %v108
  %161 = vmatpush1.msra.mxu0 %v107
  %162 = vmatprep.subr.mxu0 %v112
  %163 = vmatpush1.msra.mxu0 %v111
  %164 = vmatprep.subr.mxu0 0.0
  %165 = vmatpush1.msra.mxu0 0.0
  %166 = vmatprep.subr.mxu0 0.0
  %167 = vmatpush1.msra.mxu0 0.0
  %168 = vmatprep.subr.mxu0 0.0
  %169 = vmatpush1.msra.mxu0 0.0
  %170 = vmatprep.subr.mxu0 0.0
  %171 = vmatpush1.msra.mxu0 0.0
  %172 = vmatprep.subr.mxu0 0.0
  %173 = vmatpush1.msra.mxu0 0.0
  %174 = vmatprep.subr.mxu0 0.0
  %175 = vmatpush1.msra.mxu0 0.0
  %176 = vmatprep.subr.mxu0 0.0
  %177 = vmatpush1.msra.mxu0 0.0
  %178 = vmatprep.subr.mxu0 0.0
  %179 = vmatpush1.msra.mxu0 0.0
  %180 = vmatprep.subr.mxu0 0.0
  %181 = vmatpush1.msra.mxu0 0.0
  %182 = vmatprep.subr.mxu0 0.0
  %183 = vmatpush1.msra.mxu0 0.0
  %184 = vmatprep.subr.mxu0 0.0
  %185 = vmatpush1.msra.mxu0 0.0
  %186 = vmatprep.subr.mxu0 0.0
  %187 = vmatpush1.msra.mxu0 0.0
  %188 = vmatprep.subr.mxu0 0.0
  %189 = vmatpush1.msra.mxu0 0.0
  %190 = vmatprep.subr.mxu0 0.0
  %191 = vmatpush1.msra.mxu0 0.0
  %192 = vmatprep.mubr.f32.mxu0 %v117
  %193 = vmatmul.mubr.f32.gmra.mrb[0].mxu0 %v35
  %v194 = vpop.f32.mrb[0].mxu0
  %v195 = vadd.f32 0.0, %v194
  %v196 = vpop.f32.mrb[0].mxu0
  %v197 = vadd.f32 0.0, %v196
  %198 = vmatprep.mubr.f32.mxu0 %v120
  %199 = vmatmul.mubr.f32.gmra.mrb[0].mxu0 %v37
  %v200 = vpop.f32.mrb[0].mxu0
  %v201 = vadd.f32 0.0, %v200
  %v202 = vpop.f32.mrb[0].mxu0
  %v203 = vadd.f32 0.0, %v202
  %204 = vmatprep.mubr.f32.mxu0 %v123
  %205 = vmatmul.mubr.f32.gmra.mrb[0].mxu0 %v39
  %v206 = vpop.f32.mrb[0].mxu0
  %v207 = vadd.f32 0.0, %v206
  %v208 = vpop.f32.mrb[0].mxu0
  %v209 = vadd.f32 0.0, %v208
  %210 = vmatprep.mubr.f32.mxu0 %v126
  %211 = vmatmul.mubr.f32.gmra.mrb[0].mxu0 %v41
  %v212 = vpop.f32.mrb[0].mxu0
  %v213 = vadd.f32 0.0, %v212
  %v214 = vpop.f32.mrb[0].mxu0
  %v215 = vadd.f32 0.0, %v214
  %216 = vdwg.mxu0
  %217 = vmatprep.subr.mxu0 %v46
  %218 = vmatpush1.msra.mxu0 %v45
  %219 = vmatprep.subr.mxu0 %v50
  %220 = vmatpush1.msra.mxu0 %v49
  %221 = vmatprep.subr.mxu0 %v54
  %222 = vmatpush1.msra.mxu0 %v53
  %223 = vmatprep.subr.mxu0 %v58
  %224 = vmatpush1.msra.mxu0 %v57
  %225 = vmatprep.subr.mxu0 %v62
  %226 = vmatpush1.msra.mxu0 %v61
  %227 = vmatprep.subr.mxu0 %v66
  %228 = vmatpush1.msra.mxu0 %v65
  %229 = vmatprep.subr.mxu0 %v70
  %230 = vmatpush1.msra.mxu0 %v69
  %231 = vmatprep.subr.mxu0 %v74
  %232 = vmatpush1.msra.mxu0 %v73
  %233 = vmatprep.subr.mxu0 %v78
  %234 = vmatpush1.msra.mxu0 %v77
  %235 = vmatprep.subr.mxu0 %v82
  %236 = vmatpush1.msra.mxu0 %v81
  %237 = vmatprep.subr.mxu0 %v86
  %238 = vmatpush1.msra.mxu0 %v85
  %239 = vmatprep.subr.mxu0 %v90
  %240 = vmatpush1.msra.mxu0 %v89
  %241 = vmatprep.subr.mxu0 %v94
  %242 = vmatpush1.msra.mxu0 %v93
  %243 = vmatprep.subr.mxu0 %v98
  %244 = vmatpush1.msra.mxu0 %v97
  %245 = vmatprep.subr.mxu0 %v102
  %246 = vmatpush1.msra.mxu0 %v101
  %247 = vmatprep.subr.mxu0 %v106
  %248 = vmatpush1.msra.mxu0 %v105
  %249 = vmatprep.subr.mxu0 %v110
  %250 = vmatpush1.msra.mxu0 %v109
  %251 = vmatprep.subr.mxu0 %v114
  %252 = vmatpush1.msra.mxu0 %v113
  %253 = vmatprep.subr.mxu0 0.0
  %254 = vmatpush1.msra.mxu0 0.0
  %255 = vmatprep.subr.mxu0 0.0
  %256 = vmatpush1.msra.mxu0 0.0
  %257 = vmatprep.subr.mxu0 0.0
  %258 = vmatpush1.msra.mxu0 0.0
  %259 = vmatprep.subr.mxu0 0.0
  %260 = vmatpush1.msra.mxu0 0.0
  %261 = vmatprep.subr.mxu0 0.0
  %262 = vmatpush1.msra.mxu0 0.0
  %263 = vmatprep.subr.mxu0 0.0
  %264 = vmatpush1.msra.mxu0 0.0
  %265 = vmatprep.subr.mxu0 0.0
  %266 = vmatpush1.msra.mxu0 0.0
  %267 = vmatprep.subr.mxu0 0.0
  %268 = vmatpush1.msra.mxu0 0.0
  %269 = vmatprep.subr.mxu0 0.0
  %270 = vmatpush1.msra.mxu0 0.0
  %271 = vmatprep.subr.mxu0 0.0
  %272 = vmatpush1.msra.mxu0 0.0
  %273 = vmatprep.subr.mxu0 0.0
  %274 = vmatpush1.msra.mxu0 0.0
  %275 = vmatprep.subr.mxu0 0.0
  %276 = vmatpush1.msra.mxu0 0.0
  %277 = vmatprep.subr.mxu0 0.0
  %278 = vmatpush1.msra.mxu0 0.0
  %279 = vmatprep.subr.mxu0 0.0
  %280 = vmatpush1.msra.mxu0 0.0
  %281 = vmatprep.mubr.f32.mxu0 %v117
  %282 = vmatmul.mubr.f32.gmra.mrb[0].mxu0 %v35
  %v283 = vpop.f32.mrb[0].mxu0
  %v284 = vadd.f32 0.0, %v283
  %v285 = vpop.f32.mrb[0].mxu0
  %v286 = vadd.f32 0.0, %v285
  %287 = vmatprep.mubr.f32.mxu0 %v120
  %288 = vmatmul.mubr.f32.gmra.mrb[0].mxu0 %v37
  %v289 = vpop.f32.mrb[0].mxu0
  %v290 = vadd.f32 0.0, %v289
  %v291 = vpop.f32.mrb[0].mxu0
  %v292 = vadd.f32 0.0, %v291
  %293 = vmatprep.mubr.f32.mxu0 %v123
  %294 = vmatmul.mubr.f32.gmra.mrb[0].mxu0 %v39
  %v295 = vpop.f32.mrb[0].mxu0
  %v296 = vadd.f32 0.0, %v295
  %v297 = vpop.f32.mrb[0].mxu0
  %v298 = vadd.f32 0.0, %v297
  %299 = vmatprep.mubr.f32.mxu0 %v126
  %300 = vmatmul.mubr.f32.gmra.mrb[0].mxu0 %v41
  %v301 = vpop.f32.mrb[0].mxu0
  %v302 = vadd.f32 0.0, %v301
  %v303 = vpop.f32.mrb[0].mxu0
  %v304 = vadd.f32 0.0, %v303
  %305 = vdwg.mxu0
  %v306 = vadd.f32 %v195, %v197
  %v307 = vadd.f32 %v306, %v284
  %v308 = vadd.f32 %v307, %v286
  %309 = vadd.xlane.f32.xlu0 %v308
  %v310 = vpop.xlane.xlu0 %309
  %v311 = vadd.f32 %v201, %v203
  %v312 = vadd.f32 %v311, %v290
  %v313 = vadd.f32 %v312, %v292
  %314 = vadd.xlane.f32.xlu0 %v313
  %v315 = vpop.xlane.xlu0 %314
  %v316 = vadd.f32 %v207, %v209
  %v317 = vadd.f32 %v316, %v296
  %v318 = vadd.f32 %v317, %v298
  %319 = vadd.xlane.f32.xlu0 %v318
  %v320 = vpop.xlane.xlu0 %319
  %v321 = vadd.f32 %v213, %v215
  %v322 = vadd.f32 %v321, %v302
  %v323 = vadd.f32 %v322, %v304
  %324 = vadd.xlane.f32.xlu0 %v323
  %v325 = vpop.xlane.xlu0 %324
  %v326 = vmul.f32 %v310, 0.001953125
  %v327 = vmul.f32 %v315, 0.001953125
  %v328 = vmul.f32 %v320, 0.001953125
  %v329 = vmul.f32 %v325, 0.001953125
  %v330 = vmul.f32 %v195, %v195
  %v331 = vmul.f32 %v197, %v197
  %v332 = vmul.f32 %v284, %v284
  %v333 = vmul.f32 %v286, %v286
  %v334 = vmul.f32 %v201, %v201
  %v335 = vmul.f32 %v203, %v203
  %v336 = vmul.f32 %v290, %v290
  %v337 = vmul.f32 %v292, %v292
  %v338 = vmul.f32 %v207, %v207
  %v339 = vmul.f32 %v209, %v209
  %v340 = vmul.f32 %v296, %v296
  %v341 = vmul.f32 %v298, %v298
  %v342 = vmul.f32 %v213, %v213
  %v343 = vmul.f32 %v215, %v215
  %v344 = vmul.f32 %v302, %v302
  %v345 = vmul.f32 %v304, %v304
  %v346 = vadd.f32 %v330, %v331
  %v347 = vadd.f32 %v346, %v332
  %v348 = vadd.f32 %v347, %v333
  %349 = vadd.xlane.f32.xlu0 %v348
  %v350 = vpop.xlane.xlu0 %349
  %v351 = vadd.f32 %v334, %v335
  %v352 = vadd.f32 %v351, %v336
  %v353 = vadd.f32 %v352, %v337
  %354 = vadd.xlane.f32.xlu0 %v353
  %v355 = vpop.xlane.xlu0 %354
  %v356 = vadd.f32 %v338, %v339
  %v357 = vadd.f32 %v356, %v340
  %v358 = vadd.f32 %v357, %v341
  %359 = vadd.xlane.f32.xlu0 %v358
  %v360 = vpop.xlane.xlu0 %359
  %v361 = vadd.f32 %v342, %v343
  %v362 = vadd.f32 %v361, %v344
  %v363 = vadd.f32 %v362, %v345
  %364 = vadd.xlane.f32.xlu0 %v363
  %v365 = vpop.xlane.xlu0 %364
  %v366 = vmul.f32 %v350, 0.001953125
  %v367 = vmul.f32 %v355, 0.001953125
  %v368 = vmul.f32 %v360, 0.001953125
  %v369 = vmul.f32 %v365, 0.001953125
  %v370 = vmul.f32 %v326, %v326
  %v371 = vmul.f32 %v327, %v327
  %v372 = vmul.f32 %v328, %v328
  %v373 = vmul.f32 %v329, %v329
  %v374 = vsub.f32 %v366, %v370
  %v375 = vsub.f32 %v367, %v371
  %v376 = vsub.f32 %v368, %v372
  %v377 = vsub.f32 %v369, %v373
  %v378 = vld [vmem:[%s8] sm:$0xff]
  %v379 = vld [vmem:[%s8 + $0x8] sm:$0xff]
  %v380 = vld [vmem:[%s8 + $0x10] sm:$0xff]
  %v381 = vld [vmem:[%s8 + $0x18] sm:$0xff]
  %v382 = vadd.f32 %v374, 1e-05
  %v383 = vadd.f32 %v375, 1e-05
  %v384 = vadd.f32 %v376, 1e-05
  %v385 = vadd.f32 %v377, 1e-05
  %v386 = vrsqrt.pop %v382
  %v387 = vrsqrt.pop %v383
  %v388 = vrsqrt.pop %v384
  %v389 = vrsqrt.pop %v385
  %v390 = vmul.f32 %v378, %v386
  %v391 = vmul.f32 %v379, %v387
  %v392 = vmul.f32 %v380, %v388
  %v393 = vmul.f32 %v381, %v389
  %v394 = vld [vmem:[%s9] sm:$0xff]
  %v395 = vld [vmem:[%s9 + $0x8] sm:$0xff]
  %v396 = vld [vmem:[%s9 + $0x10] sm:$0xff]
  %v397 = vld [vmem:[%s9 + $0x18] sm:$0xff]
  %v398 = vmul.f32 %v326, %v390
  %v399 = vmul.f32 %v327, %v391
  %v400 = vmul.f32 %v328, %v392
  %v401 = vmul.f32 %v329, %v393
  %v402 = vsub.f32 %v394, %v398
  %v403 = vsub.f32 %v395, %v399
  %v404 = vsub.f32 %v396, %v400
  %v405 = vsub.f32 %v397, %v401
  %407 = vset.pattern.permute.xlu0 0
  %408 = vperm.xlu0 %407, %v390
  %v409 = vpop.permute.xlu0 %408
  %412 = vset.pattern.permute.xlu0 0
  %413 = vperm.xlu0 %412, %v391
  %v414 = vpop.permute.xlu0 %413
  %417 = vset.pattern.permute.xlu0 0
  %418 = vperm.xlu0 %417, %v392
  %v419 = vpop.permute.xlu0 %418
  %422 = vset.pattern.permute.xlu0 0
  %423 = vperm.xlu0 %422, %v393
  %v424 = vpop.permute.xlu0 %423
  %v426 = vmul.f32 %v195, %v409
  %v427 = vmul.f32 %v197, %v409
  %v428 = vmul.f32 %v284, %v409
  %v429 = vmul.f32 %v286, %v409
  %v430 = vmul.f32 %v201, %v414
  %v431 = vmul.f32 %v203, %v414
  %v432 = vmul.f32 %v290, %v414
  %v433 = vmul.f32 %v292, %v414
  %v434 = vmul.f32 %v207, %v419
  %v435 = vmul.f32 %v209, %v419
  %v436 = vmul.f32 %v296, %v419
  %v437 = vmul.f32 %v298, %v419
  %v438 = vmul.f32 %v213, %v424
  %v439 = vmul.f32 %v215, %v424
  %v440 = vmul.f32 %v302, %v424
  %v441 = vmul.f32 %v304, %v424
  %443 = vset.pattern.permute.xlu0 0
  %444 = vperm.xlu0 %443, %v402
  %v445 = vpop.permute.xlu0 %444
  %448 = vset.pattern.permute.xlu0 0
  %449 = vperm.xlu0 %448, %v403
  %v450 = vpop.permute.xlu0 %449
  %453 = vset.pattern.permute.xlu0 0
  %454 = vperm.xlu0 %453, %v404
  %v455 = vpop.permute.xlu0 %454
  %458 = vset.pattern.permute.xlu0 0
  %459 = vperm.xlu0 %458, %v405
  %v460 = vpop.permute.xlu0 %459
  %v462 = vadd.f32 %v426, %v445
  %v463 = vadd.f32 %v427, %v445
  %v464 = vadd.f32 %v428, %v445
  %v465 = vadd.f32 %v429, %v445
  %v466 = vadd.f32 %v430, %v450
  %v467 = vadd.f32 %v431, %v450
  %v468 = vadd.f32 %v432, %v450
  %v469 = vadd.f32 %v433, %v450
  %v470 = vadd.f32 %v434, %v455
  %v471 = vadd.f32 %v435, %v455
  %v472 = vadd.f32 %v436, %v455
  %v473 = vadd.f32 %v437, %v455
  %v474 = vadd.f32 %v438, %v460
  %v475 = vadd.f32 %v439, %v460
  %v476 = vadd.f32 %v440, %v460
  %v477 = vadd.f32 %v441, %v460
  %v478 = vmax.f32 %v462, 0.0
  %v479 = vmax.f32 %v463, 0.0
  %v480 = vmax.f32 %v464, 0.0
  %v481 = vmax.f32 %v465, 0.0
  %v482 = vmax.f32 %v466, 0.0
  %v483 = vmax.f32 %v467, 0.0
  %v484 = vmax.f32 %v468, 0.0
  %v485 = vmax.f32 %v469, 0.0
  %v486 = vmax.f32 %v470, 0.0
  %v487 = vmax.f32 %v471, 0.0
  %v488 = vmax.f32 %v472, 0.0
  %v489 = vmax.f32 %v473, 0.0
  %v490 = vmax.f32 %v474, 0.0
  %v491 = vmax.f32 %v475, 0.0
  %v492 = vmax.f32 %v476, 0.0
  %v493 = vmax.f32 %v477, 0.0
  %v494 = vld [vmem:[%s2] sm:$0xff]
  %v495 = vld [vmem:[%s2 + $0x8] sm:$0xff]
  %v496 = vld [vmem:[%s2 + $0x10] sm:$0xff]
  %v497 = vld [vmem:[%s2 + $0x18] sm:$0xff]
  %v498 = vld [vmem:[%s2 + $0x20] sm:$0xff]
  %v499 = vld [vmem:[%s2 + $0x28] sm:$0xff]
  %v500 = vld [vmem:[%s2 + $0x30] sm:$0xff]
  %v501 = vld [vmem:[%s2 + $0x38] sm:$0xff]
  %v502 = vld [vmem:[%s2 + $0x40] sm:$0xff]
  %v503 = vld [vmem:[%s2 + $0x48] sm:$0xff]
  %v504 = vld [vmem:[%s2 + $0x50] sm:$0xff]
  %v505 = vld [vmem:[%s2 + $0x58] sm:$0xff]
  %v506 = vld [vmem:[%s2 + $0x60] sm:$0xff]
  %v507 = vld [vmem:[%s2 + $0x68] sm:$0xff]
  %v508 = vld [vmem:[%s2 + $0x70] sm:$0xff]
  %v509 = vld [vmem:[%s2 + $0x78] sm:$0xff]
  %v510 = vld [vmem:[%s2 + $0x80] sm:$0xff]
  %v511 = vld [vmem:[%s2 + $0x88] sm:$0xff]
  %v512 = vld [vmem:[%s2 + $0x90] sm:$0xff]
  %v513 = vld [vmem:[%s2 + $0x98] sm:$0xff]
  %v514 = vld [vmem:[%s2 + $0xa0] sm:$0xff]
  %v515 = vld [vmem:[%s2 + $0xa8] sm:$0xff]
  %v516 = vld [vmem:[%s2 + $0xb0] sm:$0xff]
  %v517 = vld [vmem:[%s2 + $0xb8] sm:$0xff]
  %v518 = vld [vmem:[%s2 + $0xc0] sm:$0xff]
  %v519 = vld [vmem:[%s2 + $0xc8] sm:$0xff]
  %v520 = vld [vmem:[%s2 + $0xd0] sm:$0xff]
  %v521 = vld [vmem:[%s2 + $0xd8] sm:$0xff]
  %v522 = vld [vmem:[%s2 + $0xe0] sm:$0xff]
  %v523 = vld [vmem:[%s2 + $0xe8] sm:$0xff]
  %v524 = vld [vmem:[%s2 + $0xf0] sm:$0xff]
  %v525 = vld [vmem:[%s2 + $0xf8] sm:$0xff]
  %v526 = vld [vmem:[%s2 + $0x100] sm:$0xff]
  %v527 = vld [vmem:[%s2 + $0x108] sm:$0xff]
  %v528 = vld [vmem:[%s2 + $0x110] sm:$0xff]
  %v529 = vld [vmem:[%s2 + $0x118] sm:$0xff]
  %v530 = vld [vmem:[%s2 + $0x120] sm:$0xff]
  %v531 = vld [vmem:[%s2 + $0x128] sm:$0xff]
  %v532 = vld [vmem:[%s2 + $0x130] sm:$0xff]
  %v533 = vld [vmem:[%s2 + $0x138] sm:$0xff]
  %v534 = vld [vmem:[%s2 + $0x140] sm:$0xff]
  %v535 = vld [vmem:[%s2 + $0x148] sm:$0xff]
  %v536 = vld [vmem:[%s2 + $0x150] sm:$0xff]
  %v537 = vld [vmem:[%s2 + $0x158] sm:$0xff]
  %v538 = vld [vmem:[%s2 + $0x160] sm:$0xff]
  %v539 = vld [vmem:[%s2 + $0x168] sm:$0xff]
  %v540 = vld [vmem:[%s2 + $0x170] sm:$0xff]
  %v541 = vld [vmem:[%s2 + $0x178] sm:$0xff]
  %v542 = vld [vmem:[%s2 + $0x180] sm:$0xff]
  %v543 = vld [vmem:[%s2 + $0x188] sm:$0xff]
  %v544 = vld [vmem:[%s2 + $0x190] sm:$0xff]
  %v545 = vld [vmem:[%s2 + $0x198] sm:$0xff]
  %v546 = vld [vmem:[%s2 + $0x1a0] sm:$0xff]
  %v547 = vld [vmem:[%s2 + $0x1a8] sm:$0xff]
  %v548 = vld [vmem:[%s2 + $0x1b0] sm:$0xff]
  %v549 = vld [vmem:[%s2 + $0x1b8] sm:$0xff]
  %v550 = vld [vmem:[%s2 + $0x1c0] sm:$0xff]
  %v551 = vld [vmem:[%s2 + $0x1c8] sm:$0xff]
  %v552 = vld [vmem:[%s2 + $0x1d0] sm:$0xff]
  %v553 = vld [vmem:[%s2 + $0x1d8] sm:$0xff]
  %v554 = vld [vmem:[%s2 + $0x1e0] sm:$0xff]
  %v555 = vld [vmem:[%s2 + $0x1e8] sm:$0xff]
  %v556 = vld [vmem:[%s2 + $0x1f0] sm:$0xff]
  %v557 = vld [vmem:[%s2 + $0x1f8] sm:$0xff]
  %558 = vmatprep.subr.mxu0 0.0
  %559 = vmatpush1.msra.mxu0 %v494
  %560 = vmatprep.subr.mxu0 0.0
  %561 = vmatpush1.msra.mxu0 %v495
  %562 = vmatprep.subr.mxu0 0.0
  %563 = vmatpush1.msra.mxu0 %v496
  %564 = vmatprep.subr.mxu0 0.0
  %565 = vmatpush1.msra.mxu0 %v497
  %566 = vmatprep.subr.mxu0 0.0
  %567 = vmatpush1.msra.mxu0 %v498
  %568 = vmatprep.subr.mxu0 0.0
  %569 = vmatpush1.msra.mxu0 %v499
  %570 = vmatprep.subr.mxu0 0.0
  %571 = vmatpush1.msra.mxu0 %v500
  %572 = vmatprep.subr.mxu0 0.0
  %573 = vmatpush1.msra.mxu0 %v501
  %574 = vmatprep.subr.mxu0 0.0
  %575 = vmatpush1.msra.mxu0 %v502
  %576 = vmatprep.subr.mxu0 0.0
  %577 = vmatpush1.msra.mxu0 %v503
  %578 = vmatprep.subr.mxu0 0.0
  %579 = vmatpush1.msra.mxu0 %v504
  %580 = vmatprep.subr.mxu0 0.0
  %581 = vmatpush1.msra.mxu0 %v505
  %582 = vmatprep.subr.mxu0 0.0
  %583 = vmatpush1.msra.mxu0 %v506
  %584 = vmatprep.subr.mxu0 0.0
  %585 = vmatpush1.msra.mxu0 %v507
  %586 = vmatprep.subr.mxu0 0.0
  %587 = vmatpush1.msra.mxu0 %v508
  %588 = vmatprep.subr.mxu0 0.0
  %589 = vmatpush1.msra.mxu0 %v509
  %590 = vmatprep.subr.mxu0 0.0
  %591 = vmatpush1.msra.mxu0 %v510
  %592 = vmatprep.subr.mxu0 0.0
  %593 = vmatpush1.msra.mxu0 %v511
  %594 = vmatprep.subr.mxu0 0.0
  %595 = vmatpush1.msra.mxu0 %v512
  %596 = vmatprep.subr.mxu0 0.0
  %597 = vmatpush1.msra.mxu0 %v513
  %598 = vmatprep.subr.mxu0 0.0
  %599 = vmatpush1.msra.mxu0 %v514
  %600 = vmatprep.subr.mxu0 0.0
  %601 = vmatpush1.msra.mxu0 %v515
  %602 = vmatprep.subr.mxu0 0.0
  %603 = vmatpush1.msra.mxu0 %v516
  %604 = vmatprep.subr.mxu0 0.0
  %605 = vmatpush1.msra.mxu0 %v517
  %606 = vmatprep.subr.mxu0 0.0
  %607 = vmatpush1.msra.mxu0 %v518
  %608 = vmatprep.subr.mxu0 0.0
  %609 = vmatpush1.msra.mxu0 %v519
  %610 = vmatprep.subr.mxu0 0.0
  %611 = vmatpush1.msra.mxu0 %v520
  %612 = vmatprep.subr.mxu0 0.0
  %613 = vmatpush1.msra.mxu0 %v521
  %614 = vmatprep.subr.mxu0 0.0
  %615 = vmatpush1.msra.mxu0 %v522
  %616 = vmatprep.subr.mxu0 0.0
  %617 = vmatpush1.msra.mxu0 %v523
  %618 = vmatprep.subr.mxu0 0.0
  %619 = vmatpush1.msra.mxu0 %v524
  %620 = vmatprep.subr.mxu0 0.0
  %621 = vmatpush1.msra.mxu0 %v525
  %622 = vmatprep.mubr.f32.mxu0 %v479
  %623 = vmatmul.mubr.f32.gmra.mrb[0].mxu0 %v478
  %v624 = vpop.f32.mrb[0].mxu0
  %v625 = vadd.f32 0.0, %v624
  %v626 = vpop.f32.mrb[0].mxu0
  %627 = vmatprep.mubr.f32.mxu0 %v483
  %628 = vmatmul.mubr.f32.gmra.mrb[0].mxu0 %v482
  %v629 = vpop.f32.mrb[0].mxu0
  %v630 = vadd.f32 0.0, %v629
  %v631 = vpop.f32.mrb[0].mxu0
  %632 = vmatprep.mubr.f32.mxu0 %v487
  %633 = vmatmul.mubr.f32.gmra.mrb[0].mxu0 %v486
  %v634 = vpop.f32.mrb[0].mxu0
  %v635 = vadd.f32 0.0, %v634
  %v636 = vpop.f32.mrb[0].mxu0
  %637 = vmatprep.mubr.f32.mxu0 %v491
  %638 = vmatmul.mubr.f32.gmra.mrb[0].mxu0 %v490
  %v639 = vpop.f32.mrb[0].mxu0
  %v640 = vadd.f32 0.0, %v639
  %v641 = vpop.f32.mrb[0].mxu0
  %642 = vdwg.mxu0
  %643 = vmatprep.subr.mxu0 0.0
  %644 = vmatpush1.msra.mxu0 %v526
  %645 = vmatprep.subr.mxu0 0.0
  %646 = vmatpush1.msra.mxu0 %v527
  %647 = vmatprep.subr.mxu0 0.0
  %648 = vmatpush1.msra.mxu0 %v528
  %649 = vmatprep.subr.mxu0 0.0
  %650 = vmatpush1.msra.mxu0 %v529
  %651 = vmatprep.subr.mxu0 0.0
  %652 = vmatpush1.msra.mxu0 %v530
  %653 = vmatprep.subr.mxu0 0.0
  %654 = vmatpush1.msra.mxu0 %v531
  %655 = vmatprep.subr.mxu0 0.0
  %656 = vmatpush1.msra.mxu0 %v532
  %657 = vmatprep.subr.mxu0 0.0
  %658 = vmatpush1.msra.mxu0 %v533
  %659 = vmatprep.subr.mxu0 0.0
  %660 = vmatpush1.msra.mxu0 %v534
  %661 = vmatprep.subr.mxu0 0.0
  %662 = vmatpush1.msra.mxu0 %v535
  %663 = vmatprep.subr.mxu0 0.0
  %664 = vmatpush1.msra.mxu0 %v536
  %665 = vmatprep.subr.mxu0 0.0
  %666 = vmatpush1.msra.mxu0 %v537
  %667 = vmatprep.subr.mxu0 0.0
  %668 = vmatpush1.msra.mxu0 %v538
  %669 = vmatprep.subr.mxu0 0.0
  %670 = vmatpush1.msra.mxu0 %v539
  %671 = vmatprep.subr.mxu0 0.0
  %672 = vmatpush1.msra.mxu0 %v540
  %673 = vmatprep.subr.mxu0 0.0
  %674 = vmatpush1.msra.mxu0 %v541
  %675 = vmatprep.subr.mxu0 0.0
  %676 = vmatpush1.msra.mxu0 %v542
  %677 = vmatprep.subr.mxu0 0.0
  %678 = vmatpush1.msra.mxu0 %v543
  %679 = vmatprep.subr.mxu0 0.0
  %680 = vmatpush1.msra.mxu0 %v544
  %681 = vmatprep.subr.mxu0 0.0
  %682 = vmatpush1.msra.mxu0 %v545
  %683 = vmatprep.subr.mxu0 0.0
  %684 = vmatpush1.msra.mxu0 %v546
  %685 = vmatprep.subr.mxu0 0.0
  %686 = vmatpush1.msra.mxu0 %v547
  %687 = vmatprep.subr.mxu0 0.0
  %688 = vmatpush1.msra.mxu0 %v548
  %689 = vmatprep.subr.mxu0 0.0
  %690 = vmatpush1.msra.mxu0 %v549
  %691 = vmatprep.subr.mxu0 0.0
  %692 = vmatpush1.msra.mxu0 %v550
  %693 = vmatprep.subr.mxu0 0.0
  %694 = vmatpush1.msra.mxu0 %v551
  %695 = vmatprep.subr.mxu0 0.0
  %696 = vmatpush1.msra.mxu0 %v552
  %697 = vmatprep.subr.mxu0 0.0
  %698 = vmatpush1.msra.mxu0 %v553
  %699 = vmatprep.subr.mxu0 0.0
  %700 = vmatpush1.msra.mxu0 %v554
  %701 = vmatprep.subr.mxu0 0.0
  %702 = vmatpush1.msra.mxu0 %v555
  %703 = vmatprep.subr.mxu0 0.0
  %704 = vmatpush1.msra.mxu0 %v556
  %705 = vmatprep.subr.mxu0 0.0
  %706 = vmatpush1.msra.mxu0 %v557
  %707 = vmatprep.mubr.f32.mxu0 %v481
  %708 = vmatmul.mubr.f32.gmra.mrb[0].mxu0 %v480
  %v709 = vpop.f32.mrb[0].mxu0
  %v710 = vadd.f32 %v625, %v709
  %v711 = vpop.f32.mrb[0].mxu0
  %712 = vmatprep.mubr.f32.mxu0 %v485
  %713 = vmatmul.mubr.f32.gmra.mrb[0].mxu0 %v484
  %v714 = vpop.f32.mrb[0].mxu0
  %v715 = vadd.f32 %v630, %v714
  %v716 = vpop.f32.mrb[0].mxu0
  %717 = vmatprep.mubr.f32.mxu0 %v489
  %718 = vmatmul.mubr.f32.gmra.mrb[0].mxu0 %v488
  %v719 = vpop.f32.mrb[0].mxu0
  %v720 = vadd.f32 %v635, %v719
  %v721 = vpop.f32.mrb[0].mxu0
  %722 = vmatprep.mubr.f32.mxu0 %v493
  %723 = vmatmul.mubr.f32.gmra.mrb[0].mxu0 %v492
  %v724 = vpop.f32.mrb[0].mxu0
  %v725 = vadd.f32 %v640, %v724
  %v726 = vpop.f32.mrb[0].mxu0
  %727 = vdwg.mxu0
  %v728 = vld [vmem:[%s3] sm:$0xff]
  %v729 = vld [vmem:[%s3 + $0x8] sm:$0xff]
  %v730 = vld [vmem:[%s3 + $0x10] sm:$0xff]
  %v731 = vld [vmem:[%s3 + $0x18] sm:$0xff]
  %s732 = scalar_lea.vmem %s2, 512
  %v733 = vld [vmem:[%s732] sm:$0xff]
  %v734 = vld [vmem:[%s732 + $0x8] sm:$0xff]
  %v735 = vld [vmem:[%s732 + $0x10] sm:$0xff]
  %v736 = vld [vmem:[%s732 + $0x18] sm:$0xff]
  %v737 = vld [vmem:[%s732 + $0x20] sm:$0xff]
  %v738 = vld [vmem:[%s732 + $0x28] sm:$0xff]
  %v739 = vld [vmem:[%s732 + $0x30] sm:$0xff]
  %v740 = vld [vmem:[%s732 + $0x38] sm:$0xff]
  %v741 = vld [vmem:[%s732 + $0x40] sm:$0xff]
  %v742 = vld [vmem:[%s732 + $0x48] sm:$0xff]
  %v743 = vld [vmem:[%s732 + $0x50] sm:$0xff]
  %v744 = vld [vmem:[%s732 + $0x58] sm:$0xff]
  %v745 = vld [vmem:[%s732 + $0x60] sm:$0xff]
  %v746 = vld [vmem:[%s732 + $0x68] sm:$0xff]
  %v747 = vld [vmem:[%s732 + $0x70] sm:$0xff]
  %v748 = vld [vmem:[%s732 + $0x78] sm:$0xff]
  %v749 = vld [vmem:[%s732 + $0x80] sm:$0xff]
  %v750 = vld [vmem:[%s732 + $0x88] sm:$0xff]
  %v751 = vld [vmem:[%s732 + $0x90] sm:$0xff]
  %v752 = vld [vmem:[%s732 + $0x98] sm:$0xff]
  %v753 = vld [vmem:[%s732 + $0xa0] sm:$0xff]
  %v754 = vld [vmem:[%s732 + $0xa8] sm:$0xff]
  %v755 = vld [vmem:[%s732 + $0xb0] sm:$0xff]
  %v756 = vld [vmem:[%s732 + $0xb8] sm:$0xff]
  %v757 = vld [vmem:[%s732 + $0xc0] sm:$0xff]
  %v758 = vld [vmem:[%s732 + $0xc8] sm:$0xff]
  %v759 = vld [vmem:[%s732 + $0xd0] sm:$0xff]
  %v760 = vld [vmem:[%s732 + $0xd8] sm:$0xff]
  %v761 = vld [vmem:[%s732 + $0xe0] sm:$0xff]
  %v762 = vld [vmem:[%s732 + $0xe8] sm:$0xff]
  %v763 = vld [vmem:[%s732 + $0xf0] sm:$0xff]
  %v764 = vld [vmem:[%s732 + $0xf8] sm:$0xff]
  %v765 = vld [vmem:[%s732 + $0x100] sm:$0xff]
  %v766 = vld [vmem:[%s732 + $0x108] sm:$0xff]
  %v767 = vld [vmem:[%s732 + $0x110] sm:$0xff]
  %v768 = vld [vmem:[%s732 + $0x118] sm:$0xff]
  %v769 = vld [vmem:[%s732 + $0x120] sm:$0xff]
  %v770 = vld [vmem:[%s732 + $0x128] sm:$0xff]
  %v771 = vld [vmem:[%s732 + $0x130] sm:$0xff]
  %v772 = vld [vmem:[%s732 + $0x138] sm:$0xff]
  %v773 = vld [vmem:[%s732 + $0x140] sm:$0xff]
  %v774 = vld [vmem:[%s732 + $0x148] sm:$0xff]
  %v775 = vld [vmem:[%s732 + $0x150] sm:$0xff]
  %v776 = vld [vmem:[%s732 + $0x158] sm:$0xff]
  %v777 = vld [vmem:[%s732 + $0x160] sm:$0xff]
  %v778 = vld [vmem:[%s732 + $0x168] sm:$0xff]
  %v779 = vld [vmem:[%s732 + $0x170] sm:$0xff]
  %v780 = vld [vmem:[%s732 + $0x178] sm:$0xff]
  %v781 = vld [vmem:[%s732 + $0x180] sm:$0xff]
  %v782 = vld [vmem:[%s732 + $0x188] sm:$0xff]
  %v783 = vld [vmem:[%s732 + $0x190] sm:$0xff]
  %v784 = vld [vmem:[%s732 + $0x198] sm:$0xff]
  %v785 = vld [vmem:[%s732 + $0x1a0] sm:$0xff]
  %v786 = vld [vmem:[%s732 + $0x1a8] sm:$0xff]
  %v787 = vld [vmem:[%s732 + $0x1b0] sm:$0xff]
  %v788 = vld [vmem:[%s732 + $0x1b8] sm:$0xff]
  %v789 = vld [vmem:[%s732 + $0x1c0] sm:$0xff]
  %v790 = vld [vmem:[%s732 + $0x1c8] sm:$0xff]
  %v791 = vld [vmem:[%s732 + $0x1d0] sm:$0xff]
  %v792 = vld [vmem:[%s732 + $0x1d8] sm:$0xff]
  %v793 = vld [vmem:[%s732 + $0x1e0] sm:$0xff]
  %v794 = vld [vmem:[%s732 + $0x1e8] sm:$0xff]
  %v795 = vld [vmem:[%s732 + $0x1f0] sm:$0xff]
  %v796 = vld [vmem:[%s732 + $0x1f8] sm:$0xff]
  %797 = vmatprep.subr.mxu0 0.0
  %798 = vmatpush1.msra.mxu0 %v733
  %799 = vmatprep.subr.mxu0 0.0
  %800 = vmatpush1.msra.mxu0 %v734
  %801 = vmatprep.subr.mxu0 0.0
  %802 = vmatpush1.msra.mxu0 %v735
  %803 = vmatprep.subr.mxu0 0.0
  %804 = vmatpush1.msra.mxu0 %v736
  %805 = vmatprep.subr.mxu0 0.0
  %806 = vmatpush1.msra.mxu0 %v737
  %807 = vmatprep.subr.mxu0 0.0
  %808 = vmatpush1.msra.mxu0 %v738
  %809 = vmatprep.subr.mxu0 0.0
  %810 = vmatpush1.msra.mxu0 %v739
  %811 = vmatprep.subr.mxu0 0.0
  %812 = vmatpush1.msra.mxu0 %v740
  %813 = vmatprep.subr.mxu0 0.0
  %814 = vmatpush1.msra.mxu0 %v741
  %815 = vmatprep.subr.mxu0 0.0
  %816 = vmatpush1.msra.mxu0 %v742
  %817 = vmatprep.subr.mxu0 0.0
  %818 = vmatpush1.msra.mxu0 %v743
  %819 = vmatprep.subr.mxu0 0.0
  %820 = vmatpush1.msra.mxu0 %v744
  %821 = vmatprep.subr.mxu0 0.0
  %822 = vmatpush1.msra.mxu0 %v745
  %823 = vmatprep.subr.mxu0 0.0
  %824 = vmatpush1.msra.mxu0 %v746
  %825 = vmatprep.subr.mxu0 0.0
  %826 = vmatpush1.msra.mxu0 %v747
  %827 = vmatprep.subr.mxu0 0.0
  %828 = vmatpush1.msra.mxu0 %v748
  %829 = vmatprep.subr.mxu0 0.0
  %830 = vmatpush1.msra.mxu0 %v749
  %831 = vmatprep.subr.mxu0 0.0
  %832 = vmatpush1.msra.mxu0 %v750
  %833 = vmatprep.subr.mxu0 0.0
  %834 = vmatpush1.msra.mxu0 %v751
  %835 = vmatprep.subr.mxu0 0.0
  %836 = vmatpush1.msra.mxu0 %v752
  %837 = vmatprep.subr.mxu0 0.0
  %838 = vmatpush1.msra.mxu0 %v753
  %839 = vmatprep.subr.mxu0 0.0
  %840 = vmatpush1.msra.mxu0 %v754
  %841 = vmatprep.subr.mxu0 0.0
  %842 = vmatpush1.msra.mxu0 %v755
  %843 = vmatprep.subr.mxu0 0.0
  %844 = vmatpush1.msra.mxu0 %v756
  %845 = vmatprep.subr.mxu0 0.0
  %846 = vmatpush1.msra.mxu0 %v757
  %847 = vmatprep.subr.mxu0 0.0
  %848 = vmatpush1.msra.mxu0 %v758
  %849 = vmatprep.subr.mxu0 0.0
  %850 = vmatpush1.msra.mxu0 %v759
  %851 = vmatprep.subr.mxu0 0.0
  %852 = vmatpush1.msra.mxu0 %v760
  %853 = vmatprep.subr.mxu0 0.0
  %854 = vmatpush1.msra.mxu0 %v761
  %855 = vmatprep.subr.mxu0 0.0
  %856 = vmatpush1.msra.mxu0 %v762
  %857 = vmatprep.subr.mxu0 0.0
  %858 = vmatpush1.msra.mxu0 %v763
  %859 = vmatprep.subr.mxu0 0.0
  %860 = vmatpush1.msra.mxu0 %v764
  %861 = vmatprep.mubr.f32.mxu0 %v479
  %862 = vmatmul.mubr.f32.gmra.mrb[0].mxu0 %v478
  %v863 = vpop.f32.mrb[0].mxu0
  %v864 = vadd.f32 0.0, %v863
  %v865 = vpop.f32.mrb[0].mxu0
  %866 = vmatprep.mubr.f32.mxu0 %v483
  %867 = vmatmul.mubr.f32.gmra.mrb[0].mxu0 %v482
  %v868 = vpop.f32.mrb[0].mxu0
  %v869 = vadd.f32 0.0, %v868
  %v870 = vpop.f32.mrb[0].mxu0
  %871 = vmatprep.mubr.f32.mxu0 %v487
  %872 = vmatmul.mubr.f32.gmra.mrb[0].mxu0 %v486
  %v873 = vpop.f32.mrb[0].mxu0
  %v874 = vadd.f32 0.0, %v873
  %v875 = vpop.f32.mrb[0].mxu0
  %876 = vmatprep.mubr.f32.mxu0 %v491
  %877 = vmatmul.mubr.f32.gmra.mrb[0].mxu0 %v490
  %v878 = vpop.f32.mrb[0].mxu0
  %v879 = vadd.f32 0.0, %v878
  %v880 = vpop.f32.mrb[0].mxu0
  %881 = vdwg.mxu0
  %882 = vmatprep.subr.mxu0 0.0
  %883 = vmatpush1.msra.mxu0 %v765
  %884 = vmatprep.subr.mxu0 0.0
  %885 = vmatpush1.msra.mxu0 %v766
  %886 = vmatprep.subr.mxu0 0.0
  %887 = vmatpush1.msra.mxu0 %v767
  %888 = vmatprep.subr.mxu0 0.0
  %889 = vmatpush1.msra.mxu0 %v768
  %890 = vmatprep.subr.mxu0 0.0
  %891 = vmatpush1.msra.mxu0 %v769
  %892 = vmatprep.subr.mxu0 0.0
  %893 = vmatpush1.msra.mxu0 %v770
  %894 = vmatprep.subr.mxu0 0.0
  %895 = vmatpush1.msra.mxu0 %v771
  %896 = vmatprep.subr.mxu0 0.0
  %897 = vmatpush1.msra.mxu0 %v772
  %898 = vmatprep.subr.mxu0 0.0
  %899 = vmatpush1.msra.mxu0 %v773
  %900 = vmatprep.subr.mxu0 0.0
  %901 = vmatpush1.msra.mxu0 %v774
  %902 = vmatprep.subr.mxu0 0.0
  %903 = vmatpush1.msra.mxu0 %v775
  %904 = vmatprep.subr.mxu0 0.0
  %905 = vmatpush1.msra.mxu0 %v776
  %906 = vmatprep.subr.mxu0 0.0
  %907 = vmatpush1.msra.mxu0 %v777
  %908 = vmatprep.subr.mxu0 0.0
  %909 = vmatpush1.msra.mxu0 %v778
  %910 = vmatprep.subr.mxu0 0.0
  %911 = vmatpush1.msra.mxu0 %v779
  %912 = vmatprep.subr.mxu0 0.0
  %913 = vmatpush1.msra.mxu0 %v780
  %914 = vmatprep.subr.mxu0 0.0
  %915 = vmatpush1.msra.mxu0 %v781
  %916 = vmatprep.subr.mxu0 0.0
  %917 = vmatpush1.msra.mxu0 %v782
  %918 = vmatprep.subr.mxu0 0.0
  %919 = vmatpush1.msra.mxu0 %v783
  %920 = vmatprep.subr.mxu0 0.0
  %921 = vmatpush1.msra.mxu0 %v784
  %922 = vmatprep.subr.mxu0 0.0
  %923 = vmatpush1.msra.mxu0 %v785
  %924 = vmatprep.subr.mxu0 0.0
  %925 = vmatpush1.msra.mxu0 %v786
  %926 = vmatprep.subr.mxu0 0.0
  %927 = vmatpush1.msra.mxu0 %v787
  %928 = vmatprep.subr.mxu0 0.0
  %929 = vmatpush1.msra.mxu0 %v788
  %930 = vmatprep.subr.mxu0 0.0
  %931 = vmatpush1.msra.mxu0 %v789
  %932 = vmatprep.subr.mxu0 0.0
  %933 = vmatpush1.msra.mxu0 %v790
  %934 = vmatprep.subr.mxu0 0.0
  %935 = vmatpush1.msra.mxu0 %v791
  %936 = vmatprep.subr.mxu0 0.0
  %937 = vmatpush1.msra.mxu0 %v792
  %938 = vmatprep.subr.mxu0 0.0
  %939 = vmatpush1.msra.mxu0 %v793
  %940 = vmatprep.subr.mxu0 0.0
  %941 = vmatpush1.msra.mxu0 %v794
  %942 = vmatprep.subr.mxu0 0.0
  %943 = vmatpush1.msra.mxu0 %v795
  %944 = vmatprep.subr.mxu0 0.0
  %945 = vmatpush1.msra.mxu0 %v796
  %946 = vmatprep.mubr.f32.mxu0 %v481
  %947 = vmatmul.mubr.f32.gmra.mrb[0].mxu0 %v480
  %v948 = vpop.f32.mrb[0].mxu0
  %v949 = vadd.f32 %v864, %v948
  %v950 = vpop.f32.mrb[0].mxu0
  %951 = vmatprep.mubr.f32.mxu0 %v485
  %952 = vmatmul.mubr.f32.gmra.mrb[0].mxu0 %v484
  %v953 = vpop.f32.mrb[0].mxu0
  %v954 = vadd.f32 %v869, %v953
  %v955 = vpop.f32.mrb[0].mxu0
  %956 = vmatprep.mubr.f32.mxu0 %v489
  %957 = vmatmul.mubr.f32.gmra.mrb[0].mxu0 %v488
  %v958 = vpop.f32.mrb[0].mxu0
  %v959 = vadd.f32 %v874, %v958
  %v960 = vpop.f32.mrb[0].mxu0
  %961 = vmatprep.mubr.f32.mxu0 %v493
  %962 = vmatmul.mubr.f32.gmra.mrb[0].mxu0 %v492
  %v963 = vpop.f32.mrb[0].mxu0
  %v964 = vadd.f32 %v879, %v963
  %v965 = vpop.f32.mrb[0].mxu0
  %966 = vdwg.mxu0
  %s967 = scalar_lea.vmem %s3, 32
  %v968 = vld [vmem:[%s967] sm:$0xff]
  %v969 = vld [vmem:[%s967 + $0x8] sm:$0xff]
  %v970 = vld [vmem:[%s967 + $0x10] sm:$0xff]
  %v971 = vld [vmem:[%s967 + $0x18] sm:$0xff]
  %vm972 = vcmask 261120
  %v974 = vsel %vm972, %v968, 0
  %v977 = vsel %vm972, %v969, 0
  %v980 = vsel %vm972, %v970, 0
  %v983 = vsel %vm972, %v971, 0
  %985 = vmatprep.subr.mxu0 0.0
  %986 = vmatpush1.msra.mxu0 %v949
  %987 = vmatprep.subr.mxu0 0.0
  %988 = vmatpush1.msra.mxu0 %v954
  %989 = vmatprep.subr.mxu0 0.0
  %990 = vmatpush1.msra.mxu0 %v959
  %991 = vmatprep.subr.mxu0 0.0
  %992 = vmatpush1.msra.mxu0 %v964
  %993 = vmatprep.subr.mxu0 0.0
  %994 = vmatpush1.msra.mxu0 0.0
  %995 = vmatprep.subr.mxu0 0.0
  %996 = vmatpush1.msra.mxu0 0.0
  %997 = vmatprep.subr.mxu0 0.0
  %998 = vmatpush1.msra.mxu0 0.0
  %999 = vmatprep.subr.mxu0 0.0
  %1000 = vmatpush1.msra.mxu0 0.0
  %1001 = vmatprep.subr.mxu0 0.0
  %1002 = vmatpush1.msra.mxu0 0.0
  %1003 = vmatprep.subr.mxu0 0.0
  %1004 = vmatpush1.msra.mxu0 0.0
  %1005 = vmatprep.subr.mxu0 0.0
  %1006 = vmatpush1.msra.mxu0 0.0
  %1007 = vmatprep.subr.mxu0 0.0
  %1008 = vmatpush1.msra.mxu0 0.0
  %1009 = vmatprep.subr.mxu0 0.0
  %1010 = vmatpush1.msra.mxu0 0.0
  %1011 = vmatprep.subr.mxu0 0.0
  %1012 = vmatpush1.msra.mxu0 0.0
  %1013 = vmatprep.subr.mxu0 0.0
  %1014 = vmatpush1.msra.mxu0 0.0
  %1015 = vmatprep.subr.mxu0 0.0
  %1016 = vmatpush1.msra.mxu0 0.0
  %1017 = vmatprep.subr.mxu0 0.0
  %1018 = vmatpush1.msra.mxu0 0.0
  %1019 = vmatprep.subr.mxu0 0.0
  %1020 = vmatpush1.msra.mxu0 0.0
  %1021 = vmatprep.subr.mxu0 0.0
  %1022 = vmatpush1.msra.mxu0 0.0
  %1023 = vmatprep.subr.mxu0 0.0
  %1024 = vmatpush1.msra.mxu0 0.0
  %1025 = vmatprep.subr.mxu0 0.0
  %1026 = vmatpush1.msra.mxu0 0.0
  %1027 = vmatprep.subr.mxu0 0.0
  %1028 = vmatpush1.msra.mxu0 0.0
  %1029 = vmatprep.subr.mxu0 0.0
  %1030 = vmatpush1.msra.mxu0 0.0
  %1031 = vmatprep.subr.mxu0 0.0
  %1032 = vmatpush1.msra.mxu0 0.0
  %1033 = vmatprep.subr.mxu0 0.0
  %1034 = vmatpush1.msra.mxu0 0.0
  %1035 = vmatprep.subr.mxu0 0.0
  %1036 = vmatpush1.msra.mxu0 0.0
  %1037 = vmatprep.subr.mxu0 0.0
  %1038 = vmatpush1.msra.mxu0 0.0
  %1039 = vmatprep.subr.mxu0 0.0
  %1040 = vmatpush1.msra.mxu0 0.0
  %1041 = vmatprep.subr.mxu0 0.0
  %1042 = vmatpush1.msra.mxu0 0.0
  %1043 = vmatprep.subr.mxu0 0.0
  %1044 = vmatpush1.msra.mxu0 0.0
  %1045 = vmatprep.subr.mxu0 0.0
  %1046 = vmatpush1.msra.mxu0 0.0
  %1047 = vmatprep.subr.mxu0 0.0
  %1048 = vmatpush1.msra.mxu0 0.0
  %1049 = vmatprep.mubr.f32.mxu0 0.0
  %1050 = vmatmul.mubr.f32.gmra.mrb[0].mxu0 %v974
  %v1051 = vpop.f32.mrb[0].mxu0
  %v1052 = vadd.f32 0.0, %v1051
  %v1053 = vpop.f32.mrb[0].mxu0
  %1054 = vmatprep.mubr.f32.mxu0 0.0
  %1055 = vmatmul.mubr.f32.gmra.mrb[0].mxu0 %v977
  %v1056 = vpop.f32.mrb[0].mxu0
  %v1057 = vadd.f32 0.0, %v1056
  %v1058 = vpop.f32.mrb[0].mxu0
  %1059 = vmatprep.mubr.f32.mxu0 0.0
  %1060 = vmatmul.mubr.f32.gmra.mrb[0].mxu0 %v980
  %v1061 = vpop.f32.mrb[0].mxu0
  %v1062 = vadd.f32 0.0, %v1061
  %v1063 = vpop.f32.mrb[0].mxu0
  %1064 = vmatprep.mubr.f32.mxu0 0.0
  %1065 = vmatmul.mubr.f32.gmra.mrb[0].mxu0 %v983
  %v1066 = vpop.f32.mrb[0].mxu0
  %v1067 = vadd.f32 0.0, %v1066
  %v1068 = vpop.f32.mrb[0].mxu0
  %1069 = vdwg.mxu0
  %v1071 = vsel %vm972, %v728, 0
  %v1074 = vsel %vm972, %v729, 0
  %v1077 = vsel %vm972, %v730, 0
  %v1080 = vsel %vm972, %v731, 0
  %1082 = vmatprep.subr.mxu0 0.0
  %1083 = vmatpush1.msra.mxu0 %v710
  %1084 = vmatprep.subr.mxu0 0.0
  %1085 = vmatpush1.msra.mxu0 %v715
  %1086 = vmatprep.subr.mxu0 0.0
  %1087 = vmatpush1.msra.mxu0 %v720
  %1088 = vmatprep.subr.mxu0 0.0
  %1089 = vmatpush1.msra.mxu0 %v725
  %1090 = vmatprep.subr.mxu0 0.0
  %1091 = vmatpush1.msra.mxu0 0.0
  %1092 = vmatprep.subr.mxu0 0.0
  %1093 = vmatpush1.msra.mxu0 0.0
  %1094 = vmatprep.subr.mxu0 0.0
  %1095 = vmatpush1.msra.mxu0 0.0
  %1096 = vmatprep.subr.mxu0 0.0
  %1097 = vmatpush1.msra.mxu0 0.0
  %1098 = vmatprep.subr.mxu0 0.0
  %1099 = vmatpush1.msra.mxu0 0.0
  %1100 = vmatprep.subr.mxu0 0.0
  %1101 = vmatpush1.msra.mxu0 0.0
  %1102 = vmatprep.subr.mxu0 0.0
  %1103 = vmatpush1.msra.mxu0 0.0
  %1104 = vmatprep.subr.mxu0 0.0
  %1105 = vmatpush1.msra.mxu0 0.0
  %1106 = vmatprep.subr.mxu0 0.0
  %1107 = vmatpush1.msra.mxu0 0.0
  %1108 = vmatprep.subr.mxu0 0.0
  %1109 = vmatpush1.msra.mxu0 0.0
  %1110 = vmatprep.subr.mxu0 0.0
  %1111 = vmatpush1.msra.mxu0 0.0
  %1112 = vmatprep.subr.mxu0 0.0
  %1113 = vmatpush1.msra.mxu0 0.0
  %1114 = vmatprep.subr.mxu0 0.0
  %1115 = vmatpush1.msra.mxu0 0.0
  %1116 = vmatprep.subr.mxu0 0.0
  %1117 = vmatpush1.msra.mxu0 0.0
  %1118 = vmatprep.subr.mxu0 0.0
  %1119 = vmatpush1.msra.mxu0 0.0
  %1120 = vmatprep.subr.mxu0 0.0
  %1121 = vmatpush1.msra.mxu0 0.0
  %1122 = vmatprep.subr.mxu0 0.0
  %1123 = vmatpush1.msra.mxu0 0.0
  %1124 = vmatprep.subr.mxu0 0.0
  %1125 = vmatpush1.msra.mxu0 0.0
  %1126 = vmatprep.subr.mxu0 0.0
  %1127 = vmatpush1.msra.mxu0 0.0
  %1128 = vmatprep.subr.mxu0 0.0
  %1129 = vmatpush1.msra.mxu0 0.0
  %1130 = vmatprep.subr.mxu0 0.0
  %1131 = vmatpush1.msra.mxu0 0.0
  %1132 = vmatprep.subr.mxu0 0.0
  %1133 = vmatpush1.msra.mxu0 0.0
  %1134 = vmatprep.subr.mxu0 0.0
  %1135 = vmatpush1.msra.mxu0 0.0
  %1136 = vmatprep.subr.mxu0 0.0
  %1137 = vmatpush1.msra.mxu0 0.0
  %1138 = vmatprep.subr.mxu0 0.0
  %1139 = vmatpush1.msra.mxu0 0.0
  %1140 = vmatprep.subr.mxu0 0.0
  %1141 = vmatpush1.msra.mxu0 0.0
  %1142 = vmatprep.subr.mxu0 0.0
  %1143 = vmatpush1.msra.mxu0 0.0
  %1144 = vmatprep.subr.mxu0 0.0
  %1145 = vmatpush1.msra.mxu0 0.0
  %1146 = vmatprep.mubr.f32.mxu0 0.0
  %1147 = vmatmul.mubr.f32.gmra.mrb[0].mxu0 %v1071
  %v1148 = vpop.f32.mrb[0].mxu0
  %v1149 = vadd.f32 %v1052, %v1148
  %v1150 = vpop.f32.mrb[0].mxu0
  %1151 = vmatprep.mubr.f32.mxu0 0.0
  %1152 = vmatmul.mubr.f32.gmra.mrb[0].mxu0 %v1074
  %v1153 = vpop.f32.mrb[0].mxu0
  %v1154 = vadd.f32 %v1057, %v1153
  %v1155 = vpop.f32.mrb[0].mxu0
  %1156 = vmatprep.mubr.f32.mxu0 0.0
  %1157 = vmatmul.mubr.f32.gmra.mrb[0].mxu0 %v1077
  %v1158 = vpop.f32.mrb[0].mxu0
  %v1159 = vadd.f32 %v1062, %v1158
  %v1160 = vpop.f32.mrb[0].mxu0
  %1161 = vmatprep.mubr.f32.mxu0 0.0
  %1162 = vmatmul.mubr.f32.gmra.mrb[0].mxu0 %v1080
  %v1163 = vpop.f32.mrb[0].mxu0
  %v1164 = vadd.f32 %v1067, %v1163
  %v1165 = vpop.f32.mrb[0].mxu0
  %1166 = vdwg.mxu0
  %s1167 = scalar_lea.vmem %s2, 1024
  %v1168 = vld [vmem:[%s1167] sm:$0xff]
  %v1169 = vld [vmem:[%s1167 + $0x8] sm:$0xff]
  %v1170 = vld [vmem:[%s1167 + $0x10] sm:$0xff]
  %v1171 = vld [vmem:[%s1167 + $0x18] sm:$0xff]
  %v1172 = vld [vmem:[%s1167 + $0x20] sm:$0xff]
  %v1173 = vld [vmem:[%s1167 + $0x28] sm:$0xff]
  %v1174 = vld [vmem:[%s1167 + $0x30] sm:$0xff]
  %v1175 = vld [vmem:[%s1167 + $0x38] sm:$0xff]
  %v1176 = vld [vmem:[%s1167 + $0x40] sm:$0xff]
  %v1177 = vld [vmem:[%s1167 + $0x48] sm:$0xff]
  %v1178 = vld [vmem:[%s1167 + $0x50] sm:$0xff]
  %v1179 = vld [vmem:[%s1167 + $0x58] sm:$0xff]
  %v1180 = vld [vmem:[%s1167 + $0x60] sm:$0xff]
  %v1181 = vld [vmem:[%s1167 + $0x68] sm:$0xff]
  %v1182 = vld [vmem:[%s1167 + $0x70] sm:$0xff]
  %v1183 = vld [vmem:[%s1167 + $0x78] sm:$0xff]
  %v1184 = vld [vmem:[%s1167 + $0x80] sm:$0xff]
  %v1185 = vld [vmem:[%s1167 + $0x88] sm:$0xff]
  %v1186 = vld [vmem:[%s1167 + $0x90] sm:$0xff]
  %v1187 = vld [vmem:[%s1167 + $0x98] sm:$0xff]
  %v1188 = vld [vmem:[%s1167 + $0xa0] sm:$0xff]
  %v1189 = vld [vmem:[%s1167 + $0xa8] sm:$0xff]
  %v1190 = vld [vmem:[%s1167 + $0xb0] sm:$0xff]
  %v1191 = vld [vmem:[%s1167 + $0xb8] sm:$0xff]
  %v1192 = vld [vmem:[%s1167 + $0xc0] sm:$0xff]
  %v1193 = vld [vmem:[%s1167 + $0xc8] sm:$0xff]
  %v1194 = vld [vmem:[%s1167 + $0xd0] sm:$0xff]
  %v1195 = vld [vmem:[%s1167 + $0xd8] sm:$0xff]
  %v1196 = vld [vmem:[%s1167 + $0xe0] sm:$0xff]
  %v1197 = vld [vmem:[%s1167 + $0xe8] sm:$0xff]
  %v1198 = vld [vmem:[%s1167 + $0xf0] sm:$0xff]
  %v1199 = vld [vmem:[%s1167 + $0xf8] sm:$0xff]
  %v1200 = vld [vmem:[%s1167 + $0x100] sm:$0xff]
  %v1201 = vld [vmem:[%s1167 + $0x108] sm:$0xff]
  %v1202 = vld [vmem:[%s1167 + $0x110] sm:$0xff]
  %v1203 = vld [vmem:[%s1167 + $0x118] sm:$0xff]
  %v1204 = vld [vmem:[%s1167 + $0x120] sm:$0xff]
  %v1205 = vld [vmem:[%s1167 + $0x128] sm:$0xff]
  %v1206 = vld [vmem:[%s1167 + $0x130] sm:$0xff]
  %v1207 = vld [vmem:[%s1167 + $0x138] sm:$0xff]
  %v1208 = vld [vmem:[%s1167 + $0x140] sm:$0xff]
  %v1209 = vld [vmem:[%s1167 + $0x148] sm:$0xff]
  %v1210 = vld [vmem:[%s1167 + $0x150] sm:$0xff]
  %v1211 = vld [vmem:[%s1167 + $0x158] sm:$0xff]
  %v1212 = vld [vmem:[%s1167 + $0x160] sm:$0xff]
  %v1213 = vld [vmem:[%s1167 + $0x168] sm:$0xff]
  %v1214 = vld [vmem:[%s1167 + $0x170] sm:$0xff]
  %v1215 = vld [vmem:[%s1167 + $0x178] sm:$0xff]
  %v1216 = vld [vmem:[%s1167 + $0x180] sm:$0xff]
  %v1217 = vld [vmem:[%s1167 + $0x188] sm:$0xff]
  %v1218 = vld [vmem:[%s1167 + $0x190] sm:$0xff]
  %v1219 = vld [vmem:[%s1167 + $0x198] sm:$0xff]
  %v1220 = vld [vmem:[%s1167 + $0x1a0] sm:$0xff]
  %v1221 = vld [vmem:[%s1167 + $0x1a8] sm:$0xff]
  %v1222 = vld [vmem:[%s1167 + $0x1b0] sm:$0xff]
  %v1223 = vld [vmem:[%s1167 + $0x1b8] sm:$0xff]
  %v1224 = vld [vmem:[%s1167 + $0x1c0] sm:$0xff]
  %v1225 = vld [vmem:[%s1167 + $0x1c8] sm:$0xff]
  %v1226 = vld [vmem:[%s1167 + $0x1d0] sm:$0xff]
  %v1227 = vld [vmem:[%s1167 + $0x1d8] sm:$0xff]
  %v1228 = vld [vmem:[%s1167 + $0x1e0] sm:$0xff]
  %v1229 = vld [vmem:[%s1167 + $0x1e8] sm:$0xff]
  %v1230 = vld [vmem:[%s1167 + $0x1f0] sm:$0xff]
  %v1231 = vld [vmem:[%s1167 + $0x1f8] sm:$0xff]
  %1232 = vmatprep.subr.mxu0 0.0
  %1233 = vmatpush1.msra.mxu0 %v1168
  %1234 = vmatprep.subr.mxu0 0.0
  %1235 = vmatpush1.msra.mxu0 %v1169
  %1236 = vmatprep.subr.mxu0 0.0
  %1237 = vmatpush1.msra.mxu0 %v1170
  %1238 = vmatprep.subr.mxu0 0.0
  %1239 = vmatpush1.msra.mxu0 %v1171
  %1240 = vmatprep.subr.mxu0 0.0
  %1241 = vmatpush1.msra.mxu0 %v1172
  %1242 = vmatprep.subr.mxu0 0.0
  %1243 = vmatpush1.msra.mxu0 %v1173
  %1244 = vmatprep.subr.mxu0 0.0
  %1245 = vmatpush1.msra.mxu0 %v1174
  %1246 = vmatprep.subr.mxu0 0.0
  %1247 = vmatpush1.msra.mxu0 %v1175
  %1248 = vmatprep.subr.mxu0 0.0
  %1249 = vmatpush1.msra.mxu0 %v1176
  %1250 = vmatprep.subr.mxu0 0.0
  %1251 = vmatpush1.msra.mxu0 %v1177
  %1252 = vmatprep.subr.mxu0 0.0
  %1253 = vmatpush1.msra.mxu0 %v1178
  %1254 = vmatprep.subr.mxu0 0.0
  %1255 = vmatpush1.msra.mxu0 %v1179
  %1256 = vmatprep.subr.mxu0 0.0
  %1257 = vmatpush1.msra.mxu0 %v1180
  %1258 = vmatprep.subr.mxu0 0.0
  %1259 = vmatpush1.msra.mxu0 %v1181
  %1260 = vmatprep.subr.mxu0 0.0
  %1261 = vmatpush1.msra.mxu0 %v1182
  %1262 = vmatprep.subr.mxu0 0.0
  %1263 = vmatpush1.msra.mxu0 %v1183
  %1264 = vmatprep.subr.mxu0 0.0
  %1265 = vmatpush1.msra.mxu0 %v1184
  %1266 = vmatprep.subr.mxu0 0.0
  %1267 = vmatpush1.msra.mxu0 %v1185
  %1268 = vmatprep.subr.mxu0 0.0
  %1269 = vmatpush1.msra.mxu0 %v1186
  %1270 = vmatprep.subr.mxu0 0.0
  %1271 = vmatpush1.msra.mxu0 %v1187
  %1272 = vmatprep.subr.mxu0 0.0
  %1273 = vmatpush1.msra.mxu0 %v1188
  %1274 = vmatprep.subr.mxu0 0.0
  %1275 = vmatpush1.msra.mxu0 %v1189
  %1276 = vmatprep.subr.mxu0 0.0
  %1277 = vmatpush1.msra.mxu0 %v1190
  %1278 = vmatprep.subr.mxu0 0.0
  %1279 = vmatpush1.msra.mxu0 %v1191
  %1280 = vmatprep.subr.mxu0 0.0
  %1281 = vmatpush1.msra.mxu0 %v1192
  %1282 = vmatprep.subr.mxu0 0.0
  %1283 = vmatpush1.msra.mxu0 %v1193
  %1284 = vmatprep.subr.mxu0 0.0
  %1285 = vmatpush1.msra.mxu0 %v1194
  %1286 = vmatprep.subr.mxu0 0.0
  %1287 = vmatpush1.msra.mxu0 %v1195
  %1288 = vmatprep.subr.mxu0 0.0
  %1289 = vmatpush1.msra.mxu0 %v1196
  %1290 = vmatprep.subr.mxu0 0.0
  %1291 = vmatpush1.msra.mxu0 %v1197
  %1292 = vmatprep.subr.mxu0 0.0
  %1293 = vmatpush1.msra.mxu0 %v1198
  %1294 = vmatprep.subr.mxu0 0.0
  %1295 = vmatpush1.msra.mxu0 %v1199
  %1296 = vmatprep.mubr.f32.mxu0 %v479
  %1297 = vmatmul.mubr.f32.gmra.mrb[0].mxu0 %v478
  %v1298 = vpop.f32.mrb[0].mxu0
  %v1299 = vadd.f32 0.0, %v1298
  %v1300 = vpop.f32.mrb[0].mxu0
  %1301 = vmatprep.mubr.f32.mxu0 %v483
  %1302 = vmatmul.mubr.f32.gmra.mrb[0].mxu0 %v482
  %v1303 = vpop.f32.mrb[0].mxu0
  %v1304 = vadd.f32 0.0, %v1303
  %v1305 = vpop.f32.mrb[0].mxu0
  %1306 = vmatprep.mubr.f32.mxu0 %v487
  %1307 = vmatmul.mubr.f32.gmra.mrb[0].mxu0 %v486
  %v1308 = vpop.f32.mrb[0].mxu0
  %v1309 = vadd.f32 0.0, %v1308
  %v1310 = vpop.f32.mrb[0].mxu0
  %1311 = vmatprep.mubr.f32.mxu0 %v491
  %1312 = vmatmul.mubr.f32.gmra.mrb[0].mxu0 %v490
  %v1313 = vpop.f32.mrb[0].mxu0
  %v1314 = vadd.f32 0.0, %v1313
  %v1315 = vpop.f32.mrb[0].mxu0
  %1316 = vdwg.mxu0
  %1317 = vmatprep.subr.mxu0 0.0
  %1318 = vmatpush1.msra.mxu0 %v1200
  %1319 = vmatprep.subr.mxu0 0.0
  %1320 = vmatpush1.msra.mxu0 %v1201
  %1321 = vmatprep.subr.mxu0 0.0
  %1322 = vmatpush1.msra.mxu0 %v1202
  %1323 = vmatprep.subr.mxu0 0.0
  %1324 = vmatpush1.msra.mxu0 %v1203
  %1325 = vmatprep.subr.mxu0 0.0
  %1326 = vmatpush1.msra.mxu0 %v1204
  %1327 = vmatprep.subr.mxu0 0.0
  %1328 = vmatpush1.msra.mxu0 %v1205
  %1329 = vmatprep.subr.mxu0 0.0
  %1330 = vmatpush1.msra.mxu0 %v1206
  %1331 = vmatprep.subr.mxu0 0.0
  %1332 = vmatpush1.msra.mxu0 %v1207
  %1333 = vmatprep.subr.mxu0 0.0
  %1334 = vmatpush1.msra.mxu0 %v1208
  %1335 = vmatprep.subr.mxu0 0.0
  %1336 = vmatpush1.msra.mxu0 %v1209
  %1337 = vmatprep.subr.mxu0 0.0
  %1338 = vmatpush1.msra.mxu0 %v1210
  %1339 = vmatprep.subr.mxu0 0.0
  %1340 = vmatpush1.msra.mxu0 %v1211
  %1341 = vmatprep.subr.mxu0 0.0
  %1342 = vmatpush1.msra.mxu0 %v1212
  %1343 = vmatprep.subr.mxu0 0.0
  %1344 = vmatpush1.msra.mxu0 %v1213
  %1345 = vmatprep.subr.mxu0 0.0
  %1346 = vmatpush1.msra.mxu0 %v1214
  %1347 = vmatprep.subr.mxu0 0.0
  %1348 = vmatpush1.msra.mxu0 %v1215
  %1349 = vmatprep.subr.mxu0 0.0
  %1350 = vmatpush1.msra.mxu0 %v1216
  %1351 = vmatprep.subr.mxu0 0.0
  %1352 = vmatpush1.msra.mxu0 %v1217
  %1353 = vmatprep.subr.mxu0 0.0
  %1354 = vmatpush1.msra.mxu0 %v1218
  %1355 = vmatprep.subr.mxu0 0.0
  %1356 = vmatpush1.msra.mxu0 %v1219
  %1357 = vmatprep.subr.mxu0 0.0
  %1358 = vmatpush1.msra.mxu0 %v1220
  %1359 = vmatprep.subr.mxu0 0.0
  %1360 = vmatpush1.msra.mxu0 %v1221
  %1361 = vmatprep.subr.mxu0 0.0
  %1362 = vmatpush1.msra.mxu0 %v1222
  %1363 = vmatprep.subr.mxu0 0.0
  %1364 = vmatpush1.msra.mxu0 %v1223
  %1365 = vmatprep.subr.mxu0 0.0
  %1366 = vmatpush1.msra.mxu0 %v1224
  %1367 = vmatprep.subr.mxu0 0.0
  %1368 = vmatpush1.msra.mxu0 %v1225
  %1369 = vmatprep.subr.mxu0 0.0
  %1370 = vmatpush1.msra.mxu0 %v1226
  %1371 = vmatprep.subr.mxu0 0.0
  %1372 = vmatpush1.msra.mxu0 %v1227
  %1373 = vmatprep.subr.mxu0 0.0
  %1374 = vmatpush1.msra.mxu0 %v1228
  %1375 = vmatprep.subr.mxu0 0.0
  %1376 = vmatpush1.msra.mxu0 %v1229
  %1377 = vmatprep.subr.mxu0 0.0
  %1378 = vmatpush1.msra.mxu0 %v1230
  %1379 = vmatprep.subr.mxu0 0.0
  %1380 = vmatpush1.msra.mxu0 %v1231
  %1381 = vmatprep.mubr.f32.mxu0 %v481
  %1382 = vmatmul.mubr.f32.gmra.mrb[0].mxu0 %v480
  %v1383 = vpop.f32.mrb[0].mxu0
  %v1384 = vadd.f32 %v1299, %v1383
  %v1385 = vpop.f32.mrb[0].mxu0
  %1386 = vmatprep.mubr.f32.mxu0 %v485
  %1387 = vmatmul.mubr.f32.gmra.mrb[0].mxu0 %v484
  %v1388 = vpop.f32.mrb[0].mxu0
  %v1389 = vadd.f32 %v1304, %v1388
  %v1390 = vpop.f32.mrb[0].mxu0
  %1391 = vmatprep.mubr.f32.mxu0 %v489
  %1392 = vmatmul.mubr.f32.gmra.mrb[0].mxu0 %v488
  %v1393 = vpop.f32.mrb[0].mxu0
  %v1394 = vadd.f32 %v1309, %v1393
  %v1395 = vpop.f32.mrb[0].mxu0
  %1396 = vmatprep.mubr.f32.mxu0 %v493
  %1397 = vmatmul.mubr.f32.gmra.mrb[0].mxu0 %v492
  %v1398 = vpop.f32.mrb[0].mxu0
  %v1399 = vadd.f32 %v1314, %v1398
  %v1400 = vpop.f32.mrb[0].mxu0
  %1401 = vdwg.mxu0
  %s1402 = scalar_lea.vmem %s3, 64
  %v1403 = vld [vmem:[%s1402] sm:$0xff]
  %v1404 = vld [vmem:[%s1402 + $0x8] sm:$0xff]
  %v1405 = vld [vmem:[%s1402 + $0x10] sm:$0xff]
  %v1406 = vld [vmem:[%s1402 + $0x18] sm:$0xff]
  %v1408 = vsel %vm972, %v1403, 0
  %v1411 = vsel %vm972, %v1404, 0
  %v1414 = vsel %vm972, %v1405, 0
  %v1417 = vsel %vm972, %v1406, 0
  %1419 = vmatprep.subr.mxu0 0.0
  %1420 = vmatpush1.msra.mxu0 %v1384
  %1421 = vmatprep.subr.mxu0 0.0
  %1422 = vmatpush1.msra.mxu0 %v1389
  %1423 = vmatprep.subr.mxu0 0.0
  %1424 = vmatpush1.msra.mxu0 %v1394
  %1425 = vmatprep.subr.mxu0 0.0
  %1426 = vmatpush1.msra.mxu0 %v1399
  %1427 = vmatprep.subr.mxu0 0.0
  %1428 = vmatpush1.msra.mxu0 0.0
  %1429 = vmatprep.subr.mxu0 0.0
  %1430 = vmatpush1.msra.mxu0 0.0
  %1431 = vmatprep.subr.mxu0 0.0
  %1432 = vmatpush1.msra.mxu0 0.0
  %1433 = vmatprep.subr.mxu0 0.0
  %1434 = vmatpush1.msra.mxu0 0.0
  %1435 = vmatprep.subr.mxu0 0.0
  %1436 = vmatpush1.msra.mxu0 0.0
  %1437 = vmatprep.subr.mxu0 0.0
  %1438 = vmatpush1.msra.mxu0 0.0
  %1439 = vmatprep.subr.mxu0 0.0
  %1440 = vmatpush1.msra.mxu0 0.0
  %1441 = vmatprep.subr.mxu0 0.0
  %1442 = vmatpush1.msra.mxu0 0.0
  %1443 = vmatprep.subr.mxu0 0.0
  %1444 = vmatpush1.msra.mxu0 0.0
  %1445 = vmatprep.subr.mxu0 0.0
  %1446 = vmatpush1.msra.mxu0 0.0
  %1447 = vmatprep.subr.mxu0 0.0
  %1448 = vmatpush1.msra.mxu0 0.0
  %1449 = vmatprep.subr.mxu0 0.0
  %1450 = vmatpush1.msra.mxu0 0.0
  %1451 = vmatprep.subr.mxu0 0.0
  %1452 = vmatpush1.msra.mxu0 0.0
  %1453 = vmatprep.subr.mxu0 0.0
  %1454 = vmatpush1.msra.mxu0 0.0
  %1455 = vmatprep.subr.mxu0 0.0
  %1456 = vmatpush1.msra.mxu0 0.0
  %1457 = vmatprep.subr.mxu0 0.0
  %1458 = vmatpush1.msra.mxu0 0.0
  %1459 = vmatprep.subr.mxu0 0.0
  %1460 = vmatpush1.msra.mxu0 0.0
  %1461 = vmatprep.subr.mxu0 0.0
  %1462 = vmatpush1.msra.mxu0 0.0
  %1463 = vmatprep.subr.mxu0 0.0
  %1464 = vmatpush1.msra.mxu0 0.0
  %1465 = vmatprep.subr.mxu0 0.0
  %1466 = vmatpush1.msra.mxu0 0.0
  %1467 = vmatprep.subr.mxu0 0.0
  %1468 = vmatpush1.msra.mxu0 0.0
  %1469 = vmatprep.subr.mxu0 0.0
  %1470 = vmatpush1.msra.mxu0 0.0
  %1471 = vmatprep.subr.mxu0 0.0
  %1472 = vmatpush1.msra.mxu0 0.0
  %1473 = vmatprep.subr.mxu0 0.0
  %1474 = vmatpush1.msra.mxu0 0.0
  %1475 = vmatprep.subr.mxu0 0.0
  %1476 = vmatpush1.msra.mxu0 0.0
  %1477 = vmatprep.subr.mxu0 0.0
  %1478 = vmatpush1.msra.mxu0 0.0
  %1479 = vmatprep.subr.mxu0 0.0
  %1480 = vmatpush1.msra.mxu0 0.0
  %1481 = vmatprep.subr.mxu0 0.0
  %1482 = vmatpush1.msra.mxu0 0.0
  %1483 = vmatprep.mubr.f32.mxu0 0.0
  %1484 = vmatmul.mubr.f32.gmra.mrb[0].mxu0 %v1408
  %v1485 = vpop.f32.mrb[0].mxu0
  %v1486 = vadd.f32 0.0, %v1485
  %v1487 = vpop.f32.mrb[0].mxu0
  %1488 = vmatprep.mubr.f32.mxu0 0.0
  %1489 = vmatmul.mubr.f32.gmra.mrb[0].mxu0 %v1411
  %v1490 = vpop.f32.mrb[0].mxu0
  %v1491 = vadd.f32 0.0, %v1490
  %v1492 = vpop.f32.mrb[0].mxu0
  %1493 = vmatprep.mubr.f32.mxu0 0.0
  %1494 = vmatmul.mubr.f32.gmra.mrb[0].mxu0 %v1414
  %v1495 = vpop.f32.mrb[0].mxu0
  %v1496 = vadd.f32 0.0, %v1495
  %v1497 = vpop.f32.mrb[0].mxu0
  %1498 = vmatprep.mubr.f32.mxu0 0.0
  %1499 = vmatmul.mubr.f32.gmra.mrb[0].mxu0 %v1417
  %v1500 = vpop.f32.mrb[0].mxu0
  %v1501 = vadd.f32 0.0, %v1500
  %v1502 = vpop.f32.mrb[0].mxu0
  %1503 = vdwg.mxu0
  %v1504 = vadd.f32 %v1149, %v1486
  %v1505 = vadd.f32 %v1154, %v1491
  %v1506 = vadd.f32 %v1159, %v1496
  %v1507 = vadd.f32 %v1164, %v1501
  %s1508 = scalar_lea.vmem %s2, 1536
  %v1509 = vld [vmem:[%s1508] sm:$0xff]
  %v1510 = vld [vmem:[%s1508 + $0x8] sm:$0xff]
  %v1511 = vld [vmem:[%s1508 + $0x10] sm:$0xff]
  %v1512 = vld [vmem:[%s1508 + $0x18] sm:$0xff]
  %v1513 = vld [vmem:[%s1508 + $0x20] sm:$0xff]
  %v1514 = vld [vmem:[%s1508 + $0x28] sm:$0xff]
  %v1515 = vld [vmem:[%s1508 + $0x30] sm:$0xff]
  %v1516 = vld [vmem:[%s1508 + $0x38] sm:$0xff]
  %v1517 = vld [vmem:[%s1508 + $0x40] sm:$0xff]
  %v1518 = vld [vmem:[%s1508 + $0x48] sm:$0xff]
  %v1519 = vld [vmem:[%s1508 + $0x50] sm:$0xff]
  %v1520 = vld [vmem:[%s1508 + $0x58] sm:$0xff]
  %v1521 = vld [vmem:[%s1508 + $0x60] sm:$0xff]
  %v1522 = vld [vmem:[%s1508 + $0x68] sm:$0xff]
  %v1523 = vld [vmem:[%s1508 + $0x70] sm:$0xff]
  %v1524 = vld [vmem:[%s1508 + $0x78] sm:$0xff]
  %v1525 = vld [vmem:[%s1508 + $0x80] sm:$0xff]
  %v1526 = vld [vmem:[%s1508 + $0x88] sm:$0xff]
  %v1527 = vld [vmem:[%s1508 + $0x90] sm:$0xff]
  %v1528 = vld [vmem:[%s1508 + $0x98] sm:$0xff]
  %v1529 = vld [vmem:[%s1508 + $0xa0] sm:$0xff]
  %v1530 = vld [vmem:[%s1508 + $0xa8] sm:$0xff]
  %v1531 = vld [vmem:[%s1508 + $0xb0] sm:$0xff]
  %v1532 = vld [vmem:[%s1508 + $0xb8] sm:$0xff]
  %v1533 = vld [vmem:[%s1508 + $0xc0] sm:$0xff]
  %v1534 = vld [vmem:[%s1508 + $0xc8] sm:$0xff]
  %v1535 = vld [vmem:[%s1508 + $0xd0] sm:$0xff]
  %v1536 = vld [vmem:[%s1508 + $0xd8] sm:$0xff]
  %v1537 = vld [vmem:[%s1508 + $0xe0] sm:$0xff]
  %v1538 = vld [vmem:[%s1508 + $0xe8] sm:$0xff]
  %v1539 = vld [vmem:[%s1508 + $0xf0] sm:$0xff]
  %v1540 = vld [vmem:[%s1508 + $0xf8] sm:$0xff]
  %v1541 = vld [vmem:[%s1508 + $0x100] sm:$0xff]
  %v1542 = vld [vmem:[%s1508 + $0x108] sm:$0xff]
  %v1543 = vld [vmem:[%s1508 + $0x110] sm:$0xff]
  %v1544 = vld [vmem:[%s1508 + $0x118] sm:$0xff]
  %v1545 = vld [vmem:[%s1508 + $0x120] sm:$0xff]
  %v1546 = vld [vmem:[%s1508 + $0x128] sm:$0xff]
  %v1547 = vld [vmem:[%s1508 + $0x130] sm:$0xff]
  %v1548 = vld [vmem:[%s1508 + $0x138] sm:$0xff]
  %v1549 = vld [vmem:[%s1508 + $0x140] sm:$0xff]
  %v1550 = vld [vmem:[%s1508 + $0x148] sm:$0xff]
  %v1551 = vld [vmem:[%s1508 + $0x150] sm:$0xff]
  %v1552 = vld [vmem:[%s1508 + $0x158] sm:$0xff]
  %v1553 = vld [vmem:[%s1508 + $0x160] sm:$0xff]
  %v1554 = vld [vmem:[%s1508 + $0x168] sm:$0xff]
  %v1555 = vld [vmem:[%s1508 + $0x170] sm:$0xff]
  %v1556 = vld [vmem:[%s1508 + $0x178] sm:$0xff]
  %v1557 = vld [vmem:[%s1508 + $0x180] sm:$0xff]
  %v1558 = vld [vmem:[%s1508 + $0x188] sm:$0xff]
  %v1559 = vld [vmem:[%s1508 + $0x190] sm:$0xff]
  %v1560 = vld [vmem:[%s1508 + $0x198] sm:$0xff]
  %v1561 = vld [vmem:[%s1508 + $0x1a0] sm:$0xff]
  %v1562 = vld [vmem:[%s1508 + $0x1a8] sm:$0xff]
  %v1563 = vld [vmem:[%s1508 + $0x1b0] sm:$0xff]
  %v1564 = vld [vmem:[%s1508 + $0x1b8] sm:$0xff]
  %v1565 = vld [vmem:[%s1508 + $0x1c0] sm:$0xff]
  %v1566 = vld [vmem:[%s1508 + $0x1c8] sm:$0xff]
  %v1567 = vld [vmem:[%s1508 + $0x1d0] sm:$0xff]
  %v1568 = vld [vmem:[%s1508 + $0x1d8] sm:$0xff]
  %v1569 = vld [vmem:[%s1508 + $0x1e0] sm:$0xff]
  %v1570 = vld [vmem:[%s1508 + $0x1e8] sm:$0xff]
  %v1571 = vld [vmem:[%s1508 + $0x1f0] sm:$0xff]
  %v1572 = vld [vmem:[%s1508 + $0x1f8] sm:$0xff]
  %1573 = vmatprep.subr.mxu0 0.0
  %1574 = vmatpush1.msra.mxu0 %v1509
  %1575 = vmatprep.subr.mxu0 0.0
  %1576 = vmatpush1.msra.mxu0 %v1510
  %1577 = vmatprep.subr.mxu0 0.0
  %1578 = vmatpush1.msra.mxu0 %v1511
  %1579 = vmatprep.subr.mxu0 0.0
  %1580 = vmatpush1.msra.mxu0 %v1512
  %1581 = vmatprep.subr.mxu0 0.0
  %1582 = vmatpush1.msra.mxu0 %v1513
  %1583 = vmatprep.subr.mxu0 0.0
  %1584 = vmatpush1.msra.mxu0 %v1514
  %1585 = vmatprep.subr.mxu0 0.0
  %1586 = vmatpush1.msra.mxu0 %v1515
  %1587 = vmatprep.subr.mxu0 0.0
  %1588 = vmatpush1.msra.mxu0 %v1516
  %1589 = vmatprep.subr.mxu0 0.0
  %1590 = vmatpush1.msra.mxu0 %v1517
  %1591 = vmatprep.subr.mxu0 0.0
  %1592 = vmatpush1.msra.mxu0 %v1518
  %1593 = vmatprep.subr.mxu0 0.0
  %1594 = vmatpush1.msra.mxu0 %v1519
  %1595 = vmatprep.subr.mxu0 0.0
  %1596 = vmatpush1.msra.mxu0 %v1520
  %1597 = vmatprep.subr.mxu0 0.0
  %1598 = vmatpush1.msra.mxu0 %v1521
  %1599 = vmatprep.subr.mxu0 0.0
  %1600 = vmatpush1.msra.mxu0 %v1522
  %1601 = vmatprep.subr.mxu0 0.0
  %1602 = vmatpush1.msra.mxu0 %v1523
  %1603 = vmatprep.subr.mxu0 0.0
  %1604 = vmatpush1.msra.mxu0 %v1524
  %1605 = vmatprep.subr.mxu0 0.0
  %1606 = vmatpush1.msra.mxu0 %v1525
  %1607 = vmatprep.subr.mxu0 0.0
  %1608 = vmatpush1.msra.mxu0 %v1526
  %1609 = vmatprep.subr.mxu0 0.0
  %1610 = vmatpush1.msra.mxu0 %v1527
  %1611 = vmatprep.subr.mxu0 0.0
  %1612 = vmatpush1.msra.mxu0 %v1528
  %1613 = vmatprep.subr.mxu0 0.0
  %1614 = vmatpush1.msra.mxu0 %v1529
  %1615 = vmatprep.subr.mxu0 0.0
  %1616 = vmatpush1.msra.mxu0 %v1530
  %1617 = vmatprep.subr.mxu0 0.0
  %1618 = vmatpush1.msra.mxu0 %v1531
  %1619 = vmatprep.subr.mxu0 0.0
  %1620 = vmatpush1.msra.mxu0 %v1532
  %1621 = vmatprep.subr.mxu0 0.0
  %1622 = vmatpush1.msra.mxu0 %v1533
  %1623 = vmatprep.subr.mxu0 0.0
  %1624 = vmatpush1.msra.mxu0 %v1534
  %1625 = vmatprep.subr.mxu0 0.0
  %1626 = vmatpush1.msra.mxu0 %v1535
  %1627 = vmatprep.subr.mxu0 0.0
  %1628 = vmatpush1.msra.mxu0 %v1536
  %1629 = vmatprep.subr.mxu0 0.0
  %1630 = vmatpush1.msra.mxu0 %v1537
  %1631 = vmatprep.subr.mxu0 0.0
  %1632 = vmatpush1.msra.mxu0 %v1538
  %1633 = vmatprep.subr.mxu0 0.0
  %1634 = vmatpush1.msra.mxu0 %v1539
  %1635 = vmatprep.subr.mxu0 0.0
  %1636 = vmatpush1.msra.mxu0 %v1540
  %1637 = vmatprep.mubr.f32.mxu0 %v479
  %1638 = vmatmul.mubr.f32.gmra.mrb[0].mxu0 %v478
  %v1639 = vpop.f32.mrb[0].mxu0
  %v1640 = vadd.f32 0.0, %v1639
  %v1641 = vpop.f32.mrb[0].mxu0
  %1642 = vmatprep.mubr.f32.mxu0 %v483
  %1643 = vmatmul.mubr.f32.gmra.mrb[0].mxu0 %v482
  %v1644 = vpop.f32.mrb[0].mxu0
  %v1645 = vadd.f32 0.0, %v1644
  %v1646 = vpop.f32.mrb[0].mxu0
  %1647 = vmatprep.mubr.f32.mxu0 %v487
  %1648 = vmatmul.mubr.f32.gmra.mrb[0].mxu0 %v486
  %v1649 = vpop.f32.mrb[0].mxu0
  %v1650 = vadd.f32 0.0, %v1649
  %v1651 = vpop.f32.mrb[0].mxu0
  %1652 = vmatprep.mubr.f32.mxu0 %v491
  %1653 = vmatmul.mubr.f32.gmra.mrb[0].mxu0 %v490
  %v1654 = vpop.f32.mrb[0].mxu0
  %v1655 = vadd.f32 0.0, %v1654
  %v1656 = vpop.f32.mrb[0].mxu0
  %1657 = vdwg.mxu0
  %1658 = vmatprep.subr.mxu0 0.0
  %1659 = vmatpush1.msra.mxu0 %v1541
  %1660 = vmatprep.subr.mxu0 0.0
  %1661 = vmatpush1.msra.mxu0 %v1542
  %1662 = vmatprep.subr.mxu0 0.0
  %1663 = vmatpush1.msra.mxu0 %v1543
  %1664 = vmatprep.subr.mxu0 0.0
  %1665 = vmatpush1.msra.mxu0 %v1544
  %1666 = vmatprep.subr.mxu0 0.0
  %1667 = vmatpush1.msra.mxu0 %v1545
  %1668 = vmatprep.subr.mxu0 0.0
  %1669 = vmatpush1.msra.mxu0 %v1546
  %1670 = vmatprep.subr.mxu0 0.0
  %1671 = vmatpush1.msra.mxu0 %v1547
  %1672 = vmatprep.subr.mxu0 0.0
  %1673 = vmatpush1.msra.mxu0 %v1548
  %1674 = vmatprep.subr.mxu0 0.0
  %1675 = vmatpush1.msra.mxu0 %v1549
  %1676 = vmatprep.subr.mxu0 0.0
  %1677 = vmatpush1.msra.mxu0 %v1550
  %1678 = vmatprep.subr.mxu0 0.0
  %1679 = vmatpush1.msra.mxu0 %v1551
  %1680 = vmatprep.subr.mxu0 0.0
  %1681 = vmatpush1.msra.mxu0 %v1552
  %1682 = vmatprep.subr.mxu0 0.0
  %1683 = vmatpush1.msra.mxu0 %v1553
  %1684 = vmatprep.subr.mxu0 0.0
  %1685 = vmatpush1.msra.mxu0 %v1554
  %1686 = vmatprep.subr.mxu0 0.0
  %1687 = vmatpush1.msra.mxu0 %v1555
  %1688 = vmatprep.subr.mxu0 0.0
  %1689 = vmatpush1.msra.mxu0 %v1556
  %1690 = vmatprep.subr.mxu0 0.0
  %1691 = vmatpush1.msra.mxu0 %v1557
  %1692 = vmatprep.subr.mxu0 0.0
  %1693 = vmatpush1.msra.mxu0 %v1558
  %1694 = vmatprep.subr.mxu0 0.0
  %1695 = vmatpush1.msra.mxu0 %v1559
  %1696 = vmatprep.subr.mxu0 0.0
  %1697 = vmatpush1.msra.mxu0 %v1560
  %1698 = vmatprep.subr.mxu0 0.0
  %1699 = vmatpush1.msra.mxu0 %v1561
  %1700 = vmatprep.subr.mxu0 0.0
  %1701 = vmatpush1.msra.mxu0 %v1562
  %1702 = vmatprep.subr.mxu0 0.0
  %1703 = vmatpush1.msra.mxu0 %v1563
  %1704 = vmatprep.subr.mxu0 0.0
  %1705 = vmatpush1.msra.mxu0 %v1564
  %1706 = vmatprep.subr.mxu0 0.0
  %1707 = vmatpush1.msra.mxu0 %v1565
  %1708 = vmatprep.subr.mxu0 0.0
  %1709 = vmatpush1.msra.mxu0 %v1566
  %1710 = vmatprep.subr.mxu0 0.0
  %1711 = vmatpush1.msra.mxu0 %v1567
  %1712 = vmatprep.subr.mxu0 0.0
  %1713 = vmatpush1.msra.mxu0 %v1568
  %1714 = vmatprep.subr.mxu0 0.0
  %1715 = vmatpush1.msra.mxu0 %v1569
  %1716 = vmatprep.subr.mxu0 0.0
  %1717 = vmatpush1.msra.mxu0 %v1570
  %1718 = vmatprep.subr.mxu0 0.0
  %1719 = vmatpush1.msra.mxu0 %v1571
  %1720 = vmatprep.subr.mxu0 0.0
  %1721 = vmatpush1.msra.mxu0 %v1572
  %1722 = vmatprep.mubr.f32.mxu0 %v481
  %1723 = vmatmul.mubr.f32.gmra.mrb[0].mxu0 %v480
  %v1724 = vpop.f32.mrb[0].mxu0
  %v1725 = vadd.f32 %v1640, %v1724
  %v1726 = vpop.f32.mrb[0].mxu0
  %1727 = vmatprep.mubr.f32.mxu0 %v485
  %1728 = vmatmul.mubr.f32.gmra.mrb[0].mxu0 %v484
  %v1729 = vpop.f32.mrb[0].mxu0
  %v1730 = vadd.f32 %v1645, %v1729
  %v1731 = vpop.f32.mrb[0].mxu0
  %1732 = vmatprep.mubr.f32.mxu0 %v489
  %1733 = vmatmul.mubr.f32.gmra.mrb[0].mxu0 %v488
  %v1734 = vpop.f32.mrb[0].mxu0
  %v1735 = vadd.f32 %v1650, %v1734
  %v1736 = vpop.f32.mrb[0].mxu0
  %1737 = vmatprep.mubr.f32.mxu0 %v493
  %1738 = vmatmul.mubr.f32.gmra.mrb[0].mxu0 %v492
  %v1739 = vpop.f32.mrb[0].mxu0
  %v1740 = vadd.f32 %v1655, %v1739
  %v1741 = vpop.f32.mrb[0].mxu0
  %1742 = vdwg.mxu0
  %s1743 = scalar_lea.vmem %s3, 96
  %v1744 = vld [vmem:[%s1743] sm:$0xff]
  %v1745 = vld [vmem:[%s1743 + $0x8] sm:$0xff]
  %v1746 = vld [vmem:[%s1743 + $0x10] sm:$0xff]
  %v1747 = vld [vmem:[%s1743 + $0x18] sm:$0xff]
  %v1749 = vsel %vm972, %v1744, 0
  %v1752 = vsel %vm972, %v1745, 0
  %v1755 = vsel %vm972, %v1746, 0
  %v1758 = vsel %vm972, %v1747, 0
  %1760 = vmatprep.subr.mxu0 0.0
  %1761 = vmatpush1.msra.mxu0 %v1725
  %1762 = vmatprep.subr.mxu0 0.0
  %1763 = vmatpush1.msra.mxu0 %v1730
  %1764 = vmatprep.subr.mxu0 0.0
  %1765 = vmatpush1.msra.mxu0 %v1735
  %1766 = vmatprep.subr.mxu0 0.0
  %1767 = vmatpush1.msra.mxu0 %v1740
  %1768 = vmatprep.subr.mxu0 0.0
  %1769 = vmatpush1.msra.mxu0 0.0
  %1770 = vmatprep.subr.mxu0 0.0
  %1771 = vmatpush1.msra.mxu0 0.0
  %1772 = vmatprep.subr.mxu0 0.0
  %1773 = vmatpush1.msra.mxu0 0.0
  %1774 = vmatprep.subr.mxu0 0.0
  %1775 = vmatpush1.msra.mxu0 0.0
  %1776 = vmatprep.subr.mxu0 0.0
  %1777 = vmatpush1.msra.mxu0 0.0
  %1778 = vmatprep.subr.mxu0 0.0
  %1779 = vmatpush1.msra.mxu0 0.0
  %1780 = vmatprep.subr.mxu0 0.0
  %1781 = vmatpush1.msra.mxu0 0.0
  %1782 = vmatprep.subr.mxu0 0.0
  %1783 = vmatpush1.msra.mxu0 0.0
  %1784 = vmatprep.subr.mxu0 0.0
  %1785 = vmatpush1.msra.mxu0 0.0
  %1786 = vmatprep.subr.mxu0 0.0
  %1787 = vmatpush1.msra.mxu0 0.0
  %1788 = vmatprep.subr.mxu0 0.0
  %1789 = vmatpush1.msra.mxu0 0.0
  %1790 = vmatprep.subr.mxu0 0.0
  %1791 = vmatpush1.msra.mxu0 0.0
  %1792 = vmatprep.subr.mxu0 0.0
  %1793 = vmatpush1.msra.mxu0 0.0
  %1794 = vmatprep.subr.mxu0 0.0
  %1795 = vmatpush1.msra.mxu0 0.0
  %1796 = vmatprep.subr.mxu0 0.0
  %1797 = vmatpush1.msra.mxu0 0.0
  %1798 = vmatprep.subr.mxu0 0.0
  %1799 = vmatpush1.msra.mxu0 0.0
  %1800 = vmatprep.subr.mxu0 0.0
  %1801 = vmatpush1.msra.mxu0 0.0
  %1802 = vmatprep.subr.mxu0 0.0
  %1803 = vmatpush1.msra.mxu0 0.0
  %1804 = vmatprep.subr.mxu0 0.0
  %1805 = vmatpush1.msra.mxu0 0.0
  %1806 = vmatprep.subr.mxu0 0.0
  %1807 = vmatpush1.msra.mxu0 0.0
  %1808 = vmatprep.subr.mxu0 0.0
  %1809 = vmatpush1.msra.mxu0 0.0
  %1810 = vmatprep.subr.mxu0 0.0
  %1811 = vmatpush1.msra.mxu0 0.0
  %1812 = vmatprep.subr.mxu0 0.0
  %1813 = vmatpush1.msra.mxu0 0.0
  %1814 = vmatprep.subr.mxu0 0.0
  %1815 = vmatpush1.msra.mxu0 0.0
  %1816 = vmatprep.subr.mxu0 0.0
  %1817 = vmatpush1.msra.mxu0 0.0
  %1818 = vmatprep.subr.mxu0 0.0
  %1819 = vmatpush1.msra.mxu0 0.0
  %1820 = vmatprep.subr.mxu0 0.0
  %1821 = vmatpush1.msra.mxu0 0.0
  %1822 = vmatprep.subr.mxu0 0.0
  %1823 = vmatpush1.msra.mxu0 0.0
  %1824 = vmatprep.mubr.f32.mxu0 0.0
  %1825 = vmatmul.mubr.f32.gmra.mrb[0].mxu0 %v1749
  %v1826 = vpop.f32.mrb[0].mxu0
  %v1827 = vadd.f32 0.0, %v1826
  %v1828 = vpop.f32.mrb[0].mxu0
  %1829 = vmatprep.mubr.f32.mxu0 0.0
  %1830 = vmatmul.mubr.f32.gmra.mrb[0].mxu0 %v1752
  %v1831 = vpop.f32.mrb[0].mxu0
  %v1832 = vadd.f32 0.0, %v1831
  %v1833 = vpop.f32.mrb[0].mxu0
  %1834 = vmatprep.mubr.f32.mxu0 0.0
  %1835 = vmatmul.mubr.f32.gmra.mrb[0].mxu0 %v1755
  %v1836 = vpop.f32.mrb[0].mxu0
  %v1837 = vadd.f32 0.0, %v1836
  %v1838 = vpop.f32.mrb[0].mxu0
  %1839 = vmatprep.mubr.f32.mxu0 0.0
  %1840 = vmatmul.mubr.f32.gmra.mrb[0].mxu0 %v1758
  %v1841 = vpop.f32.mrb[0].mxu0
  %v1842 = vadd.f32 0.0, %v1841
  %v1843 = vpop.f32.mrb[0].mxu0
  %1844 = vdwg.mxu0
  %v1845 = vadd.f32 %v1504, %v1827
  %v1846 = vadd.f32 %v1505, %v1832
  %v1847 = vadd.f32 %v1506, %v1837
  %v1848 = vadd.f32 %v1507, %v1842
  %s1849 = scalar_lea.vmem %s2, 2048
  %v1850 = vld [vmem:[%s1849] sm:$0xff]
  %v1851 = vld [vmem:[%s1849 + $0x8] sm:$0xff]
  %v1852 = vld [vmem:[%s1849 + $0x10] sm:$0xff]
  %v1853 = vld [vmem:[%s1849 + $0x18] sm:$0xff]
  %v1854 = vld [vmem:[%s1849 + $0x20] sm:$0xff]
  %v1855 = vld [vmem:[%s1849 + $0x28] sm:$0xff]
  %v1856 = vld [vmem:[%s1849 + $0x30] sm:$0xff]
  %v1857 = vld [vmem:[%s1849 + $0x38] sm:$0xff]
  %v1858 = vld [vmem:[%s1849 + $0x40] sm:$0xff]
  %v1859 = vld [vmem:[%s1849 + $0x48] sm:$0xff]
  %v1860 = vld [vmem:[%s1849 + $0x50] sm:$0xff]
  %v1861 = vld [vmem:[%s1849 + $0x58] sm:$0xff]
  %v1862 = vld [vmem:[%s1849 + $0x60] sm:$0xff]
  %v1863 = vld [vmem:[%s1849 + $0x68] sm:$0xff]
  %v1864 = vld [vmem:[%s1849 + $0x70] sm:$0xff]
  %v1865 = vld [vmem:[%s1849 + $0x78] sm:$0xff]
  %v1866 = vld [vmem:[%s1849 + $0x80] sm:$0xff]
  %v1867 = vld [vmem:[%s1849 + $0x88] sm:$0xff]
  %v1868 = vld [vmem:[%s1849 + $0x90] sm:$0xff]
  %v1869 = vld [vmem:[%s1849 + $0x98] sm:$0xff]
  %v1870 = vld [vmem:[%s1849 + $0xa0] sm:$0xff]
  %v1871 = vld [vmem:[%s1849 + $0xa8] sm:$0xff]
  %v1872 = vld [vmem:[%s1849 + $0xb0] sm:$0xff]
  %v1873 = vld [vmem:[%s1849 + $0xb8] sm:$0xff]
  %v1874 = vld [vmem:[%s1849 + $0xc0] sm:$0xff]
  %v1875 = vld [vmem:[%s1849 + $0xc8] sm:$0xff]
  %v1876 = vld [vmem:[%s1849 + $0xd0] sm:$0xff]
  %v1877 = vld [vmem:[%s1849 + $0xd8] sm:$0xff]
  %v1878 = vld [vmem:[%s1849 + $0xe0] sm:$0xff]
  %v1879 = vld [vmem:[%s1849 + $0xe8] sm:$0xff]
  %v1880 = vld [vmem:[%s1849 + $0xf0] sm:$0xff]
  %v1881 = vld [vmem:[%s1849 + $0xf8] sm:$0xff]
  %v1882 = vld [vmem:[%s1849 + $0x100] sm:$0xff]
  %v1883 = vld [vmem:[%s1849 + $0x108] sm:$0xff]
  %v1884 = vld [vmem:[%s1849 + $0x110] sm:$0xff]
  %v1885 = vld [vmem:[%s1849 + $0x118] sm:$0xff]
  %v1886 = vld [vmem:[%s1849 + $0x120] sm:$0xff]
  %v1887 = vld [vmem:[%s1849 + $0x128] sm:$0xff]
  %v1888 = vld [vmem:[%s1849 + $0x130] sm:$0xff]
  %v1889 = vld [vmem:[%s1849 + $0x138] sm:$0xff]
  %v1890 = vld [vmem:[%s1849 + $0x140] sm:$0xff]
  %v1891 = vld [vmem:[%s1849 + $0x148] sm:$0xff]
  %v1892 = vld [vmem:[%s1849 + $0x150] sm:$0xff]
  %v1893 = vld [vmem:[%s1849 + $0x158] sm:$0xff]
  %v1894 = vld [vmem:[%s1849 + $0x160] sm:$0xff]
  %v1895 = vld [vmem:[%s1849 + $0x168] sm:$0xff]
  %v1896 = vld [vmem:[%s1849 + $0x170] sm:$0xff]
  %v1897 = vld [vmem:[%s1849 + $0x178] sm:$0xff]
  %v1898 = vld [vmem:[%s1849 + $0x180] sm:$0xff]
  %v1899 = vld [vmem:[%s1849 + $0x188] sm:$0xff]
  %v1900 = vld [vmem:[%s1849 + $0x190] sm:$0xff]
  %v1901 = vld [vmem:[%s1849 + $0x198] sm:$0xff]
  %v1902 = vld [vmem:[%s1849 + $0x1a0] sm:$0xff]
  %v1903 = vld [vmem:[%s1849 + $0x1a8] sm:$0xff]
  %v1904 = vld [vmem:[%s1849 + $0x1b0] sm:$0xff]
  %v1905 = vld [vmem:[%s1849 + $0x1b8] sm:$0xff]
  %v1906 = vld [vmem:[%s1849 + $0x1c0] sm:$0xff]
  %v1907 = vld [vmem:[%s1849 + $0x1c8] sm:$0xff]
  %v1908 = vld [vmem:[%s1849 + $0x1d0] sm:$0xff]
  %v1909 = vld [vmem:[%s1849 + $0x1d8] sm:$0xff]
  %v1910 = vld [vmem:[%s1849 + $0x1e0] sm:$0xff]
  %v1911 = vld [vmem:[%s1849 + $0x1e8] sm:$0xff]
  %v1912 = vld [vmem:[%s1849 + $0x1f0] sm:$0xff]
  %v1913 = vld [vmem:[%s1849 + $0x1f8] sm:$0xff]
  %1914 = vmatprep.subr.mxu0 0.0
  %1915 = vmatpush1.msra.mxu0 %v1850
  %1916 = vmatprep.subr.mxu0 0.0
  %1917 = vmatpush1.msra.mxu0 %v1851
  %1918 = vmatprep.subr.mxu0 0.0
  %1919 = vmatpush1.msra.mxu0 %v1852
  %1920 = vmatprep.subr.mxu0 0.0
  %1921 = vmatpush1.msra.mxu0 %v1853
  %1922 = vmatprep.subr.mxu0 0.0
  %1923 = vmatpush1.msra.mxu0 %v1854
  %1924 = vmatprep.subr.mxu0 0.0
  %1925 = vmatpush1.msra.mxu0 %v1855
  %1926 = vmatprep.subr.mxu0 0.0
  %1927 = vmatpush1.msra.mxu0 %v1856
  %1928 = vmatprep.subr.mxu0 0.0
  %1929 = vmatpush1.msra.mxu0 %v1857
  %1930 = vmatprep.subr.mxu0 0.0
  %1931 = vmatpush1.msra.mxu0 %v1858
  %1932 = vmatprep.subr.mxu0 0.0
  %1933 = vmatpush1.msra.mxu0 %v1859
  %1934 = vmatprep.subr.mxu0 0.0
  %1935 = vmatpush1.msra.mxu0 %v1860
  %1936 = vmatprep.subr.mxu0 0.0
  %1937 = vmatpush1.msra.mxu0 %v1861
  %1938 = vmatprep.subr.mxu0 0.0
  %1939 = vmatpush1.msra.mxu0 %v1862
  %1940 = vmatprep.subr.mxu0 0.0
  %1941 = vmatpush1.msra.mxu0 %v1863
  %1942 = vmatprep.subr.mxu0 0.0
  %1943 = vmatpush1.msra.mxu0 %v1864
  %1944 = vmatprep.subr.mxu0 0.0
  %1945 = vmatpush1.msra.mxu0 %v1865
  %1946 = vmatprep.subr.mxu0 0.0
  %1947 = vmatpush1.msra.mxu0 %v1866
  %1948 = vmatprep.subr.mxu0 0.0
  %1949 = vmatpush1.msra.mxu0 %v1867
  %1950 = vmatprep.subr.mxu0 0.0
  %1951 = vmatpush1.msra.mxu0 %v1868
  %1952 = vmatprep.subr.mxu0 0.0
  %1953 = vmatpush1.msra.mxu0 %v1869
  %1954 = vmatprep.subr.mxu0 0.0
  %1955 = vmatpush1.msra.mxu0 %v1870
  %1956 = vmatprep.subr.mxu0 0.0
  %1957 = vmatpush1.msra.mxu0 %v1871
  %1958 = vmatprep.subr.mxu0 0.0
  %1959 = vmatpush1.msra.mxu0 %v1872
  %1960 = vmatprep.subr.mxu0 0.0
  %1961 = vmatpush1.msra.mxu0 %v1873
  %1962 = vmatprep.subr.mxu0 0.0
  %1963 = vmatpush1.msra.mxu0 %v1874
  %1964 = vmatprep.subr.mxu0 0.0
  %1965 = vmatpush1.msra.mxu0 %v1875
  %1966 = vmatprep.subr.mxu0 0.0
  %1967 = vmatpush1.msra.mxu0 %v1876
  %1968 = vmatprep.subr.mxu0 0.0
  %1969 = vmatpush1.msra.mxu0 %v1877
  %1970 = vmatprep.subr.mxu0 0.0
  %1971 = vmatpush1.msra.mxu0 %v1878
  %1972 = vmatprep.subr.mxu0 0.0
  %1973 = vmatpush1.msra.mxu0 %v1879
  %1974 = vmatprep.subr.mxu0 0.0
  %1975 = vmatpush1.msra.mxu0 %v1880
  %1976 = vmatprep.subr.mxu0 0.0
  %1977 = vmatpush1.msra.mxu0 %v1881
  %1978 = vmatprep.mubr.f32.mxu0 %v479
  %1979 = vmatmul.mubr.f32.gmra.mrb[0].mxu0 %v478
  %v1980 = vpop.f32.mrb[0].mxu0
  %v1981 = vadd.f32 0.0, %v1980
  %v1982 = vpop.f32.mrb[0].mxu0
  %1983 = vmatprep.mubr.f32.mxu0 %v483
  %1984 = vmatmul.mubr.f32.gmra.mrb[0].mxu0 %v482
  %v1985 = vpop.f32.mrb[0].mxu0
  %v1986 = vadd.f32 0.0, %v1985
  %v1987 = vpop.f32.mrb[0].mxu0
  %1988 = vmatprep.mubr.f32.mxu0 %v487
  %1989 = vmatmul.mubr.f32.gmra.mrb[0].mxu0 %v486
  %v1990 = vpop.f32.mrb[0].mxu0
  %v1991 = vadd.f32 0.0, %v1990
  %v1992 = vpop.f32.mrb[0].mxu0
  %1993 = vmatprep.mubr.f32.mxu0 %v491
  %1994 = vmatmul.mubr.f32.gmra.mrb[0].mxu0 %v490
  %v1995 = vpop.f32.mrb[0].mxu0
  %v1996 = vadd.f32 0.0, %v1995
  %v1997 = vpop.f32.mrb[0].mxu0
  %1998 = vdwg.mxu0
  %1999 = vmatprep.subr.mxu0 0.0
  %2000 = vmatpush1.msra.mxu0 %v1882
  %2001 = vmatprep.subr.mxu0 0.0
  %2002 = vmatpush1.msra.mxu0 %v1883
  %2003 = vmatprep.subr.mxu0 0.0
  %2004 = vmatpush1.msra.mxu0 %v1884
  %2005 = vmatprep.subr.mxu0 0.0
  %2006 = vmatpush1.msra.mxu0 %v1885
  %2007 = vmatprep.subr.mxu0 0.0
  %2008 = vmatpush1.msra.mxu0 %v1886
  %2009 = vmatprep.subr.mxu0 0.0
  %2010 = vmatpush1.msra.mxu0 %v1887
  %2011 = vmatprep.subr.mxu0 0.0
  %2012 = vmatpush1.msra.mxu0 %v1888
  %2013 = vmatprep.subr.mxu0 0.0
  %2014 = vmatpush1.msra.mxu0 %v1889
  %2015 = vmatprep.subr.mxu0 0.0
  %2016 = vmatpush1.msra.mxu0 %v1890
  %2017 = vmatprep.subr.mxu0 0.0
  %2018 = vmatpush1.msra.mxu0 %v1891
  %2019 = vmatprep.subr.mxu0 0.0
  %2020 = vmatpush1.msra.mxu0 %v1892
  %2021 = vmatprep.subr.mxu0 0.0
  %2022 = vmatpush1.msra.mxu0 %v1893
  %2023 = vmatprep.subr.mxu0 0.0
  %2024 = vmatpush1.msra.mxu0 %v1894
  %2025 = vmatprep.subr.mxu0 0.0
  %2026 = vmatpush1.msra.mxu0 %v1895
  %2027 = vmatprep.subr.mxu0 0.0
  %2028 = vmatpush1.msra.mxu0 %v1896
  %2029 = vmatprep.subr.mxu0 0.0
  %2030 = vmatpush1.msra.mxu0 %v1897
  %2031 = vmatprep.subr.mxu0 0.0
  %2032 = vmatpush1.msra.mxu0 %v1898
  %2033 = vmatprep.subr.mxu0 0.0
  %2034 = vmatpush1.msra.mxu0 %v1899
  %2035 = vmatprep.subr.mxu0 0.0
  %2036 = vmatpush1.msra.mxu0 %v1900
  %2037 = vmatprep.subr.mxu0 0.0
  %2038 = vmatpush1.msra.mxu0 %v1901
  %2039 = vmatprep.subr.mxu0 0.0
  %2040 = vmatpush1.msra.mxu0 %v1902
  %2041 = vmatprep.subr.mxu0 0.0
  %2042 = vmatpush1.msra.mxu0 %v1903
  %2043 = vmatprep.subr.mxu0 0.0
  %2044 = vmatpush1.msra.mxu0 %v1904
  %2045 = vmatprep.subr.mxu0 0.0
  %2046 = vmatpush1.msra.mxu0 %v1905
  %2047 = vmatprep.subr.mxu0 0.0
  %2048 = vmatpush1.msra.mxu0 %v1906
  %2049 = vmatprep.subr.mxu0 0.0
  %2050 = vmatpush1.msra.mxu0 %v1907
  %2051 = vmatprep.subr.mxu0 0.0
  %2052 = vmatpush1.msra.mxu0 %v1908
  %2053 = vmatprep.subr.mxu0 0.0
  %2054 = vmatpush1.msra.mxu0 %v1909
  %2055 = vmatprep.subr.mxu0 0.0
  %2056 = vmatpush1.msra.mxu0 %v1910
  %2057 = vmatprep.subr.mxu0 0.0
  %2058 = vmatpush1.msra.mxu0 %v1911
  %2059 = vmatprep.subr.mxu0 0.0
  %2060 = vmatpush1.msra.mxu0 %v1912
  %2061 = vmatprep.subr.mxu0 0.0
  %2062 = vmatpush1.msra.mxu0 %v1913
  %2063 = vmatprep.mubr.f32.mxu0 %v481
  %2064 = vmatmul.mubr.f32.gmra.mrb[0].mxu0 %v480
  %v2065 = vpop.f32.mrb[0].mxu0
  %v2066 = vadd.f32 %v1981, %v2065
  %v2067 = vpop.f32.mrb[0].mxu0
  %2068 = vmatprep.mubr.f32.mxu0 %v485
  %2069 = vmatmul.mubr.f32.gmra.mrb[0].mxu0 %v484
  %v2070 = vpop.f32.mrb[0].mxu0
  %v2071 = vadd.f32 %v1986, %v2070
  %v2072 = vpop.f32.mrb[0].mxu0
  %2073 = vmatprep.mubr.f32.mxu0 %v489
  %2074 = vmatmul.mubr.f32.gmra.mrb[0].mxu0 %v488
  %v2075 = vpop.f32.mrb[0].mxu0
  %v2076 = vadd.f32 %v1991, %v2075
  %v2077 = vpop.f32.mrb[0].mxu0
  %2078 = vmatprep.mubr.f32.mxu0 %v493
  %2079 = vmatmul.mubr.f32.gmra.mrb[0].mxu0 %v492
  %v2080 = vpop.f32.mrb[0].mxu0
  %v2081 = vadd.f32 %v1996, %v2080
  %v2082 = vpop.f32.mrb[0].mxu0
  %2083 = vdwg.mxu0
  %s2084 = scalar_lea.vmem %s3, 128
  %v2085 = vld [vmem:[%s2084] sm:$0xff]
  %v2086 = vld [vmem:[%s2084 + $0x8] sm:$0xff]
  %v2087 = vld [vmem:[%s2084 + $0x10] sm:$0xff]
  %v2088 = vld [vmem:[%s2084 + $0x18] sm:$0xff]
  %v2090 = vsel %vm972, %v2085, 0
  %v2093 = vsel %vm972, %v2086, 0
  %v2096 = vsel %vm972, %v2087, 0
  %v2099 = vsel %vm972, %v2088, 0
  %2101 = vmatprep.subr.mxu0 0.0
  %2102 = vmatpush1.msra.mxu0 %v2066
  %2103 = vmatprep.subr.mxu0 0.0
  %2104 = vmatpush1.msra.mxu0 %v2071
  %2105 = vmatprep.subr.mxu0 0.0
  %2106 = vmatpush1.msra.mxu0 %v2076
  %2107 = vmatprep.subr.mxu0 0.0
  %2108 = vmatpush1.msra.mxu0 %v2081
  %2109 = vmatprep.subr.mxu0 0.0
  %2110 = vmatpush1.msra.mxu0 0.0
  %2111 = vmatprep.subr.mxu0 0.0
  %2112 = vmatpush1.msra.mxu0 0.0
  %2113 = vmatprep.subr.mxu0 0.0
  %2114 = vmatpush1.msra.mxu0 0.0
  %2115 = vmatprep.subr.mxu0 0.0
  %2116 = vmatpush1.msra.mxu0 0.0
  %2117 = vmatprep.subr.mxu0 0.0
  %2118 = vmatpush1.msra.mxu0 0.0
  %2119 = vmatprep.subr.mxu0 0.0
  %2120 = vmatpush1.msra.mxu0 0.0
  %2121 = vmatprep.subr.mxu0 0.0
  %2122 = vmatpush1.msra.mxu0 0.0
  %2123 = vmatprep.subr.mxu0 0.0
  %2124 = vmatpush1.msra.mxu0 0.0
  %2125 = vmatprep.subr.mxu0 0.0
  %2126 = vmatpush1.msra.mxu0 0.0
  %2127 = vmatprep.subr.mxu0 0.0
  %2128 = vmatpush1.msra.mxu0 0.0
  %2129 = vmatprep.subr.mxu0 0.0
  %2130 = vmatpush1.msra.mxu0 0.0
  %2131 = vmatprep.subr.mxu0 0.0
  %2132 = vmatpush1.msra.mxu0 0.0
  %2133 = vmatprep.subr.mxu0 0.0
  %2134 = vmatpush1.msra.mxu0 0.0
  %2135 = vmatprep.subr.mxu0 0.0
  %2136 = vmatpush1.msra.mxu0 0.0
  %2137 = vmatprep.subr.mxu0 0.0
  %2138 = vmatpush1.msra.mxu0 0.0
  %2139 = vmatprep.subr.mxu0 0.0
  %2140 = vmatpush1.msra.mxu0 0.0
  %2141 = vmatprep.subr.mxu0 0.0
  %2142 = vmatpush1.msra.mxu0 0.0
  %2143 = vmatprep.subr.mxu0 0.0
  %2144 = vmatpush1.msra.mxu0 0.0
  %2145 = vmatprep.subr.mxu0 0.0
  %2146 = vmatpush1.msra.mxu0 0.0
  %2147 = vmatprep.subr.mxu0 0.0
  %2148 = vmatpush1.msra.mxu0 0.0
  %2149 = vmatprep.subr.mxu0 0.0
  %2150 = vmatpush1.msra.mxu0 0.0
  %2151 = vmatprep.subr.mxu0 0.0
  %2152 = vmatpush1.msra.mxu0 0.0
  %2153 = vmatprep.subr.mxu0 0.0
  %2154 = vmatpush1.msra.mxu0 0.0
  %2155 = vmatprep.subr.mxu0 0.0
  %2156 = vmatpush1.msra.mxu0 0.0
  %2157 = vmatprep.subr.mxu0 0.0
  %2158 = vmatpush1.msra.mxu0 0.0
  %2159 = vmatprep.subr.mxu0 0.0
  %2160 = vmatpush1.msra.mxu0 0.0
  %2161 = vmatprep.subr.mxu0 0.0
  %2162 = vmatpush1.msra.mxu0 0.0
  %2163 = vmatprep.subr.mxu0 0.0
  %2164 = vmatpush1.msra.mxu0 0.0
  %2165 = vmatprep.mubr.f32.mxu0 0.0
  %2166 = vmatmul.mubr.f32.gmra.mrb[0].mxu0 %v2090
  %v2167 = vpop.f32.mrb[0].mxu0
  %v2168 = vadd.f32 0.0, %v2167
  %v2169 = vpop.f32.mrb[0].mxu0
  %2170 = vmatprep.mubr.f32.mxu0 0.0
  %2171 = vmatmul.mubr.f32.gmra.mrb[0].mxu0 %v2093
  %v2172 = vpop.f32.mrb[0].mxu0
  %v2173 = vadd.f32 0.0, %v2172
  %v2174 = vpop.f32.mrb[0].mxu0
  %2175 = vmatprep.mubr.f32.mxu0 0.0
  %2176 = vmatmul.mubr.f32.gmra.mrb[0].mxu0 %v2096
  %v2177 = vpop.f32.mrb[0].mxu0
  %v2178 = vadd.f32 0.0, %v2177
  %v2179 = vpop.f32.mrb[0].mxu0
  %2180 = vmatprep.mubr.f32.mxu0 0.0
  %2181 = vmatmul.mubr.f32.gmra.mrb[0].mxu0 %v2099
  %v2182 = vpop.f32.mrb[0].mxu0
  %v2183 = vadd.f32 0.0, %v2182
  %v2184 = vpop.f32.mrb[0].mxu0
  %2185 = vdwg.mxu0
  %v2186 = vadd.f32 %v1845, %v2168
  %v2187 = vadd.f32 %v1846, %v2173
  %v2188 = vadd.f32 %v1847, %v2178
  %v2189 = vadd.f32 %v1848, %v2183
  %s2190 = scalar_lea.vmem %s2, 2560
  %v2191 = vld [vmem:[%s2190] sm:$0xff]
  %v2192 = vld [vmem:[%s2190 + $0x8] sm:$0xff]
  %v2193 = vld [vmem:[%s2190 + $0x10] sm:$0xff]
  %v2194 = vld [vmem:[%s2190 + $0x18] sm:$0xff]
  %v2195 = vld [vmem:[%s2190 + $0x20] sm:$0xff]
  %v2196 = vld [vmem:[%s2190 + $0x28] sm:$0xff]
  %v2197 = vld [vmem:[%s2190 + $0x30] sm:$0xff]
  %v2198 = vld [vmem:[%s2190 + $0x38] sm:$0xff]
  %v2199 = vld [vmem:[%s2190 + $0x40] sm:$0xff]
  %v2200 = vld [vmem:[%s2190 + $0x48] sm:$0xff]
  %v2201 = vld [vmem:[%s2190 + $0x50] sm:$0xff]
  %v2202 = vld [vmem:[%s2190 + $0x58] sm:$0xff]
  %v2203 = vld [vmem:[%s2190 + $0x60] sm:$0xff]
  %v2204 = vld [vmem:[%s2190 + $0x68] sm:$0xff]
  %v2205 = vld [vmem:[%s2190 + $0x70] sm:$0xff]
  %v2206 = vld [vmem:[%s2190 + $0x78] sm:$0xff]
  %v2207 = vld [vmem:[%s2190 + $0x80] sm:$0xff]
  %v2208 = vld [vmem:[%s2190 + $0x88] sm:$0xff]
  %v2209 = vld [vmem:[%s2190 + $0x90] sm:$0xff]
  %v2210 = vld [vmem:[%s2190 + $0x98] sm:$0xff]
  %v2211 = vld [vmem:[%s2190 + $0xa0] sm:$0xff]
  %v2212 = vld [vmem:[%s2190 + $0xa8] sm:$0xff]
  %v2213 = vld [vmem:[%s2190 + $0xb0] sm:$0xff]
  %v2214 = vld [vmem:[%s2190 + $0xb8] sm:$0xff]
  %v2215 = vld [vmem:[%s2190 + $0xc0] sm:$0xff]
  %v2216 = vld [vmem:[%s2190 + $0xc8] sm:$0xff]
  %v2217 = vld [vmem:[%s2190 + $0xd0] sm:$0xff]
  %v2218 = vld [vmem:[%s2190 + $0xd8] sm:$0xff]
  %v2219 = vld [vmem:[%s2190 + $0xe0] sm:$0xff]
  %v2220 = vld [vmem:[%s2190 + $0xe8] sm:$0xff]
  %v2221 = vld [vmem:[%s2190 + $0xf0] sm:$0xff]
  %v2222 = vld [vmem:[%s2190 + $0xf8] sm:$0xff]
  %v2223 = vld [vmem:[%s2190 + $0x100] sm:$0xff]
  %v2224 = vld [vmem:[%s2190 + $0x108] sm:$0xff]
  %v2225 = vld [vmem:[%s2190 + $0x110] sm:$0xff]
  %v2226 = vld [vmem:[%s2190 + $0x118] sm:$0xff]
  %v2227 = vld [vmem:[%s2190 + $0x120] sm:$0xff]
  %v2228 = vld [vmem:[%s2190 + $0x128] sm:$0xff]
  %v2229 = vld [vmem:[%s2190 + $0x130] sm:$0xff]
  %v2230 = vld [vmem:[%s2190 + $0x138] sm:$0xff]
  %v2231 = vld [vmem:[%s2190 + $0x140] sm:$0xff]
  %v2232 = vld [vmem:[%s2190 + $0x148] sm:$0xff]
  %v2233 = vld [vmem:[%s2190 + $0x150] sm:$0xff]
  %v2234 = vld [vmem:[%s2190 + $0x158] sm:$0xff]
  %v2235 = vld [vmem:[%s2190 + $0x160] sm:$0xff]
  %v2236 = vld [vmem:[%s2190 + $0x168] sm:$0xff]
  %v2237 = vld [vmem:[%s2190 + $0x170] sm:$0xff]
  %v2238 = vld [vmem:[%s2190 + $0x178] sm:$0xff]
  %v2239 = vld [vmem:[%s2190 + $0x180] sm:$0xff]
  %v2240 = vld [vmem:[%s2190 + $0x188] sm:$0xff]
  %v2241 = vld [vmem:[%s2190 + $0x190] sm:$0xff]
  %v2242 = vld [vmem:[%s2190 + $0x198] sm:$0xff]
  %v2243 = vld [vmem:[%s2190 + $0x1a0] sm:$0xff]
  %v2244 = vld [vmem:[%s2190 + $0x1a8] sm:$0xff]
  %v2245 = vld [vmem:[%s2190 + $0x1b0] sm:$0xff]
  %v2246 = vld [vmem:[%s2190 + $0x1b8] sm:$0xff]
  %v2247 = vld [vmem:[%s2190 + $0x1c0] sm:$0xff]
  %v2248 = vld [vmem:[%s2190 + $0x1c8] sm:$0xff]
  %v2249 = vld [vmem:[%s2190 + $0x1d0] sm:$0xff]
  %v2250 = vld [vmem:[%s2190 + $0x1d8] sm:$0xff]
  %v2251 = vld [vmem:[%s2190 + $0x1e0] sm:$0xff]
  %v2252 = vld [vmem:[%s2190 + $0x1e8] sm:$0xff]
  %v2253 = vld [vmem:[%s2190 + $0x1f0] sm:$0xff]
  %v2254 = vld [vmem:[%s2190 + $0x1f8] sm:$0xff]
  %2255 = vmatprep.subr.mxu0 0.0
  %2256 = vmatpush1.msra.mxu0 %v2191
  %2257 = vmatprep.subr.mxu0 0.0
  %2258 = vmatpush1.msra.mxu0 %v2192
  %2259 = vmatprep.subr.mxu0 0.0
  %2260 = vmatpush1.msra.mxu0 %v2193
  %2261 = vmatprep.subr.mxu0 0.0
  %2262 = vmatpush1.msra.mxu0 %v2194
  %2263 = vmatprep.subr.mxu0 0.0
  %2264 = vmatpush1.msra.mxu0 %v2195
  %2265 = vmatprep.subr.mxu0 0.0
  %2266 = vmatpush1.msra.mxu0 %v2196
  %2267 = vmatprep.subr.mxu0 0.0
  %2268 = vmatpush1.msra.mxu0 %v2197
  %2269 = vmatprep.subr.mxu0 0.0
  %2270 = vmatpush1.msra.mxu0 %v2198
  %2271 = vmatprep.subr.mxu0 0.0
  %2272 = vmatpush1.msra.mxu0 %v2199
  %2273 = vmatprep.subr.mxu0 0.0
  %2274 = vmatpush1.msra.mxu0 %v2200
  %2275 = vmatprep.subr.mxu0 0.0
  %2276 = vmatpush1.msra.mxu0 %v2201
  %2277 = vmatprep.subr.mxu0 0.0
  %2278 = vmatpush1.msra.mxu0 %v2202
  %2279 = vmatprep.subr.mxu0 0.0
  %2280 = vmatpush1.msra.mxu0 %v2203
  %2281 = vmatprep.subr.mxu0 0.0
  %2282 = vmatpush1.msra.mxu0 %v2204
  %2283 = vmatprep.subr.mxu0 0.0
  %2284 = vmatpush1.msra.mxu0 %v2205
  %2285 = vmatprep.subr.mxu0 0.0
  %2286 = vmatpush1.msra.mxu0 %v2206
  %2287 = vmatprep.subr.mxu0 0.0
  %2288 = vmatpush1.msra.mxu0 %v2207
  %2289 = vmatprep.subr.mxu0 0.0
  %2290 = vmatpush1.msra.mxu0 %v2208
  %2291 = vmatprep.subr.mxu0 0.0
  %2292 = vmatpush1.msra.mxu0 %v2209
  %2293 = vmatprep.subr.mxu0 0.0
  %2294 = vmatpush1.msra.mxu0 %v2210
  %2295 = vmatprep.subr.mxu0 0.0
  %2296 = vmatpush1.msra.mxu0 %v2211
  %2297 = vmatprep.subr.mxu0 0.0
  %2298 = vmatpush1.msra.mxu0 %v2212
  %2299 = vmatprep.subr.mxu0 0.0
  %2300 = vmatpush1.msra.mxu0 %v2213
  %2301 = vmatprep.subr.mxu0 0.0
  %2302 = vmatpush1.msra.mxu0 %v2214
  %2303 = vmatprep.subr.mxu0 0.0
  %2304 = vmatpush1.msra.mxu0 %v2215
  %2305 = vmatprep.subr.mxu0 0.0
  %2306 = vmatpush1.msra.mxu0 %v2216
  %2307 = vmatprep.subr.mxu0 0.0
  %2308 = vmatpush1.msra.mxu0 %v2217
  %2309 = vmatprep.subr.mxu0 0.0
  %2310 = vmatpush1.msra.mxu0 %v2218
  %2311 = vmatprep.subr.mxu0 0.0
  %2312 = vmatpush1.msra.mxu0 %v2219
  %2313 = vmatprep.subr.mxu0 0.0
  %2314 = vmatpush1.msra.mxu0 %v2220
  %2315 = vmatprep.subr.mxu0 0.0
  %2316 = vmatpush1.msra.mxu0 %v2221
  %2317 = vmatprep.subr.mxu0 0.0
  %2318 = vmatpush1.msra.mxu0 %v2222
  %2319 = vmatprep.mubr.f32.mxu0 %v479
  %2320 = vmatmul.mubr.f32.gmra.mrb[0].mxu0 %v478
  %v2321 = vpop.f32.mrb[0].mxu0
  %v2322 = vadd.f32 0.0, %v2321
  %v2323 = vpop.f32.mrb[0].mxu0
  %2324 = vmatprep.mubr.f32.mxu0 %v483
  %2325 = vmatmul.mubr.f32.gmra.mrb[0].mxu0 %v482
  %v2326 = vpop.f32.mrb[0].mxu0
  %v2327 = vadd.f32 0.0, %v2326
  %v2328 = vpop.f32.mrb[0].mxu0
  %2329 = vmatprep.mubr.f32.mxu0 %v487
  %2330 = vmatmul.mubr.f32.gmra.mrb[0].mxu0 %v486
  %v2331 = vpop.f32.mrb[0].mxu0
  %v2332 = vadd.f32 0.0, %v2331
  %v2333 = vpop.f32.mrb[0].mxu0
  %2334 = vmatprep.mubr.f32.mxu0 %v491
  %2335 = vmatmul.mubr.f32.gmra.mrb[0].mxu0 %v490
  %v2336 = vpop.f32.mrb[0].mxu0
  %v2337 = vadd.f32 0.0, %v2336
  %v2338 = vpop.f32.mrb[0].mxu0
  %2339 = vdwg.mxu0
  %2340 = vmatprep.subr.mxu0 0.0
  %2341 = vmatpush1.msra.mxu0 %v2223
  %2342 = vmatprep.subr.mxu0 0.0
  %2343 = vmatpush1.msra.mxu0 %v2224
  %2344 = vmatprep.subr.mxu0 0.0
  %2345 = vmatpush1.msra.mxu0 %v2225
  %2346 = vmatprep.subr.mxu0 0.0
  %2347 = vmatpush1.msra.mxu0 %v2226
  %2348 = vmatprep.subr.mxu0 0.0
  %2349 = vmatpush1.msra.mxu0 %v2227
  %2350 = vmatprep.subr.mxu0 0.0
  %2351 = vmatpush1.msra.mxu0 %v2228
  %2352 = vmatprep.subr.mxu0 0.0
  %2353 = vmatpush1.msra.mxu0 %v2229
  %2354 = vmatprep.subr.mxu0 0.0
  %2355 = vmatpush1.msra.mxu0 %v2230
  %2356 = vmatprep.subr.mxu0 0.0
  %2357 = vmatpush1.msra.mxu0 %v2231
  %2358 = vmatprep.subr.mxu0 0.0
  %2359 = vmatpush1.msra.mxu0 %v2232
  %2360 = vmatprep.subr.mxu0 0.0
  %2361 = vmatpush1.msra.mxu0 %v2233
  %2362 = vmatprep.subr.mxu0 0.0
  %2363 = vmatpush1.msra.mxu0 %v2234
  %2364 = vmatprep.subr.mxu0 0.0
  %2365 = vmatpush1.msra.mxu0 %v2235
  %2366 = vmatprep.subr.mxu0 0.0
  %2367 = vmatpush1.msra.mxu0 %v2236
  %2368 = vmatprep.subr.mxu0 0.0
  %2369 = vmatpush1.msra.mxu0 %v2237
  %2370 = vmatprep.subr.mxu0 0.0
  %2371 = vmatpush1.msra.mxu0 %v2238
  %2372 = vmatprep.subr.mxu0 0.0
  %2373 = vmatpush1.msra.mxu0 %v2239
  %2374 = vmatprep.subr.mxu0 0.0
  %2375 = vmatpush1.msra.mxu0 %v2240
  %2376 = vmatprep.subr.mxu0 0.0
  %2377 = vmatpush1.msra.mxu0 %v2241
  %2378 = vmatprep.subr.mxu0 0.0
  %2379 = vmatpush1.msra.mxu0 %v2242
  %2380 = vmatprep.subr.mxu0 0.0
  %2381 = vmatpush1.msra.mxu0 %v2243
  %2382 = vmatprep.subr.mxu0 0.0
  %2383 = vmatpush1.msra.mxu0 %v2244
  %2384 = vmatprep.subr.mxu0 0.0
  %2385 = vmatpush1.msra.mxu0 %v2245
  %2386 = vmatprep.subr.mxu0 0.0
  %2387 = vmatpush1.msra.mxu0 %v2246
  %2388 = vmatprep.subr.mxu0 0.0
  %2389 = vmatpush1.msra.mxu0 %v2247
  %2390 = vmatprep.subr.mxu0 0.0
  %2391 = vmatpush1.msra.mxu0 %v2248
  %2392 = vmatprep.subr.mxu0 0.0
  %2393 = vmatpush1.msra.mxu0 %v2249
  %2394 = vmatprep.subr.mxu0 0.0
  %2395 = vmatpush1.msra.mxu0 %v2250
  %2396 = vmatprep.subr.mxu0 0.0
  %2397 = vmatpush1.msra.mxu0 %v2251
  %2398 = vmatprep.subr.mxu0 0.0
  %2399 = vmatpush1.msra.mxu0 %v2252
  %2400 = vmatprep.subr.mxu0 0.0
  %2401 = vmatpush1.msra.mxu0 %v2253
  %2402 = vmatprep.subr.mxu0 0.0
  %2403 = vmatpush1.msra.mxu0 %v2254
  %2404 = vmatprep.mubr.f32.mxu0 %v481
  %2405 = vmatmul.mubr.f32.gmra.mrb[0].mxu0 %v480
  %v2406 = vpop.f32.mrb[0].mxu0
  %v2407 = vadd.f32 %v2322, %v2406
  %v2408 = vpop.f32.mrb[0].mxu0
  %2409 = vmatprep.mubr.f32.mxu0 %v485
  %2410 = vmatmul.mubr.f32.gmra.mrb[0].mxu0 %v484
  %v2411 = vpop.f32.mrb[0].mxu0
  %v2412 = vadd.f32 %v2327, %v2411
  %v2413 = vpop.f32.mrb[0].mxu0
  %2414 = vmatprep.mubr.f32.mxu0 %v489
  %2415 = vmatmul.mubr.f32.gmra.mrb[0].mxu0 %v488
  %v2416 = vpop.f32.mrb[0].mxu0
  %v2417 = vadd.f32 %v2332, %v2416
  %v2418 = vpop.f32.mrb[0].mxu0
  %2419 = vmatprep.mubr.f32.mxu0 %v493
  %2420 = vmatmul.mubr.f32.gmra.mrb[0].mxu0 %v492
  %v2421 = vpop.f32.mrb[0].mxu0
  %v2422 = vadd.f32 %v2337, %v2421
  %v2423 = vpop.f32.mrb[0].mxu0
  %2424 = vdwg.mxu0
  %s2425 = scalar_lea.vmem %s3, 160
  %v2426 = vld [vmem:[%s2425] sm:$0xff]
  %v2427 = vld [vmem:[%s2425 + $0x8] sm:$0xff]
  %v2428 = vld [vmem:[%s2425 + $0x10] sm:$0xff]
  %v2429 = vld [vmem:[%s2425 + $0x18] sm:$0xff]
  %v2431 = vsel %vm972, %v2426, 0
  %v2434 = vsel %vm972, %v2427, 0
  %v2437 = vsel %vm972, %v2428, 0
  %v2440 = vsel %vm972, %v2429, 0
  %2442 = vmatprep.subr.mxu0 0.0
  %2443 = vmatpush1.msra.mxu0 %v2407
  %2444 = vmatprep.subr.mxu0 0.0
  %2445 = vmatpush1.msra.mxu0 %v2412
  %2446 = vmatprep.subr.mxu0 0.0
  %2447 = vmatpush1.msra.mxu0 %v2417
  %2448 = vmatprep.subr.mxu0 0.0
  %2449 = vmatpush1.msra.mxu0 %v2422
  %2450 = vmatprep.subr.mxu0 0.0
  %2451 = vmatpush1.msra.mxu0 0.0
  %2452 = vmatprep.subr.mxu0 0.0
  %2453 = vmatpush1.msra.mxu0 0.0
  %2454 = vmatprep.subr.mxu0 0.0
  %2455 = vmatpush1.msra.mxu0 0.0
  %2456 = vmatprep.subr.mxu0 0.0
  %2457 = vmatpush1.msra.mxu0 0.0
  %2458 = vmatprep.subr.mxu0 0.0
  %2459 = vmatpush1.msra.mxu0 0.0
  %2460 = vmatprep.subr.mxu0 0.0
  %2461 = vmatpush1.msra.mxu0 0.0
  %2462 = vmatprep.subr.mxu0 0.0
  %2463 = vmatpush1.msra.mxu0 0.0
  %2464 = vmatprep.subr.mxu0 0.0
  %2465 = vmatpush1.msra.mxu0 0.0
  %2466 = vmatprep.subr.mxu0 0.0
  %2467 = vmatpush1.msra.mxu0 0.0
  %2468 = vmatprep.subr.mxu0 0.0
  %2469 = vmatpush1.msra.mxu0 0.0
  %2470 = vmatprep.subr.mxu0 0.0
  %2471 = vmatpush1.msra.mxu0 0.0
  %2472 = vmatprep.subr.mxu0 0.0
  %2473 = vmatpush1.msra.mxu0 0.0
  %2474 = vmatprep.subr.mxu0 0.0
  %2475 = vmatpush1.msra.mxu0 0.0
  %2476 = vmatprep.subr.mxu0 0.0
  %2477 = vmatpush1.msra.mxu0 0.0
  %2478 = vmatprep.subr.mxu0 0.0
  %2479 = vmatpush1.msra.mxu0 0.0
  %2480 = vmatprep.subr.mxu0 0.0
  %2481 = vmatpush1.msra.mxu0 0.0
  %2482 = vmatprep.subr.mxu0 0.0
  %2483 = vmatpush1.msra.mxu0 0.0
  %2484 = vmatprep.subr.mxu0 0.0
  %2485 = vmatpush1.msra.mxu0 0.0
  %2486 = vmatprep.subr.mxu0 0.0
  %2487 = vmatpush1.msra.mxu0 0.0
  %2488 = vmatprep.subr.mxu0 0.0
  %2489 = vmatpush1.msra.mxu0 0.0
  %2490 = vmatprep.subr.mxu0 0.0
  %2491 = vmatpush1.msra.mxu0 0.0
  %2492 = vmatprep.subr.mxu0 0.0
  %2493 = vmatpush1.msra.mxu0 0.0
  %2494 = vmatprep.subr.mxu0 0.0
  %2495 = vmatpush1.msra.mxu0 0.0
  %2496 = vmatprep.subr.mxu0 0.0
  %2497 = vmatpush1.msra.mxu0 0.0
  %2498 = vmatprep.subr.mxu0 0.0
  %2499 = vmatpush1.msra.mxu0 0.0
  %2500 = vmatprep.subr.mxu0 0.0
  %2501 = vmatpush1.msra.mxu0 0.0
  %2502 = vmatprep.subr.mxu0 0.0
  %2503 = vmatpush1.msra.mxu0 0.0
  %2504 = vmatprep.subr.mxu0 0.0
  %2505 = vmatpush1.msra.mxu0 0.0
  %2506 = vmatprep.mubr.f32.mxu0 0.0
  %2507 = vmatmul.mubr.f32.gmra.mrb[0].mxu0 %v2431
  %v2508 = vpop.f32.mrb[0].mxu0
  %v2509 = vadd.f32 0.0, %v2508
  %v2510 = vpop.f32.mrb[0].mxu0
  %2511 = vmatprep.mubr.f32.mxu0 0.0
  %2512 = vmatmul.mubr.f32.gmra.mrb[0].mxu0 %v2434
  %v2513 = vpop.f32.mrb[0].mxu0
  %v2514 = vadd.f32 0.0, %v2513
  %v2515 = vpop.f32.mrb[0].mxu0
  %2516 = vmatprep.mubr.f32.mxu0 0.0
  %2517 = vmatmul.mubr.f32.gmra.mrb[0].mxu0 %v2437
  %v2518 = vpop.f32.mrb[0].mxu0
  %v2519 = vadd.f32 0.0, %v2518
  %v2520 = vpop.f32.mrb[0].mxu0
  %2521 = vmatprep.mubr.f32.mxu0 0.0
  %2522 = vmatmul.mubr.f32.gmra.mrb[0].mxu0 %v2440
  %v2523 = vpop.f32.mrb[0].mxu0
  %v2524 = vadd.f32 0.0, %v2523
  %v2525 = vpop.f32.mrb[0].mxu0
  %2526 = vdwg.mxu0
  %v2527 = vadd.f32 %v2186, %v2509
  %v2528 = vadd.f32 %v2187, %v2514
  %v2529 = vadd.f32 %v2188, %v2519
  %v2530 = vadd.f32 %v2189, %v2524
  %s2531 = scalar_lea.vmem %s2, 3072
  %v2532 = vld [vmem:[%s2531] sm:$0xff]
  %v2533 = vld [vmem:[%s2531 + $0x8] sm:$0xff]
  %v2534 = vld [vmem:[%s2531 + $0x10] sm:$0xff]
  %v2535 = vld [vmem:[%s2531 + $0x18] sm:$0xff]
  %v2536 = vld [vmem:[%s2531 + $0x20] sm:$0xff]
  %v2537 = vld [vmem:[%s2531 + $0x28] sm:$0xff]
  %v2538 = vld [vmem:[%s2531 + $0x30] sm:$0xff]
  %v2539 = vld [vmem:[%s2531 + $0x38] sm:$0xff]
  %v2540 = vld [vmem:[%s2531 + $0x40] sm:$0xff]
  %v2541 = vld [vmem:[%s2531 + $0x48] sm:$0xff]
  %v2542 = vld [vmem:[%s2531 + $0x50] sm:$0xff]
  %v2543 = vld [vmem:[%s2531 + $0x58] sm:$0xff]
  %v2544 = vld [vmem:[%s2531 + $0x60] sm:$0xff]
  %v2545 = vld [vmem:[%s2531 + $0x68] sm:$0xff]
  %v2546 = vld [vmem:[%s2531 + $0x70] sm:$0xff]
  %v2547 = vld [vmem:[%s2531 + $0x78] sm:$0xff]
  %v2548 = vld [vmem:[%s2531 + $0x80] sm:$0xff]
  %v2549 = vld [vmem:[%s2531 + $0x88] sm:$0xff]
  %v2550 = vld [vmem:[%s2531 + $0x90] sm:$0xff]
  %v2551 = vld [vmem:[%s2531 + $0x98] sm:$0xff]
  %v2552 = vld [vmem:[%s2531 + $0xa0] sm:$0xff]
  %v2553 = vld [vmem:[%s2531 + $0xa8] sm:$0xff]
  %v2554 = vld [vmem:[%s2531 + $0xb0] sm:$0xff]
  %v2555 = vld [vmem:[%s2531 + $0xb8] sm:$0xff]
  %v2556 = vld [vmem:[%s2531 + $0xc0] sm:$0xff]
  %v2557 = vld [vmem:[%s2531 + $0xc8] sm:$0xff]
  %v2558 = vld [vmem:[%s2531 + $0xd0] sm:$0xff]
  %v2559 = vld [vmem:[%s2531 + $0xd8] sm:$0xff]
  %v2560 = vld [vmem:[%s2531 + $0xe0] sm:$0xff]
  %v2561 = vld [vmem:[%s2531 + $0xe8] sm:$0xff]
  %v2562 = vld [vmem:[%s2531 + $0xf0] sm:$0xff]
  %v2563 = vld [vmem:[%s2531 + $0xf8] sm:$0xff]
  %v2564 = vld [vmem:[%s2531 + $0x100] sm:$0xff]
  %v2565 = vld [vmem:[%s2531 + $0x108] sm:$0xff]
  %v2566 = vld [vmem:[%s2531 + $0x110] sm:$0xff]
  %v2567 = vld [vmem:[%s2531 + $0x118] sm:$0xff]
  %v2568 = vld [vmem:[%s2531 + $0x120] sm:$0xff]
  %v2569 = vld [vmem:[%s2531 + $0x128] sm:$0xff]
  %v2570 = vld [vmem:[%s2531 + $0x130] sm:$0xff]
  %v2571 = vld [vmem:[%s2531 + $0x138] sm:$0xff]
  %v2572 = vld [vmem:[%s2531 + $0x140] sm:$0xff]
  %v2573 = vld [vmem:[%s2531 + $0x148] sm:$0xff]
  %v2574 = vld [vmem:[%s2531 + $0x150] sm:$0xff]
  %v2575 = vld [vmem:[%s2531 + $0x158] sm:$0xff]
  %v2576 = vld [vmem:[%s2531 + $0x160] sm:$0xff]
  %v2577 = vld [vmem:[%s2531 + $0x168] sm:$0xff]
  %v2578 = vld [vmem:[%s2531 + $0x170] sm:$0xff]
  %v2579 = vld [vmem:[%s2531 + $0x178] sm:$0xff]
  %v2580 = vld [vmem:[%s2531 + $0x180] sm:$0xff]
  %v2581 = vld [vmem:[%s2531 + $0x188] sm:$0xff]
  %v2582 = vld [vmem:[%s2531 + $0x190] sm:$0xff]
  %v2583 = vld [vmem:[%s2531 + $0x198] sm:$0xff]
  %v2584 = vld [vmem:[%s2531 + $0x1a0] sm:$0xff]
  %v2585 = vld [vmem:[%s2531 + $0x1a8] sm:$0xff]
  %v2586 = vld [vmem:[%s2531 + $0x1b0] sm:$0xff]
  %v2587 = vld [vmem:[%s2531 + $0x1b8] sm:$0xff]
  %v2588 = vld [vmem:[%s2531 + $0x1c0] sm:$0xff]
  %v2589 = vld [vmem:[%s2531 + $0x1c8] sm:$0xff]
  %v2590 = vld [vmem:[%s2531 + $0x1d0] sm:$0xff]
  %v2591 = vld [vmem:[%s2531 + $0x1d8] sm:$0xff]
  %v2592 = vld [vmem:[%s2531 + $0x1e0] sm:$0xff]
  %v2593 = vld [vmem:[%s2531 + $0x1e8] sm:$0xff]
  %v2594 = vld [vmem:[%s2531 + $0x1f0] sm:$0xff]
  %v2595 = vld [vmem:[%s2531 + $0x1f8] sm:$0xff]
  %2596 = vmatprep.subr.mxu0 0.0
  %2597 = vmatpush1.msra.mxu0 %v2532
  %2598 = vmatprep.subr.mxu0 0.0
  %2599 = vmatpush1.msra.mxu0 %v2533
  %2600 = vmatprep.subr.mxu0 0.0
  %2601 = vmatpush1.msra.mxu0 %v2534
  %2602 = vmatprep.subr.mxu0 0.0
  %2603 = vmatpush1.msra.mxu0 %v2535
  %2604 = vmatprep.subr.mxu0 0.0
  %2605 = vmatpush1.msra.mxu0 %v2536
  %2606 = vmatprep.subr.mxu0 0.0
  %2607 = vmatpush1.msra.mxu0 %v2537
  %2608 = vmatprep.subr.mxu0 0.0
  %2609 = vmatpush1.msra.mxu0 %v2538
  %2610 = vmatprep.subr.mxu0 0.0
  %2611 = vmatpush1.msra.mxu0 %v2539
  %2612 = vmatprep.subr.mxu0 0.0
  %2613 = vmatpush1.msra.mxu0 %v2540
  %2614 = vmatprep.subr.mxu0 0.0
  %2615 = vmatpush1.msra.mxu0 %v2541
  %2616 = vmatprep.subr.mxu0 0.0
  %2617 = vmatpush1.msra.mxu0 %v2542
  %2618 = vmatprep.subr.mxu0 0.0
  %2619 = vmatpush1.msra.mxu0 %v2543
  %2620 = vmatprep.subr.mxu0 0.0
  %2621 = vmatpush1.msra.mxu0 %v2544
  %2622 = vmatprep.subr.mxu0 0.0
  %2623 = vmatpush1.msra.mxu0 %v2545
  %2624 = vmatprep.subr.mxu0 0.0
  %2625 = vmatpush1.msra.mxu0 %v2546
  %2626 = vmatprep.subr.mxu0 0.0
  %2627 = vmatpush1.msra.mxu0 %v2547
  %2628 = vmatprep.subr.mxu0 0.0
  %2629 = vmatpush1.msra.mxu0 %v2548
  %2630 = vmatprep.subr.mxu0 0.0
  %2631 = vmatpush1.msra.mxu0 %v2549
  %2632 = vmatprep.subr.mxu0 0.0
  %2633 = vmatpush1.msra.mxu0 %v2550
  %2634 = vmatprep.subr.mxu0 0.0
  %2635 = vmatpush1.msra.mxu0 %v2551
  %2636 = vmatprep.subr.mxu0 0.0
  %2637 = vmatpush1.msra.mxu0 %v2552
  %2638 = vmatprep.subr.mxu0 0.0
  %2639 = vmatpush1.msra.mxu0 %v2553
  %2640 = vmatprep.subr.mxu0 0.0
  %2641 = vmatpush1.msra.mxu0 %v2554
  %2642 = vmatprep.subr.mxu0 0.0
  %2643 = vmatpush1.msra.mxu0 %v2555
  %2644 = vmatprep.subr.mxu0 0.0
  %2645 = vmatpush1.msra.mxu0 %v2556
  %2646 = vmatprep.subr.mxu0 0.0
  %2647 = vmatpush1.msra.mxu0 %v2557
  %2648 = vmatprep.subr.mxu0 0.0
  %2649 = vmatpush1.msra.mxu0 %v2558
  %2650 = vmatprep.subr.mxu0 0.0
  %2651 = vmatpush1.msra.mxu0 %v2559
  %2652 = vmatprep.subr.mxu0 0.0
  %2653 = vmatpush1.msra.mxu0 %v2560
  %2654 = vmatprep.subr.mxu0 0.0
  %2655 = vmatpush1.msra.mxu0 %v2561
  %2656 = vmatprep.subr.mxu0 0.0
  %2657 = vmatpush1.msra.mxu0 %v2562
  %2658 = vmatprep.subr.mxu0 0.0
  %2659 = vmatpush1.msra.mxu0 %v2563
  %2660 = vmatprep.mubr.f32.mxu0 %v479
  %2661 = vmatmul.mubr.f32.gmra.mrb[0].mxu0 %v478
  %v2662 = vpop.f32.mrb[0].mxu0
  %v2663 = vadd.f32 0.0, %v2662
  %v2664 = vpop.f32.mrb[0].mxu0
  %2665 = vmatprep.mubr.f32.mxu0 %v483
  %2666 = vmatmul.mubr.f32.gmra.mrb[0].mxu0 %v482
  %v2667 = vpop.f32.mrb[0].mxu0
  %v2668 = vadd.f32 0.0, %v2667
  %v2669 = vpop.f32.mrb[0].mxu0
  %2670 = vmatprep.mubr.f32.mxu0 %v487
  %2671 = vmatmul.mubr.f32.gmra.mrb[0].mxu0 %v486
  %v2672 = vpop.f32.mrb[0].mxu0
  %v2673 = vadd.f32 0.0, %v2672
  %v2674 = vpop.f32.mrb[0].mxu0
  %2675 = vmatprep.mubr.f32.mxu0 %v491
  %2676 = vmatmul.mubr.f32.gmra.mrb[0].mxu0 %v490
  %v2677 = vpop.f32.mrb[0].mxu0
  %v2678 = vadd.f32 0.0, %v2677
  %v2679 = vpop.f32.mrb[0].mxu0
  %2680 = vdwg.mxu0
  %2681 = vmatprep.subr.mxu0 0.0
  %2682 = vmatpush1.msra.mxu0 %v2564
  %2683 = vmatprep.subr.mxu0 0.0
  %2684 = vmatpush1.msra.mxu0 %v2565
  %2685 = vmatprep.subr.mxu0 0.0
  %2686 = vmatpush1.msra.mxu0 %v2566
  %2687 = vmatprep.subr.mxu0 0.0
  %2688 = vmatpush1.msra.mxu0 %v2567
  %2689 = vmatprep.subr.mxu0 0.0
  %2690 = vmatpush1.msra.mxu0 %v2568
  %2691 = vmatprep.subr.mxu0 0.0
  %2692 = vmatpush1.msra.mxu0 %v2569
  %2693 = vmatprep.subr.mxu0 0.0
  %2694 = vmatpush1.msra.mxu0 %v2570
  %2695 = vmatprep.subr.mxu0 0.0
  %2696 = vmatpush1.msra.mxu0 %v2571
  %2697 = vmatprep.subr.mxu0 0.0
  %2698 = vmatpush1.msra.mxu0 %v2572
  %2699 = vmatprep.subr.mxu0 0.0
  %2700 = vmatpush1.msra.mxu0 %v2573
  %2701 = vmatprep.subr.mxu0 0.0
  %2702 = vmatpush1.msra.mxu0 %v2574
  %2703 = vmatprep.subr.mxu0 0.0
  %2704 = vmatpush1.msra.mxu0 %v2575
  %2705 = vmatprep.subr.mxu0 0.0
  %2706 = vmatpush1.msra.mxu0 %v2576
  %2707 = vmatprep.subr.mxu0 0.0
  %2708 = vmatpush1.msra.mxu0 %v2577
  %2709 = vmatprep.subr.mxu0 0.0
  %2710 = vmatpush1.msra.mxu0 %v2578
  %2711 = vmatprep.subr.mxu0 0.0
  %2712 = vmatpush1.msra.mxu0 %v2579
  %2713 = vmatprep.subr.mxu0 0.0
  %2714 = vmatpush1.msra.mxu0 %v2580
  %2715 = vmatprep.subr.mxu0 0.0
  %2716 = vmatpush1.msra.mxu0 %v2581
  %2717 = vmatprep.subr.mxu0 0.0
  %2718 = vmatpush1.msra.mxu0 %v2582
  %2719 = vmatprep.subr.mxu0 0.0
  %2720 = vmatpush1.msra.mxu0 %v2583
  %2721 = vmatprep.subr.mxu0 0.0
  %2722 = vmatpush1.msra.mxu0 %v2584
  %2723 = vmatprep.subr.mxu0 0.0
  %2724 = vmatpush1.msra.mxu0 %v2585
  %2725 = vmatprep.subr.mxu0 0.0
  %2726 = vmatpush1.msra.mxu0 %v2586
  %2727 = vmatprep.subr.mxu0 0.0
  %2728 = vmatpush1.msra.mxu0 %v2587
  %2729 = vmatprep.subr.mxu0 0.0
  %2730 = vmatpush1.msra.mxu0 %v2588
  %2731 = vmatprep.subr.mxu0 0.0
  %2732 = vmatpush1.msra.mxu0 %v2589
  %2733 = vmatprep.subr.mxu0 0.0
  %2734 = vmatpush1.msra.mxu0 %v2590
  %2735 = vmatprep.subr.mxu0 0.0
  %2736 = vmatpush1.msra.mxu0 %v2591
  %2737 = vmatprep.subr.mxu0 0.0
  %2738 = vmatpush1.msra.mxu0 %v2592
  %2739 = vmatprep.subr.mxu0 0.0
  %2740 = vmatpush1.msra.mxu0 %v2593
  %2741 = vmatprep.subr.mxu0 0.0
  %2742 = vmatpush1.msra.mxu0 %v2594
  %2743 = vmatprep.subr.mxu0 0.0
  %2744 = vmatpush1.msra.mxu0 %v2595
  %2745 = vmatprep.mubr.f32.mxu0 %v481
  %2746 = vmatmul.mubr.f32.gmra.mrb[0].mxu0 %v480
  %v2747 = vpop.f32.mrb[0].mxu0
  %v2748 = vadd.f32 %v2663, %v2747
  %v2749 = vpop.f32.mrb[0].mxu0
  %2750 = vmatprep.mubr.f32.mxu0 %v485
  %2751 = vmatmul.mubr.f32.gmra.mrb[0].mxu0 %v484
  %v2752 = vpop.f32.mrb[0].mxu0
  %v2753 = vadd.f32 %v2668, %v2752
  %v2754 = vpop.f32.mrb[0].mxu0
  %2755 = vmatprep.mubr.f32.mxu0 %v489
  %2756 = vmatmul.mubr.f32.gmra.mrb[0].mxu0 %v488
  %v2757 = vpop.f32.mrb[0].mxu0
  %v2758 = vadd.f32 %v2673, %v2757
  %v2759 = vpop.f32.mrb[0].mxu0
  %2760 = vmatprep.mubr.f32.mxu0 %v493
  %2761 = vmatmul.mubr.f32.gmra.mrb[0].mxu0 %v492
  %v2762 = vpop.f32.mrb[0].mxu0
  %v2763 = vadd.f32 %v2678, %v2762
  %v2764 = vpop.f32.mrb[0].mxu0
  %2765 = vdwg.mxu0
  %s2766 = scalar_lea.vmem %s3, 192
  %v2767 = vld [vmem:[%s2766] sm:$0xff]
  %v2768 = vld [vmem:[%s2766 + $0x8] sm:$0xff]
  %v2769 = vld [vmem:[%s2766 + $0x10] sm:$0xff]
  %v2770 = vld [vmem:[%s2766 + $0x18] sm:$0xff]
  %v2772 = vsel %vm972, %v2767, 0
  %v2775 = vsel %vm972, %v2768, 0
  %v2778 = vsel %vm972, %v2769, 0
  %v2781 = vsel %vm972, %v2770, 0
  %2783 = vmatprep.subr.mxu0 0.0
  %2784 = vmatpush1.msra.mxu0 %v2748
  %2785 = vmatprep.subr.mxu0 0.0
  %2786 = vmatpush1.msra.mxu0 %v2753
  %2787 = vmatprep.subr.mxu0 0.0
  %2788 = vmatpush1.msra.mxu0 %v2758
  %2789 = vmatprep.subr.mxu0 0.0
  %2790 = vmatpush1.msra.mxu0 %v2763
  %2791 = vmatprep.subr.mxu0 0.0
  %2792 = vmatpush1.msra.mxu0 0.0
  %2793 = vmatprep.subr.mxu0 0.0
  %2794 = vmatpush1.msra.mxu0 0.0
  %2795 = vmatprep.subr.mxu0 0.0
  %2796 = vmatpush1.msra.mxu0 0.0
  %2797 = vmatprep.subr.mxu0 0.0
  %2798 = vmatpush1.msra.mxu0 0.0
  %2799 = vmatprep.subr.mxu0 0.0
  %2800 = vmatpush1.msra.mxu0 0.0
  %2801 = vmatprep.subr.mxu0 0.0
  %2802 = vmatpush1.msra.mxu0 0.0
  %2803 = vmatprep.subr.mxu0 0.0
  %2804 = vmatpush1.msra.mxu0 0.0
  %2805 = vmatprep.subr.mxu0 0.0
  %2806 = vmatpush1.msra.mxu0 0.0
  %2807 = vmatprep.subr.mxu0 0.0
  %2808 = vmatpush1.msra.mxu0 0.0
  %2809 = vmatprep.subr.mxu0 0.0
  %2810 = vmatpush1.msra.mxu0 0.0
  %2811 = vmatprep.subr.mxu0 0.0
  %2812 = vmatpush1.msra.mxu0 0.0
  %2813 = vmatprep.subr.mxu0 0.0
  %2814 = vmatpush1.msra.mxu0 0.0
  %2815 = vmatprep.subr.mxu0 0.0
  %2816 = vmatpush1.msra.mxu0 0.0
  %2817 = vmatprep.subr.mxu0 0.0
  %2818 = vmatpush1.msra.mxu0 0.0
  %2819 = vmatprep.subr.mxu0 0.0
  %2820 = vmatpush1.msra.mxu0 0.0
  %2821 = vmatprep.subr.mxu0 0.0
  %2822 = vmatpush1.msra.mxu0 0.0
  %2823 = vmatprep.subr.mxu0 0.0
  %2824 = vmatpush1.msra.mxu0 0.0
  %2825 = vmatprep.subr.mxu0 0.0
  %2826 = vmatpush1.msra.mxu0 0.0
  %2827 = vmatprep.subr.mxu0 0.0
  %2828 = vmatpush1.msra.mxu0 0.0
  %2829 = vmatprep.subr.mxu0 0.0
  %2830 = vmatpush1.msra.mxu0 0.0
  %2831 = vmatprep.subr.mxu0 0.0
  %2832 = vmatpush1.msra.mxu0 0.0
  %2833 = vmatprep.subr.mxu0 0.0
  %2834 = vmatpush1.msra.mxu0 0.0
  %2835 = vmatprep.subr.mxu0 0.0
  %2836 = vmatpush1.msra.mxu0 0.0
  %2837 = vmatprep.subr.mxu0 0.0
  %2838 = vmatpush1.msra.mxu0 0.0
  %2839 = vmatprep.subr.mxu0 0.0
  %2840 = vmatpush1.msra.mxu0 0.0
  %2841 = vmatprep.subr.mxu0 0.0
  %2842 = vmatpush1.msra.mxu0 0.0
  %2843 = vmatprep.subr.mxu0 0.0
  %2844 = vmatpush1.msra.mxu0 0.0
  %2845 = vmatprep.subr.mxu0 0.0
  %2846 = vmatpush1.msra.mxu0 0.0
  %2847 = vmatprep.mubr.f32.mxu0 0.0
  %2848 = vmatmul.mubr.f32.gmra.mrb[0].mxu0 %v2772
  %v2849 = vpop.f32.mrb[0].mxu0
  %v2850 = vadd.f32 0.0, %v2849
  %v2851 = vpop.f32.mrb[0].mxu0
  %2852 = vmatprep.mubr.f32.mxu0 0.0
  %2853 = vmatmul.mubr.f32.gmra.mrb[0].mxu0 %v2775
  %v2854 = vpop.f32.mrb[0].mxu0
  %v2855 = vadd.f32 0.0, %v2854
  %v2856 = vpop.f32.mrb[0].mxu0
  %2857 = vmatprep.mubr.f32.mxu0 0.0
  %2858 = vmatmul.mubr.f32.gmra.mrb[0].mxu0 %v2778
  %v2859 = vpop.f32.mrb[0].mxu0
  %v2860 = vadd.f32 0.0, %v2859
  %v2861 = vpop.f32.mrb[0].mxu0
  %2862 = vmatprep.mubr.f32.mxu0 0.0
  %2863 = vmatmul.mubr.f32.gmra.mrb[0].mxu0 %v2781
  %v2864 = vpop.f32.mrb[0].mxu0
  %v2865 = vadd.f32 0.0, %v2864
  %v2866 = vpop.f32.mrb[0].mxu0
  %2867 = vdwg.mxu0
  %v2868 = vadd.f32 %v2527, %v2850
  %v2869 = vadd.f32 %v2528, %v2855
  %v2870 = vadd.f32 %v2529, %v2860
  %v2871 = vadd.f32 %v2530, %v2865
  %s2872 = scalar_lea.vmem %s2, 3584
  %v2873 = vld [vmem:[%s2872] sm:$0xff]
  %v2874 = vld [vmem:[%s2872 + $0x8] sm:$0xff]
  %v2875 = vld [vmem:[%s2872 + $0x10] sm:$0xff]
  %v2876 = vld [vmem:[%s2872 + $0x18] sm:$0xff]
  %v2877 = vld [vmem:[%s2872 + $0x20] sm:$0xff]
  %v2878 = vld [vmem:[%s2872 + $0x28] sm:$0xff]
  %v2879 = vld [vmem:[%s2872 + $0x30] sm:$0xff]
  %v2880 = vld [vmem:[%s2872 + $0x38] sm:$0xff]
  %v2881 = vld [vmem:[%s2872 + $0x40] sm:$0xff]
  %v2882 = vld [vmem:[%s2872 + $0x48] sm:$0xff]
  %v2883 = vld [vmem:[%s2872 + $0x50] sm:$0xff]
  %v2884 = vld [vmem:[%s2872 + $0x58] sm:$0xff]
  %v2885 = vld [vmem:[%s2872 + $0x60] sm:$0xff]
  %v2886 = vld [vmem:[%s2872 + $0x68] sm:$0xff]
  %v2887 = vld [vmem:[%s2872 + $0x70] sm:$0xff]
  %v2888 = vld [vmem:[%s2872 + $0x78] sm:$0xff]
  %v2889 = vld [vmem:[%s2872 + $0x80] sm:$0xff]
  %v2890 = vld [vmem:[%s2872 + $0x88] sm:$0xff]
  %v2891 = vld [vmem:[%s2872 + $0x90] sm:$0xff]
  %v2892 = vld [vmem:[%s2872 + $0x98] sm:$0xff]
  %v2893 = vld [vmem:[%s2872 + $0xa0] sm:$0xff]
  %v2894 = vld [vmem:[%s2872 + $0xa8] sm:$0xff]
  %v2895 = vld [vmem:[%s2872 + $0xb0] sm:$0xff]
  %v2896 = vld [vmem:[%s2872 + $0xb8] sm:$0xff]
  %v2897 = vld [vmem:[%s2872 + $0xc0] sm:$0xff]
  %v2898 = vld [vmem:[%s2872 + $0xc8] sm:$0xff]
  %v2899 = vld [vmem:[%s2872 + $0xd0] sm:$0xff]
  %v2900 = vld [vmem:[%s2872 + $0xd8] sm:$0xff]
  %v2901 = vld [vmem:[%s2872 + $0xe0] sm:$0xff]
  %v2902 = vld [vmem:[%s2872 + $0xe8] sm:$0xff]
  %v2903 = vld [vmem:[%s2872 + $0xf0] sm:$0xff]
  %v2904 = vld [vmem:[%s2872 + $0xf8] sm:$0xff]
  %v2905 = vld [vmem:[%s2872 + $0x100] sm:$0xff]
  %v2906 = vld [vmem:[%s2872 + $0x108] sm:$0xff]
  %v2907 = vld [vmem:[%s2872 + $0x110] sm:$0xff]
  %v2908 = vld [vmem:[%s2872 + $0x118] sm:$0xff]
  %v2909 = vld [vmem:[%s2872 + $0x120] sm:$0xff]
  %v2910 = vld [vmem:[%s2872 + $0x128] sm:$0xff]
  %v2911 = vld [vmem:[%s2872 + $0x130] sm:$0xff]
  %v2912 = vld [vmem:[%s2872 + $0x138] sm:$0xff]
  %v2913 = vld [vmem:[%s2872 + $0x140] sm:$0xff]
  %v2914 = vld [vmem:[%s2872 + $0x148] sm:$0xff]
  %v2915 = vld [vmem:[%s2872 + $0x150] sm:$0xff]
  %v2916 = vld [vmem:[%s2872 + $0x158] sm:$0xff]
  %v2917 = vld [vmem:[%s2872 + $0x160] sm:$0xff]
  %v2918 = vld [vmem:[%s2872 + $0x168] sm:$0xff]
  %v2919 = vld [vmem:[%s2872 + $0x170] sm:$0xff]
  %v2920 = vld [vmem:[%s2872 + $0x178] sm:$0xff]
  %v2921 = vld [vmem:[%s2872 + $0x180] sm:$0xff]
  %v2922 = vld [vmem:[%s2872 + $0x188] sm:$0xff]
  %v2923 = vld [vmem:[%s2872 + $0x190] sm:$0xff]
  %v2924 = vld [vmem:[%s2872 + $0x198] sm:$0xff]
  %v2925 = vld [vmem:[%s2872 + $0x1a0] sm:$0xff]
  %v2926 = vld [vmem:[%s2872 + $0x1a8] sm:$0xff]
  %v2927 = vld [vmem:[%s2872 + $0x1b0] sm:$0xff]
  %v2928 = vld [vmem:[%s2872 + $0x1b8] sm:$0xff]
  %v2929 = vld [vmem:[%s2872 + $0x1c0] sm:$0xff]
  %v2930 = vld [vmem:[%s2872 + $0x1c8] sm:$0xff]
  %v2931 = vld [vmem:[%s2872 + $0x1d0] sm:$0xff]
  %v2932 = vld [vmem:[%s2872 + $0x1d8] sm:$0xff]
  %v2933 = vld [vmem:[%s2872 + $0x1e0] sm:$0xff]
  %v2934 = vld [vmem:[%s2872 + $0x1e8] sm:$0xff]
  %v2935 = vld [vmem:[%s2872 + $0x1f0] sm:$0xff]
  %v2936 = vld [vmem:[%s2872 + $0x1f8] sm:$0xff]
  %2937 = vmatprep.subr.mxu0 0.0
  %2938 = vmatpush1.msra.mxu0 %v2873
  %2939 = vmatprep.subr.mxu0 0.0
  %2940 = vmatpush1.msra.mxu0 %v2874
  %2941 = vmatprep.subr.mxu0 0.0
  %2942 = vmatpush1.msra.mxu0 %v2875
  %2943 = vmatprep.subr.mxu0 0.0
  %2944 = vmatpush1.msra.mxu0 %v2876
  %2945 = vmatprep.subr.mxu0 0.0
  %2946 = vmatpush1.msra.mxu0 %v2877
  %2947 = vmatprep.subr.mxu0 0.0
  %2948 = vmatpush1.msra.mxu0 %v2878
  %2949 = vmatprep.subr.mxu0 0.0
  %2950 = vmatpush1.msra.mxu0 %v2879
  %2951 = vmatprep.subr.mxu0 0.0
  %2952 = vmatpush1.msra.mxu0 %v2880
  %2953 = vmatprep.subr.mxu0 0.0
  %2954 = vmatpush1.msra.mxu0 %v2881
  %2955 = vmatprep.subr.mxu0 0.0
  %2956 = vmatpush1.msra.mxu0 %v2882
  %2957 = vmatprep.subr.mxu0 0.0
  %2958 = vmatpush1.msra.mxu0 %v2883
  %2959 = vmatprep.subr.mxu0 0.0
  %2960 = vmatpush1.msra.mxu0 %v2884
  %2961 = vmatprep.subr.mxu0 0.0
  %2962 = vmatpush1.msra.mxu0 %v2885
  %2963 = vmatprep.subr.mxu0 0.0
  %2964 = vmatpush1.msra.mxu0 %v2886
  %2965 = vmatprep.subr.mxu0 0.0
  %2966 = vmatpush1.msra.mxu0 %v2887
  %2967 = vmatprep.subr.mxu0 0.0
  %2968 = vmatpush1.msra.mxu0 %v2888
  %2969 = vmatprep.subr.mxu0 0.0
  %2970 = vmatpush1.msra.mxu0 %v2889
  %2971 = vmatprep.subr.mxu0 0.0
  %2972 = vmatpush1.msra.mxu0 %v2890
  %2973 = vmatprep.subr.mxu0 0.0
  %2974 = vmatpush1.msra.mxu0 %v2891
  %2975 = vmatprep.subr.mxu0 0.0
  %2976 = vmatpush1.msra.mxu0 %v2892
  %2977 = vmatprep.subr.mxu0 0.0
  %2978 = vmatpush1.msra.mxu0 %v2893
  %2979 = vmatprep.subr.mxu0 0.0
  %2980 = vmatpush1.msra.mxu0 %v2894
  %2981 = vmatprep.subr.mxu0 0.0
  %2982 = vmatpush1.msra.mxu0 %v2895
  %2983 = vmatprep.subr.mxu0 0.0
  %2984 = vmatpush1.msra.mxu0 %v2896
  %2985 = vmatprep.subr.mxu0 0.0
  %2986 = vmatpush1.msra.mxu0 %v2897
  %2987 = vmatprep.subr.mxu0 0.0
  %2988 = vmatpush1.msra.mxu0 %v2898
  %2989 = vmatprep.subr.mxu0 0.0
  %2990 = vmatpush1.msra.mxu0 %v2899
  %2991 = vmatprep.subr.mxu0 0.0
  %2992 = vmatpush1.msra.mxu0 %v2900
  %2993 = vmatprep.subr.mxu0 0.0
  %2994 = vmatpush1.msra.mxu0 %v2901
  %2995 = vmatprep.subr.mxu0 0.0
  %2996 = vmatpush1.msra.mxu0 %v2902
  %2997 = vmatprep.subr.mxu0 0.0
  %2998 = vmatpush1.msra.mxu0 %v2903
  %2999 = vmatprep.subr.mxu0 0.0
  %3000 = vmatpush1.msra.mxu0 %v2904
  %3001 = vmatprep.mubr.f32.mxu0 %v479
  %3002 = vmatmul.mubr.f32.gmra.mrb[0].mxu0 %v478
  %v3003 = vpop.f32.mrb[0].mxu0
  %v3004 = vadd.f32 0.0, %v3003
  %v3005 = vpop.f32.mrb[0].mxu0
  %3006 = vmatprep.mubr.f32.mxu0 %v483
  %3007 = vmatmul.mubr.f32.gmra.mrb[0].mxu0 %v482
  %v3008 = vpop.f32.mrb[0].mxu0
  %v3009 = vadd.f32 0.0, %v3008
  %v3010 = vpop.f32.mrb[0].mxu0
  %3011 = vmatprep.mubr.f32.mxu0 %v487
  %3012 = vmatmul.mubr.f32.gmra.mrb[0].mxu0 %v486
  %v3013 = vpop.f32.mrb[0].mxu0
  %v3014 = vadd.f32 0.0, %v3013
  %v3015 = vpop.f32.mrb[0].mxu0
  %3016 = vmatprep.mubr.f32.mxu0 %v491
  %3017 = vmatmul.mubr.f32.gmra.mrb[0].mxu0 %v490
  %v3018 = vpop.f32.mrb[0].mxu0
  %v3019 = vadd.f32 0.0, %v3018
  %v3020 = vpop.f32.mrb[0].mxu0
  %3021 = vdwg.mxu0
  %3022 = vmatprep.subr.mxu0 0.0
  %3023 = vmatpush1.msra.mxu0 %v2905
  %3024 = vmatprep.subr.mxu0 0.0
  %3025 = vmatpush1.msra.mxu0 %v2906
  %3026 = vmatprep.subr.mxu0 0.0
  %3027 = vmatpush1.msra.mxu0 %v2907
  %3028 = vmatprep.subr.mxu0 0.0
  %3029 = vmatpush1.msra.mxu0 %v2908
  %3030 = vmatprep.subr.mxu0 0.0
  %3031 = vmatpush1.msra.mxu0 %v2909
  %3032 = vmatprep.subr.mxu0 0.0
  %3033 = vmatpush1.msra.mxu0 %v2910
  %3034 = vmatprep.subr.mxu0 0.0
  %3035 = vmatpush1.msra.mxu0 %v2911
  %3036 = vmatprep.subr.mxu0 0.0
  %3037 = vmatpush1.msra.mxu0 %v2912
  %3038 = vmatprep.subr.mxu0 0.0
  %3039 = vmatpush1.msra.mxu0 %v2913
  %3040 = vmatprep.subr.mxu0 0.0
  %3041 = vmatpush1.msra.mxu0 %v2914
  %3042 = vmatprep.subr.mxu0 0.0
  %3043 = vmatpush1.msra.mxu0 %v2915
  %3044 = vmatprep.subr.mxu0 0.0
  %3045 = vmatpush1.msra.mxu0 %v2916
  %3046 = vmatprep.subr.mxu0 0.0
  %3047 = vmatpush1.msra.mxu0 %v2917
  %3048 = vmatprep.subr.mxu0 0.0
  %3049 = vmatpush1.msra.mxu0 %v2918
  %3050 = vmatprep.subr.mxu0 0.0
  %3051 = vmatpush1.msra.mxu0 %v2919
  %3052 = vmatprep.subr.mxu0 0.0
  %3053 = vmatpush1.msra.mxu0 %v2920
  %3054 = vmatprep.subr.mxu0 0.0
  %3055 = vmatpush1.msra.mxu0 %v2921
  %3056 = vmatprep.subr.mxu0 0.0
  %3057 = vmatpush1.msra.mxu0 %v2922
  %3058 = vmatprep.subr.mxu0 0.0
  %3059 = vmatpush1.msra.mxu0 %v2923
  %3060 = vmatprep.subr.mxu0 0.0
  %3061 = vmatpush1.msra.mxu0 %v2924
  %3062 = vmatprep.subr.mxu0 0.0
  %3063 = vmatpush1.msra.mxu0 %v2925
  %3064 = vmatprep.subr.mxu0 0.0
  %3065 = vmatpush1.msra.mxu0 %v2926
  %3066 = vmatprep.subr.mxu0 0.0
  %3067 = vmatpush1.msra.mxu0 %v2927
  %3068 = vmatprep.subr.mxu0 0.0
  %3069 = vmatpush1.msra.mxu0 %v2928
  %3070 = vmatprep.subr.mxu0 0.0
  %3071 = vmatpush1.msra.mxu0 %v2929
  %3072 = vmatprep.subr.mxu0 0.0
  %3073 = vmatpush1.msra.mxu0 %v2930
  %3074 = vmatprep.subr.mxu0 0.0
  %3075 = vmatpush1.msra.mxu0 %v2931
  %3076 = vmatprep.subr.mxu0 0.0
  %3077 = vmatpush1.msra.mxu0 %v2932
  %3078 = vmatprep.subr.mxu0 0.0
  %3079 = vmatpush1.msra.mxu0 %v2933
  %3080 = vmatprep.subr.mxu0 0.0
  %3081 = vmatpush1.msra.mxu0 %v2934
  %3082 = vmatprep.subr.mxu0 0.0
  %3083 = vmatpush1.msra.mxu0 %v2935
  %3084 = vmatprep.subr.mxu0 0.0
  %3085 = vmatpush1.msra.mxu0 %v2936
  %3086 = vmatprep.mubr.f32.mxu0 %v481
  %3087 = vmatmul.mubr.f32.gmra.mrb[0].mxu0 %v480
  %v3088 = vpop.f32.mrb[0].mxu0
  %v3089 = vadd.f32 %v3004, %v3088
  %v3090 = vpop.f32.mrb[0].mxu0
  %3091 = vmatprep.mubr.f32.mxu0 %v485
  %3092 = vmatmul.mubr.f32.gmra.mrb[0].mxu0 %v484
  %v3093 = vpop.f32.mrb[0].mxu0
  %v3094 = vadd.f32 %v3009, %v3093
  %v3095 = vpop.f32.mrb[0].mxu0
  %3096 = vmatprep.mubr.f32.mxu0 %v489
  %3097 = vmatmul.mubr.f32.gmra.mrb[0].mxu0 %v488
  %v3098 = vpop.f32.mrb[0].mxu0
  %v3099 = vadd.f32 %v3014, %v3098
  %v3100 = vpop.f32.mrb[0].mxu0
  %3101 = vmatprep.mubr.f32.mxu0 %v493
  %3102 = vmatmul.mubr.f32.gmra.mrb[0].mxu0 %v492
  %v3103 = vpop.f32.mrb[0].mxu0
  %v3104 = vadd.f32 %v3019, %v3103
  %v3105 = vpop.f32.mrb[0].mxu0
  %3106 = vdwg.mxu0
  %s3107 = scalar_lea.vmem %s3, 224
  %v3108 = vld [vmem:[%s3107] sm:$0xff]
  %v3109 = vld [vmem:[%s3107 + $0x8] sm:$0xff]
  %v3110 = vld [vmem:[%s3107 + $0x10] sm:$0xff]
  %v3111 = vld [vmem:[%s3107 + $0x18] sm:$0xff]
  %v3113 = vsel %vm972, %v3108, 0
  %v3116 = vsel %vm972, %v3109, 0
  %v3119 = vsel %vm972, %v3110, 0
  %v3122 = vsel %vm972, %v3111, 0
  %3124 = vmatprep.subr.mxu0 0.0
  %3125 = vmatpush1.msra.mxu0 %v3089
  %3126 = vmatprep.subr.mxu0 0.0
  %3127 = vmatpush1.msra.mxu0 %v3094
  %3128 = vmatprep.subr.mxu0 0.0
  %3129 = vmatpush1.msra.mxu0 %v3099
  %3130 = vmatprep.subr.mxu0 0.0
  %3131 = vmatpush1.msra.mxu0 %v3104
  %3132 = vmatprep.subr.mxu0 0.0
  %3133 = vmatpush1.msra.mxu0 0.0
  %3134 = vmatprep.subr.mxu0 0.0
  %3135 = vmatpush1.msra.mxu0 0.0
  %3136 = vmatprep.subr.mxu0 0.0
  %3137 = vmatpush1.msra.mxu0 0.0
  %3138 = vmatprep.subr.mxu0 0.0
  %3139 = vmatpush1.msra.mxu0 0.0
  %3140 = vmatprep.subr.mxu0 0.0
  %3141 = vmatpush1.msra.mxu0 0.0
  %3142 = vmatprep.subr.mxu0 0.0
  %3143 = vmatpush1.msra.mxu0 0.0
  %3144 = vmatprep.subr.mxu0 0.0
  %3145 = vmatpush1.msra.mxu0 0.0
  %3146 = vmatprep.subr.mxu0 0.0
  %3147 = vmatpush1.msra.mxu0 0.0
  %3148 = vmatprep.subr.mxu0 0.0
  %3149 = vmatpush1.msra.mxu0 0.0
  %3150 = vmatprep.subr.mxu0 0.0
  %3151 = vmatpush1.msra.mxu0 0.0
  %3152 = vmatprep.subr.mxu0 0.0
  %3153 = vmatpush1.msra.mxu0 0.0
  %3154 = vmatprep.subr.mxu0 0.0
  %3155 = vmatpush1.msra.mxu0 0.0
  %3156 = vmatprep.subr.mxu0 0.0
  %3157 = vmatpush1.msra.mxu0 0.0
  %3158 = vmatprep.subr.mxu0 0.0
  %3159 = vmatpush1.msra.mxu0 0.0
  %3160 = vmatprep.subr.mxu0 0.0
  %3161 = vmatpush1.msra.mxu0 0.0
  %3162 = vmatprep.subr.mxu0 0.0
  %3163 = vmatpush1.msra.mxu0 0.0
  %3164 = vmatprep.subr.mxu0 0.0
  %3165 = vmatpush1.msra.mxu0 0.0
  %3166 = vmatprep.subr.mxu0 0.0
  %3167 = vmatpush1.msra.mxu0 0.0
  %3168 = vmatprep.subr.mxu0 0.0
  %3169 = vmatpush1.msra.mxu0 0.0
  %3170 = vmatprep.subr.mxu0 0.0
  %3171 = vmatpush1.msra.mxu0 0.0
  %3172 = vmatprep.subr.mxu0 0.0
  %3173 = vmatpush1.msra.mxu0 0.0
  %3174 = vmatprep.subr.mxu0 0.0
  %3175 = vmatpush1.msra.mxu0 0.0
  %3176 = vmatprep.subr.mxu0 0.0
  %3177 = vmatpush1.msra.mxu0 0.0
  %3178 = vmatprep.subr.mxu0 0.0
  %3179 = vmatpush1.msra.mxu0 0.0
  %3180 = vmatprep.subr.mxu0 0.0
  %3181 = vmatpush1.msra.mxu0 0.0
  %3182 = vmatprep.subr.mxu0 0.0
  %3183 = vmatpush1.msra.mxu0 0.0
  %3184 = vmatprep.subr.mxu0 0.0
  %3185 = vmatpush1.msra.mxu0 0.0
  %3186 = vmatprep.subr.mxu0 0.0
  %3187 = vmatpush1.msra.mxu0 0.0
  %3188 = vmatprep.mubr.f32.mxu0 0.0
  %3189 = vmatmul.mubr.f32.gmra.mrb[0].mxu0 %v3113
  %v3190 = vpop.f32.mrb[0].mxu0
  %v3191 = vadd.f32 0.0, %v3190
  %v3192 = vpop.f32.mrb[0].mxu0
  %3193 = vmatprep.mubr.f32.mxu0 0.0
  %3194 = vmatmul.mubr.f32.gmra.mrb[0].mxu0 %v3116
  %v3195 = vpop.f32.mrb[0].mxu0
  %v3196 = vadd.f32 0.0, %v3195
  %v3197 = vpop.f32.mrb[0].mxu0
  %3198 = vmatprep.mubr.f32.mxu0 0.0
  %3199 = vmatmul.mubr.f32.gmra.mrb[0].mxu0 %v3119
  %v3200 = vpop.f32.mrb[0].mxu0
  %v3201 = vadd.f32 0.0, %v3200
  %v3202 = vpop.f32.mrb[0].mxu0
  %3203 = vmatprep.mubr.f32.mxu0 0.0
  %3204 = vmatmul.mubr.f32.gmra.mrb[0].mxu0 %v3122
  %v3205 = vpop.f32.mrb[0].mxu0
  %v3206 = vadd.f32 0.0, %v3205
  %v3207 = vpop.f32.mrb[0].mxu0
  %3208 = vdwg.mxu0
  %v3209 = vadd.f32 %v2868, %v3191
  %v3210 = vadd.f32 %v2869, %v3196
  %v3211 = vadd.f32 %v2870, %v3201
  %v3212 = vadd.f32 %v2871, %v3206
  %s3213 = scalar_lea.vmem %s2, 4096
  %v3214 = vld [vmem:[%s3213] sm:$0xff]
  %v3215 = vld [vmem:[%s3213 + $0x8] sm:$0xff]
  %v3216 = vld [vmem:[%s3213 + $0x10] sm:$0xff]
  %v3217 = vld [vmem:[%s3213 + $0x18] sm:$0xff]
  %v3218 = vld [vmem:[%s3213 + $0x20] sm:$0xff]
  %v3219 = vld [vmem:[%s3213 + $0x28] sm:$0xff]
  %v3220 = vld [vmem:[%s3213 + $0x30] sm:$0xff]
  %v3221 = vld [vmem:[%s3213 + $0x38] sm:$0xff]
  %v3222 = vld [vmem:[%s3213 + $0x40] sm:$0xff]
  %v3223 = vld [vmem:[%s3213 + $0x48] sm:$0xff]
  %v3224 = vld [vmem:[%s3213 + $0x50] sm:$0xff]
  %v3225 = vld [vmem:[%s3213 + $0x58] sm:$0xff]
  %v3226 = vld [vmem:[%s3213 + $0x60] sm:$0xff]
  %v3227 = vld [vmem:[%s3213 + $0x68] sm:$0xff]
  %v3228 = vld [vmem:[%s3213 + $0x70] sm:$0xff]
  %v3229 = vld [vmem:[%s3213 + $0x78] sm:$0xff]
  %v3230 = vld [vmem:[%s3213 + $0x80] sm:$0xff]
  %v3231 = vld [vmem:[%s3213 + $0x88] sm:$0xff]
  %v3232 = vld [vmem:[%s3213 + $0x90] sm:$0xff]
  %v3233 = vld [vmem:[%s3213 + $0x98] sm:$0xff]
  %v3234 = vld [vmem:[%s3213 + $0xa0] sm:$0xff]
  %v3235 = vld [vmem:[%s3213 + $0xa8] sm:$0xff]
  %v3236 = vld [vmem:[%s3213 + $0xb0] sm:$0xff]
  %v3237 = vld [vmem:[%s3213 + $0xb8] sm:$0xff]
  %v3238 = vld [vmem:[%s3213 + $0xc0] sm:$0xff]
  %v3239 = vld [vmem:[%s3213 + $0xc8] sm:$0xff]
  %v3240 = vld [vmem:[%s3213 + $0xd0] sm:$0xff]
  %v3241 = vld [vmem:[%s3213 + $0xd8] sm:$0xff]
  %v3242 = vld [vmem:[%s3213 + $0xe0] sm:$0xff]
  %v3243 = vld [vmem:[%s3213 + $0xe8] sm:$0xff]
  %v3244 = vld [vmem:[%s3213 + $0xf0] sm:$0xff]
  %v3245 = vld [vmem:[%s3213 + $0xf8] sm:$0xff]
  %v3246 = vld [vmem:[%s3213 + $0x100] sm:$0xff]
  %v3247 = vld [vmem:[%s3213 + $0x108] sm:$0xff]
  %v3248 = vld [vmem:[%s3213 + $0x110] sm:$0xff]
  %v3249 = vld [vmem:[%s3213 + $0x118] sm:$0xff]
  %v3250 = vld [vmem:[%s3213 + $0x120] sm:$0xff]
  %v3251 = vld [vmem:[%s3213 + $0x128] sm:$0xff]
  %v3252 = vld [vmem:[%s3213 + $0x130] sm:$0xff]
  %v3253 = vld [vmem:[%s3213 + $0x138] sm:$0xff]
  %v3254 = vld [vmem:[%s3213 + $0x140] sm:$0xff]
  %v3255 = vld [vmem:[%s3213 + $0x148] sm:$0xff]
  %v3256 = vld [vmem:[%s3213 + $0x150] sm:$0xff]
  %v3257 = vld [vmem:[%s3213 + $0x158] sm:$0xff]
  %v3258 = vld [vmem:[%s3213 + $0x160] sm:$0xff]
  %v3259 = vld [vmem:[%s3213 + $0x168] sm:$0xff]
  %v3260 = vld [vmem:[%s3213 + $0x170] sm:$0xff]
  %v3261 = vld [vmem:[%s3213 + $0x178] sm:$0xff]
  %v3262 = vld [vmem:[%s3213 + $0x180] sm:$0xff]
  %v3263 = vld [vmem:[%s3213 + $0x188] sm:$0xff]
  %v3264 = vld [vmem:[%s3213 + $0x190] sm:$0xff]
  %v3265 = vld [vmem:[%s3213 + $0x198] sm:$0xff]
  %v3266 = vld [vmem:[%s3213 + $0x1a0] sm:$0xff]
  %v3267 = vld [vmem:[%s3213 + $0x1a8] sm:$0xff]
  %v3268 = vld [vmem:[%s3213 + $0x1b0] sm:$0xff]
  %v3269 = vld [vmem:[%s3213 + $0x1b8] sm:$0xff]
  %v3270 = vld [vmem:[%s3213 + $0x1c0] sm:$0xff]
  %v3271 = vld [vmem:[%s3213 + $0x1c8] sm:$0xff]
  %v3272 = vld [vmem:[%s3213 + $0x1d0] sm:$0xff]
  %v3273 = vld [vmem:[%s3213 + $0x1d8] sm:$0xff]
  %v3274 = vld [vmem:[%s3213 + $0x1e0] sm:$0xff]
  %v3275 = vld [vmem:[%s3213 + $0x1e8] sm:$0xff]
  %v3276 = vld [vmem:[%s3213 + $0x1f0] sm:$0xff]
  %v3277 = vld [vmem:[%s3213 + $0x1f8] sm:$0xff]
  %3278 = vmatprep.subr.mxu0 0.0
  %3279 = vmatpush1.msra.mxu0 %v3214
  %3280 = vmatprep.subr.mxu0 0.0
  %3281 = vmatpush1.msra.mxu0 %v3215
  %3282 = vmatprep.subr.mxu0 0.0
  %3283 = vmatpush1.msra.mxu0 %v3216
  %3284 = vmatprep.subr.mxu0 0.0
  %3285 = vmatpush1.msra.mxu0 %v3217
  %3286 = vmatprep.subr.mxu0 0.0
  %3287 = vmatpush1.msra.mxu0 %v3218
  %3288 = vmatprep.subr.mxu0 0.0
  %3289 = vmatpush1.msra.mxu0 %v3219
  %3290 = vmatprep.subr.mxu0 0.0
  %3291 = vmatpush1.msra.mxu0 %v3220
  %3292 = vmatprep.subr.mxu0 0.0
  %3293 = vmatpush1.msra.mxu0 %v3221
  %3294 = vmatprep.subr.mxu0 0.0
  %3295 = vmatpush1.msra.mxu0 %v3222
  %3296 = vmatprep.subr.mxu0 0.0
  %3297 = vmatpush1.msra.mxu0 %v3223
  %3298 = vmatprep.subr.mxu0 0.0
  %3299 = vmatpush1.msra.mxu0 %v3224
  %3300 = vmatprep.subr.mxu0 0.0
  %3301 = vmatpush1.msra.mxu0 %v3225
  %3302 = vmatprep.subr.mxu0 0.0
  %3303 = vmatpush1.msra.mxu0 %v3226
  %3304 = vmatprep.subr.mxu0 0.0
  %3305 = vmatpush1.msra.mxu0 %v3227
  %3306 = vmatprep.subr.mxu0 0.0
  %3307 = vmatpush1.msra.mxu0 %v3228
  %3308 = vmatprep.subr.mxu0 0.0
  %3309 = vmatpush1.msra.mxu0 %v3229
  %3310 = vmatprep.subr.mxu0 0.0
  %3311 = vmatpush1.msra.mxu0 %v3230
  %3312 = vmatprep.subr.mxu0 0.0
  %3313 = vmatpush1.msra.mxu0 %v3231
  %3314 = vmatprep.subr.mxu0 0.0
  %3315 = vmatpush1.msra.mxu0 %v3232
  %3316 = vmatprep.subr.mxu0 0.0
  %3317 = vmatpush1.msra.mxu0 %v3233
  %3318 = vmatprep.subr.mxu0 0.0
  %3319 = vmatpush1.msra.mxu0 %v3234
  %3320 = vmatprep.subr.mxu0 0.0
  %3321 = vmatpush1.msra.mxu0 %v3235
  %3322 = vmatprep.subr.mxu0 0.0
  %3323 = vmatpush1.msra.mxu0 %v3236
  %3324 = vmatprep.subr.mxu0 0.0
  %3325 = vmatpush1.msra.mxu0 %v3237
  %3326 = vmatprep.subr.mxu0 0.0
  %3327 = vmatpush1.msra.mxu0 %v3238
  %3328 = vmatprep.subr.mxu0 0.0
  %3329 = vmatpush1.msra.mxu0 %v3239
  %3330 = vmatprep.subr.mxu0 0.0
  %3331 = vmatpush1.msra.mxu0 %v3240
  %3332 = vmatprep.subr.mxu0 0.0
  %3333 = vmatpush1.msra.mxu0 %v3241
  %3334 = vmatprep.subr.mxu0 0.0
  %3335 = vmatpush1.msra.mxu0 %v3242
  %3336 = vmatprep.subr.mxu0 0.0
  %3337 = vmatpush1.msra.mxu0 %v3243
  %3338 = vmatprep.subr.mxu0 0.0
  %3339 = vmatpush1.msra.mxu0 %v3244
  %3340 = vmatprep.subr.mxu0 0.0
  %3341 = vmatpush1.msra.mxu0 %v3245
  %3342 = vmatprep.mubr.f32.mxu0 %v479
  %3343 = vmatmul.mubr.f32.gmra.mrb[0].mxu0 %v478
  %v3344 = vpop.f32.mrb[0].mxu0
  %v3345 = vadd.f32 0.0, %v3344
  %v3346 = vpop.f32.mrb[0].mxu0
  %3347 = vmatprep.mubr.f32.mxu0 %v483
  %3348 = vmatmul.mubr.f32.gmra.mrb[0].mxu0 %v482
  %v3349 = vpop.f32.mrb[0].mxu0
  %v3350 = vadd.f32 0.0, %v3349
  %v3351 = vpop.f32.mrb[0].mxu0
  %3352 = vmatprep.mubr.f32.mxu0 %v487
  %3353 = vmatmul.mubr.f32.gmra.mrb[0].mxu0 %v486
  %v3354 = vpop.f32.mrb[0].mxu0
  %v3355 = vadd.f32 0.0, %v3354
  %v3356 = vpop.f32.mrb[0].mxu0
  %3357 = vmatprep.mubr.f32.mxu0 %v491
  %3358 = vmatmul.mubr.f32.gmra.mrb[0].mxu0 %v490
  %v3359 = vpop.f32.mrb[0].mxu0
  %v3360 = vadd.f32 0.0, %v3359
  %v3361 = vpop.f32.mrb[0].mxu0
  %3362 = vdwg.mxu0
  %3363 = vmatprep.subr.mxu0 0.0
  %3364 = vmatpush1.msra.mxu0 %v3246
  %3365 = vmatprep.subr.mxu0 0.0
  %3366 = vmatpush1.msra.mxu0 %v3247
  %3367 = vmatprep.subr.mxu0 0.0
  %3368 = vmatpush1.msra.mxu0 %v3248
  %3369 = vmatprep.subr.mxu0 0.0
  %3370 = vmatpush1.msra.mxu0 %v3249
  %3371 = vmatprep.subr.mxu0 0.0
  %3372 = vmatpush1.msra.mxu0 %v3250
  %3373 = vmatprep.subr.mxu0 0.0
  %3374 = vmatpush1.msra.mxu0 %v3251
  %3375 = vmatprep.subr.mxu0 0.0
  %3376 = vmatpush1.msra.mxu0 %v3252
  %3377 = vmatprep.subr.mxu0 0.0
  %3378 = vmatpush1.msra.mxu0 %v3253
  %3379 = vmatprep.subr.mxu0 0.0
  %3380 = vmatpush1.msra.mxu0 %v3254
  %3381 = vmatprep.subr.mxu0 0.0
  %3382 = vmatpush1.msra.mxu0 %v3255
  %3383 = vmatprep.subr.mxu0 0.0
  %3384 = vmatpush1.msra.mxu0 %v3256
  %3385 = vmatprep.subr.mxu0 0.0
  %3386 = vmatpush1.msra.mxu0 %v3257
  %3387 = vmatprep.subr.mxu0 0.0
  %3388 = vmatpush1.msra.mxu0 %v3258
  %3389 = vmatprep.subr.mxu0 0.0
  %3390 = vmatpush1.msra.mxu0 %v3259
  %3391 = vmatprep.subr.mxu0 0.0
  %3392 = vmatpush1.msra.mxu0 %v3260
  %3393 = vmatprep.subr.mxu0 0.0
  %3394 = vmatpush1.msra.mxu0 %v3261
  %3395 = vmatprep.subr.mxu0 0.0
  %3396 = vmatpush1.msra.mxu0 %v3262
  %3397 = vmatprep.subr.mxu0 0.0
  %3398 = vmatpush1.msra.mxu0 %v3263
  %3399 = vmatprep.subr.mxu0 0.0
  %3400 = vmatpush1.msra.mxu0 %v3264
  %3401 = vmatprep.subr.mxu0 0.0
  %3402 = vmatpush1.msra.mxu0 %v3265
  %3403 = vmatprep.subr.mxu0 0.0
  %3404 = vmatpush1.msra.mxu0 %v3266
  %3405 = vmatprep.subr.mxu0 0.0
  %3406 = vmatpush1.msra.mxu0 %v3267
  %3407 = vmatprep.subr.mxu0 0.0
  %3408 = vmatpush1.msra.mxu0 %v3268
  %3409 = vmatprep.subr.mxu0 0.0
  %3410 = vmatpush1.msra.mxu0 %v3269
  %3411 = vmatprep.subr.mxu0 0.0
  %3412 = vmatpush1.msra.mxu0 %v3270
  %3413 = vmatprep.subr.mxu0 0.0
  %3414 = vmatpush1.msra.mxu0 %v3271
  %3415 = vmatprep.subr.mxu0 0.0
  %3416 = vmatpush1.msra.mxu0 %v3272
  %3417 = vmatprep.subr.mxu0 0.0
  %3418 = vmatpush1.msra.mxu0 %v3273
  %3419 = vmatprep.subr.mxu0 0.0
  %3420 = vmatpush1.msra.mxu0 %v3274
  %3421 = vmatprep.subr.mxu0 0.0
  %3422 = vmatpush1.msra.mxu0 %v3275
  %3423 = vmatprep.subr.mxu0 0.0
  %3424 = vmatpush1.msra.mxu0 %v3276
  %3425 = vmatprep.subr.mxu0 0.0
  %3426 = vmatpush1.msra.mxu0 %v3277
  %3427 = vmatprep.mubr.f32.mxu0 %v481
  %3428 = vmatmul.mubr.f32.gmra.mrb[0].mxu0 %v480
  %v3429 = vpop.f32.mrb[0].mxu0
  %v3430 = vadd.f32 %v3345, %v3429
  %v3431 = vpop.f32.mrb[0].mxu0
  %3432 = vmatprep.mubr.f32.mxu0 %v485
  %3433 = vmatmul.mubr.f32.gmra.mrb[0].mxu0 %v484
  %v3434 = vpop.f32.mrb[0].mxu0
  %v3435 = vadd.f32 %v3350, %v3434
  %v3436 = vpop.f32.mrb[0].mxu0
  %3437 = vmatprep.mubr.f32.mxu0 %v489
  %3438 = vmatmul.mubr.f32.gmra.mrb[0].mxu0 %v488
  %v3439 = vpop.f32.mrb[0].mxu0
  %v3440 = vadd.f32 %v3355, %v3439
  %v3441 = vpop.f32.mrb[0].mxu0
  %3442 = vmatprep.mubr.f32.mxu0 %v493
  %3443 = vmatmul.mubr.f32.gmra.mrb[0].mxu0 %v492
  %v3444 = vpop.f32.mrb[0].mxu0
  %v3445 = vadd.f32 %v3360, %v3444
  %v3446 = vpop.f32.mrb[0].mxu0
  %3447 = vdwg.mxu0
  %s3448 = scalar_lea.vmem %s3, 256
  %v3449 = vld [vmem:[%s3448] sm:$0xff]
  %v3450 = vld [vmem:[%s3448 + $0x8] sm:$0xff]
  %v3451 = vld [vmem:[%s3448 + $0x10] sm:$0xff]
  %v3452 = vld [vmem:[%s3448 + $0x18] sm:$0xff]
  %v3454 = vsel %vm972, %v3449, 0
  %v3457 = vsel %vm972, %v3450, 0
  %v3460 = vsel %vm972, %v3451, 0
  %v3463 = vsel %vm972, %v3452, 0
  %3465 = vmatprep.subr.mxu0 0.0
  %3466 = vmatpush1.msra.mxu0 %v3430
  %3467 = vmatprep.subr.mxu0 0.0
  %3468 = vmatpush1.msra.mxu0 %v3435
  %3469 = vmatprep.subr.mxu0 0.0
  %3470 = vmatpush1.msra.mxu0 %v3440
  %3471 = vmatprep.subr.mxu0 0.0
  %3472 = vmatpush1.msra.mxu0 %v3445
  %3473 = vmatprep.subr.mxu0 0.0
  %3474 = vmatpush1.msra.mxu0 0.0
  %3475 = vmatprep.subr.mxu0 0.0
  %3476 = vmatpush1.msra.mxu0 0.0
  %3477 = vmatprep.subr.mxu0 0.0
  %3478 = vmatpush1.msra.mxu0 0.0
  %3479 = vmatprep.subr.mxu0 0.0
  %3480 = vmatpush1.msra.mxu0 0.0
  %3481 = vmatprep.subr.mxu0 0.0
  %3482 = vmatpush1.msra.mxu0 0.0
  %3483 = vmatprep.subr.mxu0 0.0
  %3484 = vmatpush1.msra.mxu0 0.0
  %3485 = vmatprep.subr.mxu0 0.0
  %3486 = vmatpush1.msra.mxu0 0.0
  %3487 = vmatprep.subr.mxu0 0.0
  %3488 = vmatpush1.msra.mxu0 0.0
  %3489 = vmatprep.subr.mxu0 0.0
  %3490 = vmatpush1.msra.mxu0 0.0
  %3491 = vmatprep.subr.mxu0 0.0
  %3492 = vmatpush1.msra.mxu0 0.0
  %3493 = vmatprep.subr.mxu0 0.0
  %3494 = vmatpush1.msra.mxu0 0.0
  %3495 = vmatprep.subr.mxu0 0.0
  %3496 = vmatpush1.msra.mxu0 0.0
  %3497 = vmatprep.subr.mxu0 0.0
  %3498 = vmatpush1.msra.mxu0 0.0
  %3499 = vmatprep.subr.mxu0 0.0
  %3500 = vmatpush1.msra.mxu0 0.0
  %3501 = vmatprep.subr.mxu0 0.0
  %3502 = vmatpush1.msra.mxu0 0.0
  %3503 = vmatprep.subr.mxu0 0.0
  %3504 = vmatpush1.msra.mxu0 0.0
  %3505 = vmatprep.subr.mxu0 0.0
  %3506 = vmatpush1.msra.mxu0 0.0
  %3507 = vmatprep.subr.mxu0 0.0
  %3508 = vmatpush1.msra.mxu0 0.0
  %3509 = vmatprep.subr.mxu0 0.0
  %3510 = vmatpush1.msra.mxu0 0.0
  %3511 = vmatprep.subr.mxu0 0.0
  %3512 = vmatpush1.msra.mxu0 0.0
  %3513 = vmatprep.subr.mxu0 0.0
  %3514 = vmatpush1.msra.mxu0 0.0
  %3515 = vmatprep.subr.mxu0 0.0
  %3516 = vmatpush1.msra.mxu0 0.0
  %3517 = vmatprep.subr.mxu0 0.0
  %3518 = vmatpush1.msra.mxu0 0.0
  %3519 = vmatprep.subr.mxu0 0.0
  %3520 = vmatpush1.msra.mxu0 0.0
  %3521 = vmatprep.subr.mxu0 0.0
  %3522 = vmatpush1.msra.mxu0 0.0
  %3523 = vmatprep.subr.mxu0 0.0
  %3524 = vmatpush1.msra.mxu0 0.0
  %3525 = vmatprep.subr.mxu0 0.0
  %3526 = vmatpush1.msra.mxu0 0.0
  %3527 = vmatprep.subr.mxu0 0.0
  %3528 = vmatpush1.msra.mxu0 0.0
  %3529 = vmatprep.mubr.f32.mxu0 0.0
  %3530 = vmatmul.mubr.f32.gmra.mrb[0].mxu0 %v3454
  %v3531 = vpop.f32.mrb[0].mxu0
  %v3532 = vadd.f32 0.0, %v3531
  %v3533 = vpop.f32.mrb[0].mxu0
  %3534 = vmatprep.mubr.f32.mxu0 0.0
  %3535 = vmatmul.mubr.f32.gmra.mrb[0].mxu0 %v3457
  %v3536 = vpop.f32.mrb[0].mxu0
  %v3537 = vadd.f32 0.0, %v3536
  %v3538 = vpop.f32.mrb[0].mxu0
  %3539 = vmatprep.mubr.f32.mxu0 0.0
  %3540 = vmatmul.mubr.f32.gmra.mrb[0].mxu0 %v3460
  %v3541 = vpop.f32.mrb[0].mxu0
  %v3542 = vadd.f32 0.0, %v3541
  %v3543 = vpop.f32.mrb[0].mxu0
  %3544 = vmatprep.mubr.f32.mxu0 0.0
  %3545 = vmatmul.mubr.f32.gmra.mrb[0].mxu0 %v3463
  %v3546 = vpop.f32.mrb[0].mxu0
  %v3547 = vadd.f32 0.0, %v3546
  %v3548 = vpop.f32.mrb[0].mxu0
  %3549 = vdwg.mxu0
  %v3550 = vadd.f32 %v3209, %v3532
  %v3551 = vadd.f32 %v3210, %v3537
  %v3552 = vadd.f32 %v3211, %v3542
  %v3553 = vadd.f32 %v3212, %v3547
  %vm3554 = vcmask 801792
  %v3555 = vsel %vm3554, %v3550, 0.0
  %3556 = vadd.xlane.f32.xlu0 %v3555
  %v3557 = vpop.xlane.xlu0 %3556
  %v3558 = vsel %vm3554, %v3551, 0.0
  %3559 = vadd.xlane.f32.xlu0 %v3558
  %v3560 = vpop.xlane.xlu0 %3559
  %v3561 = vsel %vm3554, %v3552, 0.0
  %3562 = vadd.xlane.f32.xlu0 %v3561
  %v3563 = vpop.xlane.xlu0 %3562
  %v3564 = vsel %vm3554, %v3553, 0.0
  %3565 = vadd.xlane.f32.xlu0 %v3564
  %v3566 = vpop.xlane.xlu0 %3565
  %v3567 = vmul.f32 %v3557, 0.010204081
  %v3568 = vmul.f32 %v3560, 0.010204081
  %v3569 = vmul.f32 %v3563, 0.010204081
  %v3570 = vmul.f32 %v3566, 0.010204081
  %v3571 = vmul.f32 %v3550, %v3550
  %v3572 = vmul.f32 %v3551, %v3551
  %v3573 = vmul.f32 %v3552, %v3552
  %v3574 = vmul.f32 %v3553, %v3553
  %v3575 = vsel %vm3554, %v3571, 0.0
  %3576 = vadd.xlane.f32.xlu0 %v3575
  %v3577 = vpop.xlane.xlu0 %3576
  %v3578 = vsel %vm3554, %v3572, 0.0
  %3579 = vadd.xlane.f32.xlu0 %v3578
  %v3580 = vpop.xlane.xlu0 %3579
  %v3581 = vsel %vm3554, %v3573, 0.0
  %3582 = vadd.xlane.f32.xlu0 %v3581
  %v3583 = vpop.xlane.xlu0 %3582
  %v3584 = vsel %vm3554, %v3574, 0.0
  %3585 = vadd.xlane.f32.xlu0 %v3584
  %v3586 = vpop.xlane.xlu0 %3585
  %v3587 = vmul.f32 %v3577, 0.010204081
  %v3588 = vmul.f32 %v3580, 0.010204081
  %v3589 = vmul.f32 %v3583, 0.010204081
  %v3590 = vmul.f32 %v3586, 0.010204081
  %v3591 = vmul.f32 %v3567, %v3567
  %v3592 = vmul.f32 %v3568, %v3568
  %v3593 = vmul.f32 %v3569, %v3569
  %v3594 = vmul.f32 %v3570, %v3570
  %v3595 = vsub.f32 %v3587, %v3591
  %v3596 = vsub.f32 %v3588, %v3592
  %v3597 = vsub.f32 %v3589, %v3593
  %v3598 = vsub.f32 %v3590, %v3594
  %s3599 = scalar_lea.vmem %s8, 32
  %v3600 = vld [vmem:[%s3599] sm:$0xff]
  %v3601 = vld [vmem:[%s3599 + $0x8] sm:$0xff]
  %v3602 = vld [vmem:[%s3599 + $0x10] sm:$0xff]
  %v3603 = vld [vmem:[%s3599 + $0x18] sm:$0xff]
  %v3604 = vadd.f32 %v3595, 1e-05
  %v3605 = vadd.f32 %v3596, 1e-05
  %v3606 = vadd.f32 %v3597, 1e-05
  %v3607 = vadd.f32 %v3598, 1e-05
  %v3608 = vrsqrt.pop %v3604
  %v3609 = vrsqrt.pop %v3605
  %v3610 = vrsqrt.pop %v3606
  %v3611 = vrsqrt.pop %v3607
  %v3612 = vmul.f32 %v3600, %v3608
  %v3613 = vmul.f32 %v3601, %v3609
  %v3614 = vmul.f32 %v3602, %v3610
  %v3615 = vmul.f32 %v3603, %v3611
  %s3616 = scalar_lea.vmem %s9, 32
  %v3617 = vld [vmem:[%s3616] sm:$0xff]
  %v3618 = vld [vmem:[%s3616 + $0x8] sm:$0xff]
  %v3619 = vld [vmem:[%s3616 + $0x10] sm:$0xff]
  %v3620 = vld [vmem:[%s3616 + $0x18] sm:$0xff]
  %v3621 = vmul.f32 %v3567, %v3612
  %v3622 = vmul.f32 %v3568, %v3613
  %v3623 = vmul.f32 %v3569, %v3614
  %v3624 = vmul.f32 %v3570, %v3615
  %v3625 = vsub.f32 %v3617, %v3621
  %v3626 = vsub.f32 %v3618, %v3622
  %v3627 = vsub.f32 %v3619, %v3623
  %v3628 = vsub.f32 %v3620, %v3624
  %3630 = vset.pattern.permute.xlu0 0
  %3631 = vperm.xlu0 %3630, %v3612
  %v3632 = vpop.permute.xlu0 %3631
  %3635 = vset.pattern.permute.xlu0 0
  %3636 = vperm.xlu0 %3635, %v3613
  %v3637 = vpop.permute.xlu0 %3636
  %3640 = vset.pattern.permute.xlu0 0
  %3641 = vperm.xlu0 %3640, %v3614
  %v3642 = vpop.permute.xlu0 %3641
  %3645 = vset.pattern.permute.xlu0 0
  %3646 = vperm.xlu0 %3645, %v3615
  %v3647 = vpop.permute.xlu0 %3646
  %v3649 = vmul.f32 %v3550, %v3632
  %v3650 = vmul.f32 %v3551, %v3637
  %v3651 = vmul.f32 %v3552, %v3642
  %v3652 = vmul.f32 %v3553, %v3647
  %3654 = vset.pattern.permute.xlu0 0
  %3655 = vperm.xlu0 %3654, %v3625
  %v3656 = vpop.permute.xlu0 %3655
  %3659 = vset.pattern.permute.xlu0 0
  %3660 = vperm.xlu0 %3659, %v3626
  %v3661 = vpop.permute.xlu0 %3660
  %3664 = vset.pattern.permute.xlu0 0
  %3665 = vperm.xlu0 %3664, %v3627
  %v3666 = vpop.permute.xlu0 %3665
  %3669 = vset.pattern.permute.xlu0 0
  %3670 = vperm.xlu0 %3669, %v3628
  %v3671 = vpop.permute.xlu0 %3670
  %v3673 = vadd.f32 %v3649, %v3656
  %v3674 = vadd.f32 %v3650, %v3661
  %v3675 = vadd.f32 %v3651, %v3666
  %v3676 = vadd.f32 %v3652, %v3671
  %v3677 = vmax.f32 %v3673, 0.0
  %v3678 = vmax.f32 %v3674, 0.0
  %v3679 = vmax.f32 %v3675, 0.0
  %v3680 = vmax.f32 %v3676, 0.0
  %v3681 = vld [vmem:[%s4] sm:$0xff]
  %v3682 = vld [vmem:[%s4 + $0x8] sm:$0xff]
  %v3683 = vld [vmem:[%s4 + $0x10] sm:$0xff]
  %v3684 = vld [vmem:[%s4 + $0x18] sm:$0xff]
  %v3685 = vld [vmem:[%s4 + $0x20] sm:$0xff]
  %v3686 = vld [vmem:[%s4 + $0x28] sm:$0xff]
  %v3687 = vld [vmem:[%s4 + $0x30] sm:$0xff]
  %v3688 = vld [vmem:[%s4 + $0x38] sm:$0xff]
  %v3689 = vld [vmem:[%s4 + $0x40] sm:$0xff]
  %v3690 = vld [vmem:[%s4 + $0x48] sm:$0xff]
  %v3691 = vld [vmem:[%s4 + $0x50] sm:$0xff]
  %v3692 = vld [vmem:[%s4 + $0x58] sm:$0xff]
  %v3693 = vld [vmem:[%s4 + $0x60] sm:$0x3]
  %v3695 = vsel %vm3554, %v3677, 0
  %v3698 = vsel %vm3554, %v3678, 0
  %v3701 = vsel %vm3554, %v3679, 0
  %v3704 = vsel %vm3554, %v3680, 0
  %vm3706 = vcmask 1041408
  %v3708 = vsel %vm3706, %v3693, 0
  %3710 = vmatprep.subr.mxu0 0.0
  %3711 = vmatpush1.msra.mxu0 %v3681
  %3712 = vmatprep.subr.mxu0 0.0
  %3713 = vmatpush1.msra.mxu0 %v3682
  %3714 = vmatprep.subr.mxu0 0.0
  %3715 = vmatpush1.msra.mxu0 %v3683
  %3716 = vmatprep.subr.mxu0 0.0
  %3717 = vmatpush1.msra.mxu0 %v3684
  %3718 = vmatprep.subr.mxu0 0.0
  %3719 = vmatpush1.msra.mxu0 %v3685
  %3720 = vmatprep.subr.mxu0 0.0
  %3721 = vmatpush1.msra.mxu0 %v3686
  %3722 = vmatprep.subr.mxu0 0.0
  %3723 = vmatpush1.msra.mxu0 %v3687
  %3724 = vmatprep.subr.mxu0 0.0
  %3725 = vmatpush1.msra.mxu0 %v3688
  %3726 = vmatprep.subr.mxu0 0.0
  %3727 = vmatpush1.msra.mxu0 %v3689
  %3728 = vmatprep.subr.mxu0 0.0
  %3729 = vmatpush1.msra.mxu0 %v3690
  %3730 = vmatprep.subr.mxu0 0.0
  %3731 = vmatpush1.msra.mxu0 %v3691
  %3732 = vmatprep.subr.mxu0 0.0
  %3733 = vmatpush1.msra.mxu0 %v3692
  %3734 = vmatprep.subr.mxu0 0.0
  %3735 = vmatpush1.msra.mxu0 %v3708
  %3736 = vmatprep.subr.mxu0 0.0
  %3737 = vmatpush1.msra.mxu0 0.0
  %3738 = vmatprep.subr.mxu0 0.0
  %3739 = vmatpush1.msra.mxu0 0.0
  %3740 = vmatprep.subr.mxu0 0.0
  %3741 = vmatpush1.msra.mxu0 0.0
  %3742 = vmatprep.subr.mxu0 0.0
  %3743 = vmatpush1.msra.mxu0 0.0
  %3744 = vmatprep.subr.mxu0 0.0
  %3745 = vmatpush1.msra.mxu0 0.0
  %3746 = vmatprep.subr.mxu0 0.0
  %3747 = vmatpush1.msra.mxu0 0.0
  %3748 = vmatprep.subr.mxu0 0.0
  %3749 = vmatpush1.msra.mxu0 0.0
  %3750 = vmatprep.subr.mxu0 0.0
  %3751 = vmatpush1.msra.mxu0 0.0
  %3752 = vmatprep.subr.mxu0 0.0
  %3753 = vmatpush1.msra.mxu0 0.0
  %3754 = vmatprep.subr.mxu0 0.0
  %3755 = vmatpush1.msra.mxu0 0.0
  %3756 = vmatprep.subr.mxu0 0.0
  %3757 = vmatpush1.msra.mxu0 0.0
  %3758 = vmatprep.subr.mxu0 0.0
  %3759 = vmatpush1.msra.mxu0 0.0
  %3760 = vmatprep.subr.mxu0 0.0
  %3761 = vmatpush1.msra.mxu0 0.0
  %3762 = vmatprep.subr.mxu0 0.0
  %3763 = vmatpush1.msra.mxu0 0.0
  %3764 = vmatprep.subr.mxu0 0.0
  %3765 = vmatpush1.msra.mxu0 0.0
  %3766 = vmatprep.subr.mxu0 0.0
  %3767 = vmatpush1.msra.mxu0 0.0
  %3768 = vmatprep.subr.mxu0 0.0
  %3769 = vmatpush1.msra.mxu0 0.0
  %3770 = vmatprep.subr.mxu0 0.0
  %3771 = vmatpush1.msra.mxu0 0.0
  %3772 = vmatprep.subr.mxu0 0.0
  %3773 = vmatpush1.msra.mxu0 0.0
  %3774 = vmatprep.mubr.f32.mxu0 0.0
  %3775 = vmatmul.mubr.f32.gmra.mrb[0].mxu0 %v3695
  %v3776 = vpop.f32.mrb[0].mxu0
  %v3777 = vadd.f32 0.0, %v3776
  %v3778 = vpop.f32.mrb[0].mxu0
  %3779 = vmatprep.mubr.f32.mxu0 0.0
  %3780 = vmatmul.mubr.f32.gmra.mrb[0].mxu0 %v3698
  %v3781 = vpop.f32.mrb[0].mxu0
  %v3782 = vadd.f32 0.0, %v3781
  %v3783 = vpop.f32.mrb[0].mxu0
  %3784 = vmatprep.mubr.f32.mxu0 0.0
  %3785 = vmatmul.mubr.f32.gmra.mrb[0].mxu0 %v3701
  %v3786 = vpop.f32.mrb[0].mxu0
  %v3787 = vadd.f32 0.0, %v3786
  %v3788 = vpop.f32.mrb[0].mxu0
  %3789 = vmatprep.mubr.f32.mxu0 0.0
  %3790 = vmatmul.mubr.f32.gmra.mrb[0].mxu0 %v3704
  %v3791 = vpop.f32.mrb[0].mxu0
  %v3792 = vadd.f32 0.0, %v3791
  %v3793 = vpop.f32.mrb[0].mxu0
  %3794 = vdwg.mxu0
  %v3795 = vld [vmem:[%s5] sm:$0xff]
  %v3796 = vld [vmem:[%s5 + $0x8] sm:$0xff]
  %v3797 = vld [vmem:[%s5 + $0x10] sm:$0xff]
  %v3798 = vld [vmem:[%s5 + $0x18] sm:$0xff]
  %s3799 = scalar_lea.vmem %s4, 104
  %v3800 = vld [vmem:[%s3799] sm:$0xff]
  %v3801 = vld [vmem:[%s3799 + $0x8] sm:$0xff]
  %v3802 = vld [vmem:[%s3799 + $0x10] sm:$0xff]
  %v3803 = vld [vmem:[%s3799 + $0x18] sm:$0xff]
  %v3804 = vld [vmem:[%s3799 + $0x20] sm:$0xff]
  %v3805 = vld [vmem:[%s3799 + $0x28] sm:$0xff]
  %v3806 = vld [vmem:[%s3799 + $0x30] sm:$0xff]
  %v3807 = vld [vmem:[%s3799 + $0x38] sm:$0xff]
  %v3808 = vld [vmem:[%s3799 + $0x40] sm:$0xff]
  %v3809 = vld [vmem:[%s3799 + $0x48] sm:$0xff]
  %v3810 = vld [vmem:[%s3799 + $0x50] sm:$0xff]
  %v3811 = vld [vmem:[%s3799 + $0x58] sm:$0xff]
  %v3812 = vld [vmem:[%s3799 + $0x60] sm:$0x3]
  %v3814 = vsel %vm3706, %v3812, 0
  %3816 = vmatprep.subr.mxu0 0.0
  %3817 = vmatpush1.msra.mxu0 %v3800
  %3818 = vmatprep.subr.mxu0 0.0
  %3819 = vmatpush1.msra.mxu0 %v3801
  %3820 = vmatprep.subr.mxu0 0.0
  %3821 = vmatpush1.msra.mxu0 %v3802
  %3822 = vmatprep.subr.mxu0 0.0
  %3823 = vmatpush1.msra.mxu0 %v3803
  %3824 = vmatprep.subr.mxu0 0.0
  %3825 = vmatpush1.msra.mxu0 %v3804
  %3826 = vmatprep.subr.mxu0 0.0
  %3827 = vmatpush1.msra.mxu0 %v3805
  %3828 = vmatprep.subr.mxu0 0.0
  %3829 = vmatpush1.msra.mxu0 %v3806
  %3830 = vmatprep.subr.mxu0 0.0
  %3831 = vmatpush1.msra.mxu0 %v3807
  %3832 = vmatprep.subr.mxu0 0.0
  %3833 = vmatpush1.msra.mxu0 %v3808
  %3834 = vmatprep.subr.mxu0 0.0
  %3835 = vmatpush1.msra.mxu0 %v3809
  %3836 = vmatprep.subr.mxu0 0.0
  %3837 = vmatpush1.msra.mxu0 %v3810
  %3838 = vmatprep.subr.mxu0 0.0
  %3839 = vmatpush1.msra.mxu0 %v3811
  %3840 = vmatprep.subr.mxu0 0.0
  %3841 = vmatpush1.msra.mxu0 %v3814
  %3842 = vmatprep.subr.mxu0 0.0
  %3843 = vmatpush1.msra.mxu0 0.0
  %3844 = vmatprep.subr.mxu0 0.0
  %3845 = vmatpush1.msra.mxu0 0.0
  %3846 = vmatprep.subr.mxu0 0.0
  %3847 = vmatpush1.msra.mxu0 0.0
  %3848 = vmatprep.subr.mxu0 0.0
  %3849 = vmatpush1.msra.mxu0 0.0
  %3850 = vmatprep.subr.mxu0 0.0
  %3851 = vmatpush1.msra.mxu0 0.0
  %3852 = vmatprep.subr.mxu0 0.0
  %3853 = vmatpush1.msra.mxu0 0.0
  %3854 = vmatprep.subr.mxu0 0.0
  %3855 = vmatpush1.msra.mxu0 0.0
  %3856 = vmatprep.subr.mxu0 0.0
  %3857 = vmatpush1.msra.mxu0 0.0
  %3858 = vmatprep.subr.mxu0 0.0
  %3859 = vmatpush1.msra.mxu0 0.0
  %3860 = vmatprep.subr.mxu0 0.0
  %3861 = vmatpush1.msra.mxu0 0.0
  %3862 = vmatprep.subr.mxu0 0.0
  %3863 = vmatpush1.msra.mxu0 0.0
  %3864 = vmatprep.subr.mxu0 0.0
  %3865 = vmatpush1.msra.mxu0 0.0
  %3866 = vmatprep.subr.mxu0 0.0
  %3867 = vmatpush1.msra.mxu0 0.0
  %3868 = vmatprep.subr.mxu0 0.0
  %3869 = vmatpush1.msra.mxu0 0.0
  %3870 = vmatprep.subr.mxu0 0.0
  %3871 = vmatpush1.msra.mxu0 0.0
  %3872 = vmatprep.subr.mxu0 0.0
  %3873 = vmatpush1.msra.mxu0 0.0
  %3874 = vmatprep.subr.mxu0 0.0
  %3875 = vmatpush1.msra.mxu0 0.0
  %3876 = vmatprep.subr.mxu0 0.0
  %3877 = vmatpush1.msra.mxu0 0.0
  %3878 = vmatprep.subr.mxu0 0.0
  %3879 = vmatpush1.msra.mxu0 0.0
  %3880 = vmatprep.mubr.f32.mxu0 0.0
  %3881 = vmatmul.mubr.f32.gmra.mrb[0].mxu0 %v3695
  %v3882 = vpop.f32.mrb[0].mxu0
  %v3883 = vadd.f32 0.0, %v3882
  %v3884 = vpop.f32.mrb[0].mxu0
  %3885 = vmatprep.mubr.f32.mxu0 0.0
  %3886 = vmatmul.mubr.f32.gmra.mrb[0].mxu0 %v3698
  %v3887 = vpop.f32.mrb[0].mxu0
  %v3888 = vadd.f32 0.0, %v3887
  %v3889 = vpop.f32.mrb[0].mxu0
  %3890 = vmatprep.mubr.f32.mxu0 0.0
  %3891 = vmatmul.mubr.f32.gmra.mrb[0].mxu0 %v3701
  %v3892 = vpop.f32.mrb[0].mxu0
  %v3893 = vadd.f32 0.0, %v3892
  %v3894 = vpop.f32.mrb[0].mxu0
  %3895 = vmatprep.mubr.f32.mxu0 0.0
  %3896 = vmatmul.mubr.f32.gmra.mrb[0].mxu0 %v3704
  %v3897 = vpop.f32.mrb[0].mxu0
  %v3898 = vadd.f32 0.0, %v3897
  %v3899 = vpop.f32.mrb[0].mxu0
  %3900 = vdwg.mxu0
  %s3901 = scalar_lea.vmem %s5, 32
  %v3902 = vld [vmem:[%s3901] sm:$0xff]
  %v3903 = vld [vmem:[%s3901 + $0x8] sm:$0xff]
  %v3904 = vld [vmem:[%s3901 + $0x10] sm:$0xff]
  %v3905 = vld [vmem:[%s3901 + $0x18] sm:$0xff]
  %v3907 = vsel %vm972, %v3902, 0
  %v3910 = vsel %vm972, %v3903, 0
  %v3913 = vsel %vm972, %v3904, 0
  %v3916 = vsel %vm972, %v3905, 0
  %3918 = vmatprep.subr.mxu0 0.0
  %3919 = vmatpush1.msra.mxu0 %v3883
  %3920 = vmatprep.subr.mxu0 0.0
  %3921 = vmatpush1.msra.mxu0 %v3888
  %3922 = vmatprep.subr.mxu0 0.0
  %3923 = vmatpush1.msra.mxu0 %v3893
  %3924 = vmatprep.subr.mxu0 0.0
  %3925 = vmatpush1.msra.mxu0 %v3898
  %3926 = vmatprep.subr.mxu0 0.0
  %3927 = vmatpush1.msra.mxu0 0.0
  %3928 = vmatprep.subr.mxu0 0.0
  %3929 = vmatpush1.msra.mxu0 0.0
  %3930 = vmatprep.subr.mxu0 0.0
  %3931 = vmatpush1.msra.mxu0 0.0
  %3932 = vmatprep.subr.mxu0 0.0
  %3933 = vmatpush1.msra.mxu0 0.0
  %3934 = vmatprep.subr.mxu0 0.0
  %3935 = vmatpush1.msra.mxu0 0.0
  %3936 = vmatprep.subr.mxu0 0.0
  %3937 = vmatpush1.msra.mxu0 0.0
  %3938 = vmatprep.subr.mxu0 0.0
  %3939 = vmatpush1.msra.mxu0 0.0
  %3940 = vmatprep.subr.mxu0 0.0
  %3941 = vmatpush1.msra.mxu0 0.0
  %3942 = vmatprep.subr.mxu0 0.0
  %3943 = vmatpush1.msra.mxu0 0.0
  %3944 = vmatprep.subr.mxu0 0.0
  %3945 = vmatpush1.msra.mxu0 0.0
  %3946 = vmatprep.subr.mxu0 0.0
  %3947 = vmatpush1.msra.mxu0 0.0
  %3948 = vmatprep.subr.mxu0 0.0
  %3949 = vmatpush1.msra.mxu0 0.0
  %3950 = vmatprep.subr.mxu0 0.0
  %3951 = vmatpush1.msra.mxu0 0.0
  %3952 = vmatprep.subr.mxu0 0.0
  %3953 = vmatpush1.msra.mxu0 0.0
  %3954 = vmatprep.subr.mxu0 0.0
  %3955 = vmatpush1.msra.mxu0 0.0
  %3956 = vmatprep.subr.mxu0 0.0
  %3957 = vmatpush1.msra.mxu0 0.0
  %3958 = vmatprep.subr.mxu0 0.0
  %3959 = vmatpush1.msra.mxu0 0.0
  %3960 = vmatprep.subr.mxu0 0.0
  %3961 = vmatpush1.msra.mxu0 0.0
  %3962 = vmatprep.subr.mxu0 0.0
  %3963 = vmatpush1.msra.mxu0 0.0
  %3964 = vmatprep.subr.mxu0 0.0
  %3965 = vmatpush1.msra.mxu0 0.0
  %3966 = vmatprep.subr.mxu0 0.0
  %3967 = vmatpush1.msra.mxu0 0.0
  %3968 = vmatprep.subr.mxu0 0.0
  %3969 = vmatpush1.msra.mxu0 0.0
  %3970 = vmatprep.subr.mxu0 0.0
  %3971 = vmatpush1.msra.mxu0 0.0
  %3972 = vmatprep.subr.mxu0 0.0
  %3973 = vmatpush1.msra.mxu0 0.0
  %3974 = vmatprep.subr.mxu0 0.0
  %3975 = vmatpush1.msra.mxu0 0.0
  %3976 = vmatprep.subr.mxu0 0.0
  %3977 = vmatpush1.msra.mxu0 0.0
  %3978 = vmatprep.subr.mxu0 0.0
  %3979 = vmatpush1.msra.mxu0 0.0
  %3980 = vmatprep.subr.mxu0 0.0
  %3981 = vmatpush1.msra.mxu0 0.0
  %3982 = vmatprep.mubr.f32.mxu0 0.0
  %3983 = vmatmul.mubr.f32.gmra.mrb[0].mxu0 %v3907
  %v3984 = vpop.f32.mrb[0].mxu0
  %v3985 = vadd.f32 0.0, %v3984
  %v3986 = vpop.f32.mrb[0].mxu0
  %3987 = vmatprep.mubr.f32.mxu0 0.0
  %3988 = vmatmul.mubr.f32.gmra.mrb[0].mxu0 %v3910
  %v3989 = vpop.f32.mrb[0].mxu0
  %v3990 = vadd.f32 0.0, %v3989
  %v3991 = vpop.f32.mrb[0].mxu0
  %3992 = vmatprep.mubr.f32.mxu0 0.0
  %3993 = vmatmul.mubr.f32.gmra.mrb[0].mxu0 %v3913
  %v3994 = vpop.f32.mrb[0].mxu0
  %v3995 = vadd.f32 0.0, %v3994
  %v3996 = vpop.f32.mrb[0].mxu0
  %3997 = vmatprep.mubr.f32.mxu0 0.0
  %3998 = vmatmul.mubr.f32.gmra.mrb[0].mxu0 %v3916
  %v3999 = vpop.f32.mrb[0].mxu0
  %v4000 = vadd.f32 0.0, %v3999
  %v4001 = vpop.f32.mrb[0].mxu0
  %4002 = vdwg.mxu0
  %v4004 = vsel %vm972, %v3795, 0
  %v4007 = vsel %vm972, %v3796, 0
  %v4010 = vsel %vm972, %v3797, 0
  %v4013 = vsel %vm972, %v3798, 0
  %4015 = vmatprep.subr.mxu0 0.0
  %4016 = vmatpush1.msra.mxu0 %v3777
  %4017 = vmatprep.subr.mxu0 0.0
  %4018 = vmatpush1.msra.mxu0 %v3782
  %4019 = vmatprep.subr.mxu0 0.0
  %4020 = vmatpush1.msra.mxu0 %v3787
  %4021 = vmatprep.subr.mxu0 0.0
  %4022 = vmatpush1.msra.mxu0 %v3792
  %4023 = vmatprep.subr.mxu0 0.0
  %4024 = vmatpush1.msra.mxu0 0.0
  %4025 = vmatprep.subr.mxu0 0.0
  %4026 = vmatpush1.msra.mxu0 0.0
  %4027 = vmatprep.subr.mxu0 0.0
  %4028 = vmatpush1.msra.mxu0 0.0
  %4029 = vmatprep.subr.mxu0 0.0
  %4030 = vmatpush1.msra.mxu0 0.0
  %4031 = vmatprep.subr.mxu0 0.0
  %4032 = vmatpush1.msra.mxu0 0.0
  %4033 = vmatprep.subr.mxu0 0.0
  %4034 = vmatpush1.msra.mxu0 0.0
  %4035 = vmatprep.subr.mxu0 0.0
  %4036 = vmatpush1.msra.mxu0 0.0
  %4037 = vmatprep.subr.mxu0 0.0
  %4038 = vmatpush1.msra.mxu0 0.0
  %4039 = vmatprep.subr.mxu0 0.0
  %4040 = vmatpush1.msra.mxu0 0.0
  %4041 = vmatprep.subr.mxu0 0.0
  %4042 = vmatpush1.msra.mxu0 0.0
  %4043 = vmatprep.subr.mxu0 0.0
  %4044 = vmatpush1.msra.mxu0 0.0
  %4045 = vmatprep.subr.mxu0 0.0
  %4046 = vmatpush1.msra.mxu0 0.0
  %4047 = vmatprep.subr.mxu0 0.0
  %4048 = vmatpush1.msra.mxu0 0.0
  %4049 = vmatprep.subr.mxu0 0.0
  %4050 = vmatpush1.msra.mxu0 0.0
  %4051 = vmatprep.subr.mxu0 0.0
  %4052 = vmatpush1.msra.mxu0 0.0
  %4053 = vmatprep.subr.mxu0 0.0
  %4054 = vmatpush1.msra.mxu0 0.0
  %4055 = vmatprep.subr.mxu0 0.0
  %4056 = vmatpush1.msra.mxu0 0.0
  %4057 = vmatprep.subr.mxu0 0.0
  %4058 = vmatpush1.msra.mxu0 0.0
  %4059 = vmatprep.subr.mxu0 0.0
  %4060 = vmatpush1.msra.mxu0 0.0
  %4061 = vmatprep.subr.mxu0 0.0
  %4062 = vmatpush1.msra.mxu0 0.0
  %4063 = vmatprep.subr.mxu0 0.0
  %4064 = vmatpush1.msra.mxu0 0.0
  %4065 = vmatprep.subr.mxu0 0.0
  %4066 = vmatpush1.msra.mxu0 0.0
  %4067 = vmatprep.subr.mxu0 0.0
  %4068 = vmatpush1.msra.mxu0 0.0
  %4069 = vmatprep.subr.mxu0 0.0
  %4070 = vmatpush1.msra.mxu0 0.0
  %4071 = vmatprep.subr.mxu0 0.0
  %4072 = vmatpush1.msra.mxu0 0.0
  %4073 = vmatprep.subr.mxu0 0.0
  %4074 = vmatpush1.msra.mxu0 0.0
  %4075 = vmatprep.subr.mxu0 0.0
  %4076 = vmatpush1.msra.mxu0 0.0
  %4077 = vmatprep.subr.mxu0 0.0
  %4078 = vmatpush1.msra.mxu0 0.0
  %4079 = vmatprep.mubr.f32.mxu0 0.0
  %4080 = vmatmul.mubr.f32.gmra.mrb[0].mxu0 %v4004
  %v4081 = vpop.f32.mrb[0].mxu0
  %v4082 = vadd.f32 %v3985, %v4081
  %v4083 = vpop.f32.mrb[0].mxu0
  %4084 = vmatprep.mubr.f32.mxu0 0.0
  %4085 = vmatmul.mubr.f32.gmra.mrb[0].mxu0 %v4007
  %v4086 = vpop.f32.mrb[0].mxu0
  %v4087 = vadd.f32 %v3990, %v4086
  %v4088 = vpop.f32.mrb[0].mxu0
  %4089 = vmatprep.mubr.f32.mxu0 0.0
  %4090 = vmatmul.mubr.f32.gmra.mrb[0].mxu0 %v4010
  %v4091 = vpop.f32.mrb[0].mxu0
  %v4092 = vadd.f32 %v3995, %v4091
  %v4093 = vpop.f32.mrb[0].mxu0
  %4094 = vmatprep.mubr.f32.mxu0 0.0
  %4095 = vmatmul.mubr.f32.gmra.mrb[0].mxu0 %v4013
  %v4096 = vpop.f32.mrb[0].mxu0
  %v4097 = vadd.f32 %v4000, %v4096
  %v4098 = vpop.f32.mrb[0].mxu0
  %4099 = vdwg.mxu0
  %s4100 = scalar_lea.vmem %s4, 208
  %v4101 = vld [vmem:[%s4100] sm:$0xff]
  %v4102 = vld [vmem:[%s4100 + $0x8] sm:$0xff]
  %v4103 = vld [vmem:[%s4100 + $0x10] sm:$0xff]
  %v4104 = vld [vmem:[%s4100 + $0x18] sm:$0xff]
  %v4105 = vld [vmem:[%s4100 + $0x20] sm:$0xff]
  %v4106 = vld [vmem:[%s4100 + $0x28] sm:$0xff]
  %v4107 = vld [vmem:[%s4100 + $0x30] sm:$0xff]
  %v4108 = vld [vmem:[%s4100 + $0x38] sm:$0xff]
  %v4109 = vld [vmem:[%s4100 + $0x40] sm:$0xff]
  %v4110 = vld [vmem:[%s4100 + $0x48] sm:$0xff]
  %v4111 = vld [vmem:[%s4100 + $0x50] sm:$0xff]
  %v4112 = vld [vmem:[%s4100 + $0x58] sm:$0xff]
  %v4113 = vld [vmem:[%s4100 + $0x60] sm:$0x3]
  %v4115 = vsel %vm3706, %v4113, 0
  %4117 = vmatprep.subr.mxu0 0.0
  %4118 = vmatpush1.msra.mxu0 %v4101
  %4119 = vmatprep.subr.mxu0 0.0
  %4120 = vmatpush1.msra.mxu0 %v4102
  %4121 = vmatprep.subr.mxu0 0.0
  %4122 = vmatpush1.msra.mxu0 %v4103
  %4123 = vmatprep.subr.mxu0 0.0
  %4124 = vmatpush1.msra.mxu0 %v4104
  %4125 = vmatprep.subr.mxu0 0.0
  %4126 = vmatpush1.msra.mxu0 %v4105
  %4127 = vmatprep.subr.mxu0 0.0
  %4128 = vmatpush1.msra.mxu0 %v4106
  %4129 = vmatprep.subr.mxu0 0.0
  %4130 = vmatpush1.msra.mxu0 %v4107
  %4131 = vmatprep.subr.mxu0 0.0
  %4132 = vmatpush1.msra.mxu0 %v4108
  %4133 = vmatprep.subr.mxu0 0.0
  %4134 = vmatpush1.msra.mxu0 %v4109
  %4135 = vmatprep.subr.mxu0 0.0
  %4136 = vmatpush1.msra.mxu0 %v4110
  %4137 = vmatprep.subr.mxu0 0.0
  %4138 = vmatpush1.msra.mxu0 %v4111
  %4139 = vmatprep.subr.mxu0 0.0
  %4140 = vmatpush1.msra.mxu0 %v4112
  %4141 = vmatprep.subr.mxu0 0.0
  %4142 = vmatpush1.msra.mxu0 %v4115
  %4143 = vmatprep.subr.mxu0 0.0
  %4144 = vmatpush1.msra.mxu0 0.0
  %4145 = vmatprep.subr.mxu0 0.0
  %4146 = vmatpush1.msra.mxu0 0.0
  %4147 = vmatprep.subr.mxu0 0.0
  %4148 = vmatpush1.msra.mxu0 0.0
  %4149 = vmatprep.subr.mxu0 0.0
  %4150 = vmatpush1.msra.mxu0 0.0
  %4151 = vmatprep.subr.mxu0 0.0
  %4152 = vmatpush1.msra.mxu0 0.0
  %4153 = vmatprep.subr.mxu0 0.0
  %4154 = vmatpush1.msra.mxu0 0.0
  %4155 = vmatprep.subr.mxu0 0.0
  %4156 = vmatpush1.msra.mxu0 0.0
  %4157 = vmatprep.subr.mxu0 0.0
  %4158 = vmatpush1.msra.mxu0 0.0
  %4159 = vmatprep.subr.mxu0 0.0
  %4160 = vmatpush1.msra.mxu0 0.0
  %4161 = vmatprep.subr.mxu0 0.0
  %4162 = vmatpush1.msra.mxu0 0.0
  %4163 = vmatprep.subr.mxu0 0.0
  %4164 = vmatpush1.msra.mxu0 0.0
  %4165 = vmatprep.subr.mxu0 0.0
  %4166 = vmatpush1.msra.mxu0 0.0
  %4167 = vmatprep.subr.mxu0 0.0
  %4168 = vmatpush1.msra.mxu0 0.0
  %4169 = vmatprep.subr.mxu0 0.0
  %4170 = vmatpush1.msra.mxu0 0.0
  %4171 = vmatprep.subr.mxu0 0.0
  %4172 = vmatpush1.msra.mxu0 0.0
  %4173 = vmatprep.subr.mxu0 0.0
  %4174 = vmatpush1.msra.mxu0 0.0
  %4175 = vmatprep.subr.mxu0 0.0
  %4176 = vmatpush1.msra.mxu0 0.0
  %4177 = vmatprep.subr.mxu0 0.0
  %4178 = vmatpush1.msra.mxu0 0.0
  %4179 = vmatprep.subr.mxu0 0.0
  %4180 = vmatpush1.msra.mxu0 0.0
  %4181 = vmatprep.mubr.f32.mxu0 0.0
  %4182 = vmatmul.mubr.f32.gmra.mrb[0].mxu0 %v3695
  %v4183 = vpop.f32.mrb[0].mxu0
  %v4184 = vadd.f32 0.0, %v4183
  %v4185 = vpop.f32.mrb[0].mxu0
  %4186 = vmatprep.mubr.f32.mxu0 0.0
  %4187 = vmatmul.mubr.f32.gmra.mrb[0].mxu0 %v3698
  %v4188 = vpop.f32.mrb[0].mxu0
  %v4189 = vadd.f32 0.0, %v4188
  %v4190 = vpop.f32.mrb[0].mxu0
  %4191 = vmatprep.mubr.f32.mxu0 0.0
  %4192 = vmatmul.mubr.f32.gmra.mrb[0].mxu0 %v3701
  %v4193 = vpop.f32.mrb[0].mxu0
  %v4194 = vadd.f32 0.0, %v4193
  %v4195 = vpop.f32.mrb[0].mxu0
  %4196 = vmatprep.mubr.f32.mxu0 0.0
  %4197 = vmatmul.mubr.f32.gmra.mrb[0].mxu0 %v3704
  %v4198 = vpop.f32.mrb[0].mxu0
  %v4199 = vadd.f32 0.0, %v4198
  %v4200 = vpop.f32.mrb[0].mxu0
  %4201 = vdwg.mxu0
  %s4202 = scalar_lea.vmem %s5, 64
  %v4203 = vld [vmem:[%s4202] sm:$0xff]
  %v4204 = vld [vmem:[%s4202 + $0x8] sm:$0xff]
  %v4205 = vld [vmem:[%s4202 + $0x10] sm:$0xff]
  %v4206 = vld [vmem:[%s4202 + $0x18] sm:$0xff]
  %v4208 = vsel %vm972, %v4203, 0
  %v4211 = vsel %vm972, %v4204, 0
  %v4214 = vsel %vm972, %v4205, 0
  %v4217 = vsel %vm972, %v4206, 0
  %4219 = vmatprep.subr.mxu0 0.0
  %4220 = vmatpush1.msra.mxu0 %v4184
  %4221 = vmatprep.subr.mxu0 0.0
  %4222 = vmatpush1.msra.mxu0 %v4189
  %4223 = vmatprep.subr.mxu0 0.0
  %4224 = vmatpush1.msra.mxu0 %v4194
  %4225 = vmatprep.subr.mxu0 0.0
  %4226 = vmatpush1.msra.mxu0 %v4199
  %4227 = vmatprep.subr.mxu0 0.0
  %4228 = vmatpush1.msra.mxu0 0.0
  %4229 = vmatprep.subr.mxu0 0.0
  %4230 = vmatpush1.msra.mxu0 0.0
  %4231 = vmatprep.subr.mxu0 0.0
  %4232 = vmatpush1.msra.mxu0 0.0
  %4233 = vmatprep.subr.mxu0 0.0
  %4234 = vmatpush1.msra.mxu0 0.0
  %4235 = vmatprep.subr.mxu0 0.0
  %4236 = vmatpush1.msra.mxu0 0.0
  %4237 = vmatprep.subr.mxu0 0.0
  %4238 = vmatpush1.msra.mxu0 0.0
  %4239 = vmatprep.subr.mxu0 0.0
  %4240 = vmatpush1.msra.mxu0 0.0
  %4241 = vmatprep.subr.mxu0 0.0
  %4242 = vmatpush1.msra.mxu0 0.0
  %4243 = vmatprep.subr.mxu0 0.0
  %4244 = vmatpush1.msra.mxu0 0.0
  %4245 = vmatprep.subr.mxu0 0.0
  %4246 = vmatpush1.msra.mxu0 0.0
  %4247 = vmatprep.subr.mxu0 0.0
  %4248 = vmatpush1.msra.mxu0 0.0
  %4249 = vmatprep.subr.mxu0 0.0
  %4250 = vmatpush1.msra.mxu0 0.0
  %4251 = vmatprep.subr.mxu0 0.0
  %4252 = vmatpush1.msra.mxu0 0.0
  %4253 = vmatprep.subr.mxu0 0.0
  %4254 = vmatpush1.msra.mxu0 0.0
  %4255 = vmatprep.subr.mxu0 0.0
  %4256 = vmatpush1.msra.mxu0 0.0
  %4257 = vmatprep.subr.mxu0 0.0
  %4258 = vmatpush1.msra.mxu0 0.0
  %4259 = vmatprep.subr.mxu0 0.0
  %4260 = vmatpush1.msra.mxu0 0.0
  %4261 = vmatprep.subr.mxu0 0.0
  %4262 = vmatpush1.msra.mxu0 0.0
  %4263 = vmatprep.subr.mxu0 0.0
  %4264 = vmatpush1.msra.mxu0 0.0
  %4265 = vmatprep.subr.mxu0 0.0
  %4266 = vmatpush1.msra.mxu0 0.0
  %4267 = vmatprep.subr.mxu0 0.0
  %4268 = vmatpush1.msra.mxu0 0.0
  %4269 = vmatprep.subr.mxu0 0.0
  %4270 = vmatpush1.msra.mxu0 0.0
  %4271 = vmatprep.subr.mxu0 0.0
  %4272 = vmatpush1.msra.mxu0 0.0
  %4273 = vmatprep.subr.mxu0 0.0
  %4274 = vmatpush1.msra.mxu0 0.0
  %4275 = vmatprep.subr.mxu0 0.0
  %4276 = vmatpush1.msra.mxu0 0.0
  %4277 = vmatprep.subr.mxu0 0.0
  %4278 = vmatpush1.msra.mxu0 0.0
  %4279 = vmatprep.subr.mxu0 0.0
  %4280 = vmatpush1.msra.mxu0 0.0
  %4281 = vmatprep.subr.mxu0 0.0
  %4282 = vmatpush1.msra.mxu0 0.0
  %4283 = vmatprep.mubr.f32.mxu0 0.0
  %4284 = vmatmul.mubr.f32.gmra.mrb[0].mxu0 %v4208
  %v4285 = vpop.f32.mrb[0].mxu0
  %v4286 = vadd.f32 0.0, %v4285
  %v4287 = vpop.f32.mrb[0].mxu0
  %4288 = vmatprep.mubr.f32.mxu0 0.0
  %4289 = vmatmul.mubr.f32.gmra.mrb[0].mxu0 %v4211
  %v4290 = vpop.f32.mrb[0].mxu0
  %v4291 = vadd.f32 0.0, %v4290
  %v4292 = vpop.f32.mrb[0].mxu0
  %4293 = vmatprep.mubr.f32.mxu0 0.0
  %4294 = vmatmul.mubr.f32.gmra.mrb[0].mxu0 %v4214
  %v4295 = vpop.f32.mrb[0].mxu0
  %v4296 = vadd.f32 0.0, %v4295
  %v4297 = vpop.f32.mrb[0].mxu0
  %4298 = vmatprep.mubr.f32.mxu0 0.0
  %4299 = vmatmul.mubr.f32.gmra.mrb[0].mxu0 %v4217
  %v4300 = vpop.f32.mrb[0].mxu0
  %v4301 = vadd.f32 0.0, %v4300
  %v4302 = vpop.f32.mrb[0].mxu0
  %4303 = vdwg.mxu0
  %v4304 = vadd.f32 %v4082, %v4286
  %v4305 = vadd.f32 %v4087, %v4291
  %v4306 = vadd.f32 %v4092, %v4296
  %v4307 = vadd.f32 %v4097, %v4301
  %s4308 = scalar_lea.vmem %s4, 312
  %v4309 = vld [vmem:[%s4308] sm:$0xff]
  %v4310 = vld [vmem:[%s4308 + $0x8] sm:$0xff]
  %v4311 = vld [vmem:[%s4308 + $0x10] sm:$0xff]
  %v4312 = vld [vmem:[%s4308 + $0x18] sm:$0xff]
  %v4313 = vld [vmem:[%s4308 + $0x20] sm:$0xff]
  %v4314 = vld [vmem:[%s4308 + $0x28] sm:$0xff]
  %v4315 = vld [vmem:[%s4308 + $0x30] sm:$0xff]
  %v4316 = vld [vmem:[%s4308 + $0x38] sm:$0xff]
  %v4317 = vld [vmem:[%s4308 + $0x40] sm:$0xff]
  %v4318 = vld [vmem:[%s4308 + $0x48] sm:$0xff]
  %v4319 = vld [vmem:[%s4308 + $0x50] sm:$0xff]
  %v4320 = vld [vmem:[%s4308 + $0x58] sm:$0xff]
  %v4321 = vld [vmem:[%s4308 + $0x60] sm:$0x3]
  %v4323 = vsel %vm3706, %v4321, 0
  %4325 = vmatprep.subr.mxu0 0.0
  %4326 = vmatpush1.msra.mxu0 %v4309
  %4327 = vmatprep.subr.mxu0 0.0
  %4328 = vmatpush1.msra.mxu0 %v4310
  %4329 = vmatprep.subr.mxu0 0.0
  %4330 = vmatpush1.msra.mxu0 %v4311
  %4331 = vmatprep.subr.mxu0 0.0
  %4332 = vmatpush1.msra.mxu0 %v4312
  %4333 = vmatprep.subr.mxu0 0.0
  %4334 = vmatpush1.msra.mxu0 %v4313
  %4335 = vmatprep.subr.mxu0 0.0
  %4336 = vmatpush1.msra.mxu0 %v4314
  %4337 = vmatprep.subr.mxu0 0.0
  %4338 = vmatpush1.msra.mxu0 %v4315
  %4339 = vmatprep.subr.mxu0 0.0
  %4340 = vmatpush1.msra.mxu0 %v4316
  %4341 = vmatprep.subr.mxu0 0.0
  %4342 = vmatpush1.msra.mxu0 %v4317
  %4343 = vmatprep.subr.mxu0 0.0
  %4344 = vmatpush1.msra.mxu0 %v4318
  %4345 = vmatprep.subr.mxu0 0.0
  %4346 = vmatpush1.msra.mxu0 %v4319
  %4347 = vmatprep.subr.mxu0 0.0
  %4348 = vmatpush1.msra.mxu0 %v4320
  %4349 = vmatprep.subr.mxu0 0.0
  %4350 = vmatpush1.msra.mxu0 %v4323
  %4351 = vmatprep.subr.mxu0 0.0
  %4352 = vmatpush1.msra.mxu0 0.0
  %4353 = vmatprep.subr.mxu0 0.0
  %4354 = vmatpush1.msra.mxu0 0.0
  %4355 = vmatprep.subr.mxu0 0.0
  %4356 = vmatpush1.msra.mxu0 0.0
  %4357 = vmatprep.subr.mxu0 0.0
  %4358 = vmatpush1.msra.mxu0 0.0
  %4359 = vmatprep.subr.mxu0 0.0
  %4360 = vmatpush1.msra.mxu0 0.0
  %4361 = vmatprep.subr.mxu0 0.0
  %4362 = vmatpush1.msra.mxu0 0.0
  %4363 = vmatprep.subr.mxu0 0.0
  %4364 = vmatpush1.msra.mxu0 0.0
  %4365 = vmatprep.subr.mxu0 0.0
  %4366 = vmatpush1.msra.mxu0 0.0
  %4367 = vmatprep.subr.mxu0 0.0
  %4368 = vmatpush1.msra.mxu0 0.0
  %4369 = vmatprep.subr.mxu0 0.0
  %4370 = vmatpush1.msra.mxu0 0.0
  %4371 = vmatprep.subr.mxu0 0.0
  %4372 = vmatpush1.msra.mxu0 0.0
  %4373 = vmatprep.subr.mxu0 0.0
  %4374 = vmatpush1.msra.mxu0 0.0
  %4375 = vmatprep.subr.mxu0 0.0
  %4376 = vmatpush1.msra.mxu0 0.0
  %4377 = vmatprep.subr.mxu0 0.0
  %4378 = vmatpush1.msra.mxu0 0.0
  %4379 = vmatprep.subr.mxu0 0.0
  %4380 = vmatpush1.msra.mxu0 0.0
  %4381 = vmatprep.subr.mxu0 0.0
  %4382 = vmatpush1.msra.mxu0 0.0
  %4383 = vmatprep.subr.mxu0 0.0
  %4384 = vmatpush1.msra.mxu0 0.0
  %4385 = vmatprep.subr.mxu0 0.0
  %4386 = vmatpush1.msra.mxu0 0.0
  %4387 = vmatprep.subr.mxu0 0.0
  %4388 = vmatpush1.msra.mxu0 0.0
  %4389 = vmatprep.mubr.f32.mxu0 0.0
  %4390 = vmatmul.mubr.f32.gmra.mrb[0].mxu0 %v3695
  %v4391 = vpop.f32.mrb[0].mxu0
  %v4392 = vadd.f32 0.0, %v4391
  %v4393 = vpop.f32.mrb[0].mxu0
  %4394 = vmatprep.mubr.f32.mxu0 0.0
  %4395 = vmatmul.mubr.f32.gmra.mrb[0].mxu0 %v3698
  %v4396 = vpop.f32.mrb[0].mxu0
  %v4397 = vadd.f32 0.0, %v4396
  %v4398 = vpop.f32.mrb[0].mxu0
  %4399 = vmatprep.mubr.f32.mxu0 0.0
  %4400 = vmatmul.mubr.f32.gmra.mrb[0].mxu0 %v3701
  %v4401 = vpop.f32.mrb[0].mxu0
  %v4402 = vadd.f32 0.0, %v4401
  %v4403 = vpop.f32.mrb[0].mxu0
  %4404 = vmatprep.mubr.f32.mxu0 0.0
  %4405 = vmatmul.mubr.f32.gmra.mrb[0].mxu0 %v3704
  %v4406 = vpop.f32.mrb[0].mxu0
  %v4407 = vadd.f32 0.0, %v4406
  %v4408 = vpop.f32.mrb[0].mxu0
  %4409 = vdwg.mxu0
  %s4410 = scalar_lea.vmem %s5, 96
  %v4411 = vld [vmem:[%s4410] sm:$0xff]
  %v4412 = vld [vmem:[%s4410 + $0x8] sm:$0xff]
  %v4413 = vld [vmem:[%s4410 + $0x10] sm:$0xff]
  %v4414 = vld [vmem:[%s4410 + $0x18] sm:$0xff]
  %v4416 = vsel %vm972, %v4411, 0
  %v4419 = vsel %vm972, %v4412, 0
  %v4422 = vsel %vm972, %v4413, 0
  %v4425 = vsel %vm972, %v4414, 0
  %4427 = vmatprep.subr.mxu0 0.0
  %4428 = vmatpush1.msra.mxu0 %v4392
  %4429 = vmatprep.subr.mxu0 0.0
  %4430 = vmatpush1.msra.mxu0 %v4397
  %4431 = vmatprep.subr.mxu0 0.0
  %4432 = vmatpush1.msra.mxu0 %v4402
  %4433 = vmatprep.subr.mxu0 0.0
  %4434 = vmatpush1.msra.mxu0 %v4407
  %4435 = vmatprep.subr.mxu0 0.0
  %4436 = vmatpush1.msra.mxu0 0.0
  %4437 = vmatprep.subr.mxu0 0.0
  %4438 = vmatpush1.msra.mxu0 0.0
  %4439 = vmatprep.subr.mxu0 0.0
  %4440 = vmatpush1.msra.mxu0 0.0
  %4441 = vmatprep.subr.mxu0 0.0
  %4442 = vmatpush1.msra.mxu0 0.0
  %4443 = vmatprep.subr.mxu0 0.0
  %4444 = vmatpush1.msra.mxu0 0.0
  %4445 = vmatprep.subr.mxu0 0.0
  %4446 = vmatpush1.msra.mxu0 0.0
  %4447 = vmatprep.subr.mxu0 0.0
  %4448 = vmatpush1.msra.mxu0 0.0
  %4449 = vmatprep.subr.mxu0 0.0
  %4450 = vmatpush1.msra.mxu0 0.0
  %4451 = vmatprep.subr.mxu0 0.0
  %4452 = vmatpush1.msra.mxu0 0.0
  %4453 = vmatprep.subr.mxu0 0.0
  %4454 = vmatpush1.msra.mxu0 0.0
  %4455 = vmatprep.subr.mxu0 0.0
  %4456 = vmatpush1.msra.mxu0 0.0
  %4457 = vmatprep.subr.mxu0 0.0
  %4458 = vmatpush1.msra.mxu0 0.0
  %4459 = vmatprep.subr.mxu0 0.0
  %4460 = vmatpush1.msra.mxu0 0.0
  %4461 = vmatprep.subr.mxu0 0.0
  %4462 = vmatpush1.msra.mxu0 0.0
  %4463 = vmatprep.subr.mxu0 0.0
  %4464 = vmatpush1.msra.mxu0 0.0
  %4465 = vmatprep.subr.mxu0 0.0
  %4466 = vmatpush1.msra.mxu0 0.0
  %4467 = vmatprep.subr.mxu0 0.0
  %4468 = vmatpush1.msra.mxu0 0.0
  %4469 = vmatprep.subr.mxu0 0.0
  %4470 = vmatpush1.msra.mxu0 0.0
  %4471 = vmatprep.subr.mxu0 0.0
  %4472 = vmatpush1.msra.mxu0 0.0
  %4473 = vmatprep.subr.mxu0 0.0
  %4474 = vmatpush1.msra.mxu0 0.0
  %4475 = vmatprep.subr.mxu0 0.0
  %4476 = vmatpush1.msra.mxu0 0.0
  %4477 = vmatprep.subr.mxu0 0.0
  %4478 = vmatpush1.msra.mxu0 0.0
  %4479 = vmatprep.subr.mxu0 0.0
  %4480 = vmatpush1.msra.mxu0 0.0
  %4481 = vmatprep.subr.mxu0 0.0
  %4482 = vmatpush1.msra.mxu0 0.0
  %4483 = vmatprep.subr.mxu0 0.0
  %4484 = vmatpush1.msra.mxu0 0.0
  %4485 = vmatprep.subr.mxu0 0.0
  %4486 = vmatpush1.msra.mxu0 0.0
  %4487 = vmatprep.subr.mxu0 0.0
  %4488 = vmatpush1.msra.mxu0 0.0
  %4489 = vmatprep.subr.mxu0 0.0
  %4490 = vmatpush1.msra.mxu0 0.0
  %4491 = vmatprep.mubr.f32.mxu0 0.0
  %4492 = vmatmul.mubr.f32.gmra.mrb[0].mxu0 %v4416
  %v4493 = vpop.f32.mrb[0].mxu0
  %v4494 = vadd.f32 0.0, %v4493
  %v4495 = vpop.f32.mrb[0].mxu0
  %4496 = vmatprep.mubr.f32.mxu0 0.0
  %4497 = vmatmul.mubr.f32.gmra.mrb[0].mxu0 %v4419
  %v4498 = vpop.f32.mrb[0].mxu0
  %v4499 = vadd.f32 0.0, %v4498
  %v4500 = vpop.f32.mrb[0].mxu0
  %4501 = vmatprep.mubr.f32.mxu0 0.0
  %4502 = vmatmul.mubr.f32.gmra.mrb[0].mxu0 %v4422
  %v4503 = vpop.f32.mrb[0].mxu0
  %v4504 = vadd.f32 0.0, %v4503
  %v4505 = vpop.f32.mrb[0].mxu0
  %4506 = vmatprep.mubr.f32.mxu0 0.0
  %4507 = vmatmul.mubr.f32.gmra.mrb[0].mxu0 %v4425
  %v4508 = vpop.f32.mrb[0].mxu0
  %v4509 = vadd.f32 0.0, %v4508
  %v4510 = vpop.f32.mrb[0].mxu0
  %4511 = vdwg.mxu0
  %v4512 = vadd.f32 %v4304, %v4494
  %v4513 = vadd.f32 %v4305, %v4499
  %v4514 = vadd.f32 %v4306, %v4504
  %v4515 = vadd.f32 %v4307, %v4509
  %s4516 = scalar_lea.vmem %s4, 416
  %v4517 = vld [vmem:[%s4516] sm:$0xff]
  %v4518 = vld [vmem:[%s4516 + $0x8] sm:$0xff]
  %v4519 = vld [vmem:[%s4516 + $0x10] sm:$0xff]
  %v4520 = vld [vmem:[%s4516 + $0x18] sm:$0xff]
  %v4521 = vld [vmem:[%s4516 + $0x20] sm:$0xff]
  %v4522 = vld [vmem:[%s4516 + $0x28] sm:$0xff]
  %v4523 = vld [vmem:[%s4516 + $0x30] sm:$0xff]
  %v4524 = vld [vmem:[%s4516 + $0x38] sm:$0xff]
  %v4525 = vld [vmem:[%s4516 + $0x40] sm:$0xff]
  %v4526 = vld [vmem:[%s4516 + $0x48] sm:$0xff]
  %v4527 = vld [vmem:[%s4516 + $0x50] sm:$0xff]
  %v4528 = vld [vmem:[%s4516 + $0x58] sm:$0xff]
  %v4529 = vld [vmem:[%s4516 + $0x60] sm:$0x3]
  %v4531 = vsel %vm3706, %v4529, 0
  %4533 = vmatprep.subr.mxu0 0.0
  %4534 = vmatpush1.msra.mxu0 %v4517
  %4535 = vmatprep.subr.mxu0 0.0
  %4536 = vmatpush1.msra.mxu0 %v4518
  %4537 = vmatprep.subr.mxu0 0.0
  %4538 = vmatpush1.msra.mxu0 %v4519
  %4539 = vmatprep.subr.mxu0 0.0
  %4540 = vmatpush1.msra.mxu0 %v4520
  %4541 = vmatprep.subr.mxu0 0.0
  %4542 = vmatpush1.msra.mxu0 %v4521
  %4543 = vmatprep.subr.mxu0 0.0
  %4544 = vmatpush1.msra.mxu0 %v4522
  %4545 = vmatprep.subr.mxu0 0.0
  %4546 = vmatpush1.msra.mxu0 %v4523
  %4547 = vmatprep.subr.mxu0 0.0
  %4548 = vmatpush1.msra.mxu0 %v4524
  %4549 = vmatprep.subr.mxu0 0.0
  %4550 = vmatpush1.msra.mxu0 %v4525
  %4551 = vmatprep.subr.mxu0 0.0
  %4552 = vmatpush1.msra.mxu0 %v4526
  %4553 = vmatprep.subr.mxu0 0.0
  %4554 = vmatpush1.msra.mxu0 %v4527
  %4555 = vmatprep.subr.mxu0 0.0
  %4556 = vmatpush1.msra.mxu0 %v4528
  %4557 = vmatprep.subr.mxu0 0.0
  %4558 = vmatpush1.msra.mxu0 %v4531
  %4559 = vmatprep.subr.mxu0 0.0
  %4560 = vmatpush1.msra.mxu0 0.0
  %4561 = vmatprep.subr.mxu0 0.0
  %4562 = vmatpush1.msra.mxu0 0.0
  %4563 = vmatprep.subr.mxu0 0.0
  %4564 = vmatpush1.msra.mxu0 0.0
  %4565 = vmatprep.subr.mxu0 0.0
  %4566 = vmatpush1.msra.mxu0 0.0
  %4567 = vmatprep.subr.mxu0 0.0
  %4568 = vmatpush1.msra.mxu0 0.0
  %4569 = vmatprep.subr.mxu0 0.0
  %4570 = vmatpush1.msra.mxu0 0.0
  %4571 = vmatprep.subr.mxu0 0.0
  %4572 = vmatpush1.msra.mxu0 0.0
  %4573 = vmatprep.subr.mxu0 0.0
  %4574 = vmatpush1.msra.mxu0 0.0
  %4575 = vmatprep.subr.mxu0 0.0
  %4576 = vmatpush1.msra.mxu0 0.0
  %4577 = vmatprep.subr.mxu0 0.0
  %4578 = vmatpush1.msra.mxu0 0.0
  %4579 = vmatprep.subr.mxu0 0.0
  %4580 = vmatpush1.msra.mxu0 0.0
  %4581 = vmatprep.subr.mxu0 0.0
  %4582 = vmatpush1.msra.mxu0 0.0
  %4583 = vmatprep.subr.mxu0 0.0
  %4584 = vmatpush1.msra.mxu0 0.0
  %4585 = vmatprep.subr.mxu0 0.0
  %4586 = vmatpush1.msra.mxu0 0.0
  %4587 = vmatprep.subr.mxu0 0.0
  %4588 = vmatpush1.msra.mxu0 0.0
  %4589 = vmatprep.subr.mxu0 0.0
  %4590 = vmatpush1.msra.mxu0 0.0
  %4591 = vmatprep.subr.mxu0 0.0
  %4592 = vmatpush1.msra.mxu0 0.0
  %4593 = vmatprep.subr.mxu0 0.0
  %4594 = vmatpush1.msra.mxu0 0.0
  %4595 = vmatprep.subr.mxu0 0.0
  %4596 = vmatpush1.msra.mxu0 0.0
  %4597 = vmatprep.mubr.f32.mxu0 0.0
  %4598 = vmatmul.mubr.f32.gmra.mrb[0].mxu0 %v3695
  %v4599 = vpop.f32.mrb[0].mxu0
  %v4600 = vadd.f32 0.0, %v4599
  %v4601 = vpop.f32.mrb[0].mxu0
  %4602 = vmatprep.mubr.f32.mxu0 0.0
  %4603 = vmatmul.mubr.f32.gmra.mrb[0].mxu0 %v3698
  %v4604 = vpop.f32.mrb[0].mxu0
  %v4605 = vadd.f32 0.0, %v4604
  %v4606 = vpop.f32.mrb[0].mxu0
  %4607 = vmatprep.mubr.f32.mxu0 0.0
  %4608 = vmatmul.mubr.f32.gmra.mrb[0].mxu0 %v3701
  %v4609 = vpop.f32.mrb[0].mxu0
  %v4610 = vadd.f32 0.0, %v4609
  %v4611 = vpop.f32.mrb[0].mxu0
  %4612 = vmatprep.mubr.f32.mxu0 0.0
  %4613 = vmatmul.mubr.f32.gmra.mrb[0].mxu0 %v3704
  %v4614 = vpop.f32.mrb[0].mxu0
  %v4615 = vadd.f32 0.0, %v4614
  %v4616 = vpop.f32.mrb[0].mxu0
  %4617 = vdwg.mxu0
  %s4618 = scalar_lea.vmem %s5, 128
  %v4619 = vld [vmem:[%s4618] sm:$0xff]
  %v4620 = vld [vmem:[%s4618 + $0x8] sm:$0xff]
  %v4621 = vld [vmem:[%s4618 + $0x10] sm:$0xff]
  %v4622 = vld [vmem:[%s4618 + $0x18] sm:$0xff]
  %v4624 = vsel %vm972, %v4619, 0
  %v4627 = vsel %vm972, %v4620, 0
  %v4630 = vsel %vm972, %v4621, 0
  %v4633 = vsel %vm972, %v4622, 0
  %4635 = vmatprep.subr.mxu0 0.0
  %4636 = vmatpush1.msra.mxu0 %v4600
  %4637 = vmatprep.subr.mxu0 0.0
  %4638 = vmatpush1.msra.mxu0 %v4605
  %4639 = vmatprep.subr.mxu0 0.0
  %4640 = vmatpush1.msra.mxu0 %v4610
  %4641 = vmatprep.subr.mxu0 0.0
  %4642 = vmatpush1.msra.mxu0 %v4615
  %4643 = vmatprep.subr.mxu0 0.0
  %4644 = vmatpush1.msra.mxu0 0.0
  %4645 = vmatprep.subr.mxu0 0.0
  %4646 = vmatpush1.msra.mxu0 0.0
  %4647 = vmatprep.subr.mxu0 0.0
  %4648 = vmatpush1.msra.mxu0 0.0
  %4649 = vmatprep.subr.mxu0 0.0
  %4650 = vmatpush1.msra.mxu0 0.0
  %4651 = vmatprep.subr.mxu0 0.0
  %4652 = vmatpush1.msra.mxu0 0.0
  %4653 = vmatprep.subr.mxu0 0.0
  %4654 = vmatpush1.msra.mxu0 0.0
  %4655 = vmatprep.subr.mxu0 0.0
  %4656 = vmatpush1.msra.mxu0 0.0
  %4657 = vmatprep.subr.mxu0 0.0
  %4658 = vmatpush1.msra.mxu0 0.0
  %4659 = vmatprep.subr.mxu0 0.0
  %4660 = vmatpush1.msra.mxu0 0.0
  %4661 = vmatprep.subr.mxu0 0.0
  %4662 = vmatpush1.msra.mxu0 0.0
  %4663 = vmatprep.subr.mxu0 0.0
  %4664 = vmatpush1.msra.mxu0 0.0
  %4665 = vmatprep.subr.mxu0 0.0
  %4666 = vmatpush1.msra.mxu0 0.0
  %4667 = vmatprep.subr.mxu0 0.0
  %4668 = vmatpush1.msra.mxu0 0.0
  %4669 = vmatprep.subr.mxu0 0.0
  %4670 = vmatpush1.msra.mxu0 0.0
  %4671 = vmatprep.subr.mxu0 0.0
  %4672 = vmatpush1.msra.mxu0 0.0
  %4673 = vmatprep.subr.mxu0 0.0
  %4674 = vmatpush1.msra.mxu0 0.0
  %4675 = vmatprep.subr.mxu0 0.0
  %4676 = vmatpush1.msra.mxu0 0.0
  %4677 = vmatprep.subr.mxu0 0.0
  %4678 = vmatpush1.msra.mxu0 0.0
  %4679 = vmatprep.subr.mxu0 0.0
  %4680 = vmatpush1.msra.mxu0 0.0
  %4681 = vmatprep.subr.mxu0 0.0
  %4682 = vmatpush1.msra.mxu0 0.0
  %4683 = vmatprep.subr.mxu0 0.0
  %4684 = vmatpush1.msra.mxu0 0.0
  %4685 = vmatprep.subr.mxu0 0.0
  %4686 = vmatpush1.msra.mxu0 0.0
  %4687 = vmatprep.subr.mxu0 0.0
  %4688 = vmatpush1.msra.mxu0 0.0
  %4689 = vmatprep.subr.mxu0 0.0
  %4690 = vmatpush1.msra.mxu0 0.0
  %4691 = vmatprep.subr.mxu0 0.0
  %4692 = vmatpush1.msra.mxu0 0.0
  %4693 = vmatprep.subr.mxu0 0.0
  %4694 = vmatpush1.msra.mxu0 0.0
  %4695 = vmatprep.subr.mxu0 0.0
  %4696 = vmatpush1.msra.mxu0 0.0
  %4697 = vmatprep.subr.mxu0 0.0
  %4698 = vmatpush1.msra.mxu0 0.0
  %4699 = vmatprep.mubr.f32.mxu0 0.0
  %4700 = vmatmul.mubr.f32.gmra.mrb[0].mxu0 %v4624
  %v4701 = vpop.f32.mrb[0].mxu0
  %v4702 = vadd.f32 0.0, %v4701
  %v4703 = vpop.f32.mrb[0].mxu0
  %4704 = vmatprep.mubr.f32.mxu0 0.0
  %4705 = vmatmul.mubr.f32.gmra.mrb[0].mxu0 %v4627
  %v4706 = vpop.f32.mrb[0].mxu0
  %v4707 = vadd.f32 0.0, %v4706
  %v4708 = vpop.f32.mrb[0].mxu0
  %4709 = vmatprep.mubr.f32.mxu0 0.0
  %4710 = vmatmul.mubr.f32.gmra.mrb[0].mxu0 %v4630
  %v4711 = vpop.f32.mrb[0].mxu0
  %v4712 = vadd.f32 0.0, %v4711
  %v4713 = vpop.f32.mrb[0].mxu0
  %4714 = vmatprep.mubr.f32.mxu0 0.0
  %4715 = vmatmul.mubr.f32.gmra.mrb[0].mxu0 %v4633
  %v4716 = vpop.f32.mrb[0].mxu0
  %v4717 = vadd.f32 0.0, %v4716
  %v4718 = vpop.f32.mrb[0].mxu0
  %4719 = vdwg.mxu0
  %v4720 = vadd.f32 %v4512, %v4702
  %v4721 = vadd.f32 %v4513, %v4707
  %v4722 = vadd.f32 %v4514, %v4712
  %v4723 = vadd.f32 %v4515, %v4717
  %s4724 = scalar_lea.vmem %s4, 520
  %v4725 = vld [vmem:[%s4724] sm:$0xff]
  %v4726 = vld [vmem:[%s4724 + $0x8] sm:$0xff]
  %v4727 = vld [vmem:[%s4724 + $0x10] sm:$0xff]
  %v4728 = vld [vmem:[%s4724 + $0x18] sm:$0xff]
  %v4729 = vld [vmem:[%s4724 + $0x20] sm:$0xff]
  %v4730 = vld [vmem:[%s4724 + $0x28] sm:$0xff]
  %v4731 = vld [vmem:[%s4724 + $0x30] sm:$0xff]
  %v4732 = vld [vmem:[%s4724 + $0x38] sm:$0xff]
  %v4733 = vld [vmem:[%s4724 + $0x40] sm:$0xff]
  %v4734 = vld [vmem:[%s4724 + $0x48] sm:$0xff]
  %v4735 = vld [vmem:[%s4724 + $0x50] sm:$0xff]
  %v4736 = vld [vmem:[%s4724 + $0x58] sm:$0xff]
  %v4737 = vld [vmem:[%s4724 + $0x60] sm:$0x3]
  %v4739 = vsel %vm3706, %v4737, 0
  %4741 = vmatprep.subr.mxu0 0.0
  %4742 = vmatpush1.msra.mxu0 %v4725
  %4743 = vmatprep.subr.mxu0 0.0
  %4744 = vmatpush1.msra.mxu0 %v4726
  %4745 = vmatprep.subr.mxu0 0.0
  %4746 = vmatpush1.msra.mxu0 %v4727
  %4747 = vmatprep.subr.mxu0 0.0
  %4748 = vmatpush1.msra.mxu0 %v4728
  %4749 = vmatprep.subr.mxu0 0.0
  %4750 = vmatpush1.msra.mxu0 %v4729
  %4751 = vmatprep.subr.mxu0 0.0
  %4752 = vmatpush1.msra.mxu0 %v4730
  %4753 = vmatprep.subr.mxu0 0.0
  %4754 = vmatpush1.msra.mxu0 %v4731
  %4755 = vmatprep.subr.mxu0 0.0
  %4756 = vmatpush1.msra.mxu0 %v4732
  %4757 = vmatprep.subr.mxu0 0.0
  %4758 = vmatpush1.msra.mxu0 %v4733
  %4759 = vmatprep.subr.mxu0 0.0
  %4760 = vmatpush1.msra.mxu0 %v4734
  %4761 = vmatprep.subr.mxu0 0.0
  %4762 = vmatpush1.msra.mxu0 %v4735
  %4763 = vmatprep.subr.mxu0 0.0
  %4764 = vmatpush1.msra.mxu0 %v4736
  %4765 = vmatprep.subr.mxu0 0.0
  %4766 = vmatpush1.msra.mxu0 %v4739
  %4767 = vmatprep.subr.mxu0 0.0
  %4768 = vmatpush1.msra.mxu0 0.0
  %4769 = vmatprep.subr.mxu0 0.0
  %4770 = vmatpush1.msra.mxu0 0.0
  %4771 = vmatprep.subr.mxu0 0.0
  %4772 = vmatpush1.msra.mxu0 0.0
  %4773 = vmatprep.subr.mxu0 0.0
  %4774 = vmatpush1.msra.mxu0 0.0
  %4775 = vmatprep.subr.mxu0 0.0
  %4776 = vmatpush1.msra.mxu0 0.0
  %4777 = vmatprep.subr.mxu0 0.0
  %4778 = vmatpush1.msra.mxu0 0.0
  %4779 = vmatprep.subr.mxu0 0.0
  %4780 = vmatpush1.msra.mxu0 0.0
  %4781 = vmatprep.subr.mxu0 0.0
  %4782 = vmatpush1.msra.mxu0 0.0
  %4783 = vmatprep.subr.mxu0 0.0
  %4784 = vmatpush1.msra.mxu0 0.0
  %4785 = vmatprep.subr.mxu0 0.0
  %4786 = vmatpush1.msra.mxu0 0.0
  %4787 = vmatprep.subr.mxu0 0.0
  %4788 = vmatpush1.msra.mxu0 0.0
  %4789 = vmatprep.subr.mxu0 0.0
  %4790 = vmatpush1.msra.mxu0 0.0
  %4791 = vmatprep.subr.mxu0 0.0
  %4792 = vmatpush1.msra.mxu0 0.0
  %4793 = vmatprep.subr.mxu0 0.0
  %4794 = vmatpush1.msra.mxu0 0.0
  %4795 = vmatprep.subr.mxu0 0.0
  %4796 = vmatpush1.msra.mxu0 0.0
  %4797 = vmatprep.subr.mxu0 0.0
  %4798 = vmatpush1.msra.mxu0 0.0
  %4799 = vmatprep.subr.mxu0 0.0
  %4800 = vmatpush1.msra.mxu0 0.0
  %4801 = vmatprep.subr.mxu0 0.0
  %4802 = vmatpush1.msra.mxu0 0.0
  %4803 = vmatprep.subr.mxu0 0.0
  %4804 = vmatpush1.msra.mxu0 0.0
  %4805 = vmatprep.mubr.f32.mxu0 0.0
  %4806 = vmatmul.mubr.f32.gmra.mrb[0].mxu0 %v3695
  %v4807 = vpop.f32.mrb[0].mxu0
  %v4808 = vadd.f32 0.0, %v4807
  %v4809 = vpop.f32.mrb[0].mxu0
  %4810 = vmatprep.mubr.f32.mxu0 0.0
  %4811 = vmatmul.mubr.f32.gmra.mrb[0].mxu0 %v3698
  %v4812 = vpop.f32.mrb[0].mxu0
  %v4813 = vadd.f32 0.0, %v4812
  %v4814 = vpop.f32.mrb[0].mxu0
  %4815 = vmatprep.mubr.f32.mxu0 0.0
  %4816 = vmatmul.mubr.f32.gmra.mrb[0].mxu0 %v3701
  %v4817 = vpop.f32.mrb[0].mxu0
  %v4818 = vadd.f32 0.0, %v4817
  %v4819 = vpop.f32.mrb[0].mxu0
  %4820 = vmatprep.mubr.f32.mxu0 0.0
  %4821 = vmatmul.mubr.f32.gmra.mrb[0].mxu0 %v3704
  %v4822 = vpop.f32.mrb[0].mxu0
  %v4823 = vadd.f32 0.0, %v4822
  %v4824 = vpop.f32.mrb[0].mxu0
  %4825 = vdwg.mxu0
  %s4826 = scalar_lea.vmem %s5, 160
  %v4827 = vld [vmem:[%s4826] sm:$0xff]
  %v4828 = vld [vmem:[%s4826 + $0x8] sm:$0xff]
  %v4829 = vld [vmem:[%s4826 + $0x10] sm:$0xff]
  %v4830 = vld [vmem:[%s4826 + $0x18] sm:$0xff]
  %v4832 = vsel %vm972, %v4827, 0
  %v4835 = vsel %vm972, %v4828, 0
  %v4838 = vsel %vm972, %v4829, 0
  %v4841 = vsel %vm972, %v4830, 0
  %4843 = vmatprep.subr.mxu0 0.0
  %4844 = vmatpush1.msra.mxu0 %v4808
  %4845 = vmatprep.subr.mxu0 0.0
  %4846 = vmatpush1.msra.mxu0 %v4813
  %4847 = vmatprep.subr.mxu0 0.0
  %4848 = vmatpush1.msra.mxu0 %v4818
  %4849 = vmatprep.subr.mxu0 0.0
  %4850 = vmatpush1.msra.mxu0 %v4823
  %4851 = vmatprep.subr.mxu0 0.0
  %4852 = vmatpush1.msra.mxu0 0.0
  %4853 = vmatprep.subr.mxu0 0.0
  %4854 = vmatpush1.msra.mxu0 0.0
  %4855 = vmatprep.subr.mxu0 0.0
  %4856 = vmatpush1.msra.mxu0 0.0
  %4857 = vmatprep.subr.mxu0 0.0
  %4858 = vmatpush1.msra.mxu0 0.0
  %4859 = vmatprep.subr.mxu0 0.0
  %4860 = vmatpush1.msra.mxu0 0.0
  %4861 = vmatprep.subr.mxu0 0.0
  %4862 = vmatpush1.msra.mxu0 0.0
  %4863 = vmatprep.subr.mxu0 0.0
  %4864 = vmatpush1.msra.mxu0 0.0
  %4865 = vmatprep.subr.mxu0 0.0
  %4866 = vmatpush1.msra.mxu0 0.0
  %4867 = vmatprep.subr.mxu0 0.0
  %4868 = vmatpush1.msra.mxu0 0.0
  %4869 = vmatprep.subr.mxu0 0.0
  %4870 = vmatpush1.msra.mxu0 0.0
  %4871 = vmatprep.subr.mxu0 0.0
  %4872 = vmatpush1.msra.mxu0 0.0
  %4873 = vmatprep.subr.mxu0 0.0
  %4874 = vmatpush1.msra.mxu0 0.0
  %4875 = vmatprep.subr.mxu0 0.0
  %4876 = vmatpush1.msra.mxu0 0.0
  %4877 = vmatprep.subr.mxu0 0.0
  %4878 = vmatpush1.msra.mxu0 0.0
  %4879 = vmatprep.subr.mxu0 0.0
  %4880 = vmatpush1.msra.mxu0 0.0
  %4881 = vmatprep.subr.mxu0 0.0
  %4882 = vmatpush1.msra.mxu0 0.0
  %4883 = vmatprep.subr.mxu0 0.0
  %4884 = vmatpush1.msra.mxu0 0.0
  %4885 = vmatprep.subr.mxu0 0.0
  %4886 = vmatpush1.msra.mxu0 0.0
  %4887 = vmatprep.subr.mxu0 0.0
  %4888 = vmatpush1.msra.mxu0 0.0
  %4889 = vmatprep.subr.mxu0 0.0
  %4890 = vmatpush1.msra.mxu0 0.0
  %4891 = vmatprep.subr.mxu0 0.0
  %4892 = vmatpush1.msra.mxu0 0.0
  %4893 = vmatprep.subr.mxu0 0.0
  %4894 = vmatpush1.msra.mxu0 0.0
  %4895 = vmatprep.subr.mxu0 0.0
  %4896 = vmatpush1.msra.mxu0 0.0
  %4897 = vmatprep.subr.mxu0 0.0
  %4898 = vmatpush1.msra.mxu0 0.0
  %4899 = vmatprep.subr.mxu0 0.0
  %4900 = vmatpush1.msra.mxu0 0.0
  %4901 = vmatprep.subr.mxu0 0.0
  %4902 = vmatpush1.msra.mxu0 0.0
  %4903 = vmatprep.subr.mxu0 0.0
  %4904 = vmatpush1.msra.mxu0 0.0
  %4905 = vmatprep.subr.mxu0 0.0
  %4906 = vmatpush1.msra.mxu0 0.0
  %4907 = vmatprep.mubr.f32.mxu0 0.0
  %4908 = vmatmul.mubr.f32.gmra.mrb[0].mxu0 %v4832
  %v4909 = vpop.f32.mrb[0].mxu0
  %v4910 = vadd.f32 0.0, %v4909
  %v4911 = vpop.f32.mrb[0].mxu0
  %4912 = vmatprep.mubr.f32.mxu0 0.0
  %4913 = vmatmul.mubr.f32.gmra.mrb[0].mxu0 %v4835
  %v4914 = vpop.f32.mrb[0].mxu0
  %v4915 = vadd.f32 0.0, %v4914
  %v4916 = vpop.f32.mrb[0].mxu0
  %4917 = vmatprep.mubr.f32.mxu0 0.0
  %4918 = vmatmul.mubr.f32.gmra.mrb[0].mxu0 %v4838
  %v4919 = vpop.f32.mrb[0].mxu0
  %v4920 = vadd.f32 0.0, %v4919
  %v4921 = vpop.f32.mrb[0].mxu0
  %4922 = vmatprep.mubr.f32.mxu0 0.0
  %4923 = vmatmul.mubr.f32.gmra.mrb[0].mxu0 %v4841
  %v4924 = vpop.f32.mrb[0].mxu0
  %v4925 = vadd.f32 0.0, %v4924
  %v4926 = vpop.f32.mrb[0].mxu0
  %4927 = vdwg.mxu0
  %v4928 = vadd.f32 %v4720, %v4910
  %v4929 = vadd.f32 %v4721, %v4915
  %v4930 = vadd.f32 %v4722, %v4920
  %v4931 = vadd.f32 %v4723, %v4925
  %s4932 = scalar_lea.vmem %s4, 624
  %v4933 = vld [vmem:[%s4932] sm:$0xff]
  %v4934 = vld [vmem:[%s4932 + $0x8] sm:$0xff]
  %v4935 = vld [vmem:[%s4932 + $0x10] sm:$0xff]
  %v4936 = vld [vmem:[%s4932 + $0x18] sm:$0xff]
  %v4937 = vld [vmem:[%s4932 + $0x20] sm:$0xff]
  %v4938 = vld [vmem:[%s4932 + $0x28] sm:$0xff]
  %v4939 = vld [vmem:[%s4932 + $0x30] sm:$0xff]
  %v4940 = vld [vmem:[%s4932 + $0x38] sm:$0xff]
  %v4941 = vld [vmem:[%s4932 + $0x40] sm:$0xff]
  %v4942 = vld [vmem:[%s4932 + $0x48] sm:$0xff]
  %v4943 = vld [vmem:[%s4932 + $0x50] sm:$0xff]
  %v4944 = vld [vmem:[%s4932 + $0x58] sm:$0xff]
  %v4945 = vld [vmem:[%s4932 + $0x60] sm:$0x3]
  %v4947 = vsel %vm3706, %v4945, 0
  %4949 = vmatprep.subr.mxu0 0.0
  %4950 = vmatpush1.msra.mxu0 %v4933
  %4951 = vmatprep.subr.mxu0 0.0
  %4952 = vmatpush1.msra.mxu0 %v4934
  %4953 = vmatprep.subr.mxu0 0.0
  %4954 = vmatpush1.msra.mxu0 %v4935
  %4955 = vmatprep.subr.mxu0 0.0
  %4956 = vmatpush1.msra.mxu0 %v4936
  %4957 = vmatprep.subr.mxu0 0.0
  %4958 = vmatpush1.msra.mxu0 %v4937
  %4959 = vmatprep.subr.mxu0 0.0
  %4960 = vmatpush1.msra.mxu0 %v4938
  %4961 = vmatprep.subr.mxu0 0.0
  %4962 = vmatpush1.msra.mxu0 %v4939
  %4963 = vmatprep.subr.mxu0 0.0
  %4964 = vmatpush1.msra.mxu0 %v4940
  %4965 = vmatprep.subr.mxu0 0.0
  %4966 = vmatpush1.msra.mxu0 %v4941
  %4967 = vmatprep.subr.mxu0 0.0
  %4968 = vmatpush1.msra.mxu0 %v4942
  %4969 = vmatprep.subr.mxu0 0.0
  %4970 = vmatpush1.msra.mxu0 %v4943
  %4971 = vmatprep.subr.mxu0 0.0
  %4972 = vmatpush1.msra.mxu0 %v4944
  %4973 = vmatprep.subr.mxu0 0.0
  %4974 = vmatpush1.msra.mxu0 %v4947
  %4975 = vmatprep.subr.mxu0 0.0
  %4976 = vmatpush1.msra.mxu0 0.0
  %4977 = vmatprep.subr.mxu0 0.0
  %4978 = vmatpush1.msra.mxu0 0.0
  %4979 = vmatprep.subr.mxu0 0.0
  %4980 = vmatpush1.msra.mxu0 0.0
  %4981 = vmatprep.subr.mxu0 0.0
  %4982 = vmatpush1.msra.mxu0 0.0
  %4983 = vmatprep.subr.mxu0 0.0
  %4984 = vmatpush1.msra.mxu0 0.0
  %4985 = vmatprep.subr.mxu0 0.0
  %4986 = vmatpush1.msra.mxu0 0.0
  %4987 = vmatprep.subr.mxu0 0.0
  %4988 = vmatpush1.msra.mxu0 0.0
  %4989 = vmatprep.subr.mxu0 0.0
  %4990 = vmatpush1.msra.mxu0 0.0
  %4991 = vmatprep.subr.mxu0 0.0
  %4992 = vmatpush1.msra.mxu0 0.0
  %4993 = vmatprep.subr.mxu0 0.0
  %4994 = vmatpush1.msra.mxu0 0.0
  %4995 = vmatprep.subr.mxu0 0.0
  %4996 = vmatpush1.msra.mxu0 0.0
  %4997 = vmatprep.subr.mxu0 0.0
  %4998 = vmatpush1.msra.mxu0 0.0
  %4999 = vmatprep.subr.mxu0 0.0
  %5000 = vmatpush1.msra.mxu0 0.0
  %5001 = vmatprep.subr.mxu0 0.0
  %5002 = vmatpush1.msra.mxu0 0.0
  %5003 = vmatprep.subr.mxu0 0.0
  %5004 = vmatpush1.msra.mxu0 0.0
  %5005 = vmatprep.subr.mxu0 0.0
  %5006 = vmatpush1.msra.mxu0 0.0
  %5007 = vmatprep.subr.mxu0 0.0
  %5008 = vmatpush1.msra.mxu0 0.0
  %5009 = vmatprep.subr.mxu0 0.0
  %5010 = vmatpush1.msra.mxu0 0.0
  %5011 = vmatprep.subr.mxu0 0.0
  %5012 = vmatpush1.msra.mxu0 0.0
  %5013 = vmatprep.mubr.f32.mxu0 0.0
  %5014 = vmatmul.mubr.f32.gmra.mrb[0].mxu0 %v3695
  %v5015 = vpop.f32.mrb[0].mxu0
  %v5016 = vadd.f32 0.0, %v5015
  %v5017 = vpop.f32.mrb[0].mxu0
  %5018 = vmatprep.mubr.f32.mxu0 0.0
  %5019 = vmatmul.mubr.f32.gmra.mrb[0].mxu0 %v3698
  %v5020 = vpop.f32.mrb[0].mxu0
  %v5021 = vadd.f32 0.0, %v5020
  %v5022 = vpop.f32.mrb[0].mxu0
  %5023 = vmatprep.mubr.f32.mxu0 0.0
  %5024 = vmatmul.mubr.f32.gmra.mrb[0].mxu0 %v3701
  %v5025 = vpop.f32.mrb[0].mxu0
  %v5026 = vadd.f32 0.0, %v5025
  %v5027 = vpop.f32.mrb[0].mxu0
  %5028 = vmatprep.mubr.f32.mxu0 0.0
  %5029 = vmatmul.mubr.f32.gmra.mrb[0].mxu0 %v3704
  %v5030 = vpop.f32.mrb[0].mxu0
  %v5031 = vadd.f32 0.0, %v5030
  %v5032 = vpop.f32.mrb[0].mxu0
  %5033 = vdwg.mxu0
  %s5034 = scalar_lea.vmem %s5, 192
  %v5035 = vld [vmem:[%s5034] sm:$0xff]
  %v5036 = vld [vmem:[%s5034 + $0x8] sm:$0xff]
  %v5037 = vld [vmem:[%s5034 + $0x10] sm:$0xff]
  %v5038 = vld [vmem:[%s5034 + $0x18] sm:$0xff]
  %v5040 = vsel %vm972, %v5035, 0
  %v5043 = vsel %vm972, %v5036, 0
  %v5046 = vsel %vm972, %v5037, 0
  %v5049 = vsel %vm972, %v5038, 0
  %5051 = vmatprep.subr.mxu0 0.0
  %5052 = vmatpush1.msra.mxu0 %v5016
  %5053 = vmatprep.subr.mxu0 0.0
  %5054 = vmatpush1.msra.mxu0 %v5021
  %5055 = vmatprep.subr.mxu0 0.0
  %5056 = vmatpush1.msra.mxu0 %v5026
  %5057 = vmatprep.subr.mxu0 0.0
  %5058 = vmatpush1.msra.mxu0 %v5031
  %5059 = vmatprep.subr.mxu0 0.0
  %5060 = vmatpush1.msra.mxu0 0.0
  %5061 = vmatprep.subr.mxu0 0.0
  %5062 = vmatpush1.msra.mxu0 0.0
  %5063 = vmatprep.subr.mxu0 0.0
  %5064 = vmatpush1.msra.mxu0 0.0
  %5065 = vmatprep.subr.mxu0 0.0
  %5066 = vmatpush1.msra.mxu0 0.0
  %5067 = vmatprep.subr.mxu0 0.0
  %5068 = vmatpush1.msra.mxu0 0.0
  %5069 = vmatprep.subr.mxu0 0.0
  %5070 = vmatpush1.msra.mxu0 0.0
  %5071 = vmatprep.subr.mxu0 0.0
  %5072 = vmatpush1.msra.mxu0 0.0
  %5073 = vmatprep.subr.mxu0 0.0
  %5074 = vmatpush1.msra.mxu0 0.0
  %5075 = vmatprep.subr.mxu0 0.0
  %5076 = vmatpush1.msra.mxu0 0.0
  %5077 = vmatprep.subr.mxu0 0.0
  %5078 = vmatpush1.msra.mxu0 0.0
  %5079 = vmatprep.subr.mxu0 0.0
  %5080 = vmatpush1.msra.mxu0 0.0
  %5081 = vmatprep.subr.mxu0 0.0
  %5082 = vmatpush1.msra.mxu0 0.0
  %5083 = vmatprep.subr.mxu0 0.0
  %5084 = vmatpush1.msra.mxu0 0.0
  %5085 = vmatprep.subr.mxu0 0.0
  %5086 = vmatpush1.msra.mxu0 0.0
  %5087 = vmatprep.subr.mxu0 0.0
  %5088 = vmatpush1.msra.mxu0 0.0
  %5089 = vmatprep.subr.mxu0 0.0
  %5090 = vmatpush1.msra.mxu0 0.0
  %5091 = vmatprep.subr.mxu0 0.0
  %5092 = vmatpush1.msra.mxu0 0.0
  %5093 = vmatprep.subr.mxu0 0.0
  %5094 = vmatpush1.msra.mxu0 0.0
  %5095 = vmatprep.subr.mxu0 0.0
  %5096 = vmatpush1.msra.mxu0 0.0
  %5097 = vmatprep.subr.mxu0 0.0
  %5098 = vmatpush1.msra.mxu0 0.0
  %5099 = vmatprep.subr.mxu0 0.0
  %5100 = vmatpush1.msra.mxu0 0.0
  %5101 = vmatprep.subr.mxu0 0.0
  %5102 = vmatpush1.msra.mxu0 0.0
  %5103 = vmatprep.subr.mxu0 0.0
  %5104 = vmatpush1.msra.mxu0 0.0
  %5105 = vmatprep.subr.mxu0 0.0
  %5106 = vmatpush1.msra.mxu0 0.0
  %5107 = vmatprep.subr.mxu0 0.0
  %5108 = vmatpush1.msra.mxu0 0.0
  %5109 = vmatprep.subr.mxu0 0.0
  %5110 = vmatpush1.msra.mxu0 0.0
  %5111 = vmatprep.subr.mxu0 0.0
  %5112 = vmatpush1.msra.mxu0 0.0
  %5113 = vmatprep.subr.mxu0 0.0
  %5114 = vmatpush1.msra.mxu0 0.0
  %5115 = vmatprep.mubr.f32.mxu0 0.0
  %5116 = vmatmul.mubr.f32.gmra.mrb[0].mxu0 %v5040
  %v5117 = vpop.f32.mrb[0].mxu0
  %v5118 = vadd.f32 0.0, %v5117
  %v5119 = vpop.f32.mrb[0].mxu0
  %5120 = vmatprep.mubr.f32.mxu0 0.0
  %5121 = vmatmul.mubr.f32.gmra.mrb[0].mxu0 %v5043
  %v5122 = vpop.f32.mrb[0].mxu0
  %v5123 = vadd.f32 0.0, %v5122
  %v5124 = vpop.f32.mrb[0].mxu0
  %5125 = vmatprep.mubr.f32.mxu0 0.0
  %5126 = vmatmul.mubr.f32.gmra.mrb[0].mxu0 %v5046
  %v5127 = vpop.f32.mrb[0].mxu0
  %v5128 = vadd.f32 0.0, %v5127
  %v5129 = vpop.f32.mrb[0].mxu0
  %5130 = vmatprep.mubr.f32.mxu0 0.0
  %5131 = vmatmul.mubr.f32.gmra.mrb[0].mxu0 %v5049
  %v5132 = vpop.f32.mrb[0].mxu0
  %v5133 = vadd.f32 0.0, %v5132
  %v5134 = vpop.f32.mrb[0].mxu0
  %5135 = vdwg.mxu0
  %v5136 = vadd.f32 %v4928, %v5118
  %v5137 = vadd.f32 %v4929, %v5123
  %v5138 = vadd.f32 %v4930, %v5128
  %v5139 = vadd.f32 %v4931, %v5133
  %s5140 = scalar_lea.vmem %s4, 728
  %v5141 = vld [vmem:[%s5140] sm:$0xff]
  %v5142 = vld [vmem:[%s5140 + $0x8] sm:$0xff]
  %v5143 = vld [vmem:[%s5140 + $0x10] sm:$0xff]
  %v5144 = vld [vmem:[%s5140 + $0x18] sm:$0xff]
  %v5145 = vld [vmem:[%s5140 + $0x20] sm:$0xff]
  %v5146 = vld [vmem:[%s5140 + $0x28] sm:$0xff]
  %v5147 = vld [vmem:[%s5140 + $0x30] sm:$0xff]
  %v5148 = vld [vmem:[%s5140 + $0x38] sm:$0xff]
  %v5149 = vld [vmem:[%s5140 + $0x40] sm:$0xff]
  %v5150 = vld [vmem:[%s5140 + $0x48] sm:$0xff]
  %v5151 = vld [vmem:[%s5140 + $0x50] sm:$0xff]
  %v5152 = vld [vmem:[%s5140 + $0x58] sm:$0xff]
  %v5153 = vld [vmem:[%s5140 + $0x60] sm:$0x3]
  %v5155 = vsel %vm3706, %v5153, 0
  %5157 = vmatprep.subr.mxu0 0.0
  %5158 = vmatpush1.msra.mxu0 %v5141
  %5159 = vmatprep.subr.mxu0 0.0
  %5160 = vmatpush1.msra.mxu0 %v5142
  %5161 = vmatprep.subr.mxu0 0.0
  %5162 = vmatpush1.msra.mxu0 %v5143
  %5163 = vmatprep.subr.mxu0 0.0
  %5164 = vmatpush1.msra.mxu0 %v5144
  %5165 = vmatprep.subr.mxu0 0.0
  %5166 = vmatpush1.msra.mxu0 %v5145
  %5167 = vmatprep.subr.mxu0 0.0
  %5168 = vmatpush1.msra.mxu0 %v5146
  %5169 = vmatprep.subr.mxu0 0.0
  %5170 = vmatpush1.msra.mxu0 %v5147
  %5171 = vmatprep.subr.mxu0 0.0
  %5172 = vmatpush1.msra.mxu0 %v5148
  %5173 = vmatprep.subr.mxu0 0.0
  %5174 = vmatpush1.msra.mxu0 %v5149
  %5175 = vmatprep.subr.mxu0 0.0
  %5176 = vmatpush1.msra.mxu0 %v5150
  %5177 = vmatprep.subr.mxu0 0.0
  %5178 = vmatpush1.msra.mxu0 %v5151
  %5179 = vmatprep.subr.mxu0 0.0
  %5180 = vmatpush1.msra.mxu0 %v5152
  %5181 = vmatprep.subr.mxu0 0.0
  %5182 = vmatpush1.msra.mxu0 %v5155
  %5183 = vmatprep.subr.mxu0 0.0
  %5184 = vmatpush1.msra.mxu0 0.0
  %5185 = vmatprep.subr.mxu0 0.0
  %5186 = vmatpush1.msra.mxu0 0.0
  %5187 = vmatprep.subr.mxu0 0.0
  %5188 = vmatpush1.msra.mxu0 0.0
  %5189 = vmatprep.subr.mxu0 0.0
  %5190 = vmatpush1.msra.mxu0 0.0
  %5191 = vmatprep.subr.mxu0 0.0
  %5192 = vmatpush1.msra.mxu0 0.0
  %5193 = vmatprep.subr.mxu0 0.0
  %5194 = vmatpush1.msra.mxu0 0.0
  %5195 = vmatprep.subr.mxu0 0.0
  %5196 = vmatpush1.msra.mxu0 0.0
  %5197 = vmatprep.subr.mxu0 0.0
  %5198 = vmatpush1.msra.mxu0 0.0
  %5199 = vmatprep.subr.mxu0 0.0
  %5200 = vmatpush1.msra.mxu0 0.0
  %5201 = vmatprep.subr.mxu0 0.0
  %5202 = vmatpush1.msra.mxu0 0.0
  %5203 = vmatprep.subr.mxu0 0.0
  %5204 = vmatpush1.msra.mxu0 0.0
  %5205 = vmatprep.subr.mxu0 0.0
  %5206 = vmatpush1.msra.mxu0 0.0
  %5207 = vmatprep.subr.mxu0 0.0
  %5208 = vmatpush1.msra.mxu0 0.0
  %5209 = vmatprep.subr.mxu0 0.0
  %5210 = vmatpush1.msra.mxu0 0.0
  %5211 = vmatprep.subr.mxu0 0.0
  %5212 = vmatpush1.msra.mxu0 0.0
  %5213 = vmatprep.subr.mxu0 0.0
  %5214 = vmatpush1.msra.mxu0 0.0
  %5215 = vmatprep.subr.mxu0 0.0
  %5216 = vmatpush1.msra.mxu0 0.0
  %5217 = vmatprep.subr.mxu0 0.0
  %5218 = vmatpush1.msra.mxu0 0.0
  %5219 = vmatprep.subr.mxu0 0.0
  %5220 = vmatpush1.msra.mxu0 0.0
  %5221 = vmatprep.mubr.f32.mxu0 0.0
  %5222 = vmatmul.mubr.f32.gmra.mrb[0].mxu0 %v3695
  %v5223 = vpop.f32.mrb[0].mxu0
  %v5224 = vadd.f32 0.0, %v5223
  %v5225 = vpop.f32.mrb[0].mxu0
  %5226 = vmatprep.mubr.f32.mxu0 0.0
  %5227 = vmatmul.mubr.f32.gmra.mrb[0].mxu0 %v3698
  %v5228 = vpop.f32.mrb[0].mxu0
  %v5229 = vadd.f32 0.0, %v5228
  %v5230 = vpop.f32.mrb[0].mxu0
  %5231 = vmatprep.mubr.f32.mxu0 0.0
  %5232 = vmatmul.mubr.f32.gmra.mrb[0].mxu0 %v3701
  %v5233 = vpop.f32.mrb[0].mxu0
  %v5234 = vadd.f32 0.0, %v5233
  %v5235 = vpop.f32.mrb[0].mxu0
  %5236 = vmatprep.mubr.f32.mxu0 0.0
  %5237 = vmatmul.mubr.f32.gmra.mrb[0].mxu0 %v3704
  %v5238 = vpop.f32.mrb[0].mxu0
  %v5239 = vadd.f32 0.0, %v5238
  %v5240 = vpop.f32.mrb[0].mxu0
  %5241 = vdwg.mxu0
  %s5242 = scalar_lea.vmem %s5, 224
  %v5243 = vld [vmem:[%s5242] sm:$0xff]
  %v5244 = vld [vmem:[%s5242 + $0x8] sm:$0xff]
  %v5245 = vld [vmem:[%s5242 + $0x10] sm:$0xff]
  %v5246 = vld [vmem:[%s5242 + $0x18] sm:$0xff]
  %v5248 = vsel %vm972, %v5243, 0
  %v5251 = vsel %vm972, %v5244, 0
  %v5254 = vsel %vm972, %v5245, 0
  %v5257 = vsel %vm972, %v5246, 0
  %5259 = vmatprep.subr.mxu0 0.0
  %5260 = vmatpush1.msra.mxu0 %v5224
  %5261 = vmatprep.subr.mxu0 0.0
  %5262 = vmatpush1.msra.mxu0 %v5229
  %5263 = vmatprep.subr.mxu0 0.0
  %5264 = vmatpush1.msra.mxu0 %v5234
  %5265 = vmatprep.subr.mxu0 0.0
  %5266 = vmatpush1.msra.mxu0 %v5239
  %5267 = vmatprep.subr.mxu0 0.0
  %5268 = vmatpush1.msra.mxu0 0.0
  %5269 = vmatprep.subr.mxu0 0.0
  %5270 = vmatpush1.msra.mxu0 0.0
  %5271 = vmatprep.subr.mxu0 0.0
  %5272 = vmatpush1.msra.mxu0 0.0
  %5273 = vmatprep.subr.mxu0 0.0
  %5274 = vmatpush1.msra.mxu0 0.0
  %5275 = vmatprep.subr.mxu0 0.0
  %5276 = vmatpush1.msra.mxu0 0.0
  %5277 = vmatprep.subr.mxu0 0.0
  %5278 = vmatpush1.msra.mxu0 0.0
  %5279 = vmatprep.subr.mxu0 0.0
  %5280 = vmatpush1.msra.mxu0 0.0
  %5281 = vmatprep.subr.mxu0 0.0
  %5282 = vmatpush1.msra.mxu0 0.0
  %5283 = vmatprep.subr.mxu0 0.0
  %5284 = vmatpush1.msra.mxu0 0.0
  %5285 = vmatprep.subr.mxu0 0.0
  %5286 = vmatpush1.msra.mxu0 0.0
  %5287 = vmatprep.subr.mxu0 0.0
  %5288 = vmatpush1.msra.mxu0 0.0
  %5289 = vmatprep.subr.mxu0 0.0
  %5290 = vmatpush1.msra.mxu0 0.0
  %5291 = vmatprep.subr.mxu0 0.0
  %5292 = vmatpush1.msra.mxu0 0.0
  %5293 = vmatprep.subr.mxu0 0.0
  %5294 = vmatpush1.msra.mxu0 0.0
  %5295 = vmatprep.subr.mxu0 0.0
  %5296 = vmatpush1.msra.mxu0 0.0
  %5297 = vmatprep.subr.mxu0 0.0
  %5298 = vmatpush1.msra.mxu0 0.0
  %5299 = vmatprep.subr.mxu0 0.0
  %5300 = vmatpush1.msra.mxu0 0.0
  %5301 = vmatprep.subr.mxu0 0.0
  %5302 = vmatpush1.msra.mxu0 0.0
  %5303 = vmatprep.subr.mxu0 0.0
  %5304 = vmatpush1.msra.mxu0 0.0
  %5305 = vmatprep.subr.mxu0 0.0
  %5306 = vmatpush1.msra.mxu0 0.0
  %5307 = vmatprep.subr.mxu0 0.0
  %5308 = vmatpush1.msra.mxu0 0.0
  %5309 = vmatprep.subr.mxu0 0.0
  %5310 = vmatpush1.msra.mxu0 0.0
  %5311 = vmatprep.subr.mxu0 0.0
  %5312 = vmatpush1.msra.mxu0 0.0
  %5313 = vmatprep.subr.mxu0 0.0
  %5314 = vmatpush1.msra.mxu0 0.0
  %5315 = vmatprep.subr.mxu0 0.0
  %5316 = vmatpush1.msra.mxu0 0.0
  %5317 = vmatprep.subr.mxu0 0.0
  %5318 = vmatpush1.msra.mxu0 0.0
  %5319 = vmatprep.subr.mxu0 0.0
  %5320 = vmatpush1.msra.mxu0 0.0
  %5321 = vmatprep.subr.mxu0 0.0
  %5322 = vmatpush1.msra.mxu0 0.0
  %5323 = vmatprep.mubr.f32.mxu0 0.0
  %5324 = vmatmul.mubr.f32.gmra.mrb[0].mxu0 %v5248
  %v5325 = vpop.f32.mrb[0].mxu0
  %v5326 = vadd.f32 0.0, %v5325
  %v5327 = vpop.f32.mrb[0].mxu0
  %5328 = vmatprep.mubr.f32.mxu0 0.0
  %5329 = vmatmul.mubr.f32.gmra.mrb[0].mxu0 %v5251
  %v5330 = vpop.f32.mrb[0].mxu0
  %v5331 = vadd.f32 0.0, %v5330
  %v5332 = vpop.f32.mrb[0].mxu0
  %5333 = vmatprep.mubr.f32.mxu0 0.0
  %5334 = vmatmul.mubr.f32.gmra.mrb[0].mxu0 %v5254
  %v5335 = vpop.f32.mrb[0].mxu0
  %v5336 = vadd.f32 0.0, %v5335
  %v5337 = vpop.f32.mrb[0].mxu0
  %5338 = vmatprep.mubr.f32.mxu0 0.0
  %5339 = vmatmul.mubr.f32.gmra.mrb[0].mxu0 %v5257
  %v5340 = vpop.f32.mrb[0].mxu0
  %v5341 = vadd.f32 0.0, %v5340
  %v5342 = vpop.f32.mrb[0].mxu0
  %5343 = vdwg.mxu0
  %v5344 = vadd.f32 %v5136, %v5326
  %v5345 = vadd.f32 %v5137, %v5331
  %v5346 = vadd.f32 %v5138, %v5336
  %v5347 = vadd.f32 %v5139, %v5341
  %s5348 = scalar_lea.vmem %s4, 832
  %v5349 = vld [vmem:[%s5348] sm:$0xff]
  %v5350 = vld [vmem:[%s5348 + $0x8] sm:$0xff]
  %v5351 = vld [vmem:[%s5348 + $0x10] sm:$0xff]
  %v5352 = vld [vmem:[%s5348 + $0x18] sm:$0xff]
  %v5353 = vld [vmem:[%s5348 + $0x20] sm:$0xff]
  %v5354 = vld [vmem:[%s5348 + $0x28] sm:$0xff]
  %v5355 = vld [vmem:[%s5348 + $0x30] sm:$0xff]
  %v5356 = vld [vmem:[%s5348 + $0x38] sm:$0xff]
  %v5357 = vld [vmem:[%s5348 + $0x40] sm:$0xff]
  %v5358 = vld [vmem:[%s5348 + $0x48] sm:$0xff]
  %v5359 = vld [vmem:[%s5348 + $0x50] sm:$0xff]
  %v5360 = vld [vmem:[%s5348 + $0x58] sm:$0xff]
  %v5361 = vld [vmem:[%s5348 + $0x60] sm:$0x3]
  %v5363 = vsel %vm3706, %v5361, 0
  %5365 = vmatprep.subr.mxu0 0.0
  %5366 = vmatpush1.msra.mxu0 %v5349
  %5367 = vmatprep.subr.mxu0 0.0
  %5368 = vmatpush1.msra.mxu0 %v5350
  %5369 = vmatprep.subr.mxu0 0.0
  %5370 = vmatpush1.msra.mxu0 %v5351
  %5371 = vmatprep.subr.mxu0 0.0
  %5372 = vmatpush1.msra.mxu0 %v5352
  %5373 = vmatprep.subr.mxu0 0.0
  %5374 = vmatpush1.msra.mxu0 %v5353
  %5375 = vmatprep.subr.mxu0 0.0
  %5376 = vmatpush1.msra.mxu0 %v5354
  %5377 = vmatprep.subr.mxu0 0.0
  %5378 = vmatpush1.msra.mxu0 %v5355
  %5379 = vmatprep.subr.mxu0 0.0
  %5380 = vmatpush1.msra.mxu0 %v5356
  %5381 = vmatprep.subr.mxu0 0.0
  %5382 = vmatpush1.msra.mxu0 %v5357
  %5383 = vmatprep.subr.mxu0 0.0
  %5384 = vmatpush1.msra.mxu0 %v5358
  %5385 = vmatprep.subr.mxu0 0.0
  %5386 = vmatpush1.msra.mxu0 %v5359
  %5387 = vmatprep.subr.mxu0 0.0
  %5388 = vmatpush1.msra.mxu0 %v5360
  %5389 = vmatprep.subr.mxu0 0.0
  %5390 = vmatpush1.msra.mxu0 %v5363
  %5391 = vmatprep.subr.mxu0 0.0
  %5392 = vmatpush1.msra.mxu0 0.0
  %5393 = vmatprep.subr.mxu0 0.0
  %5394 = vmatpush1.msra.mxu0 0.0
  %5395 = vmatprep.subr.mxu0 0.0
  %5396 = vmatpush1.msra.mxu0 0.0
  %5397 = vmatprep.subr.mxu0 0.0
  %5398 = vmatpush1.msra.mxu0 0.0
  %5399 = vmatprep.subr.mxu0 0.0
  %5400 = vmatpush1.msra.mxu0 0.0
  %5401 = vmatprep.subr.mxu0 0.0
  %5402 = vmatpush1.msra.mxu0 0.0
  %5403 = vmatprep.subr.mxu0 0.0
  %5404 = vmatpush1.msra.mxu0 0.0
  %5405 = vmatprep.subr.mxu0 0.0
  %5406 = vmatpush1.msra.mxu0 0.0
  %5407 = vmatprep.subr.mxu0 0.0
  %5408 = vmatpush1.msra.mxu0 0.0
  %5409 = vmatprep.subr.mxu0 0.0
  %5410 = vmatpush1.msra.mxu0 0.0
  %5411 = vmatprep.subr.mxu0 0.0
  %5412 = vmatpush1.msra.mxu0 0.0
  %5413 = vmatprep.subr.mxu0 0.0
  %5414 = vmatpush1.msra.mxu0 0.0
  %5415 = vmatprep.subr.mxu0 0.0
  %5416 = vmatpush1.msra.mxu0 0.0
  %5417 = vmatprep.subr.mxu0 0.0
  %5418 = vmatpush1.msra.mxu0 0.0
  %5419 = vmatprep.subr.mxu0 0.0
  %5420 = vmatpush1.msra.mxu0 0.0
  %5421 = vmatprep.subr.mxu0 0.0
  %5422 = vmatpush1.msra.mxu0 0.0
  %5423 = vmatprep.subr.mxu0 0.0
  %5424 = vmatpush1.msra.mxu0 0.0
  %5425 = vmatprep.subr.mxu0 0.0
  %5426 = vmatpush1.msra.mxu0 0.0
  %5427 = vmatprep.subr.mxu0 0.0
  %5428 = vmatpush1.msra.mxu0 0.0
  %5429 = vmatprep.mubr.f32.mxu0 0.0
  %5430 = vmatmul.mubr.f32.gmra.mrb[0].mxu0 %v3695
  %v5431 = vpop.f32.mrb[0].mxu0
  %v5432 = vadd.f32 0.0, %v5431
  %v5433 = vpop.f32.mrb[0].mxu0
  %5434 = vmatprep.mubr.f32.mxu0 0.0
  %5435 = vmatmul.mubr.f32.gmra.mrb[0].mxu0 %v3698
  %v5436 = vpop.f32.mrb[0].mxu0
  %v5437 = vadd.f32 0.0, %v5436
  %v5438 = vpop.f32.mrb[0].mxu0
  %5439 = vmatprep.mubr.f32.mxu0 0.0
  %5440 = vmatmul.mubr.f32.gmra.mrb[0].mxu0 %v3701
  %v5441 = vpop.f32.mrb[0].mxu0
  %v5442 = vadd.f32 0.0, %v5441
  %v5443 = vpop.f32.mrb[0].mxu0
  %5444 = vmatprep.mubr.f32.mxu0 0.0
  %5445 = vmatmul.mubr.f32.gmra.mrb[0].mxu0 %v3704
  %v5446 = vpop.f32.mrb[0].mxu0
  %v5447 = vadd.f32 0.0, %v5446
  %v5448 = vpop.f32.mrb[0].mxu0
  %5449 = vdwg.mxu0
  %s5450 = scalar_lea.vmem %s5, 256
  %v5451 = vld [vmem:[%s5450] sm:$0xff]
  %v5452 = vld [vmem:[%s5450 + $0x8] sm:$0xff]
  %v5453 = vld [vmem:[%s5450 + $0x10] sm:$0xff]
  %v5454 = vld [vmem:[%s5450 + $0x18] sm:$0xff]
  %v5456 = vsel %vm972, %v5451, 0
  %v5459 = vsel %vm972, %v5452, 0
  %v5462 = vsel %vm972, %v5453, 0
  %v5465 = vsel %vm972, %v5454, 0
  %5467 = vmatprep.subr.mxu0 0.0
  %5468 = vmatpush1.msra.mxu0 %v5432
  %5469 = vmatprep.subr.mxu0 0.0
  %5470 = vmatpush1.msra.mxu0 %v5437
  %5471 = vmatprep.subr.mxu0 0.0
  %5472 = vmatpush1.msra.mxu0 %v5442
  %5473 = vmatprep.subr.mxu0 0.0
  %5474 = vmatpush1.msra.mxu0 %v5447
  %5475 = vmatprep.subr.mxu0 0.0
  %5476 = vmatpush1.msra.mxu0 0.0
  %5477 = vmatprep.subr.mxu0 0.0
  %5478 = vmatpush1.msra.mxu0 0.0
  %5479 = vmatprep.subr.mxu0 0.0
  %5480 = vmatpush1.msra.mxu0 0.0
  %5481 = vmatprep.subr.mxu0 0.0
  %5482 = vmatpush1.msra.mxu0 0.0
  %5483 = vmatprep.subr.mxu0 0.0
  %5484 = vmatpush1.msra.mxu0 0.0
  %5485 = vmatprep.subr.mxu0 0.0
  %5486 = vmatpush1.msra.mxu0 0.0
  %5487 = vmatprep.subr.mxu0 0.0
  %5488 = vmatpush1.msra.mxu0 0.0
  %5489 = vmatprep.subr.mxu0 0.0
  %5490 = vmatpush1.msra.mxu0 0.0
  %5491 = vmatprep.subr.mxu0 0.0
  %5492 = vmatpush1.msra.mxu0 0.0
  %5493 = vmatprep.subr.mxu0 0.0
  %5494 = vmatpush1.msra.mxu0 0.0
  %5495 = vmatprep.subr.mxu0 0.0
  %5496 = vmatpush1.msra.mxu0 0.0
  %5497 = vmatprep.subr.mxu0 0.0
  %5498 = vmatpush1.msra.mxu0 0.0
  %5499 = vmatprep.subr.mxu0 0.0
  %5500 = vmatpush1.msra.mxu0 0.0
  %5501 = vmatprep.subr.mxu0 0.0
  %5502 = vmatpush1.msra.mxu0 0.0
  %5503 = vmatprep.subr.mxu0 0.0
  %5504 = vmatpush1.msra.mxu0 0.0
  %5505 = vmatprep.subr.mxu0 0.0
  %5506 = vmatpush1.msra.mxu0 0.0
  %5507 = vmatprep.subr.mxu0 0.0
  %5508 = vmatpush1.msra.mxu0 0.0
  %5509 = vmatprep.subr.mxu0 0.0
  %5510 = vmatpush1.msra.mxu0 0.0
  %5511 = vmatprep.subr.mxu0 0.0
  %5512 = vmatpush1.msra.mxu0 0.0
  %5513 = vmatprep.subr.mxu0 0.0
  %5514 = vmatpush1.msra.mxu0 0.0
  %5515 = vmatprep.subr.mxu0 0.0
  %5516 = vmatpush1.msra.mxu0 0.0
  %5517 = vmatprep.subr.mxu0 0.0
  %5518 = vmatpush1.msra.mxu0 0.0
  %5519 = vmatprep.subr.mxu0 0.0
  %5520 = vmatpush1.msra.mxu0 0.0
  %5521 = vmatprep.subr.mxu0 0.0
  %5522 = vmatpush1.msra.mxu0 0.0
  %5523 = vmatprep.subr.mxu0 0.0
  %5524 = vmatpush1.msra.mxu0 0.0
  %5525 = vmatprep.subr.mxu0 0.0
  %5526 = vmatpush1.msra.mxu0 0.0
  %5527 = vmatprep.subr.mxu0 0.0
  %5528 = vmatpush1.msra.mxu0 0.0
  %5529 = vmatprep.subr.mxu0 0.0
  %5530 = vmatpush1.msra.mxu0 0.0
  %5531 = vmatprep.mubr.f32.mxu0 0.0
  %5532 = vmatmul.mubr.f32.gmra.mrb[0].mxu0 %v5456
  %v5533 = vpop.f32.mrb[0].mxu0
  %v5534 = vadd.f32 0.0, %v5533
  %v5535 = vpop.f32.mrb[0].mxu0
  %5536 = vmatprep.mubr.f32.mxu0 0.0
  %5537 = vmatmul.mubr.f32.gmra.mrb[0].mxu0 %v5459
  %v5538 = vpop.f32.mrb[0].mxu0
  %v5539 = vadd.f32 0.0, %v5538
  %v5540 = vpop.f32.mrb[0].mxu0
  %5541 = vmatprep.mubr.f32.mxu0 0.0
  %5542 = vmatmul.mubr.f32.gmra.mrb[0].mxu0 %v5462
  %v5543 = vpop.f32.mrb[0].mxu0
  %v5544 = vadd.f32 0.0, %v5543
  %v5545 = vpop.f32.mrb[0].mxu0
  %5546 = vmatprep.mubr.f32.mxu0 0.0
  %5547 = vmatmul.mubr.f32.gmra.mrb[0].mxu0 %v5465
  %v5548 = vpop.f32.mrb[0].mxu0
  %v5549 = vadd.f32 0.0, %v5548
  %v5550 = vpop.f32.mrb[0].mxu0
  %5551 = vdwg.mxu0
  %v5552 = vadd.f32 %v5344, %v5534
  %v5553 = vadd.f32 %v5345, %v5539
  %v5554 = vadd.f32 %v5346, %v5544
  %v5555 = vadd.f32 %v5347, %v5549
  %vm5556 = vcmask 146432
  %v5557 = vsel %vm5556, %v5552, 0.0
  %5558 = vadd.xlane.f32.xlu0 %v5557
  %v5559 = vpop.xlane.xlu0 %5558
  %v5560 = vsel %vm5556, %v5553, 0.0
  %5561 = vadd.xlane.f32.xlu0 %v5560
  %v5562 = vpop.xlane.xlu0 %5561
  %v5563 = vsel %vm5556, %v5554, 0.0
  %5564 = vadd.xlane.f32.xlu0 %v5563
  %v5565 = vpop.xlane.xlu0 %5564
  %v5566 = vsel %vm5556, %v5555, 0.0
  %5567 = vadd.xlane.f32.xlu0 %v5566
  %v5568 = vpop.xlane.xlu0 %5567
  %v5569 = vmul.f32 %v5559, 0.055555556
  %v5570 = vmul.f32 %v5562, 0.055555556
  %v5571 = vmul.f32 %v5565, 0.055555556
  %v5572 = vmul.f32 %v5568, 0.055555556
  %v5573 = vmul.f32 %v5552, %v5552
  %v5574 = vmul.f32 %v5553, %v5553
  %v5575 = vmul.f32 %v5554, %v5554
  %v5576 = vmul.f32 %v5555, %v5555
  %v5577 = vsel %vm5556, %v5573, 0.0
  %5578 = vadd.xlane.f32.xlu0 %v5577
  %v5579 = vpop.xlane.xlu0 %5578
  %v5580 = vsel %vm5556, %v5574, 0.0
  %5581 = vadd.xlane.f32.xlu0 %v5580
  %v5582 = vpop.xlane.xlu0 %5581
  %v5583 = vsel %vm5556, %v5575, 0.0
  %5584 = vadd.xlane.f32.xlu0 %v5583
  %v5585 = vpop.xlane.xlu0 %5584
  %v5586 = vsel %vm5556, %v5576, 0.0
  %5587 = vadd.xlane.f32.xlu0 %v5586
  %v5588 = vpop.xlane.xlu0 %5587
  %v5589 = vmul.f32 %v5579, 0.055555556
  %v5590 = vmul.f32 %v5582, 0.055555556
  %v5591 = vmul.f32 %v5585, 0.055555556
  %v5592 = vmul.f32 %v5588, 0.055555556
  %v5593 = vmul.f32 %v5569, %v5569
  %v5594 = vmul.f32 %v5570, %v5570
  %v5595 = vmul.f32 %v5571, %v5571
  %v5596 = vmul.f32 %v5572, %v5572
  %v5597 = vsub.f32 %v5589, %v5593
  %v5598 = vsub.f32 %v5590, %v5594
  %v5599 = vsub.f32 %v5591, %v5595
  %v5600 = vsub.f32 %v5592, %v5596
  %s5601 = scalar_lea.vmem %s8, 64
  %v5602 = vld [vmem:[%s5601] sm:$0xff]
  %v5603 = vld [vmem:[%s5601 + $0x8] sm:$0xff]
  %v5604 = vld [vmem:[%s5601 + $0x10] sm:$0xff]
  %v5605 = vld [vmem:[%s5601 + $0x18] sm:$0xff]
  %v5606 = vadd.f32 %v5597, 1e-05
  %v5607 = vadd.f32 %v5598, 1e-05
  %v5608 = vadd.f32 %v5599, 1e-05
  %v5609 = vadd.f32 %v5600, 1e-05
  %v5610 = vrsqrt.pop %v5606
  %v5611 = vrsqrt.pop %v5607
  %v5612 = vrsqrt.pop %v5608
  %v5613 = vrsqrt.pop %v5609
  %v5614 = vmul.f32 %v5602, %v5610
  %v5615 = vmul.f32 %v5603, %v5611
  %v5616 = vmul.f32 %v5604, %v5612
  %v5617 = vmul.f32 %v5605, %v5613
  %s5618 = scalar_lea.vmem %s9, 64
  %v5619 = vld [vmem:[%s5618] sm:$0xff]
  %v5620 = vld [vmem:[%s5618 + $0x8] sm:$0xff]
  %v5621 = vld [vmem:[%s5618 + $0x10] sm:$0xff]
  %v5622 = vld [vmem:[%s5618 + $0x18] sm:$0xff]
  %v5623 = vmul.f32 %v5569, %v5614
  %v5624 = vmul.f32 %v5570, %v5615
  %v5625 = vmul.f32 %v5571, %v5616
  %v5626 = vmul.f32 %v5572, %v5617
  %v5627 = vsub.f32 %v5619, %v5623
  %v5628 = vsub.f32 %v5620, %v5624
  %v5629 = vsub.f32 %v5621, %v5625
  %v5630 = vsub.f32 %v5622, %v5626
  %5632 = vset.pattern.permute.xlu0 0
  %5633 = vperm.xlu0 %5632, %v5614
  %v5634 = vpop.permute.xlu0 %5633
  %5637 = vset.pattern.permute.xlu0 0
  %5638 = vperm.xlu0 %5637, %v5615
  %v5639 = vpop.permute.xlu0 %5638
  %5642 = vset.pattern.permute.xlu0 0
  %5643 = vperm.xlu0 %5642, %v5616
  %v5644 = vpop.permute.xlu0 %5643
  %5647 = vset.pattern.permute.xlu0 0
  %5648 = vperm.xlu0 %5647, %v5617
  %v5649 = vpop.permute.xlu0 %5648
  %v5651 = vmul.f32 %v5552, %v5634
  %v5652 = vmul.f32 %v5553, %v5639
  %v5653 = vmul.f32 %v5554, %v5644
  %v5654 = vmul.f32 %v5555, %v5649
  %5656 = vset.pattern.permute.xlu0 0
  %5657 = vperm.xlu0 %5656, %v5627
  %v5658 = vpop.permute.xlu0 %5657
  %5661 = vset.pattern.permute.xlu0 0
  %5662 = vperm.xlu0 %5661, %v5628
  %v5663 = vpop.permute.xlu0 %5662
  %5666 = vset.pattern.permute.xlu0 0
  %5667 = vperm.xlu0 %5666, %v5629
  %v5668 = vpop.permute.xlu0 %5667
  %5671 = vset.pattern.permute.xlu0 0
  %5672 = vperm.xlu0 %5671, %v5630
  %v5673 = vpop.permute.xlu0 %5672
  %v5675 = vadd.f32 %v5651, %v5658
  %v5676 = vadd.f32 %v5652, %v5663
  %v5677 = vadd.f32 %v5653, %v5668
  %v5678 = vadd.f32 %v5654, %v5673
  %v5679 = vmax.f32 %v5675, 0.0
  %v5680 = vmax.f32 %v5676, 0.0
  %v5681 = vmax.f32 %v5677, 0.0
  %v5682 = vmax.f32 %v5678, 0.0
  %v5683 = vld [vmem:[%s6] sm:$0xff]
  %v5684 = vld [vmem:[%s6 + $0x8] sm:$0xff]
  %v5685 = vld [vmem:[%s6 + $0x10] sm:$0x3]
  %v5687 = vsel %vm5556, %v5679, 0
  %v5690 = vsel %vm5556, %v5680, 0
  %v5693 = vsel %vm5556, %v5681, 0
  %v5696 = vsel %vm5556, %v5682, 0
  %v5699 = vsel %vm3706, %v5685, 0
  %5701 = vmatprep.subr.mxu0 0.0
  %5702 = vmatpush1.msra.mxu0 %v5683
  %5703 = vmatprep.subr.mxu0 0.0
  %5704 = vmatpush1.msra.mxu0 %v5684
  %5705 = vmatprep.subr.mxu0 0.0
  %5706 = vmatpush1.msra.mxu0 %v5699
  %5707 = vmatprep.subr.mxu0 0.0
  %5708 = vmatpush1.msra.mxu0 0.0
  %5709 = vmatprep.subr.mxu0 0.0
  %5710 = vmatpush1.msra.mxu0 0.0
  %5711 = vmatprep.subr.mxu0 0.0
  %5712 = vmatpush1.msra.mxu0 0.0
  %5713 = vmatprep.subr.mxu0 0.0
  %5714 = vmatpush1.msra.mxu0 0.0
  %5715 = vmatprep.subr.mxu0 0.0
  %5716 = vmatpush1.msra.mxu0 0.0
  %5717 = vmatprep.subr.mxu0 0.0
  %5718 = vmatpush1.msra.mxu0 0.0
  %5719 = vmatprep.subr.mxu0 0.0
  %5720 = vmatpush1.msra.mxu0 0.0
  %5721 = vmatprep.subr.mxu0 0.0
  %5722 = vmatpush1.msra.mxu0 0.0
  %5723 = vmatprep.subr.mxu0 0.0
  %5724 = vmatpush1.msra.mxu0 0.0
  %5725 = vmatprep.subr.mxu0 0.0
  %5726 = vmatpush1.msra.mxu0 0.0
  %5727 = vmatprep.subr.mxu0 0.0
  %5728 = vmatpush1.msra.mxu0 0.0
  %5729 = vmatprep.subr.mxu0 0.0
  %5730 = vmatpush1.msra.mxu0 0.0
  %5731 = vmatprep.subr.mxu0 0.0
  %5732 = vmatpush1.msra.mxu0 0.0
  %5733 = vmatprep.subr.mxu0 0.0
  %5734 = vmatpush1.msra.mxu0 0.0
  %5735 = vmatprep.subr.mxu0 0.0
  %5736 = vmatpush1.msra.mxu0 0.0
  %5737 = vmatprep.subr.mxu0 0.0
  %5738 = vmatpush1.msra.mxu0 0.0
  %5739 = vmatprep.subr.mxu0 0.0
  %5740 = vmatpush1.msra.mxu0 0.0
  %5741 = vmatprep.subr.mxu0 0.0
  %5742 = vmatpush1.msra.mxu0 0.0
  %5743 = vmatprep.subr.mxu0 0.0
  %5744 = vmatpush1.msra.mxu0 0.0
  %5745 = vmatprep.subr.mxu0 0.0
  %5746 = vmatpush1.msra.mxu0 0.0
  %5747 = vmatprep.subr.mxu0 0.0
  %5748 = vmatpush1.msra.mxu0 0.0
  %5749 = vmatprep.subr.mxu0 0.0
  %5750 = vmatpush1.msra.mxu0 0.0
  %5751 = vmatprep.subr.mxu0 0.0
  %5752 = vmatpush1.msra.mxu0 0.0
  %5753 = vmatprep.subr.mxu0 0.0
  %5754 = vmatpush1.msra.mxu0 0.0
  %5755 = vmatprep.subr.mxu0 0.0
  %5756 = vmatpush1.msra.mxu0 0.0
  %5757 = vmatprep.subr.mxu0 0.0
  %5758 = vmatpush1.msra.mxu0 0.0
  %5759 = vmatprep.subr.mxu0 0.0
  %5760 = vmatpush1.msra.mxu0 0.0
  %5761 = vmatprep.subr.mxu0 0.0
  %5762 = vmatpush1.msra.mxu0 0.0
  %5763 = vmatprep.subr.mxu0 0.0
  %5764 = vmatpush1.msra.mxu0 0.0
  %5765 = vmatprep.mubr.f32.mxu0 0.0
  %5766 = vmatmul.mubr.f32.gmra.mrb[0].mxu0 %v5687
  %v5767 = vpop.f32.mrb[0].mxu0
  %v5768 = vadd.f32 0.0, %v5767
  %v5769 = vpop.f32.mrb[0].mxu0
  %5770 = vmatprep.mubr.f32.mxu0 0.0
  %5771 = vmatmul.mubr.f32.gmra.mrb[0].mxu0 %v5690
  %v5772 = vpop.f32.mrb[0].mxu0
  %v5773 = vadd.f32 0.0, %v5772
  %v5774 = vpop.f32.mrb[0].mxu0
  %5775 = vmatprep.mubr.f32.mxu0 0.0
  %5776 = vmatmul.mubr.f32.gmra.mrb[0].mxu0 %v5693
  %v5777 = vpop.f32.mrb[0].mxu0
  %v5778 = vadd.f32 0.0, %v5777
  %v5779 = vpop.f32.mrb[0].mxu0
  %5780 = vmatprep.mubr.f32.mxu0 0.0
  %5781 = vmatmul.mubr.f32.gmra.mrb[0].mxu0 %v5696
  %v5782 = vpop.f32.mrb[0].mxu0
  %v5783 = vadd.f32 0.0, %v5782
  %v5784 = vpop.f32.mrb[0].mxu0
  %5785 = vdwg.mxu0
  %v5786 = vld [vmem:[%s7] sm:$0xff]
  %v5787 = vld [vmem:[%s7 + $0x8] sm:$0xff]
  %v5788 = vld [vmem:[%s7 + $0x10] sm:$0xff]
  %v5789 = vld [vmem:[%s7 + $0x18] sm:$0xff]
  %s5790 = scalar_lea.vmem %s6, 24
  %v5791 = vld [vmem:[%s5790] sm:$0xff]
  %v5792 = vld [vmem:[%s5790 + $0x8] sm:$0xff]
  %v5793 = vld [vmem:[%s5790 + $0x10] sm:$0x3]
  %v5795 = vsel %vm3706, %v5793, 0
  %5797 = vmatprep.subr.mxu0 0.0
  %5798 = vmatpush1.msra.mxu0 %v5791
  %5799 = vmatprep.subr.mxu0 0.0
  %5800 = vmatpush1.msra.mxu0 %v5792
  %5801 = vmatprep.subr.mxu0 0.0
  %5802 = vmatpush1.msra.mxu0 %v5795
  %5803 = vmatprep.subr.mxu0 0.0
  %5804 = vmatpush1.msra.mxu0 0.0
  %5805 = vmatprep.subr.mxu0 0.0
  %5806 = vmatpush1.msra.mxu0 0.0
  %5807 = vmatprep.subr.mxu0 0.0
  %5808 = vmatpush1.msra.mxu0 0.0
  %5809 = vmatprep.subr.mxu0 0.0
  %5810 = vmatpush1.msra.mxu0 0.0
  %5811 = vmatprep.subr.mxu0 0.0
  %5812 = vmatpush1.msra.mxu0 0.0
  %5813 = vmatprep.subr.mxu0 0.0
  %5814 = vmatpush1.msra.mxu0 0.0
  %5815 = vmatprep.subr.mxu0 0.0
  %5816 = vmatpush1.msra.mxu0 0.0
  %5817 = vmatprep.subr.mxu0 0.0
  %5818 = vmatpush1.msra.mxu0 0.0
  %5819 = vmatprep.subr.mxu0 0.0
  %5820 = vmatpush1.msra.mxu0 0.0
  %5821 = vmatprep.subr.mxu0 0.0
  %5822 = vmatpush1.msra.mxu0 0.0
  %5823 = vmatprep.subr.mxu0 0.0
  %5824 = vmatpush1.msra.mxu0 0.0
  %5825 = vmatprep.subr.mxu0 0.0
  %5826 = vmatpush1.msra.mxu0 0.0
  %5827 = vmatprep.subr.mxu0 0.0
  %5828 = vmatpush1.msra.mxu0 0.0
  %5829 = vmatprep.subr.mxu0 0.0
  %5830 = vmatpush1.msra.mxu0 0.0
  %5831 = vmatprep.subr.mxu0 0.0
  %5832 = vmatpush1.msra.mxu0 0.0
  %5833 = vmatprep.subr.mxu0 0.0
  %5834 = vmatpush1.msra.mxu0 0.0
  %5835 = vmatprep.subr.mxu0 0.0
  %5836 = vmatpush1.msra.mxu0 0.0
  %5837 = vmatprep.subr.mxu0 0.0
  %5838 = vmatpush1.msra.mxu0 0.0
  %5839 = vmatprep.subr.mxu0 0.0
  %5840 = vmatpush1.msra.mxu0 0.0
  %5841 = vmatprep.subr.mxu0 0.0
  %5842 = vmatpush1.msra.mxu0 0.0
  %5843 = vmatprep.subr.mxu0 0.0
  %5844 = vmatpush1.msra.mxu0 0.0
  %5845 = vmatprep.subr.mxu0 0.0
  %5846 = vmatpush1.msra.mxu0 0.0
  %5847 = vmatprep.subr.mxu0 0.0
  %5848 = vmatpush1.msra.mxu0 0.0
  %5849 = vmatprep.subr.mxu0 0.0
  %5850 = vmatpush1.msra.mxu0 0.0
  %5851 = vmatprep.subr.mxu0 0.0
  %5852 = vmatpush1.msra.mxu0 0.0
  %5853 = vmatprep.subr.mxu0 0.0
  %5854 = vmatpush1.msra.mxu0 0.0
  %5855 = vmatprep.subr.mxu0 0.0
  %5856 = vmatpush1.msra.mxu0 0.0
  %5857 = vmatprep.subr.mxu0 0.0
  %5858 = vmatpush1.msra.mxu0 0.0
  %5859 = vmatprep.subr.mxu0 0.0
  %5860 = vmatpush1.msra.mxu0 0.0
  %5861 = vmatprep.mubr.f32.mxu0 0.0
  %5862 = vmatmul.mubr.f32.gmra.mrb[0].mxu0 %v5687
  %v5863 = vpop.f32.mrb[0].mxu0
  %v5864 = vadd.f32 0.0, %v5863
  %v5865 = vpop.f32.mrb[0].mxu0
  %5866 = vmatprep.mubr.f32.mxu0 0.0
  %5867 = vmatmul.mubr.f32.gmra.mrb[0].mxu0 %v5690
  %v5868 = vpop.f32.mrb[0].mxu0
  %v5869 = vadd.f32 0.0, %v5868
  %v5870 = vpop.f32.mrb[0].mxu0
  %5871 = vmatprep.mubr.f32.mxu0 0.0
  %5872 = vmatmul.mubr.f32.gmra.mrb[0].mxu0 %v5693
  %v5873 = vpop.f32.mrb[0].mxu0
  %v5874 = vadd.f32 0.0, %v5873
  %v5875 = vpop.f32.mrb[0].mxu0
  %5876 = vmatprep.mubr.f32.mxu0 0.0
  %5877 = vmatmul.mubr.f32.gmra.mrb[0].mxu0 %v5696
  %v5878 = vpop.f32.mrb[0].mxu0
  %v5879 = vadd.f32 0.0, %v5878
  %v5880 = vpop.f32.mrb[0].mxu0
  %5881 = vdwg.mxu0
  %s5882 = scalar_lea.vmem %s7, 32
  %v5883 = vld [vmem:[%s5882] sm:$0xff]
  %v5884 = vld [vmem:[%s5882 + $0x8] sm:$0xff]
  %v5885 = vld [vmem:[%s5882 + $0x10] sm:$0xff]
  %v5886 = vld [vmem:[%s5882 + $0x18] sm:$0xff]
  %v5888 = vsel %vm972, %v5883, 0
  %v5891 = vsel %vm972, %v5884, 0
  %v5894 = vsel %vm972, %v5885, 0
  %v5897 = vsel %vm972, %v5886, 0
  %5899 = vmatprep.subr.mxu0 0.0
  %5900 = vmatpush1.msra.mxu0 %v5864
  %5901 = vmatprep.subr.mxu0 0.0
  %5902 = vmatpush1.msra.mxu0 %v5869
  %5903 = vmatprep.subr.mxu0 0.0
  %5904 = vmatpush1.msra.mxu0 %v5874
  %5905 = vmatprep.subr.mxu0 0.0
  %5906 = vmatpush1.msra.mxu0 %v5879
  %5907 = vmatprep.subr.mxu0 0.0
  %5908 = vmatpush1.msra.mxu0 0.0
  %5909 = vmatprep.subr.mxu0 0.0
  %5910 = vmatpush1.msra.mxu0 0.0
  %5911 = vmatprep.subr.mxu0 0.0
  %5912 = vmatpush1.msra.mxu0 0.0
  %5913 = vmatprep.subr.mxu0 0.0
  %5914 = vmatpush1.msra.mxu0 0.0
  %5915 = vmatprep.subr.mxu0 0.0
  %5916 = vmatpush1.msra.mxu0 0.0
  %5917 = vmatprep.subr.mxu0 0.0
  %5918 = vmatpush1.msra.mxu0 0.0
  %5919 = vmatprep.subr.mxu0 0.0
  %5920 = vmatpush1.msra.mxu0 0.0
  %5921 = vmatprep.subr.mxu0 0.0
  %5922 = vmatpush1.msra.mxu0 0.0
  %5923 = vmatprep.subr.mxu0 0.0
  %5924 = vmatpush1.msra.mxu0 0.0
  %5925 = vmatprep.subr.mxu0 0.0
  %5926 = vmatpush1.msra.mxu0 0.0
  %5927 = vmatprep.subr.mxu0 0.0
  %5928 = vmatpush1.msra.mxu0 0.0
  %5929 = vmatprep.subr.mxu0 0.0
  %5930 = vmatpush1.msra.mxu0 0.0
  %5931 = vmatprep.subr.mxu0 0.0
  %5932 = vmatpush1.msra.mxu0 0.0
  %5933 = vmatprep.subr.mxu0 0.0
  %5934 = vmatpush1.msra.mxu0 0.0
  %5935 = vmatprep.subr.mxu0 0.0
  %5936 = vmatpush1.msra.mxu0 0.0
  %5937 = vmatprep.subr.mxu0 0.0
  %5938 = vmatpush1.msra.mxu0 0.0
  %5939 = vmatprep.subr.mxu0 0.0
  %5940 = vmatpush1.msra.mxu0 0.0
  %5941 = vmatprep.subr.mxu0 0.0
  %5942 = vmatpush1.msra.mxu0 0.0
  %5943 = vmatprep.subr.mxu0 0.0
  %5944 = vmatpush1.msra.mxu0 0.0
  %5945 = vmatprep.subr.mxu0 0.0
  %5946 = vmatpush1.msra.mxu0 0.0
  %5947 = vmatprep.subr.mxu0 0.0
  %5948 = vmatpush1.msra.mxu0 0.0
  %5949 = vmatprep.subr.mxu0 0.0
  %5950 = vmatpush1.msra.mxu0 0.0
  %5951 = vmatprep.subr.mxu0 0.0
  %5952 = vmatpush1.msra.mxu0 0.0
  %5953 = vmatprep.subr.mxu0 0.0
  %5954 = vmatpush1.msra.mxu0 0.0
  %5955 = vmatprep.subr.mxu0 0.0
  %5956 = vmatpush1.msra.mxu0 0.0
  %5957 = vmatprep.subr.mxu0 0.0
  %5958 = vmatpush1.msra.mxu0 0.0
  %5959 = vmatprep.subr.mxu0 0.0
  %5960 = vmatpush1.msra.mxu0 0.0
  %5961 = vmatprep.subr.mxu0 0.0
  %5962 = vmatpush1.msra.mxu0 0.0
  %5963 = vmatprep.mubr.f32.mxu0 0.0
  %5964 = vmatmul.mubr.f32.gmra.mrb[0].mxu0 %v5888
  %v5965 = vpop.f32.mrb[0].mxu0
  %v5966 = vadd.f32 0.0, %v5965
  %v5967 = vpop.f32.mrb[0].mxu0
  %5968 = vmatprep.mubr.f32.mxu0 0.0
  %5969 = vmatmul.mubr.f32.gmra.mrb[0].mxu0 %v5891
  %v5970 = vpop.f32.mrb[0].mxu0
  %v5971 = vadd.f32 0.0, %v5970
  %v5972 = vpop.f32.mrb[0].mxu0
  %5973 = vmatprep.mubr.f32.mxu0 0.0
  %5974 = vmatmul.mubr.f32.gmra.mrb[0].mxu0 %v5894
  %v5975 = vpop.f32.mrb[0].mxu0
  %v5976 = vadd.f32 0.0, %v5975
  %v5977 = vpop.f32.mrb[0].mxu0
  %5978 = vmatprep.mubr.f32.mxu0 0.0
  %5979 = vmatmul.mubr.f32.gmra.mrb[0].mxu0 %v5897
  %v5980 = vpop.f32.mrb[0].mxu0
  %v5981 = vadd.f32 0.0, %v5980
  %v5982 = vpop.f32.mrb[0].mxu0
  %5983 = vdwg.mxu0
  %v5985 = vsel %vm972, %v5786, 0
  %v5988 = vsel %vm972, %v5787, 0
  %v5991 = vsel %vm972, %v5788, 0
  %v5994 = vsel %vm972, %v5789, 0
  %5996 = vmatprep.subr.mxu0 0.0
  %5997 = vmatpush1.msra.mxu0 %v5768
  %5998 = vmatprep.subr.mxu0 0.0
  %5999 = vmatpush1.msra.mxu0 %v5773
  %6000 = vmatprep.subr.mxu0 0.0
  %6001 = vmatpush1.msra.mxu0 %v5778
  %6002 = vmatprep.subr.mxu0 0.0
  %6003 = vmatpush1.msra.mxu0 %v5783
  %6004 = vmatprep.subr.mxu0 0.0
  %6005 = vmatpush1.msra.mxu0 0.0
  %6006 = vmatprep.subr.mxu0 0.0
  %6007 = vmatpush1.msra.mxu0 0.0
  %6008 = vmatprep.subr.mxu0 0.0
  %6009 = vmatpush1.msra.mxu0 0.0
  %6010 = vmatprep.subr.mxu0 0.0
  %6011 = vmatpush1.msra.mxu0 0.0
  %6012 = vmatprep.subr.mxu0 0.0
  %6013 = vmatpush1.msra.mxu0 0.0
  %6014 = vmatprep.subr.mxu0 0.0
  %6015 = vmatpush1.msra.mxu0 0.0
  %6016 = vmatprep.subr.mxu0 0.0
  %6017 = vmatpush1.msra.mxu0 0.0
  %6018 = vmatprep.subr.mxu0 0.0
  %6019 = vmatpush1.msra.mxu0 0.0
  %6020 = vmatprep.subr.mxu0 0.0
  %6021 = vmatpush1.msra.mxu0 0.0
  %6022 = vmatprep.subr.mxu0 0.0
  %6023 = vmatpush1.msra.mxu0 0.0
  %6024 = vmatprep.subr.mxu0 0.0
  %6025 = vmatpush1.msra.mxu0 0.0
  %6026 = vmatprep.subr.mxu0 0.0
  %6027 = vmatpush1.msra.mxu0 0.0
  %6028 = vmatprep.subr.mxu0 0.0
  %6029 = vmatpush1.msra.mxu0 0.0
  %6030 = vmatprep.subr.mxu0 0.0
  %6031 = vmatpush1.msra.mxu0 0.0
  %6032 = vmatprep.subr.mxu0 0.0
  %6033 = vmatpush1.msra.mxu0 0.0
  %6034 = vmatprep.subr.mxu0 0.0
  %6035 = vmatpush1.msra.mxu0 0.0
  %6036 = vmatprep.subr.mxu0 0.0
  %6037 = vmatpush1.msra.mxu0 0.0
  %6038 = vmatprep.subr.mxu0 0.0
  %6039 = vmatpush1.msra.mxu0 0.0
  %6040 = vmatprep.subr.mxu0 0.0
  %6041 = vmatpush1.msra.mxu0 0.0
  %6042 = vmatprep.subr.mxu0 0.0
  %6043 = vmatpush1.msra.mxu0 0.0
  %6044 = vmatprep.subr.mxu0 0.0
  %6045 = vmatpush1.msra.mxu0 0.0
  %6046 = vmatprep.subr.mxu0 0.0
  %6047 = vmatpush1.msra.mxu0 0.0
  %6048 = vmatprep.subr.mxu0 0.0
  %6049 = vmatpush1.msra.mxu0 0.0
  %6050 = vmatprep.subr.mxu0 0.0
  %6051 = vmatpush1.msra.mxu0 0.0
  %6052 = vmatprep.subr.mxu0 0.0
  %6053 = vmatpush1.msra.mxu0 0.0
  %6054 = vmatprep.subr.mxu0 0.0
  %6055 = vmatpush1.msra.mxu0 0.0
  %6056 = vmatprep.subr.mxu0 0.0
  %6057 = vmatpush1.msra.mxu0 0.0
  %6058 = vmatprep.subr.mxu0 0.0
  %6059 = vmatpush1.msra.mxu0 0.0
  %6060 = vmatprep.mubr.f32.mxu0 0.0
  %6061 = vmatmul.mubr.f32.gmra.mrb[0].mxu0 %v5985
  %v6062 = vpop.f32.mrb[0].mxu0
  %v6063 = vadd.f32 %v5966, %v6062
  %v6064 = vpop.f32.mrb[0].mxu0
  %6065 = vmatprep.mubr.f32.mxu0 0.0
  %6066 = vmatmul.mubr.f32.gmra.mrb[0].mxu0 %v5988
  %v6067 = vpop.f32.mrb[0].mxu0
  %v6068 = vadd.f32 %v5971, %v6067
  %v6069 = vpop.f32.mrb[0].mxu0
  %6070 = vmatprep.mubr.f32.mxu0 0.0
  %6071 = vmatmul.mubr.f32.gmra.mrb[0].mxu0 %v5991
  %v6072 = vpop.f32.mrb[0].mxu0
  %v6073 = vadd.f32 %v5976, %v6072
  %v6074 = vpop.f32.mrb[0].mxu0
  %6075 = vmatprep.mubr.f32.mxu0 0.0
  %6076 = vmatmul.mubr.f32.gmra.mrb[0].mxu0 %v5994
  %v6077 = vpop.f32.mrb[0].mxu0
  %v6078 = vadd.f32 %v5981, %v6077
  %v6079 = vpop.f32.mrb[0].mxu0
  %6080 = vdwg.mxu0
  %s6081 = scalar_lea.vmem %s6, 48
  %v6082 = vld [vmem:[%s6081] sm:$0xff]
  %v6083 = vld [vmem:[%s6081 + $0x8] sm:$0xff]
  %v6084 = vld [vmem:[%s6081 + $0x10] sm:$0x3]
  %v6086 = vsel %vm3706, %v6084, 0
  %6088 = vmatprep.subr.mxu0 0.0
  %6089 = vmatpush1.msra.mxu0 %v6082
  %6090 = vmatprep.subr.mxu0 0.0
  %6091 = vmatpush1.msra.mxu0 %v6083
  %6092 = vmatprep.subr.mxu0 0.0
  %6093 = vmatpush1.msra.mxu0 %v6086
  %6094 = vmatprep.subr.mxu0 0.0
  %6095 = vmatpush1.msra.mxu0 0.0
  %6096 = vmatprep.subr.mxu0 0.0
  %6097 = vmatpush1.msra.mxu0 0.0
  %6098 = vmatprep.subr.mxu0 0.0
  %6099 = vmatpush1.msra.mxu0 0.0
  %6100 = vmatprep.subr.mxu0 0.0
  %6101 = vmatpush1.msra.mxu0 0.0
  %6102 = vmatprep.subr.mxu0 0.0
  %6103 = vmatpush1.msra.mxu0 0.0
  %6104 = vmatprep.subr.mxu0 0.0
  %6105 = vmatpush1.msra.mxu0 0.0
  %6106 = vmatprep.subr.mxu0 0.0
  %6107 = vmatpush1.msra.mxu0 0.0
  %6108 = vmatprep.subr.mxu0 0.0
  %6109 = vmatpush1.msra.mxu0 0.0
  %6110 = vmatprep.subr.mxu0 0.0
  %6111 = vmatpush1.msra.mxu0 0.0
  %6112 = vmatprep.subr.mxu0 0.0
  %6113 = vmatpush1.msra.mxu0 0.0
  %6114 = vmatprep.subr.mxu0 0.0
  %6115 = vmatpush1.msra.mxu0 0.0
  %6116 = vmatprep.subr.mxu0 0.0
  %6117 = vmatpush1.msra.mxu0 0.0
  %6118 = vmatprep.subr.mxu0 0.0
  %6119 = vmatpush1.msra.mxu0 0.0
  %6120 = vmatprep.subr.mxu0 0.0
  %6121 = vmatpush1.msra.mxu0 0.0
  %6122 = vmatprep.subr.mxu0 0.0
  %6123 = vmatpush1.msra.mxu0 0.0
  %6124 = vmatprep.subr.mxu0 0.0
  %6125 = vmatpush1.msra.mxu0 0.0
  %6126 = vmatprep.subr.mxu0 0.0
  %6127 = vmatpush1.msra.mxu0 0.0
  %6128 = vmatprep.subr.mxu0 0.0
  %6129 = vmatpush1.msra.mxu0 0.0
  %6130 = vmatprep.subr.mxu0 0.0
  %6131 = vmatpush1.msra.mxu0 0.0
  %6132 = vmatprep.subr.mxu0 0.0
  %6133 = vmatpush1.msra.mxu0 0.0
  %6134 = vmatprep.subr.mxu0 0.0
  %6135 = vmatpush1.msra.mxu0 0.0
  %6136 = vmatprep.subr.mxu0 0.0
  %6137 = vmatpush1.msra.mxu0 0.0
  %6138 = vmatprep.subr.mxu0 0.0
  %6139 = vmatpush1.msra.mxu0 0.0
  %6140 = vmatprep.subr.mxu0 0.0
  %6141 = vmatpush1.msra.mxu0 0.0
  %6142 = vmatprep.subr.mxu0 0.0
  %6143 = vmatpush1.msra.mxu0 0.0
  %6144 = vmatprep.subr.mxu0 0.0
  %6145 = vmatpush1.msra.mxu0 0.0
  %6146 = vmatprep.subr.mxu0 0.0
  %6147 = vmatpush1.msra.mxu0 0.0
  %6148 = vmatprep.subr.mxu0 0.0
  %6149 = vmatpush1.msra.mxu0 0.0
  %6150 = vmatprep.subr.mxu0 0.0
  %6151 = vmatpush1.msra.mxu0 0.0
  %6152 = vmatprep.mubr.f32.mxu0 0.0
  %6153 = vmatmul.mubr.f32.gmra.mrb[0].mxu0 %v5687
  %v6154 = vpop.f32.mrb[0].mxu0
  %v6155 = vadd.f32 0.0, %v6154
  %v6156 = vpop.f32.mrb[0].mxu0
  %6157 = vmatprep.mubr.f32.mxu0 0.0
  %6158 = vmatmul.mubr.f32.gmra.mrb[0].mxu0 %v5690
  %v6159 = vpop.f32.mrb[0].mxu0
  %v6160 = vadd.f32 0.0, %v6159
  %v6161 = vpop.f32.mrb[0].mxu0
  %6162 = vmatprep.mubr.f32.mxu0 0.0
  %6163 = vmatmul.mubr.f32.gmra.mrb[0].mxu0 %v5693
  %v6164 = vpop.f32.mrb[0].mxu0
  %v6165 = vadd.f32 0.0, %v6164
  %v6166 = vpop.f32.mrb[0].mxu0
  %6167 = vmatprep.mubr.f32.mxu0 0.0
  %6168 = vmatmul.mubr.f32.gmra.mrb[0].mxu0 %v5696
  %v6169 = vpop.f32.mrb[0].mxu0
  %v6170 = vadd.f32 0.0, %v6169
  %v6171 = vpop.f32.mrb[0].mxu0
  %6172 = vdwg.mxu0
  %s6173 = scalar_lea.vmem %s7, 64
  %v6174 = vld [vmem:[%s6173] sm:$0xff]
  %v6175 = vld [vmem:[%s6173 + $0x8] sm:$0xff]
  %v6176 = vld [vmem:[%s6173 + $0x10] sm:$0xff]
  %v6177 = vld [vmem:[%s6173 + $0x18] sm:$0xff]
  %v6179 = vsel %vm972, %v6174, 0
  %v6182 = vsel %vm972, %v6175, 0
  %v6185 = vsel %vm972, %v6176, 0
  %v6188 = vsel %vm972, %v6177, 0
  %6190 = vmatprep.subr.mxu0 0.0
  %6191 = vmatpush1.msra.mxu0 %v6155
  %6192 = vmatprep.subr.mxu0 0.0
  %6193 = vmatpush1.msra.mxu0 %v6160
  %6194 = vmatprep.subr.mxu0 0.0
  %6195 = vmatpush1.msra.mxu0 %v6165
  %6196 = vmatprep.subr.mxu0 0.0
  %6197 = vmatpush1.msra.mxu0 %v6170
  %6198 = vmatprep.subr.mxu0 0.0
  %6199 = vmatpush1.msra.mxu0 0.0
  %6200 = vmatprep.subr.mxu0 0.0
  %6201 = vmatpush1.msra.mxu0 0.0
  %6202 = vmatprep.subr.mxu0 0.0
  %6203 = vmatpush1.msra.mxu0 0.0
  %6204 = vmatprep.subr.mxu0 0.0
  %6205 = vmatpush1.msra.mxu0 0.0
  %6206 = vmatprep.subr.mxu0 0.0
  %6207 = vmatpush1.msra.mxu0 0.0
  %6208 = vmatprep.subr.mxu0 0.0
  %6209 = vmatpush1.msra.mxu0 0.0
  %6210 = vmatprep.subr.mxu0 0.0
  %6211 = vmatpush1.msra.mxu0 0.0
  %6212 = vmatprep.subr.mxu0 0.0
  %6213 = vmatpush1.msra.mxu0 0.0
  %6214 = vmatprep.subr.mxu0 0.0
  %6215 = vmatpush1.msra.mxu0 0.0
  %6216 = vmatprep.subr.mxu0 0.0
  %6217 = vmatpush1.msra.mxu0 0.0
  %6218 = vmatprep.subr.mxu0 0.0
  %6219 = vmatpush1.msra.mxu0 0.0
  %6220 = vmatprep.subr.mxu0 0.0
  %6221 = vmatpush1.msra.mxu0 0.0
  %6222 = vmatprep.subr.mxu0 0.0
  %6223 = vmatpush1.msra.mxu0 0.0
  %6224 = vmatprep.subr.mxu0 0.0
  %6225 = vmatpush1.msra.mxu0 0.0
  %6226 = vmatprep.subr.mxu0 0.0
  %6227 = vmatpush1.msra.mxu0 0.0
  %6228 = vmatprep.subr.mxu0 0.0
  %6229 = vmatpush1.msra.mxu0 0.0
  %6230 = vmatprep.subr.mxu0 0.0
  %6231 = vmatpush1.msra.mxu0 0.0
  %6232 = vmatprep.subr.mxu0 0.0
  %6233 = vmatpush1.msra.mxu0 0.0
  %6234 = vmatprep.subr.mxu0 0.0
  %6235 = vmatpush1.msra.mxu0 0.0
  %6236 = vmatprep.subr.mxu0 0.0
  %6237 = vmatpush1.msra.mxu0 0.0
  %6238 = vmatprep.subr.mxu0 0.0
  %6239 = vmatpush1.msra.mxu0 0.0
  %6240 = vmatprep.subr.mxu0 0.0
  %6241 = vmatpush1.msra.mxu0 0.0
  %6242 = vmatprep.subr.mxu0 0.0
  %6243 = vmatpush1.msra.mxu0 0.0
  %6244 = vmatprep.subr.mxu0 0.0
  %6245 = vmatpush1.msra.mxu0 0.0
  %6246 = vmatprep.subr.mxu0 0.0
  %6247 = vmatpush1.msra.mxu0 0.0
  %6248 = vmatprep.subr.mxu0 0.0
  %6249 = vmatpush1.msra.mxu0 0.0
  %6250 = vmatprep.subr.mxu0 0.0
  %6251 = vmatpush1.msra.mxu0 0.0
  %6252 = vmatprep.subr.mxu0 0.0
  %6253 = vmatpush1.msra.mxu0 0.0
  %6254 = vmatprep.mubr.f32.mxu0 0.0
  %6255 = vmatmul.mubr.f32.gmra.mrb[0].mxu0 %v6179
  %v6256 = vpop.f32.mrb[0].mxu0
  %v6257 = vadd.f32 0.0, %v6256
  %v6258 = vpop.f32.mrb[0].mxu0
  %6259 = vmatprep.mubr.f32.mxu0 0.0
  %6260 = vmatmul.mubr.f32.gmra.mrb[0].mxu0 %v6182
  %v6261 = vpop.f32.mrb[0].mxu0
  %v6262 = vadd.f32 0.0, %v6261
  %v6263 = vpop.f32.mrb[0].mxu0
  %6264 = vmatprep.mubr.f32.mxu0 0.0
  %6265 = vmatmul.mubr.f32.gmra.mrb[0].mxu0 %v6185
  %v6266 = vpop.f32.mrb[0].mxu0
  %v6267 = vadd.f32 0.0, %v6266
  %v6268 = vpop.f32.mrb[0].mxu0
  %6269 = vmatprep.mubr.f32.mxu0 0.0
  %6270 = vmatmul.mubr.f32.gmra.mrb[0].mxu0 %v6188
  %v6271 = vpop.f32.mrb[0].mxu0
  %v6272 = vadd.f32 0.0, %v6271
  %v6273 = vpop.f32.mrb[0].mxu0
  %6274 = vdwg.mxu0
  %v6275 = vadd.f32 %v6063, %v6257
  %v6276 = vadd.f32 %v6068, %v6262
  %v6277 = vadd.f32 %v6073, %v6267
  %v6278 = vadd.f32 %v6078, %v6272
  %s6279 = scalar_lea.vmem %s6, 72
  %v6280 = vld [vmem:[%s6279] sm:$0xff]
  %v6281 = vld [vmem:[%s6279 + $0x8] sm:$0xff]
  %v6282 = vld [vmem:[%s6279 + $0x10] sm:$0x3]
  %v6284 = vsel %vm3706, %v6282, 0
  %6286 = vmatprep.subr.mxu0 0.0
  %6287 = vmatpush1.msra.mxu0 %v6280
  %6288 = vmatprep.subr.mxu0 0.0
  %6289 = vmatpush1.msra.mxu0 %v6281
  %6290 = vmatprep.subr.mxu0 0.0
  %6291 = vmatpush1.msra.mxu0 %v6284
  %6292 = vmatprep.subr.mxu0 0.0
  %6293 = vmatpush1.msra.mxu0 0.0
  %6294 = vmatprep.subr.mxu0 0.0
  %6295 = vmatpush1.msra.mxu0 0.0
  %6296 = vmatprep.subr.mxu0 0.0
  %6297 = vmatpush1.msra.mxu0 0.0
  %6298 = vmatprep.subr.mxu0 0.0
  %6299 = vmatpush1.msra.mxu0 0.0
  %6300 = vmatprep.subr.mxu0 0.0
  %6301 = vmatpush1.msra.mxu0 0.0
  %6302 = vmatprep.subr.mxu0 0.0
  %6303 = vmatpush1.msra.mxu0 0.0
  %6304 = vmatprep.subr.mxu0 0.0
  %6305 = vmatpush1.msra.mxu0 0.0
  %6306 = vmatprep.subr.mxu0 0.0
  %6307 = vmatpush1.msra.mxu0 0.0
  %6308 = vmatprep.subr.mxu0 0.0
  %6309 = vmatpush1.msra.mxu0 0.0
  %6310 = vmatprep.subr.mxu0 0.0
  %6311 = vmatpush1.msra.mxu0 0.0
  %6312 = vmatprep.subr.mxu0 0.0
  %6313 = vmatpush1.msra.mxu0 0.0
  %6314 = vmatprep.subr.mxu0 0.0
  %6315 = vmatpush1.msra.mxu0 0.0
  %6316 = vmatprep.subr.mxu0 0.0
  %6317 = vmatpush1.msra.mxu0 0.0
  %6318 = vmatprep.subr.mxu0 0.0
  %6319 = vmatpush1.msra.mxu0 0.0
  %6320 = vmatprep.subr.mxu0 0.0
  %6321 = vmatpush1.msra.mxu0 0.0
  %6322 = vmatprep.subr.mxu0 0.0
  %6323 = vmatpush1.msra.mxu0 0.0
  %6324 = vmatprep.subr.mxu0 0.0
  %6325 = vmatpush1.msra.mxu0 0.0
  %6326 = vmatprep.subr.mxu0 0.0
  %6327 = vmatpush1.msra.mxu0 0.0
  %6328 = vmatprep.subr.mxu0 0.0
  %6329 = vmatpush1.msra.mxu0 0.0
  %6330 = vmatprep.subr.mxu0 0.0
  %6331 = vmatpush1.msra.mxu0 0.0
  %6332 = vmatprep.subr.mxu0 0.0
  %6333 = vmatpush1.msra.mxu0 0.0
  %6334 = vmatprep.subr.mxu0 0.0
  %6335 = vmatpush1.msra.mxu0 0.0
  %6336 = vmatprep.subr.mxu0 0.0
  %6337 = vmatpush1.msra.mxu0 0.0
  %6338 = vmatprep.subr.mxu0 0.0
  %6339 = vmatpush1.msra.mxu0 0.0
  %6340 = vmatprep.subr.mxu0 0.0
  %6341 = vmatpush1.msra.mxu0 0.0
  %6342 = vmatprep.subr.mxu0 0.0
  %6343 = vmatpush1.msra.mxu0 0.0
  %6344 = vmatprep.subr.mxu0 0.0
  %6345 = vmatpush1.msra.mxu0 0.0
  %6346 = vmatprep.subr.mxu0 0.0
  %6347 = vmatpush1.msra.mxu0 0.0
  %6348 = vmatprep.subr.mxu0 0.0
  %6349 = vmatpush1.msra.mxu0 0.0
  %6350 = vmatprep.mubr.f32.mxu0 0.0
  %6351 = vmatmul.mubr.f32.gmra.mrb[0].mxu0 %v5687
  %v6352 = vpop.f32.mrb[0].mxu0
  %v6353 = vadd.f32 0.0, %v6352
  %v6354 = vpop.f32.mrb[0].mxu0
  %6355 = vmatprep.mubr.f32.mxu0 0.0
  %6356 = vmatmul.mubr.f32.gmra.mrb[0].mxu0 %v5690
  %v6357 = vpop.f32.mrb[0].mxu0
  %v6358 = vadd.f32 0.0, %v6357
  %v6359 = vpop.f32.mrb[0].mxu0
  %6360 = vmatprep.mubr.f32.mxu0 0.0
  %6361 = vmatmul.mubr.f32.gmra.mrb[0].mxu0 %v5693
  %v6362 = vpop.f32.mrb[0].mxu0
  %v6363 = vadd.f32 0.0, %v6362
  %v6364 = vpop.f32.mrb[0].mxu0
  %6365 = vmatprep.mubr.f32.mxu0 0.0
  %6366 = vmatmul.mubr.f32.gmra.mrb[0].mxu0 %v5696
  %v6367 = vpop.f32.mrb[0].mxu0
  %v6368 = vadd.f32 0.0, %v6367
  %v6369 = vpop.f32.mrb[0].mxu0
  %6370 = vdwg.mxu0
  %s6371 = scalar_lea.vmem %s7, 96
  %v6372 = vld [vmem:[%s6371] sm:$0xff]
  %v6373 = vld [vmem:[%s6371 + $0x8] sm:$0xff]
  %v6374 = vld [vmem:[%s6371 + $0x10] sm:$0xff]
  %v6375 = vld [vmem:[%s6371 + $0x18] sm:$0xff]
  %v6377 = vsel %vm972, %v6372, 0
  %v6380 = vsel %vm972, %v6373, 0
  %v6383 = vsel %vm972, %v6374, 0
  %v6386 = vsel %vm972, %v6375, 0
  %6388 = vmatprep.subr.mxu0 0.0
  %6389 = vmatpush1.msra.mxu0 %v6353
  %6390 = vmatprep.subr.mxu0 0.0
  %6391 = vmatpush1.msra.mxu0 %v6358
  %6392 = vmatprep.subr.mxu0 0.0
  %6393 = vmatpush1.msra.mxu0 %v6363
  %6394 = vmatprep.subr.mxu0 0.0
  %6395 = vmatpush1.msra.mxu0 %v6368
  %6396 = vmatprep.subr.mxu0 0.0
  %6397 = vmatpush1.msra.mxu0 0.0
  %6398 = vmatprep.subr.mxu0 0.0
  %6399 = vmatpush1.msra.mxu0 0.0
  %6400 = vmatprep.subr.mxu0 0.0
  %6401 = vmatpush1.msra.mxu0 0.0
  %6402 = vmatprep.subr.mxu0 0.0
  %6403 = vmatpush1.msra.mxu0 0.0
  %6404 = vmatprep.subr.mxu0 0.0
  %6405 = vmatpush1.msra.mxu0 0.0
  %6406 = vmatprep.subr.mxu0 0.0
  %6407 = vmatpush1.msra.mxu0 0.0
  %6408 = vmatprep.subr.mxu0 0.0
  %6409 = vmatpush1.msra.mxu0 0.0
  %6410 = vmatprep.subr.mxu0 0.0
  %6411 = vmatpush1.msra.mxu0 0.0
  %6412 = vmatprep.subr.mxu0 0.0
  %6413 = vmatpush1.msra.mxu0 0.0
  %6414 = vmatprep.subr.mxu0 0.0
  %6415 = vmatpush1.msra.mxu0 0.0
  %6416 = vmatprep.subr.mxu0 0.0
  %6417 = vmatpush1.msra.mxu0 0.0
  %6418 = vmatprep.subr.mxu0 0.0
  %6419 = vmatpush1.msra.mxu0 0.0
  %6420 = vmatprep.subr.mxu0 0.0
  %6421 = vmatpush1.msra.mxu0 0.0
  %6422 = vmatprep.subr.mxu0 0.0
  %6423 = vmatpush1.msra.mxu0 0.0
  %6424 = vmatprep.subr.mxu0 0.0
  %6425 = vmatpush1.msra.mxu0 0.0
  %6426 = vmatprep.subr.mxu0 0.0
  %6427 = vmatpush1.msra.mxu0 0.0
  %6428 = vmatprep.subr.mxu0 0.0
  %6429 = vmatpush1.msra.mxu0 0.0
  %6430 = vmatprep.subr.mxu0 0.0
  %6431 = vmatpush1.msra.mxu0 0.0
  %6432 = vmatprep.subr.mxu0 0.0
  %6433 = vmatpush1.msra.mxu0 0.0
  %6434 = vmatprep.subr.mxu0 0.0
  %6435 = vmatpush1.msra.mxu0 0.0
  %6436 = vmatprep.subr.mxu0 0.0
  %6437 = vmatpush1.msra.mxu0 0.0
  %6438 = vmatprep.subr.mxu0 0.0
  %6439 = vmatpush1.msra.mxu0 0.0
  %6440 = vmatprep.subr.mxu0 0.0
  %6441 = vmatpush1.msra.mxu0 0.0
  %6442 = vmatprep.subr.mxu0 0.0
  %6443 = vmatpush1.msra.mxu0 0.0
  %6444 = vmatprep.subr.mxu0 0.0
  %6445 = vmatpush1.msra.mxu0 0.0
  %6446 = vmatprep.subr.mxu0 0.0
  %6447 = vmatpush1.msra.mxu0 0.0
  %6448 = vmatprep.subr.mxu0 0.0
  %6449 = vmatpush1.msra.mxu0 0.0
  %6450 = vmatprep.subr.mxu0 0.0
  %6451 = vmatpush1.msra.mxu0 0.0
  %6452 = vmatprep.mubr.f32.mxu0 0.0
  %6453 = vmatmul.mubr.f32.gmra.mrb[0].mxu0 %v6377
  %v6454 = vpop.f32.mrb[0].mxu0
  %v6455 = vadd.f32 0.0, %v6454
  %v6456 = vpop.f32.mrb[0].mxu0
  %6457 = vmatprep.mubr.f32.mxu0 0.0
  %6458 = vmatmul.mubr.f32.gmra.mrb[0].mxu0 %v6380
  %v6459 = vpop.f32.mrb[0].mxu0
  %v6460 = vadd.f32 0.0, %v6459
  %v6461 = vpop.f32.mrb[0].mxu0
  %6462 = vmatprep.mubr.f32.mxu0 0.0
  %6463 = vmatmul.mubr.f32.gmra.mrb[0].mxu0 %v6383
  %v6464 = vpop.f32.mrb[0].mxu0
  %v6465 = vadd.f32 0.0, %v6464
  %v6466 = vpop.f32.mrb[0].mxu0
  %6467 = vmatprep.mubr.f32.mxu0 0.0
  %6468 = vmatmul.mubr.f32.gmra.mrb[0].mxu0 %v6386
  %v6469 = vpop.f32.mrb[0].mxu0
  %v6470 = vadd.f32 0.0, %v6469
  %v6471 = vpop.f32.mrb[0].mxu0
  %6472 = vdwg.mxu0
  %v6473 = vadd.f32 %v6275, %v6455
  %v6474 = vadd.f32 %v6276, %v6460
  %v6475 = vadd.f32 %v6277, %v6465
  %v6476 = vadd.f32 %v6278, %v6470
  %s6477 = scalar_lea.vmem %s6, 96
  %v6478 = vld [vmem:[%s6477] sm:$0xff]
  %v6479 = vld [vmem:[%s6477 + $0x8] sm:$0xff]
  %v6480 = vld [vmem:[%s6477 + $0x10] sm:$0x3]
  %v6482 = vsel %vm3706, %v6480, 0
  %6484 = vmatprep.subr.mxu0 0.0
  %6485 = vmatpush1.msra.mxu0 %v6478
  %6486 = vmatprep.subr.mxu0 0.0
  %6487 = vmatpush1.msra.mxu0 %v6479
  %6488 = vmatprep.subr.mxu0 0.0
  %6489 = vmatpush1.msra.mxu0 %v6482
  %6490 = vmatprep.subr.mxu0 0.0
  %6491 = vmatpush1.msra.mxu0 0.0
  %6492 = vmatprep.subr.mxu0 0.0
  %6493 = vmatpush1.msra.mxu0 0.0
  %6494 = vmatprep.subr.mxu0 0.0
  %6495 = vmatpush1.msra.mxu0 0.0
  %6496 = vmatprep.subr.mxu0 0.0
  %6497 = vmatpush1.msra.mxu0 0.0
  %6498 = vmatprep.subr.mxu0 0.0
  %6499 = vmatpush1.msra.mxu0 0.0
  %6500 = vmatprep.subr.mxu0 0.0
  %6501 = vmatpush1.msra.mxu0 0.0
  %6502 = vmatprep.subr.mxu0 0.0
  %6503 = vmatpush1.msra.mxu0 0.0
  %6504 = vmatprep.subr.mxu0 0.0
  %6505 = vmatpush1.msra.mxu0 0.0
  %6506 = vmatprep.subr.mxu0 0.0
  %6507 = vmatpush1.msra.mxu0 0.0
  %6508 = vmatprep.subr.mxu0 0.0
  %6509 = vmatpush1.msra.mxu0 0.0
  %6510 = vmatprep.subr.mxu0 0.0
  %6511 = vmatpush1.msra.mxu0 0.0
  %6512 = vmatprep.subr.mxu0 0.0
  %6513 = vmatpush1.msra.mxu0 0.0
  %6514 = vmatprep.subr.mxu0 0.0
  %6515 = vmatpush1.msra.mxu0 0.0
  %6516 = vmatprep.subr.mxu0 0.0
  %6517 = vmatpush1.msra.mxu0 0.0
  %6518 = vmatprep.subr.mxu0 0.0
  %6519 = vmatpush1.msra.mxu0 0.0
  %6520 = vmatprep.subr.mxu0 0.0
  %6521 = vmatpush1.msra.mxu0 0.0
  %6522 = vmatprep.subr.mxu0 0.0
  %6523 = vmatpush1.msra.mxu0 0.0
  %6524 = vmatprep.subr.mxu0 0.0
  %6525 = vmatpush1.msra.mxu0 0.0
  %6526 = vmatprep.subr.mxu0 0.0
  %6527 = vmatpush1.msra.mxu0 0.0
  %6528 = vmatprep.subr.mxu0 0.0
  %6529 = vmatpush1.msra.mxu0 0.0
  %6530 = vmatprep.subr.mxu0 0.0
  %6531 = vmatpush1.msra.mxu0 0.0
  %6532 = vmatprep.subr.mxu0 0.0
  %6533 = vmatpush1.msra.mxu0 0.0
  %6534 = vmatprep.subr.mxu0 0.0
  %6535 = vmatpush1.msra.mxu0 0.0
  %6536 = vmatprep.subr.mxu0 0.0
  %6537 = vmatpush1.msra.mxu0 0.0
  %6538 = vmatprep.subr.mxu0 0.0
  %6539 = vmatpush1.msra.mxu0 0.0
  %6540 = vmatprep.subr.mxu0 0.0
  %6541 = vmatpush1.msra.mxu0 0.0
  %6542 = vmatprep.subr.mxu0 0.0
  %6543 = vmatpush1.msra.mxu0 0.0
  %6544 = vmatprep.subr.mxu0 0.0
  %6545 = vmatpush1.msra.mxu0 0.0
  %6546 = vmatprep.subr.mxu0 0.0
  %6547 = vmatpush1.msra.mxu0 0.0
  %6548 = vmatprep.mubr.f32.mxu0 0.0
  %6549 = vmatmul.mubr.f32.gmra.mrb[0].mxu0 %v5687
  %v6550 = vpop.f32.mrb[0].mxu0
  %v6551 = vadd.f32 0.0, %v6550
  %v6552 = vpop.f32.mrb[0].mxu0
  %6553 = vmatprep.mubr.f32.mxu0 0.0
  %6554 = vmatmul.mubr.f32.gmra.mrb[0].mxu0 %v5690
  %v6555 = vpop.f32.mrb[0].mxu0
  %v6556 = vadd.f32 0.0, %v6555
  %v6557 = vpop.f32.mrb[0].mxu0
  %6558 = vmatprep.mubr.f32.mxu0 0.0
  %6559 = vmatmul.mubr.f32.gmra.mrb[0].mxu0 %v5693
  %v6560 = vpop.f32.mrb[0].mxu0
  %v6561 = vadd.f32 0.0, %v6560
  %v6562 = vpop.f32.mrb[0].mxu0
  %6563 = vmatprep.mubr.f32.mxu0 0.0
  %6564 = vmatmul.mubr.f32.gmra.mrb[0].mxu0 %v5696
  %v6565 = vpop.f32.mrb[0].mxu0
  %v6566 = vadd.f32 0.0, %v6565
  %v6567 = vpop.f32.mrb[0].mxu0
  %6568 = vdwg.mxu0
  %s6569 = scalar_lea.vmem %s7, 128
  %v6570 = vld [vmem:[%s6569] sm:$0xff]
  %v6571 = vld [vmem:[%s6569 + $0x8] sm:$0xff]
  %v6572 = vld [vmem:[%s6569 + $0x10] sm:$0xff]
  %v6573 = vld [vmem:[%s6569 + $0x18] sm:$0xff]
  %v6575 = vsel %vm972, %v6570, 0
  %v6578 = vsel %vm972, %v6571, 0
  %v6581 = vsel %vm972, %v6572, 0
  %v6584 = vsel %vm972, %v6573, 0
  %6586 = vmatprep.subr.mxu0 0.0
  %6587 = vmatpush1.msra.mxu0 %v6551
  %6588 = vmatprep.subr.mxu0 0.0
  %6589 = vmatpush1.msra.mxu0 %v6556
  %6590 = vmatprep.subr.mxu0 0.0
  %6591 = vmatpush1.msra.mxu0 %v6561
  %6592 = vmatprep.subr.mxu0 0.0
  %6593 = vmatpush1.msra.mxu0 %v6566
  %6594 = vmatprep.subr.mxu0 0.0
  %6595 = vmatpush1.msra.mxu0 0.0
  %6596 = vmatprep.subr.mxu0 0.0
  %6597 = vmatpush1.msra.mxu0 0.0
  %6598 = vmatprep.subr.mxu0 0.0
  %6599 = vmatpush1.msra.mxu0 0.0
  %6600 = vmatprep.subr.mxu0 0.0
  %6601 = vmatpush1.msra.mxu0 0.0
  %6602 = vmatprep.subr.mxu0 0.0
  %6603 = vmatpush1.msra.mxu0 0.0
  %6604 = vmatprep.subr.mxu0 0.0
  %6605 = vmatpush1.msra.mxu0 0.0
  %6606 = vmatprep.subr.mxu0 0.0
  %6607 = vmatpush1.msra.mxu0 0.0
  %6608 = vmatprep.subr.mxu0 0.0
  %6609 = vmatpush1.msra.mxu0 0.0
  %6610 = vmatprep.subr.mxu0 0.0
  %6611 = vmatpush1.msra.mxu0 0.0
  %6612 = vmatprep.subr.mxu0 0.0
  %6613 = vmatpush1.msra.mxu0 0.0
  %6614 = vmatprep.subr.mxu0 0.0
  %6615 = vmatpush1.msra.mxu0 0.0
  %6616 = vmatprep.subr.mxu0 0.0
  %6617 = vmatpush1.msra.mxu0 0.0
  %6618 = vmatprep.subr.mxu0 0.0
  %6619 = vmatpush1.msra.mxu0 0.0
  %6620 = vmatprep.subr.mxu0 0.0
  %6621 = vmatpush1.msra.mxu0 0.0
  %6622 = vmatprep.subr.mxu0 0.0
  %6623 = vmatpush1.msra.mxu0 0.0
  %6624 = vmatprep.subr.mxu0 0.0
  %6625 = vmatpush1.msra.mxu0 0.0
  %6626 = vmatprep.subr.mxu0 0.0
  %6627 = vmatpush1.msra.mxu0 0.0
  %6628 = vmatprep.subr.mxu0 0.0
  %6629 = vmatpush1.msra.mxu0 0.0
  %6630 = vmatprep.subr.mxu0 0.0
  %6631 = vmatpush1.msra.mxu0 0.0
  %6632 = vmatprep.subr.mxu0 0.0
  %6633 = vmatpush1.msra.mxu0 0.0
  %6634 = vmatprep.subr.mxu0 0.0
  %6635 = vmatpush1.msra.mxu0 0.0
  %6636 = vmatprep.subr.mxu0 0.0
  %6637 = vmatpush1.msra.mxu0 0.0
  %6638 = vmatprep.subr.mxu0 0.0
  %6639 = vmatpush1.msra.mxu0 0.0
  %6640 = vmatprep.subr.mxu0 0.0
  %6641 = vmatpush1.msra.mxu0 0.0
  %6642 = vmatprep.subr.mxu0 0.0
  %6643 = vmatpush1.msra.mxu0 0.0
  %6644 = vmatprep.subr.mxu0 0.0
  %6645 = vmatpush1.msra.mxu0 0.0
  %6646 = vmatprep.subr.mxu0 0.0
  %6647 = vmatpush1.msra.mxu0 0.0
  %6648 = vmatprep.subr.mxu0 0.0
  %6649 = vmatpush1.msra.mxu0 0.0
  %6650 = vmatprep.mubr.f32.mxu0 0.0
  %6651 = vmatmul.mubr.f32.gmra.mrb[0].mxu0 %v6575
  %v6652 = vpop.f32.mrb[0].mxu0
  %v6653 = vadd.f32 0.0, %v6652
  %v6654 = vpop.f32.mrb[0].mxu0
  %6655 = vmatprep.mubr.f32.mxu0 0.0
  %6656 = vmatmul.mubr.f32.gmra.mrb[0].mxu0 %v6578
  %v6657 = vpop.f32.mrb[0].mxu0
  %v6658 = vadd.f32 0.0, %v6657
  %v6659 = vpop.f32.mrb[0].mxu0
  %6660 = vmatprep.mubr.f32.mxu0 0.0
  %6661 = vmatmul.mubr.f32.gmra.mrb[0].mxu0 %v6581
  %v6662 = vpop.f32.mrb[0].mxu0
  %v6663 = vadd.f32 0.0, %v6662
  %v6664 = vpop.f32.mrb[0].mxu0
  %6665 = vmatprep.mubr.f32.mxu0 0.0
  %6666 = vmatmul.mubr.f32.gmra.mrb[0].mxu0 %v6584
  %v6667 = vpop.f32.mrb[0].mxu0
  %v6668 = vadd.f32 0.0, %v6667
  %v6669 = vpop.f32.mrb[0].mxu0
  %6670 = vdwg.mxu0
  %v6671 = vadd.f32 %v6473, %v6653
  %v6672 = vadd.f32 %v6474, %v6658
  %v6673 = vadd.f32 %v6475, %v6663
  %v6674 = vadd.f32 %v6476, %v6668
  %s6675 = scalar_lea.vmem %s6, 120
  %v6676 = vld [vmem:[%s6675] sm:$0xff]
  %v6677 = vld [vmem:[%s6675 + $0x8] sm:$0xff]
  %v6678 = vld [vmem:[%s6675 + $0x10] sm:$0x3]
  %v6680 = vsel %vm3706, %v6678, 0
  %6682 = vmatprep.subr.mxu0 0.0
  %6683 = vmatpush1.msra.mxu0 %v6676
  %6684 = vmatprep.subr.mxu0 0.0
  %6685 = vmatpush1.msra.mxu0 %v6677
  %6686 = vmatprep.subr.mxu0 0.0
  %6687 = vmatpush1.msra.mxu0 %v6680
  %6688 = vmatprep.subr.mxu0 0.0
  %6689 = vmatpush1.msra.mxu0 0.0
  %6690 = vmatprep.subr.mxu0 0.0
  %6691 = vmatpush1.msra.mxu0 0.0
  %6692 = vmatprep.subr.mxu0 0.0
  %6693 = vmatpush1.msra.mxu0 0.0
  %6694 = vmatprep.subr.mxu0 0.0
  %6695 = vmatpush1.msra.mxu0 0.0
  %6696 = vmatprep.subr.mxu0 0.0
  %6697 = vmatpush1.msra.mxu0 0.0
  %6698 = vmatprep.subr.mxu0 0.0
  %6699 = vmatpush1.msra.mxu0 0.0
  %6700 = vmatprep.subr.mxu0 0.0
  %6701 = vmatpush1.msra.mxu0 0.0
  %6702 = vmatprep.subr.mxu0 0.0
  %6703 = vmatpush1.msra.mxu0 0.0
  %6704 = vmatprep.subr.mxu0 0.0
  %6705 = vmatpush1.msra.mxu0 0.0
  %6706 = vmatprep.subr.mxu0 0.0
  %6707 = vmatpush1.msra.mxu0 0.0
  %6708 = vmatprep.subr.mxu0 0.0
  %6709 = vmatpush1.msra.mxu0 0.0
  %6710 = vmatprep.subr.mxu0 0.0
  %6711 = vmatpush1.msra.mxu0 0.0
  %6712 = vmatprep.subr.mxu0 0.0
  %6713 = vmatpush1.msra.mxu0 0.0
  %6714 = vmatprep.subr.mxu0 0.0
  %6715 = vmatpush1.msra.mxu0 0.0
  %6716 = vmatprep.subr.mxu0 0.0
  %6717 = vmatpush1.msra.mxu0 0.0
  %6718 = vmatprep.subr.mxu0 0.0
  %6719 = vmatpush1.msra.mxu0 0.0
  %6720 = vmatprep.subr.mxu0 0.0
  %6721 = vmatpush1.msra.mxu0 0.0
  %6722 = vmatprep.subr.mxu0 0.0
  %6723 = vmatpush1.msra.mxu0 0.0
  %6724 = vmatprep.subr.mxu0 0.0
  %6725 = vmatpush1.msra.mxu0 0.0
  %6726 = vmatprep.subr.mxu0 0.0
  %6727 = vmatpush1.msra.mxu0 0.0
  %6728 = vmatprep.subr.mxu0 0.0
  %6729 = vmatpush1.msra.mxu0 0.0
  %6730 = vmatprep.subr.mxu0 0.0
  %6731 = vmatpush1.msra.mxu0 0.0
  %6732 = vmatprep.subr.mxu0 0.0
  %6733 = vmatpush1.msra.mxu0 0.0
  %6734 = vmatprep.subr.mxu0 0.0
  %6735 = vmatpush1.msra.mxu0 0.0
  %6736 = vmatprep.subr.mxu0 0.0
  %6737 = vmatpush1.msra.mxu0 0.0
  %6738 = vmatprep.subr.mxu0 0.0
  %6739 = vmatpush1.msra.mxu0 0.0
  %6740 = vmatprep.subr.mxu0 0.0
  %6741 = vmatpush1.msra.mxu0 0.0
  %6742 = vmatprep.subr.mxu0 0.0
  %6743 = vmatpush1.msra.mxu0 0.0
  %6744 = vmatprep.subr.mxu0 0.0
  %6745 = vmatpush1.msra.mxu0 0.0
  %6746 = vmatprep.mubr.f32.mxu0 0.0
  %6747 = vmatmul.mubr.f32.gmra.mrb[0].mxu0 %v5687
  %v6748 = vpop.f32.mrb[0].mxu0
  %v6749 = vadd.f32 0.0, %v6748
  %v6750 = vpop.f32.mrb[0].mxu0
  %6751 = vmatprep.mubr.f32.mxu0 0.0
  %6752 = vmatmul.mubr.f32.gmra.mrb[0].mxu0 %v5690
  %v6753 = vpop.f32.mrb[0].mxu0
  %v6754 = vadd.f32 0.0, %v6753
  %v6755 = vpop.f32.mrb[0].mxu0
  %6756 = vmatprep.mubr.f32.mxu0 0.0
  %6757 = vmatmul.mubr.f32.gmra.mrb[0].mxu0 %v5693
  %v6758 = vpop.f32.mrb[0].mxu0
  %v6759 = vadd.f32 0.0, %v6758
  %v6760 = vpop.f32.mrb[0].mxu0
  %6761 = vmatprep.mubr.f32.mxu0 0.0
  %6762 = vmatmul.mubr.f32.gmra.mrb[0].mxu0 %v5696
  %v6763 = vpop.f32.mrb[0].mxu0
  %v6764 = vadd.f32 0.0, %v6763
  %v6765 = vpop.f32.mrb[0].mxu0
  %6766 = vdwg.mxu0
  %s6767 = scalar_lea.vmem %s7, 160
  %v6768 = vld [vmem:[%s6767] sm:$0xff]
  %v6769 = vld [vmem:[%s6767 + $0x8] sm:$0xff]
  %v6770 = vld [vmem:[%s6767 + $0x10] sm:$0xff]
  %v6771 = vld [vmem:[%s6767 + $0x18] sm:$0xff]
  %v6773 = vsel %vm972, %v6768, 0
  %v6776 = vsel %vm972, %v6769, 0
  %v6779 = vsel %vm972, %v6770, 0
  %v6782 = vsel %vm972, %v6771, 0
  %6784 = vmatprep.subr.mxu0 0.0
  %6785 = vmatpush1.msra.mxu0 %v6749
  %6786 = vmatprep.subr.mxu0 0.0
  %6787 = vmatpush1.msra.mxu0 %v6754
  %6788 = vmatprep.subr.mxu0 0.0
  %6789 = vmatpush1.msra.mxu0 %v6759
  %6790 = vmatprep.subr.mxu0 0.0
  %6791 = vmatpush1.msra.mxu0 %v6764
  %6792 = vmatprep.subr.mxu0 0.0
  %6793 = vmatpush1.msra.mxu0 0.0
  %6794 = vmatprep.subr.mxu0 0.0
  %6795 = vmatpush1.msra.mxu0 0.0
  %6796 = vmatprep.subr.mxu0 0.0
  %6797 = vmatpush1.msra.mxu0 0.0
  %6798 = vmatprep.subr.mxu0 0.0
  %6799 = vmatpush1.msra.mxu0 0.0
  %6800 = vmatprep.subr.mxu0 0.0
  %6801 = vmatpush1.msra.mxu0 0.0
  %6802 = vmatprep.subr.mxu0 0.0
  %6803 = vmatpush1.msra.mxu0 0.0
  %6804 = vmatprep.subr.mxu0 0.0
  %6805 = vmatpush1.msra.mxu0 0.0
  %6806 = vmatprep.subr.mxu0 0.0
  %6807 = vmatpush1.msra.mxu0 0.0
  %6808 = vmatprep.subr.mxu0 0.0
  %6809 = vmatpush1.msra.mxu0 0.0
  %6810 = vmatprep.subr.mxu0 0.0
  %6811 = vmatpush1.msra.mxu0 0.0
  %6812 = vmatprep.subr.mxu0 0.0
  %6813 = vmatpush1.msra.mxu0 0.0
  %6814 = vmatprep.subr.mxu0 0.0
  %6815 = vmatpush1.msra.mxu0 0.0
  %6816 = vmatprep.subr.mxu0 0.0
  %6817 = vmatpush1.msra.mxu0 0.0
  %6818 = vmatprep.subr.mxu0 0.0
  %6819 = vmatpush1.msra.mxu0 0.0
  %6820 = vmatprep.subr.mxu0 0.0
  %6821 = vmatpush1.msra.mxu0 0.0
  %6822 = vmatprep.subr.mxu0 0.0
  %6823 = vmatpush1.msra.mxu0 0.0
  %6824 = vmatprep.subr.mxu0 0.0
  %6825 = vmatpush1.msra.mxu0 0.0
  %6826 = vmatprep.subr.mxu0 0.0
  %6827 = vmatpush1.msra.mxu0 0.0
  %6828 = vmatprep.subr.mxu0 0.0
  %6829 = vmatpush1.msra.mxu0 0.0
  %6830 = vmatprep.subr.mxu0 0.0
  %6831 = vmatpush1.msra.mxu0 0.0
  %6832 = vmatprep.subr.mxu0 0.0
  %6833 = vmatpush1.msra.mxu0 0.0
  %6834 = vmatprep.subr.mxu0 0.0
  %6835 = vmatpush1.msra.mxu0 0.0
  %6836 = vmatprep.subr.mxu0 0.0
  %6837 = vmatpush1.msra.mxu0 0.0
  %6838 = vmatprep.subr.mxu0 0.0
  %6839 = vmatpush1.msra.mxu0 0.0
  %6840 = vmatprep.subr.mxu0 0.0
  %6841 = vmatpush1.msra.mxu0 0.0
  %6842 = vmatprep.subr.mxu0 0.0
  %6843 = vmatpush1.msra.mxu0 0.0
  %6844 = vmatprep.subr.mxu0 0.0
  %6845 = vmatpush1.msra.mxu0 0.0
  %6846 = vmatprep.subr.mxu0 0.0
  %6847 = vmatpush1.msra.mxu0 0.0
  %6848 = vmatprep.mubr.f32.mxu0 0.0
  %6849 = vmatmul.mubr.f32.gmra.mrb[0].mxu0 %v6773
  %v6850 = vpop.f32.mrb[0].mxu0
  %v6851 = vadd.f32 0.0, %v6850
  %v6852 = vpop.f32.mrb[0].mxu0
  %6853 = vmatprep.mubr.f32.mxu0 0.0
  %6854 = vmatmul.mubr.f32.gmra.mrb[0].mxu0 %v6776
  %v6855 = vpop.f32.mrb[0].mxu0
  %v6856 = vadd.f32 0.0, %v6855
  %v6857 = vpop.f32.mrb[0].mxu0
  %6858 = vmatprep.mubr.f32.mxu0 0.0
  %6859 = vmatmul.mubr.f32.gmra.mrb[0].mxu0 %v6779
  %v6860 = vpop.f32.mrb[0].mxu0
  %v6861 = vadd.f32 0.0, %v6860
  %v6862 = vpop.f32.mrb[0].mxu0
  %6863 = vmatprep.mubr.f32.mxu0 0.0
  %6864 = vmatmul.mubr.f32.gmra.mrb[0].mxu0 %v6782
  %v6865 = vpop.f32.mrb[0].mxu0
  %v6866 = vadd.f32 0.0, %v6865
  %v6867 = vpop.f32.mrb[0].mxu0
  %6868 = vdwg.mxu0
  %v6869 = vadd.f32 %v6671, %v6851
  %v6870 = vadd.f32 %v6672, %v6856
  %v6871 = vadd.f32 %v6673, %v6861
  %v6872 = vadd.f32 %v6674, %v6866
  %s6873 = scalar_lea.vmem %s6, 144
  %v6874 = vld [vmem:[%s6873] sm:$0xff]
  %v6875 = vld [vmem:[%s6873 + $0x8] sm:$0xff]
  %v6876 = vld [vmem:[%s6873 + $0x10] sm:$0x3]
  %v6878 = vsel %vm3706, %v6876, 0
  %6880 = vmatprep.subr.mxu0 0.0
  %6881 = vmatpush1.msra.mxu0 %v6874
  %6882 = vmatprep.subr.mxu0 0.0
  %6883 = vmatpush1.msra.mxu0 %v6875
  %6884 = vmatprep.subr.mxu0 0.0
  %6885 = vmatpush1.msra.mxu0 %v6878
  %6886 = vmatprep.subr.mxu0 0.0
  %6887 = vmatpush1.msra.mxu0 0.0
  %6888 = vmatprep.subr.mxu0 0.0
  %6889 = vmatpush1.msra.mxu0 0.0
  %6890 = vmatprep.subr.mxu0 0.0
  %6891 = vmatpush1.msra.mxu0 0.0
  %6892 = vmatprep.subr.mxu0 0.0
  %6893 = vmatpush1.msra.mxu0 0.0
  %6894 = vmatprep.subr.mxu0 0.0
  %6895 = vmatpush1.msra.mxu0 0.0
  %6896 = vmatprep.subr.mxu0 0.0
  %6897 = vmatpush1.msra.mxu0 0.0
  %6898 = vmatprep.subr.mxu0 0.0
  %6899 = vmatpush1.msra.mxu0 0.0
  %6900 = vmatprep.subr.mxu0 0.0
  %6901 = vmatpush1.msra.mxu0 0.0
  %6902 = vmatprep.subr.mxu0 0.0
  %6903 = vmatpush1.msra.mxu0 0.0
  %6904 = vmatprep.subr.mxu0 0.0
  %6905 = vmatpush1.msra.mxu0 0.0
  %6906 = vmatprep.subr.mxu0 0.0
  %6907 = vmatpush1.msra.mxu0 0.0
  %6908 = vmatprep.subr.mxu0 0.0
  %6909 = vmatpush1.msra.mxu0 0.0
  %6910 = vmatprep.subr.mxu0 0.0
  %6911 = vmatpush1.msra.mxu0 0.0
  %6912 = vmatprep.subr.mxu0 0.0
  %6913 = vmatpush1.msra.mxu0 0.0
  %6914 = vmatprep.subr.mxu0 0.0
  %6915 = vmatpush1.msra.mxu0 0.0
  %6916 = vmatprep.subr.mxu0 0.0
  %6917 = vmatpush1.msra.mxu0 0.0
  %6918 = vmatprep.subr.mxu0 0.0
  %6919 = vmatpush1.msra.mxu0 0.0
  %6920 = vmatprep.subr.mxu0 0.0
  %6921 = vmatpush1.msra.mxu0 0.0
  %6922 = vmatprep.subr.mxu0 0.0
  %6923 = vmatpush1.msra.mxu0 0.0
  %6924 = vmatprep.subr.mxu0 0.0
  %6925 = vmatpush1.msra.mxu0 0.0
  %6926 = vmatprep.subr.mxu0 0.0
  %6927 = vmatpush1.msra.mxu0 0.0
  %6928 = vmatprep.subr.mxu0 0.0
  %6929 = vmatpush1.msra.mxu0 0.0
  %6930 = vmatprep.subr.mxu0 0.0
  %6931 = vmatpush1.msra.mxu0 0.0
  %6932 = vmatprep.subr.mxu0 0.0
  %6933 = vmatpush1.msra.mxu0 0.0
  %6934 = vmatprep.subr.mxu0 0.0
  %6935 = vmatpush1.msra.mxu0 0.0
  %6936 = vmatprep.subr.mxu0 0.0
  %6937 = vmatpush1.msra.mxu0 0.0
  %6938 = vmatprep.subr.mxu0 0.0
  %6939 = vmatpush1.msra.mxu0 0.0
  %6940 = vmatprep.subr.mxu0 0.0
  %6941 = vmatpush1.msra.mxu0 0.0
  %6942 = vmatprep.subr.mxu0 0.0
  %6943 = vmatpush1.msra.mxu0 0.0
  %6944 = vmatprep.mubr.f32.mxu0 0.0
  %6945 = vmatmul.mubr.f32.gmra.mrb[0].mxu0 %v5687
  %v6946 = vpop.f32.mrb[0].mxu0
  %v6947 = vadd.f32 0.0, %v6946
  %v6948 = vpop.f32.mrb[0].mxu0
  %6949 = vmatprep.mubr.f32.mxu0 0.0
  %6950 = vmatmul.mubr.f32.gmra.mrb[0].mxu0 %v5690
  %v6951 = vpop.f32.mrb[0].mxu0
  %v6952 = vadd.f32 0.0, %v6951
  %v6953 = vpop.f32.mrb[0].mxu0
  %6954 = vmatprep.mubr.f32.mxu0 0.0
  %6955 = vmatmul.mubr.f32.gmra.mrb[0].mxu0 %v5693
  %v6956 = vpop.f32.mrb[0].mxu0
  %v6957 = vadd.f32 0.0, %v6956
  %v6958 = vpop.f32.mrb[0].mxu0
  %6959 = vmatprep.mubr.f32.mxu0 0.0
  %6960 = vmatmul.mubr.f32.gmra.mrb[0].mxu0 %v5696
  %v6961 = vpop.f32.mrb[0].mxu0
  %v6962 = vadd.f32 0.0, %v6961
  %v6963 = vpop.f32.mrb[0].mxu0
  %6964 = vdwg.mxu0
  %s6965 = scalar_lea.vmem %s7, 192
  %v6966 = vld [vmem:[%s6965] sm:$0xff]
  %v6967 = vld [vmem:[%s6965 + $0x8] sm:$0xff]
  %v6968 = vld [vmem:[%s6965 + $0x10] sm:$0xff]
  %v6969 = vld [vmem:[%s6965 + $0x18] sm:$0xff]
  %v6971 = vsel %vm972, %v6966, 0
  %v6974 = vsel %vm972, %v6967, 0
  %v6977 = vsel %vm972, %v6968, 0
  %v6980 = vsel %vm972, %v6969, 0
  %6982 = vmatprep.subr.mxu0 0.0
  %6983 = vmatpush1.msra.mxu0 %v6947
  %6984 = vmatprep.subr.mxu0 0.0
  %6985 = vmatpush1.msra.mxu0 %v6952
  %6986 = vmatprep.subr.mxu0 0.0
  %6987 = vmatpush1.msra.mxu0 %v6957
  %6988 = vmatprep.subr.mxu0 0.0
  %6989 = vmatpush1.msra.mxu0 %v6962
  %6990 = vmatprep.subr.mxu0 0.0
  %6991 = vmatpush1.msra.mxu0 0.0
  %6992 = vmatprep.subr.mxu0 0.0
  %6993 = vmatpush1.msra.mxu0 0.0
  %6994 = vmatprep.subr.mxu0 0.0
  %6995 = vmatpush1.msra.mxu0 0.0
  %6996 = vmatprep.subr.mxu0 0.0
  %6997 = vmatpush1.msra.mxu0 0.0
  %6998 = vmatprep.subr.mxu0 0.0
  %6999 = vmatpush1.msra.mxu0 0.0
  %7000 = vmatprep.subr.mxu0 0.0
  %7001 = vmatpush1.msra.mxu0 0.0
  %7002 = vmatprep.subr.mxu0 0.0
  %7003 = vmatpush1.msra.mxu0 0.0
  %7004 = vmatprep.subr.mxu0 0.0
  %7005 = vmatpush1.msra.mxu0 0.0
  %7006 = vmatprep.subr.mxu0 0.0
  %7007 = vmatpush1.msra.mxu0 0.0
  %7008 = vmatprep.subr.mxu0 0.0
  %7009 = vmatpush1.msra.mxu0 0.0
  %7010 = vmatprep.subr.mxu0 0.0
  %7011 = vmatpush1.msra.mxu0 0.0
  %7012 = vmatprep.subr.mxu0 0.0
  %7013 = vmatpush1.msra.mxu0 0.0
  %7014 = vmatprep.subr.mxu0 0.0
  %7015 = vmatpush1.msra.mxu0 0.0
  %7016 = vmatprep.subr.mxu0 0.0
  %7017 = vmatpush1.msra.mxu0 0.0
  %7018 = vmatprep.subr.mxu0 0.0
  %7019 = vmatpush1.msra.mxu0 0.0
  %7020 = vmatprep.subr.mxu0 0.0
  %7021 = vmatpush1.msra.mxu0 0.0
  %7022 = vmatprep.subr.mxu0 0.0
  %7023 = vmatpush1.msra.mxu0 0.0
  %7024 = vmatprep.subr.mxu0 0.0
  %7025 = vmatpush1.msra.mxu0 0.0
  %7026 = vmatprep.subr.mxu0 0.0
  %7027 = vmatpush1.msra.mxu0 0.0
  %7028 = vmatprep.subr.mxu0 0.0
  %7029 = vmatpush1.msra.mxu0 0.0
  %7030 = vmatprep.subr.mxu0 0.0
  %7031 = vmatpush1.msra.mxu0 0.0
  %7032 = vmatprep.subr.mxu0 0.0
  %7033 = vmatpush1.msra.mxu0 0.0
  %7034 = vmatprep.subr.mxu0 0.0
  %7035 = vmatpush1.msra.mxu0 0.0
  %7036 = vmatprep.subr.mxu0 0.0
  %7037 = vmatpush1.msra.mxu0 0.0
  %7038 = vmatprep.subr.mxu0 0.0
  %7039 = vmatpush1.msra.mxu0 0.0
  %7040 = vmatprep.subr.mxu0 0.0
  %7041 = vmatpush1.msra.mxu0 0.0
  %7042 = vmatprep.subr.mxu0 0.0
  %7043 = vmatpush1.msra.mxu0 0.0
  %7044 = vmatprep.subr.mxu0 0.0
  %7045 = vmatpush1.msra.mxu0 0.0
  %7046 = vmatprep.mubr.f32.mxu0 0.0
  %7047 = vmatmul.mubr.f32.gmra.mrb[0].mxu0 %v6971
  %v7048 = vpop.f32.mrb[0].mxu0
  %v7049 = vadd.f32 0.0, %v7048
  %v7050 = vpop.f32.mrb[0].mxu0
  %7051 = vmatprep.mubr.f32.mxu0 0.0
  %7052 = vmatmul.mubr.f32.gmra.mrb[0].mxu0 %v6974
  %v7053 = vpop.f32.mrb[0].mxu0
  %v7054 = vadd.f32 0.0, %v7053
  %v7055 = vpop.f32.mrb[0].mxu0
  %7056 = vmatprep.mubr.f32.mxu0 0.0
  %7057 = vmatmul.mubr.f32.gmra.mrb[0].mxu0 %v6977
  %v7058 = vpop.f32.mrb[0].mxu0
  %v7059 = vadd.f32 0.0, %v7058
  %v7060 = vpop.f32.mrb[0].mxu0
  %7061 = vmatprep.mubr.f32.mxu0 0.0
  %7062 = vmatmul.mubr.f32.gmra.mrb[0].mxu0 %v6980
  %v7063 = vpop.f32.mrb[0].mxu0
  %v7064 = vadd.f32 0.0, %v7063
  %v7065 = vpop.f32.mrb[0].mxu0
  %7066 = vdwg.mxu0
  %v7067 = vadd.f32 %v6869, %v7049
  %v7068 = vadd.f32 %v6870, %v7054
  %v7069 = vadd.f32 %v6871, %v7059
  %v7070 = vadd.f32 %v6872, %v7064
  %s7071 = scalar_lea.vmem %s6, 168
  %v7072 = vld [vmem:[%s7071] sm:$0xff]
  %v7073 = vld [vmem:[%s7071 + $0x8] sm:$0xff]
  %v7074 = vld [vmem:[%s7071 + $0x10] sm:$0x3]
  %v7076 = vsel %vm3706, %v7074, 0
  %7078 = vmatprep.subr.mxu0 0.0
  %7079 = vmatpush1.msra.mxu0 %v7072
  %7080 = vmatprep.subr.mxu0 0.0
  %7081 = vmatpush1.msra.mxu0 %v7073
  %7082 = vmatprep.subr.mxu0 0.0
  %7083 = vmatpush1.msra.mxu0 %v7076
  %7084 = vmatprep.subr.mxu0 0.0
  %7085 = vmatpush1.msra.mxu0 0.0
  %7086 = vmatprep.subr.mxu0 0.0
  %7087 = vmatpush1.msra.mxu0 0.0
  %7088 = vmatprep.subr.mxu0 0.0
  %7089 = vmatpush1.msra.mxu0 0.0
  %7090 = vmatprep.subr.mxu0 0.0
  %7091 = vmatpush1.msra.mxu0 0.0
  %7092 = vmatprep.subr.mxu0 0.0
  %7093 = vmatpush1.msra.mxu0 0.0
  %7094 = vmatprep.subr.mxu0 0.0
  %7095 = vmatpush1.msra.mxu0 0.0
  %7096 = vmatprep.subr.mxu0 0.0
  %7097 = vmatpush1.msra.mxu0 0.0
  %7098 = vmatprep.subr.mxu0 0.0
  %7099 = vmatpush1.msra.mxu0 0.0
  %7100 = vmatprep.subr.mxu0 0.0
  %7101 = vmatpush1.msra.mxu0 0.0
  %7102 = vmatprep.subr.mxu0 0.0
  %7103 = vmatpush1.msra.mxu0 0.0
  %7104 = vmatprep.subr.mxu0 0.0
  %7105 = vmatpush1.msra.mxu0 0.0
  %7106 = vmatprep.subr.mxu0 0.0
  %7107 = vmatpush1.msra.mxu0 0.0
  %7108 = vmatprep.subr.mxu0 0.0
  %7109 = vmatpush1.msra.mxu0 0.0
  %7110 = vmatprep.subr.mxu0 0.0
  %7111 = vmatpush1.msra.mxu0 0.0
  %7112 = vmatprep.subr.mxu0 0.0
  %7113 = vmatpush1.msra.mxu0 0.0
  %7114 = vmatprep.subr.mxu0 0.0
  %7115 = vmatpush1.msra.mxu0 0.0
  %7116 = vmatprep.subr.mxu0 0.0
  %7117 = vmatpush1.msra.mxu0 0.0
  %7118 = vmatprep.subr.mxu0 0.0
  %7119 = vmatpush1.msra.mxu0 0.0
  %7120 = vmatprep.subr.mxu0 0.0
  %7121 = vmatpush1.msra.mxu0 0.0
  %7122 = vmatprep.subr.mxu0 0.0
  %7123 = vmatpush1.msra.mxu0 0.0
  %7124 = vmatprep.subr.mxu0 0.0
  %7125 = vmatpush1.msra.mxu0 0.0
  %7126 = vmatprep.subr.mxu0 0.0
  %7127 = vmatpush1.msra.mxu0 0.0
  %7128 = vmatprep.subr.mxu0 0.0
  %7129 = vmatpush1.msra.mxu0 0.0
  %7130 = vmatprep.subr.mxu0 0.0
  %7131 = vmatpush1.msra.mxu0 0.0
  %7132 = vmatprep.subr.mxu0 0.0
  %7133 = vmatpush1.msra.mxu0 0.0
  %7134 = vmatprep.subr.mxu0 0.0
  %7135 = vmatpush1.msra.mxu0 0.0
  %7136 = vmatprep.subr.mxu0 0.0
  %7137 = vmatpush1.msra.mxu0 0.0
  %7138 = vmatprep.subr.mxu0 0.0
  %7139 = vmatpush1.msra.mxu0 0.0
  %7140 = vmatprep.subr.mxu0 0.0
  %7141 = vmatpush1.msra.mxu0 0.0
  %7142 = vmatprep.mubr.f32.mxu0 0.0
  %7143 = vmatmul.mubr.f32.gmra.mrb[0].mxu0 %v5687
  %v7144 = vpop.f32.mrb[0].mxu0
  %v7145 = vadd.f32 0.0, %v7144
  %v7146 = vpop.f32.mrb[0].mxu0
  %7147 = vmatprep.mubr.f32.mxu0 0.0
  %7148 = vmatmul.mubr.f32.gmra.mrb[0].mxu0 %v5690
  %v7149 = vpop.f32.mrb[0].mxu0
  %v7150 = vadd.f32 0.0, %v7149
  %v7151 = vpop.f32.mrb[0].mxu0
  %7152 = vmatprep.mubr.f32.mxu0 0.0
  %7153 = vmatmul.mubr.f32.gmra.mrb[0].mxu0 %v5693
  %v7154 = vpop.f32.mrb[0].mxu0
  %v7155 = vadd.f32 0.0, %v7154
  %v7156 = vpop.f32.mrb[0].mxu0
  %7157 = vmatprep.mubr.f32.mxu0 0.0
  %7158 = vmatmul.mubr.f32.gmra.mrb[0].mxu0 %v5696
  %v7159 = vpop.f32.mrb[0].mxu0
  %v7160 = vadd.f32 0.0, %v7159
  %v7161 = vpop.f32.mrb[0].mxu0
  %7162 = vdwg.mxu0
  %s7163 = scalar_lea.vmem %s7, 224
  %v7164 = vld [vmem:[%s7163] sm:$0xff]
  %v7165 = vld [vmem:[%s7163 + $0x8] sm:$0xff]
  %v7166 = vld [vmem:[%s7163 + $0x10] sm:$0xff]
  %v7167 = vld [vmem:[%s7163 + $0x18] sm:$0xff]
  %v7169 = vsel %vm972, %v7164, 0
  %v7172 = vsel %vm972, %v7165, 0
  %v7175 = vsel %vm972, %v7166, 0
  %v7178 = vsel %vm972, %v7167, 0
  %7180 = vmatprep.subr.mxu0 0.0
  %7181 = vmatpush1.msra.mxu0 %v7145
  %7182 = vmatprep.subr.mxu0 0.0
  %7183 = vmatpush1.msra.mxu0 %v7150
  %7184 = vmatprep.subr.mxu0 0.0
  %7185 = vmatpush1.msra.mxu0 %v7155
  %7186 = vmatprep.subr.mxu0 0.0
  %7187 = vmatpush1.msra.mxu0 %v7160
  %7188 = vmatprep.subr.mxu0 0.0
  %7189 = vmatpush1.msra.mxu0 0.0
  %7190 = vmatprep.subr.mxu0 0.0
  %7191 = vmatpush1.msra.mxu0 0.0
  %7192 = vmatprep.subr.mxu0 0.0
  %7193 = vmatpush1.msra.mxu0 0.0
  %7194 = vmatprep.subr.mxu0 0.0
  %7195 = vmatpush1.msra.mxu0 0.0
  %7196 = vmatprep.subr.mxu0 0.0
  %7197 = vmatpush1.msra.mxu0 0.0
  %7198 = vmatprep.subr.mxu0 0.0
  %7199 = vmatpush1.msra.mxu0 0.0
  %7200 = vmatprep.subr.mxu0 0.0
  %7201 = vmatpush1.msra.mxu0 0.0
  %7202 = vmatprep.subr.mxu0 0.0
  %7203 = vmatpush1.msra.mxu0 0.0
  %7204 = vmatprep.subr.mxu0 0.0
  %7205 = vmatpush1.msra.mxu0 0.0
  %7206 = vmatprep.subr.mxu0 0.0
  %7207 = vmatpush1.msra.mxu0 0.0
  %7208 = vmatprep.subr.mxu0 0.0
  %7209 = vmatpush1.msra.mxu0 0.0
  %7210 = vmatprep.subr.mxu0 0.0
  %7211 = vmatpush1.msra.mxu0 0.0
  %7212 = vmatprep.subr.mxu0 0.0
  %7213 = vmatpush1.msra.mxu0 0.0
  %7214 = vmatprep.subr.mxu0 0.0
  %7215 = vmatpush1.msra.mxu0 0.0
  %7216 = vmatprep.subr.mxu0 0.0
  %7217 = vmatpush1.msra.mxu0 0.0
  %7218 = vmatprep.subr.mxu0 0.0
  %7219 = vmatpush1.msra.mxu0 0.0
  %7220 = vmatprep.subr.mxu0 0.0
  %7221 = vmatpush1.msra.mxu0 0.0
  %7222 = vmatprep.subr.mxu0 0.0
  %7223 = vmatpush1.msra.mxu0 0.0
  %7224 = vmatprep.subr.mxu0 0.0
  %7225 = vmatpush1.msra.mxu0 0.0
  %7226 = vmatprep.subr.mxu0 0.0
  %7227 = vmatpush1.msra.mxu0 0.0
  %7228 = vmatprep.subr.mxu0 0.0
  %7229 = vmatpush1.msra.mxu0 0.0
  %7230 = vmatprep.subr.mxu0 0.0
  %7231 = vmatpush1.msra.mxu0 0.0
  %7232 = vmatprep.subr.mxu0 0.0
  %7233 = vmatpush1.msra.mxu0 0.0
  %7234 = vmatprep.subr.mxu0 0.0
  %7235 = vmatpush1.msra.mxu0 0.0
  %7236 = vmatprep.subr.mxu0 0.0
  %7237 = vmatpush1.msra.mxu0 0.0
  %7238 = vmatprep.subr.mxu0 0.0
  %7239 = vmatpush1.msra.mxu0 0.0
  %7240 = vmatprep.subr.mxu0 0.0
  %7241 = vmatpush1.msra.mxu0 0.0
  %7242 = vmatprep.subr.mxu0 0.0
  %7243 = vmatpush1.msra.mxu0 0.0
  %7244 = vmatprep.mubr.f32.mxu0 0.0
  %7245 = vmatmul.mubr.f32.gmra.mrb[0].mxu0 %v7169
  %v7246 = vpop.f32.mrb[0].mxu0
  %v7247 = vadd.f32 0.0, %v7246
  %v7248 = vpop.f32.mrb[0].mxu0
  %7249 = vmatprep.mubr.f32.mxu0 0.0
  %7250 = vmatmul.mubr.f32.gmra.mrb[0].mxu0 %v7172
  %v7251 = vpop.f32.mrb[0].mxu0
  %v7252 = vadd.f32 0.0, %v7251
  %v7253 = vpop.f32.mrb[0].mxu0
  %7254 = vmatprep.mubr.f32.mxu0 0.0
  %7255 = vmatmul.mubr.f32.gmra.mrb[0].mxu0 %v7175
  %v7256 = vpop.f32.mrb[0].mxu0
  %v7257 = vadd.f32 0.0, %v7256
  %v7258 = vpop.f32.mrb[0].mxu0
  %7259 = vmatprep.mubr.f32.mxu0 0.0
  %7260 = vmatmul.mubr.f32.gmra.mrb[0].mxu0 %v7178
  %v7261 = vpop.f32.mrb[0].mxu0
  %v7262 = vadd.f32 0.0, %v7261
  %v7263 = vpop.f32.mrb[0].mxu0
  %7264 = vdwg.mxu0
  %v7265 = vadd.f32 %v7067, %v7247
  %v7266 = vadd.f32 %v7068, %v7252
  %v7267 = vadd.f32 %v7069, %v7257
  %v7268 = vadd.f32 %v7070, %v7262
  %s7269 = scalar_lea.vmem %s6, 192
  %v7270 = vld [vmem:[%s7269] sm:$0xff]
  %v7271 = vld [vmem:[%s7269 + $0x8] sm:$0xff]
  %v7272 = vld [vmem:[%s7269 + $0x10] sm:$0x3]
  %v7274 = vsel %vm3706, %v7272, 0
  %7276 = vmatprep.subr.mxu0 0.0
  %7277 = vmatpush1.msra.mxu0 %v7270
  %7278 = vmatprep.subr.mxu0 0.0
  %7279 = vmatpush1.msra.mxu0 %v7271
  %7280 = vmatprep.subr.mxu0 0.0
  %7281 = vmatpush1.msra.mxu0 %v7274
  %7282 = vmatprep.subr.mxu0 0.0
  %7283 = vmatpush1.msra.mxu0 0.0
  %7284 = vmatprep.subr.mxu0 0.0
  %7285 = vmatpush1.msra.mxu0 0.0
  %7286 = vmatprep.subr.mxu0 0.0
  %7287 = vmatpush1.msra.mxu0 0.0
  %7288 = vmatprep.subr.mxu0 0.0
  %7289 = vmatpush1.msra.mxu0 0.0
  %7290 = vmatprep.subr.mxu0 0.0
  %7291 = vmatpush1.msra.mxu0 0.0
  %7292 = vmatprep.subr.mxu0 0.0
  %7293 = vmatpush1.msra.mxu0 0.0
  %7294 = vmatprep.subr.mxu0 0.0
  %7295 = vmatpush1.msra.mxu0 0.0
  %7296 = vmatprep.subr.mxu0 0.0
  %7297 = vmatpush1.msra.mxu0 0.0
  %7298 = vmatprep.subr.mxu0 0.0
  %7299 = vmatpush1.msra.mxu0 0.0
  %7300 = vmatprep.subr.mxu0 0.0
  %7301 = vmatpush1.msra.mxu0 0.0
  %7302 = vmatprep.subr.mxu0 0.0
  %7303 = vmatpush1.msra.mxu0 0.0
  %7304 = vmatprep.subr.mxu0 0.0
  %7305 = vmatpush1.msra.mxu0 0.0
  %7306 = vmatprep.subr.mxu0 0.0
  %7307 = vmatpush1.msra.mxu0 0.0
  %7308 = vmatprep.subr.mxu0 0.0
  %7309 = vmatpush1.msra.mxu0 0.0
  %7310 = vmatprep.subr.mxu0 0.0
  %7311 = vmatpush1.msra.mxu0 0.0
  %7312 = vmatprep.subr.mxu0 0.0
  %7313 = vmatpush1.msra.mxu0 0.0
  %7314 = vmatprep.subr.mxu0 0.0
  %7315 = vmatpush1.msra.mxu0 0.0
  %7316 = vmatprep.subr.mxu0 0.0
  %7317 = vmatpush1.msra.mxu0 0.0
  %7318 = vmatprep.subr.mxu0 0.0
  %7319 = vmatpush1.msra.mxu0 0.0
  %7320 = vmatprep.subr.mxu0 0.0
  %7321 = vmatpush1.msra.mxu0 0.0
  %7322 = vmatprep.subr.mxu0 0.0
  %7323 = vmatpush1.msra.mxu0 0.0
  %7324 = vmatprep.subr.mxu0 0.0
  %7325 = vmatpush1.msra.mxu0 0.0
  %7326 = vmatprep.subr.mxu0 0.0
  %7327 = vmatpush1.msra.mxu0 0.0
  %7328 = vmatprep.subr.mxu0 0.0
  %7329 = vmatpush1.msra.mxu0 0.0
  %7330 = vmatprep.subr.mxu0 0.0
  %7331 = vmatpush1.msra.mxu0 0.0
  %7332 = vmatprep.subr.mxu0 0.0
  %7333 = vmatpush1.msra.mxu0 0.0
  %7334 = vmatprep.subr.mxu0 0.0
  %7335 = vmatpush1.msra.mxu0 0.0
  %7336 = vmatprep.subr.mxu0 0.0
  %7337 = vmatpush1.msra.mxu0 0.0
  %7338 = vmatprep.subr.mxu0 0.0
  %7339 = vmatpush1.msra.mxu0 0.0
  %7340 = vmatprep.mubr.f32.mxu0 0.0
  %7341 = vmatmul.mubr.f32.gmra.mrb[0].mxu0 %v5687
  %v7342 = vpop.f32.mrb[0].mxu0
  %v7343 = vadd.f32 0.0, %v7342
  %v7344 = vpop.f32.mrb[0].mxu0
  %7345 = vmatprep.mubr.f32.mxu0 0.0
  %7346 = vmatmul.mubr.f32.gmra.mrb[0].mxu0 %v5690
  %v7347 = vpop.f32.mrb[0].mxu0
  %v7348 = vadd.f32 0.0, %v7347
  %v7349 = vpop.f32.mrb[0].mxu0
  %7350 = vmatprep.mubr.f32.mxu0 0.0
  %7351 = vmatmul.mubr.f32.gmra.mrb[0].mxu0 %v5693
  %v7352 = vpop.f32.mrb[0].mxu0
  %v7353 = vadd.f32 0.0, %v7352
  %v7354 = vpop.f32.mrb[0].mxu0
  %7355 = vmatprep.mubr.f32.mxu0 0.0
  %7356 = vmatmul.mubr.f32.gmra.mrb[0].mxu0 %v5696
  %v7357 = vpop.f32.mrb[0].mxu0
  %v7358 = vadd.f32 0.0, %v7357
  %v7359 = vpop.f32.mrb[0].mxu0
  %7360 = vdwg.mxu0
  %s7361 = scalar_lea.vmem %s7, 256
  %v7362 = vld [vmem:[%s7361] sm:$0xff]
  %v7363 = vld [vmem:[%s7361 + $0x8] sm:$0xff]
  %v7364 = vld [vmem:[%s7361 + $0x10] sm:$0xff]
  %v7365 = vld [vmem:[%s7361 + $0x18] sm:$0xff]
  %v7367 = vsel %vm972, %v7362, 0
  %v7370 = vsel %vm972, %v7363, 0
  %v7373 = vsel %vm972, %v7364, 0
  %v7376 = vsel %vm972, %v7365, 0
  %7378 = vmatprep.subr.mxu0 0.0
  %7379 = vmatpush1.msra.mxu0 %v7343
  %7380 = vmatprep.subr.mxu0 0.0
  %7381 = vmatpush1.msra.mxu0 %v7348
  %7382 = vmatprep.subr.mxu0 0.0
  %7383 = vmatpush1.msra.mxu0 %v7353
  %7384 = vmatprep.subr.mxu0 0.0
  %7385 = vmatpush1.msra.mxu0 %v7358
  %7386 = vmatprep.subr.mxu0 0.0
  %7387 = vmatpush1.msra.mxu0 0.0
  %7388 = vmatprep.subr.mxu0 0.0
  %7389 = vmatpush1.msra.mxu0 0.0
  %7390 = vmatprep.subr.mxu0 0.0
  %7391 = vmatpush1.msra.mxu0 0.0
  %7392 = vmatprep.subr.mxu0 0.0
  %7393 = vmatpush1.msra.mxu0 0.0
  %7394 = vmatprep.subr.mxu0 0.0
  %7395 = vmatpush1.msra.mxu0 0.0
  %7396 = vmatprep.subr.mxu0 0.0
  %7397 = vmatpush1.msra.mxu0 0.0
  %7398 = vmatprep.subr.mxu0 0.0
  %7399 = vmatpush1.msra.mxu0 0.0
  %7400 = vmatprep.subr.mxu0 0.0
  %7401 = vmatpush1.msra.mxu0 0.0
  %7402 = vmatprep.subr.mxu0 0.0
  %7403 = vmatpush1.msra.mxu0 0.0
  %7404 = vmatprep.subr.mxu0 0.0
  %7405 = vmatpush1.msra.mxu0 0.0
  %7406 = vmatprep.subr.mxu0 0.0
  %7407 = vmatpush1.msra.mxu0 0.0
  %7408 = vmatprep.subr.mxu0 0.0
  %7409 = vmatpush1.msra.mxu0 0.0
  %7410 = vmatprep.subr.mxu0 0.0
  %7411 = vmatpush1.msra.mxu0 0.0
  %7412 = vmatprep.subr.mxu0 0.0
  %7413 = vmatpush1.msra.mxu0 0.0
  %7414 = vmatprep.subr.mxu0 0.0
  %7415 = vmatpush1.msra.mxu0 0.0
  %7416 = vmatprep.subr.mxu0 0.0
  %7417 = vmatpush1.msra.mxu0 0.0
  %7418 = vmatprep.subr.mxu0 0.0
  %7419 = vmatpush1.msra.mxu0 0.0
  %7420 = vmatprep.subr.mxu0 0.0
  %7421 = vmatpush1.msra.mxu0 0.0
  %7422 = vmatprep.subr.mxu0 0.0
  %7423 = vmatpush1.msra.mxu0 0.0
  %7424 = vmatprep.subr.mxu0 0.0
  %7425 = vmatpush1.msra.mxu0 0.0
  %7426 = vmatprep.subr.mxu0 0.0
  %7427 = vmatpush1.msra.mxu0 0.0
  %7428 = vmatprep.subr.mxu0 0.0
  %7429 = vmatpush1.msra.mxu0 0.0
  %7430 = vmatprep.subr.mxu0 0.0
  %7431 = vmatpush1.msra.mxu0 0.0
  %7432 = vmatprep.subr.mxu0 0.0
  %7433 = vmatpush1.msra.mxu0 0.0
  %7434 = vmatprep.subr.mxu0 0.0
  %7435 = vmatpush1.msra.mxu0 0.0
  %7436 = vmatprep.subr.mxu0 0.0
  %7437 = vmatpush1.msra.mxu0 0.0
  %7438 = vmatprep.subr.mxu0 0.0
  %7439 = vmatpush1.msra.mxu0 0.0
  %7440 = vmatprep.subr.mxu0 0.0
  %7441 = vmatpush1.msra.mxu0 0.0
  %7442 = vmatprep.mubr.f32.mxu0 0.0
  %7443 = vmatmul.mubr.f32.gmra.mrb[0].mxu0 %v7367
  %v7444 = vpop.f32.mrb[0].mxu0
  %v7445 = vadd.f32 0.0, %v7444
  %v7446 = vpop.f32.mrb[0].mxu0
  %7447 = vmatprep.mubr.f32.mxu0 0.0
  %7448 = vmatmul.mubr.f32.gmra.mrb[0].mxu0 %v7370
  %v7449 = vpop.f32.mrb[0].mxu0
  %v7450 = vadd.f32 0.0, %v7449
  %v7451 = vpop.f32.mrb[0].mxu0
  %7452 = vmatprep.mubr.f32.mxu0 0.0
  %7453 = vmatmul.mubr.f32.gmra.mrb[0].mxu0 %v7373
  %v7454 = vpop.f32.mrb[0].mxu0
  %v7455 = vadd.f32 0.0, %v7454
  %v7456 = vpop.f32.mrb[0].mxu0
  %7457 = vmatprep.mubr.f32.mxu0 0.0
  %7458 = vmatmul.mubr.f32.gmra.mrb[0].mxu0 %v7376
  %v7459 = vpop.f32.mrb[0].mxu0
  %v7460 = vadd.f32 0.0, %v7459
  %v7461 = vpop.f32.mrb[0].mxu0
  %7462 = vdwg.mxu0
  %v7463 = vadd.f32 %v7265, %v7445
  %v7464 = vadd.f32 %v7266, %v7450
  %v7465 = vadd.f32 %v7267, %v7455
  %v7466 = vadd.f32 %v7268, %v7460
  %vm7467 = vcmask 15360
  %v7468 = vsel %vm7467, %v7463, 0.0
  %7469 = vadd.xlane.f32.xlu0 %v7468
  %v7470 = vpop.xlane.xlu0 %7469
  %v7471 = vsel %vm7467, %v7464, 0.0
  %7472 = vadd.xlane.f32.xlu0 %v7471
  %v7473 = vpop.xlane.xlu0 %7472
  %v7474 = vsel %vm7467, %v7465, 0.0
  %7475 = vadd.xlane.f32.xlu0 %v7474
  %v7476 = vpop.xlane.xlu0 %7475
  %v7477 = vsel %vm7467, %v7466, 0.0
  %7478 = vadd.xlane.f32.xlu0 %v7477
  %v7479 = vpop.xlane.xlu0 %7478
  %v7480 = vmul.f32 %v7470, 0.5
  %v7481 = vmul.f32 %v7473, 0.5
  %v7482 = vmul.f32 %v7476, 0.5
  %v7483 = vmul.f32 %v7479, 0.5
  %v7484 = vmul.f32 %v7463, %v7463
  %v7485 = vmul.f32 %v7464, %v7464
  %v7486 = vmul.f32 %v7465, %v7465
  %v7487 = vmul.f32 %v7466, %v7466
  %v7488 = vsel %vm7467, %v7484, 0.0
  %7489 = vadd.xlane.f32.xlu0 %v7488
  %v7490 = vpop.xlane.xlu0 %7489
  %v7491 = vsel %vm7467, %v7485, 0.0
  %7492 = vadd.xlane.f32.xlu0 %v7491
  %v7493 = vpop.xlane.xlu0 %7492
  %v7494 = vsel %vm7467, %v7486, 0.0
  %7495 = vadd.xlane.f32.xlu0 %v7494
  %v7496 = vpop.xlane.xlu0 %7495
  %v7497 = vsel %vm7467, %v7487, 0.0
  %7498 = vadd.xlane.f32.xlu0 %v7497
  %v7499 = vpop.xlane.xlu0 %7498
  %v7500 = vmul.f32 %v7490, 0.5
  %v7501 = vmul.f32 %v7493, 0.5
  %v7502 = vmul.f32 %v7496, 0.5
  %v7503 = vmul.f32 %v7499, 0.5
  %v7504 = vmul.f32 %v7480, %v7480
  %v7505 = vmul.f32 %v7481, %v7481
  %v7506 = vmul.f32 %v7482, %v7482
  %v7507 = vmul.f32 %v7483, %v7483
  %v7508 = vsub.f32 %v7500, %v7504
  %v7509 = vsub.f32 %v7501, %v7505
  %v7510 = vsub.f32 %v7502, %v7506
  %v7511 = vsub.f32 %v7503, %v7507
  %s7512 = scalar_lea.vmem %s8, 96
  %v7513 = vld [vmem:[%s7512] sm:$0xff]
  %v7514 = vld [vmem:[%s7512 + $0x8] sm:$0xff]
  %v7515 = vld [vmem:[%s7512 + $0x10] sm:$0xff]
  %v7516 = vld [vmem:[%s7512 + $0x18] sm:$0xff]
  %v7517 = vadd.f32 %v7508, 1e-05
  %v7518 = vadd.f32 %v7509, 1e-05
  %v7519 = vadd.f32 %v7510, 1e-05
  %v7520 = vadd.f32 %v7511, 1e-05
  %v7521 = vrsqrt.pop %v7517
  %v7522 = vrsqrt.pop %v7518
  %v7523 = vrsqrt.pop %v7519
  %v7524 = vrsqrt.pop %v7520
  %v7525 = vmul.f32 %v7513, %v7521
  %v7526 = vmul.f32 %v7514, %v7522
  %v7527 = vmul.f32 %v7515, %v7523
  %v7528 = vmul.f32 %v7516, %v7524
  %s7529 = scalar_lea.vmem %s9, 96
  %v7530 = vld [vmem:[%s7529] sm:$0xff]
  %v7531 = vld [vmem:[%s7529 + $0x8] sm:$0xff]
  %v7532 = vld [vmem:[%s7529 + $0x10] sm:$0xff]
  %v7533 = vld [vmem:[%s7529 + $0x18] sm:$0xff]
  %v7534 = vmul.f32 %v7480, %v7525
  %v7535 = vmul.f32 %v7481, %v7526
  %v7536 = vmul.f32 %v7482, %v7527
  %v7537 = vmul.f32 %v7483, %v7528
  %v7538 = vsub.f32 %v7530, %v7534
  %v7539 = vsub.f32 %v7531, %v7535
  %v7540 = vsub.f32 %v7532, %v7536
  %v7541 = vsub.f32 %v7533, %v7537
  %7543 = vset.pattern.permute.xlu0 0
  %7544 = vperm.xlu0 %7543, %v7525
  %v7545 = vpop.permute.xlu0 %7544
  %7548 = vset.pattern.permute.xlu0 0
  %7549 = vperm.xlu0 %7548, %v7526
  %v7550 = vpop.permute.xlu0 %7549
  %7553 = vset.pattern.permute.xlu0 0
  %7554 = vperm.xlu0 %7553, %v7527
  %v7555 = vpop.permute.xlu0 %7554
  %7558 = vset.pattern.permute.xlu0 0
  %7559 = vperm.xlu0 %7558, %v7528
  %v7560 = vpop.permute.xlu0 %7559
  %v7562 = vmul.f32 %v7463, %v7545
  %v7563 = vmul.f32 %v7464, %v7550
  %v7564 = vmul.f32 %v7465, %v7555
  %v7565 = vmul.f32 %v7466, %v7560
  %7567 = vset.pattern.permute.xlu0 0
  %7568 = vperm.xlu0 %7567, %v7538
  %v7569 = vpop.permute.xlu0 %7568
  %7572 = vset.pattern.permute.xlu0 0
  %7573 = vperm.xlu0 %7572, %v7539
  %v7574 = vpop.permute.xlu0 %7573
  %7577 = vset.pattern.permute.xlu0 0
  %7578 = vperm.xlu0 %7577, %v7540
  %v7579 = vpop.permute.xlu0 %7578
  %7582 = vset.pattern.permute.xlu0 0
  %7583 = vperm.xlu0 %7582, %v7541
  %v7584 = vpop.permute.xlu0 %7583
  %v7586 = vadd.f32 %v7562, %v7569
  %v7587 = vadd.f32 %v7563, %v7574
  %v7588 = vadd.f32 %v7564, %v7579
  %v7589 = vadd.f32 %v7565, %v7584
  %v7590 = vmax.f32 %v7586, 0.0
  %v7591 = vmax.f32 %v7587, 0.0
  %v7592 = vmax.f32 %v7588, 0.0
  %v7593 = vmax.f32 %v7589, 0.0
  %7594 = vst.msk [vmem:[%s10] sm:$0xff] %vm7467, %v7590
  %7595 = vst.msk [vmem:[%s10 + $0x8] sm:$0xff] %vm7467, %v7591
  %7596 = vst.msk [vmem:[%s10 + $0x10] sm:$0xff] %vm7467, %v7592
  %7597 = vst.msk [vmem:[%s10 + $0x18] sm:$0xff] %vm7467, %v7593
  // Predicated region
  $region42: #{tpu_custom_call.1} parent=0 // pred_check
    _
  $region43: #{tpu_custom_call.1} parent=0 // pred_check_branch
    %7599 = sbr.rel (0) target = $region45
  $region44: #{tpu_custom_call.1} parent=0 // pred_region
    _
  $region45: #{tpu_custom_call.1} parent=0 // pred_fallthru
    _
  // Predicated region
  $region46: #{tpu_custom_call.1} parent=0 // pred_check
    _
  $region47: #{tpu_custom_call.1} parent=0 // pred_check_branch
    %7601 = sbr.rel (0) target = $region49
  $region48: #{tpu_custom_call.1} parent=0 // pred_region
    _
  $region49: #{tpu_custom_call.1} parent=0 // pred_fallthru
    _

</llo_original>
